<compile_context>
chip_gen: v7x
topology: tpu7x:2x2x1
jax: 0.10.0
libtpu: 0.0.40
codegen_flags: <defaults>
</compile_context>

<pallas_src>
import math

import jax
import jax.numpy as jnp
from jax import lax
from jax.experimental import pallas as pl
from jax.experimental.pallas import tpu as pltpu

_VMEM_LIMIT = 64 * 1024 * 1024
_LN_EPS = 1e-5


def _round_up(x, m):
    return (x + m - 1) // m * m


def _rep(arr):
    """Whole-array block, replicated across a 1-D grid."""
    nd = arr.ndim
    return pl.BlockSpec(arr.shape, lambda b, nd=nd: (0,) * nd)


def _layernorm(h, gamma, beta, eps=_LN_EPS):
    mean = jnp.mean(h, axis=-1, keepdims=True)
    var = jnp.mean((h - mean) ** 2, axis=-1, keepdims=True)
    return gamma * ((h - mean) * lax.rsqrt(var + eps)) + beta


def _attn_body(q, k, v, mask, out_w, out_b, num_heads, scale):
    """Multi-head scaled-dot-product attention + output projection on 2-D
    (seq, D) f32 operands.  Heads live in contiguous Dh columns.  Each head's
    values are folded straight into the output projection, so there is no
    lane-dim concat and no per-head intermediate survives its iteration."""
    Sq, D = q.shape
    Dh = D // num_heads
    out = jnp.zeros((Sq, D), jnp.float32)
    for h in range(num_heads):
        sl = slice(h * Dh, (h + 1) * Dh)
        s = lax.dot_general(q[:, sl].astype(jnp.bfloat16),
                            k[:, sl].astype(jnp.bfloat16),
                            (((1,), (1,)), ((), ())),
                            preferred_element_type=jnp.float32) * scale + mask
        s = s - jnp.max(s, axis=-1, keepdims=True)
        e = jnp.exp(s)
        p = e * pl.reciprocal(jnp.sum(e, axis=-1, keepdims=True), approx=True)
        vals = jnp.dot(p.astype(jnp.bfloat16), v[:, sl].astype(jnp.bfloat16),
                       preferred_element_type=jnp.float32)
        out = out + jnp.dot(vals.astype(jnp.bfloat16), out_w[sl, :],
                            preferred_element_type=jnp.float32)
    return out + out_b


def _ffn_ln_body(h, w1, b1, w2, b2, gamma, beta):
    """relu(h@w1+b1)@w2+b2, + residual(h), + LayerNorm.  h is f32; weights
    are bf16 values; accumulation/LN in f32."""
    z = jnp.dot(h.astype(jnp.bfloat16), w1,
                preferred_element_type=jnp.float32) + b1
    z = jnp.maximum(z, 0.0)
    y = jnp.dot(z.astype(jnp.bfloat16), w2,
                preferred_element_type=jnp.float32) + b2
    return _layernorm(y + h, gamma, beta)


# ------------------------- fused encoder layer ------------------------------

def encoder_layer_block(x, mask, p, num_heads):
    """One pallas_call per encoder layer, grid=(B,).  Computes
    LN(attn(x)+x) then LN(ffn(.)+.) entirely in VMEM."""
    B, S, D = x.shape
    scale = 1.0 / math.sqrt(D // num_heads)

    def kernel(x_ref, m_ref, qkv_w, qkv_b, out_w, out_b, g1, bt1,
               w1, b1, w2, b2, g2, bt2, o_ref):
        xb = x_ref[...]                                        # (S, D) bf16
        x32 = xb.astype(jnp.float32)
        qkv = jnp.dot(xb, qkv_w[...],
                      preferred_element_type=jnp.float32) + qkv_b[...]
        attn = _attn_body(qkv[:, :D], qkv[:, D:2 * D], qkv[:, 2 * D:],
                          m_ref[...], out_w[...], out_b[...], num_heads, scale)
        h1 = _layernorm(attn + x32, g1[...], bt1[...])
        out = _ffn_ln_body(h1, w1[...], b1[...], w2[...], b2[...],
                           g2[...], bt2[...])
        o_ref[...] = out.astype(o_ref.dtype)

    act = pl.BlockSpec((None, S, D), lambda b: (b, 0, 0))
    msk = pl.BlockSpec((None, S, S), lambda b: (b, 0, 0))
    a, f = p["attn"], p["ffn"]
    args = [x, mask,
            a["qkv_w"], a["qkv_b"], a["out_w"], a["out_b"],
            p["norm1_g"], p["norm1_b"],
            f["w1"], f["b1"], f["w2"], f["b2"],
            p["norm2_g"], p["norm2_b"]]
    in_specs = [act, msk] + [_rep(t) for t in args[2:]]

    return pl.pallas_call(
        kernel,
        out_shape=jax.ShapeDtypeStruct((B, S, D), jnp.bfloat16),
        grid=(B,),
        in_specs=in_specs,
        out_specs=act,
        compiler_params=pltpu.CompilerParams(
            dimension_semantics=("parallel",),
            vmem_limit_bytes=_VMEM_LIMIT),
    )(*args)


# ------------------------- fused decoder layer ------------------------------

def decoder_layer_block(x_enc, y, self_mask, cross_mask, p, num_heads):
    """One pallas_call per decoder layer, grid=(B,).  Matches the reference:
    self-attention applied TWICE with the same weights, then +res/LN, then
    cross-attention (K/V from encoder, Q from decoder) +res/LN, then FFN
    +res/LN.  Both self-attention passes run in the same kernel so the
    intermediate never hits HBM and the QKV/out weights stay resident."""
    B, S, D = y.shape
    scale = 1.0 / math.sqrt(D // num_heads)

    def kernel(xe_ref, y_ref, sm_ref, cm_ref,
               sa_qkv_w, sa_qkv_b, sa_out_w, sa_out_b, g1, bt1,
               ca_kv_w, ca_kv_b, ca_q_w, ca_q_b, ca_out_w, ca_out_b, g2, bt2,
               w1, b1, w2, b2, g3, bt3, o_ref):
        yb = y_ref[...]                                        # (S, D) bf16
        y0 = yb.astype(jnp.float32)
        sm = sm_ref[...]
        # --- self-attention applied twice (reference semantics), fused ---
        cur = yb
        for _ in range(2):
            qkv = jnp.dot(cur.astype(jnp.bfloat16), sa_qkv_w[...],
                          preferred_element_type=jnp.float32) + sa_qkv_b[...]
            cur = _attn_body(qkv[:, :D], qkv[:, D:2 * D], qkv[:, 2 * D:], sm,
                             sa_out_w[...], sa_out_b[...], num_heads, scale)
        h1 = _layernorm(cur + y0, g1[...], bt1[...])
        # --- cross attention: K/V from encoder output, Q from decoder state ---
        xe = xe_ref[...]
        kv = jnp.dot(xe, ca_kv_w[...],
                     preferred_element_type=jnp.float32) + ca_kv_b[...]
        q = jnp.dot(h1.astype(jnp.bfloat16), ca_q_w[...],
                    preferred_element_type=jnp.float32) + ca_q_b[...]
        cr = _attn_body(q, kv[:, :D], kv[:, D:], cm_ref[...],
                        ca_out_w[...], ca_out_b[...], num_heads, scale)
        h2 = _layernorm(cr + h1, g2[...], bt2[...])
        out = _ffn_ln_body(h2, w1[...], b1[...], w2[...], b2[...],
                           g3[...], bt3[...])
        o_ref[...] = out.astype(o_ref.dtype)

    act = pl.BlockSpec((None, S, D), lambda b: (b, 0, 0))
    msk = pl.BlockSpec((None, S, S), lambda b: (b, 0, 0))
    sa, ca, f = p["self_attn"], p["cross_attn"], p["ffn"]
    args = [x_enc, y, self_mask, cross_mask,
            sa["qkv_w"], sa["qkv_b"], sa["out_w"], sa["out_b"],
            p["norm1_g"], p["norm1_b"],
            ca["kv_w"], ca["kv_b"], ca["q_w"], ca["q_b"],
            ca["out_w"], ca["out_b"],
            p["norm2_g"], p["norm2_b"],
            f["w1"], f["b1"], f["w2"], f["b2"],
            p["norm3_g"], p["norm3_b"]]
    in_specs = [act, act, msk, msk] + [_rep(t) for t in args[4:]]

    return pl.pallas_call(
        kernel,
        out_shape=jax.ShapeDtypeStruct((B, S, D), jnp.bfloat16),
        grid=(B,),
        in_specs=in_specs,
        out_specs=act,
        compiler_params=pltpu.CompilerParams(
            dimension_semantics=("parallel",),
            vmem_limit_bytes=_VMEM_LIMIT),
    )(*args)


# --------------------------- generic tiled linear ---------------------------

def pallas_linear(x, w, b, tm=256, tn=256, tk=512):
    """y = x @ w + b with w already (K, N).  bf16 tiles, f32 VMEM accumulator,
    reduction axis last, lane-dense 128-padded output sliced off outside."""
    M, K = x.shape
    N = w.shape[1]
    x = x.astype(jnp.bfloat16)
    w = w.astype(jnp.bfloat16)
    tm = min(tm, _round_up(M, 8))
    tn = min(tn, _round_up(N, 128))
    tk = min(tk, _round_up(K, 128))
    Mp, Np, Kp = _round_up(M, tm), _round_up(N, tn), _round_up(K, tk)

    xp = x if (Mp == M and Kp == K) else jnp.pad(x, ((0, Mp - M), (0, Kp - K)))
    wp = w if (Kp == K and Np == N) else jnp.pad(w, ((0, Kp - K), (0, Np - N)))
    bp = b if Np == N else jnp.pad(b, ((0, 0), (0, Np - N)))

    def kernel(x_ref, w_ref, b_ref, o_ref, acc_ref):
        @pl.when(pl.program_id(2) == 0)
        def _():
            acc_ref[...] = jnp.zeros_like(acc_ref)

        acc_ref[...] += jnp.dot(x_ref[...], w_ref[...],
                                preferred_element_type=jnp.float32)

        @pl.when(pl.program_id(2) == pl.num_programs(2) - 1)
        def _():
            o_ref[...] = (acc_ref[...] + b_ref[...]).astype(o_ref.dtype)

    out = pl.pallas_call(
        kernel,
        out_shape=jax.ShapeDtypeStruct((Mp, Np), jnp.float32),
        grid=(Mp // tm, Np // tn, Kp // tk),
        in_specs=[
            pl.BlockSpec((tm, tk), lambda i, j, k: (i, k)),
            pl.BlockSpec((tk, tn), lambda i, j, k: (k, j)),
            pl.BlockSpec((1, tn), lambda i, j, k: (0, j)),
        ],
        out_specs=pl.BlockSpec((tm, tn), lambda i, j, k: (i, j)),
        scratch_shapes=[pltpu.VMEM((tm, tn), jnp.float32)],
        compiler_params=pltpu.CompilerParams(
            dimension_semantics=("parallel", "parallel", "arbitrary"),
            vmem_limit_bytes=_VMEM_LIMIT),
    )(xp, wp, bp)
    return out[:M, :N]


# ------------------------------- model glue ---------------------------------

def positional_encoding(d_model, max_len):
    even_i = jnp.arange(0, d_model, 2, dtype=jnp.float32)
    denom = jnp.power(10000.0, even_i / d_model)
    pos = jnp.arange(max_len, dtype=jnp.float32).reshape(max_len, 1)
    even_pe = jnp.sin(pos / denom)
    odd_pe = jnp.cos(pos / denom)
    stacked = jnp.stack([even_pe, odd_pe], axis=2)
    return stacked.reshape(max_len, d_model)


def sentence_embedding(tokens, emb_table, pe):
    # TODO(synk): embedding gather stays in plain JAX (data-dependent gather);
    # dropout on (emb + pe) is identity (eval mode).
    x = jnp.take(emb_table, tokens, axis=0)          # (B, S, D) f32
    return x + pe[None, :, :]


def batch_tokenize(batch, vocab, max_len, start_token, end_token, START, END, PAD):
    # String tokenization has no TPU equivalent; done on host (matches reference).
    out = []
    for sent in batch:
        idx = [vocab[t] for t in list(sent)]
        if start_token:
            idx.insert(0, vocab[START])
        if end_token:
            idx.append(vocab[END])
        while len(idx) < max_len:
            idx.append(vocab[PAD])
        idx = idx[:max_len]
        out.append(idx)
    return jnp.array(out, dtype=jnp.int32)


def init_params(key, d_model, ffn_hidden, num_layers, enc_vocab_size,
                dec_vocab_size, obj_size):
    keys = iter(jax.random.split(key, 512))

    def lin(in_d, out_d):
        # Weights stored pre-transposed (in, out) and cast to bf16 for HBM.
        k1, k2 = next(keys), next(keys)
        bound = 1.0 / math.sqrt(in_d)
        w = jax.random.uniform(k1, (in_d, out_d), jnp.float32, -bound, bound)
        b = jax.random.uniform(k2, (1, out_d), jnp.float32, -bound, bound)
        return w.astype(jnp.bfloat16), b

    def mha():
        qkv_w, qkv_b = lin(d_model, 3 * d_model)
        out_w, out_b = lin(d_model, d_model)
        return {"qkv_w": qkv_w, "qkv_b": qkv_b, "out_w": out_w, "out_b": out_b}

    def mhca():
        kv_w, kv_b = lin(d_model, 2 * d_model)
        q_w, q_b = lin(d_model, d_model)
        out_w, out_b = lin(d_model, d_model)
        return {"kv_w": kv_w, "kv_b": kv_b, "q_w": q_w, "q_b": q_b,
                "out_w": out_w, "out_b": out_b}

    def ffn():
        w1, b1 = lin(d_model, ffn_hidden)
        w2, b2 = lin(ffn_hidden, d_model)
        return {"w1": w1, "b1": b1, "w2": w2, "b2": b2}

    def ln():
        return (jnp.ones((1, d_model), jnp.float32),
                jnp.zeros((1, d_model), jnp.float32))

    enc_layers = []
    for _ in range(num_layers):
        g1, b1 = ln(); g2, b2 = ln()
        enc_layers.append({"attn": mha(), "norm1_g": g1, "norm1_b": b1,
                           "ffn": ffn(), "norm2_g": g2, "norm2_b": b2})

    dec_layers = []
    for _ in range(num_layers):
        g1, b1 = ln(); g2, b2 = ln(); g3, b3 = ln()
        dec_layers.append({"self_attn": mha(), "norm1_g": g1, "norm1_b": b1,
                           "cross_attn": mhca(), "norm2_g": g2, "norm2_b": b2,
                           "ffn": ffn(), "norm3_g": g3, "norm3_b": b3})

    enc_emb = 0.02 * jax.random.normal(next(keys), (enc_vocab_size, d_model), jnp.float32)
    dec_emb = 0.02 * jax.random.normal(next(keys), (dec_vocab_size, d_model), jnp.float32)
    final_w, final_b = lin(d_model, obj_size)
    return {"enc_emb": enc_emb, "dec_emb": dec_emb,
            "enc_layers": enc_layers, "dec_layers": dec_layers,
            "final_w": final_w, "final_b": final_b}


def transformer_forward(params, x_tokens, y_tokens, enc_mask, dec_self_mask,
                        dec_cross_mask, d_model, num_heads, max_len):
    pe = positional_encoding(d_model, max_len)
    # Encoder (bf16 activations between fused layer blocks)
    x = sentence_embedding(x_tokens, params["enc_emb"], pe).astype(jnp.bfloat16)
    for lp in params["enc_layers"]:
        x = encoder_layer_block(x, enc_mask, lp, num_heads)
    # Decoder
    y = sentence_embedding(y_tokens, params["dec_emb"], pe).astype(jnp.bfloat16)
    for lp in params["dec_layers"]:
        y = decoder_layer_block(x, y, dec_self_mask, dec_cross_mask, lp, num_heads)
    # Final projection (tiled, lane-dense padded output)
    B, S, D = y.shape
    out = pallas_linear(y.reshape(B * S, D), params["final_w"], params["final_b"])
    return out.reshape(B, S, -1)


# ----------------------------------- main -----------------------------------

if __name__ == "__main__":
    d_model, ffn_hidden, num_heads, num_layers = 32, 64, 4, 1
    max_seq, batch = 8, 2

    START, END, PAD = "<S>", "<E>", "<P>"
    time_to_index = {START: 0, END: 1, PAD: 2}
    for i, c in enumerate("0123456789:"):
        time_to_index[c] = 3 + i
    obj_to_index = {START: 0, END: 1, PAD: 2}
    for i, c in enumerate("abcdefghij"):
        obj_to_index[c] = 3 + i
    obj_size = len(obj_to_index)

    x_batch = ["12:30", "09:45"]     # encoder inputs (time vocab)
    y_batch = ["abcde", "fghij"]     # decoder inputs (object vocab)

    x_tokens = batch_tokenize(x_batch, time_to_index, max_seq, False, False,
                              START, END, PAD)
    y_tokens = batch_tokenize(y_batch, obj_to_index, max_seq, True, True,
                              START, END, PAD)

    NEG = -1e9
    causal = jnp.where(jnp.triu(jnp.ones((max_seq, max_seq), jnp.float32), k=1) > 0,
                       NEG, 0.0)
    enc_mask = jnp.zeros((batch, max_seq, max_seq), jnp.float32)
    dec_self_mask = jnp.broadcast_to(causal, (batch, max_seq, max_seq)).astype(jnp.float32)
    dec_cross_mask = jnp.zeros((batch, max_seq, max_seq), jnp.float32)

    params = init_params(jax.random.PRNGKey(0), d_model, ffn_hidden, num_layers,
                         len(time_to_index), len(obj_to_index), obj_size)

    fwd = jax.jit(transformer_forward, static_argnums=(6, 7, 8))
    out = fwd(params, x_tokens, y_tokens, enc_mask, dec_self_mask,
              dec_cross_mask, d_model, num_heads, max_seq)
    out = jax.block_until_ready(out)
    assert out.shape == (batch, max_seq, obj_size), out.shape
    assert bool(jnp.all(jnp.isfinite(out)))
    print("KERNEL_OK")
</pallas_src>

<mosaic_0001>
module attributes {stable_mosaic.version = 11 : i64} {
  func.func @kernel(%arg0: i32, %arg1: memref<1x8x32xbf16, #tpu.memory_space<vmem>>, %arg2: memref<1x8x8xf32, #tpu.memory_space<vmem>>, %arg3: memref<32x96xbf16, #tpu.memory_space<vmem>>, %arg4: memref<1x96xf32, #tpu.memory_space<vmem>>, %arg5: memref<32x32xbf16, #tpu.memory_space<vmem>>, %arg6: memref<1x32xf32, #tpu.memory_space<vmem>>, %arg7: memref<1x32xf32, #tpu.memory_space<vmem>>, %arg8: memref<1x32xf32, #tpu.memory_space<vmem>>, %arg9: memref<32x64xbf16, #tpu.memory_space<vmem>>, %arg10: memref<1x64xf32, #tpu.memory_space<vmem>>, %arg11: memref<64x32xbf16, #tpu.memory_space<vmem>>, %arg12: memref<1x32xf32, #tpu.memory_space<vmem>>, %arg13: memref<1x32xf32, #tpu.memory_space<vmem>>, %arg14: memref<1x32xf32, #tpu.memory_space<vmem>>, %arg15: memref<1x8x32xbf16, #tpu.memory_space<vmem>>) attributes {dimension_semantics = [#tpu.dimension_semantics<parallel>], iteration_bounds = array<i64: 2>, scalar_prefetch = 0 : i64, scratch_operands = 0 : i64, tpu.core_type = #tpu.core_type<tc>, window_params = [{transform_indices = @transform_0, window_bounds = array<i64: 1, 8, 32>}, {transform_indices = @transform_1, window_bounds = array<i64: 1, 8, 8>}, {pipeline_mode = #tpu.pipeline_mode<synchronous>, transform_indices = @transform_2, window_bounds = array<i64: 32, 96>}, {pipeline_mode = #tpu.pipeline_mode<synchronous>, transform_indices = @transform_3, window_bounds = array<i64: 1, 96>}, {pipeline_mode = #tpu.pipeline_mode<synchronous>, transform_indices = @transform_4, window_bounds = array<i64: 32, 32>}, {pipeline_mode = #tpu.pipeline_mode<synchronous>, transform_indices = @transform_5, window_bounds = array<i64: 1, 32>}, {pipeline_mode = #tpu.pipeline_mode<synchronous>, transform_indices = @transform_6, window_bounds = array<i64: 1, 32>}, {pipeline_mode = #tpu.pipeline_mode<synchronous>, transform_indices = @transform_7, window_bounds = array<i64: 1, 32>}, {pipeline_mode = #tpu.pipeline_mode<synchronous>, transform_indices = @transform_8, window_bounds = array<i64: 32, 64>}, {pipeline_mode = #tpu.pipeline_mode<synchronous>, transform_indices = @transform_9, window_bounds = array<i64: 1, 64>}, {pipeline_mode = #tpu.pipeline_mode<synchronous>, transform_indices = @transform_10, window_bounds = array<i64: 64, 32>}, {pipeline_mode = #tpu.pipeline_mode<synchronous>, transform_indices = @transform_11, window_bounds = array<i64: 1, 32>}, {pipeline_mode = #tpu.pipeline_mode<synchronous>, transform_indices = @transform_12, window_bounds = array<i64: 1, 32>}, {pipeline_mode = #tpu.pipeline_mode<synchronous>, transform_indices = @transform_13, window_bounds = array<i64: 1, 32>}, {transform_indices = @transform_14, window_bounds = array<i64: 1, 8, 32>}]} {
    %c0 = arith.constant 0 : index
    %c0_0 = arith.constant 0 : index
    %c0_1 = arith.constant 0 : index
    %0 = vector.load %arg1[%c0, %c0_0, %c0_1] : memref<1x8x32xbf16, #tpu.memory_space<vmem>>, vector<1x8x32xbf16>
    %1 = vector.shape_cast %0 : vector<1x8x32xbf16> to vector<8x32xbf16>
    %2 = arith.extf %1 : vector<8x32xbf16> to vector<8x32xf32>
    %c0_2 = arith.constant 0 : index
    %c0_3 = arith.constant 0 : index
    %3 = vector.load %arg3[%c0_2, %c0_3] : memref<32x96xbf16, #tpu.memory_space<vmem>>, vector<32x96xbf16>
    %cst = arith.constant dense<0.000000e+00> : vector<8x96xf32>
    %4 = tpu.matmul %1, %3, %cst {dimension_numbers = #tpu.dot_dimension_numbers<[1], [0], [0], [1], [0, 0, 1, 1], [], []>} : vector<8x32xbf16>, vector<32x96xbf16>, vector<8x96xf32> -> vector<8x96xf32>
    %c0_4 = arith.constant 0 : index
    %c0_5 = arith.constant 0 : index
    %5 = vector.load %arg4[%c0_4, %c0_5] : memref<1x96xf32, #tpu.memory_space<vmem>>, vector<1x96xf32>
    %6 = vector.broadcast %5 : vector<1x96xf32> to vector<8x96xf32>
    %7 = arith.addf %4, %6 : vector<8x96xf32>
    %8 = vector.extract_strided_slice %7 {offsets = [0, 0], sizes = [8, 32], strides = [1, 1]} : vector<8x96xf32> to vector<8x32xf32>
    %9 = vector.extract_strided_slice %7 {offsets = [0, 32], sizes = [8, 32], strides = [1, 1]} : vector<8x96xf32> to vector<8x32xf32>
    %10 = vector.extract_strided_slice %7 {offsets = [0, 64], sizes = [8, 32], strides = [1, 1]} : vector<8x96xf32> to vector<8x32xf32>
    %c0_6 = arith.constant 0 : index
    %c0_7 = arith.constant 0 : index
    %c0_8 = arith.constant 0 : index
    %11 = vector.load %arg2[%c0_6, %c0_7, %c0_8] : memref<1x8x8xf32, #tpu.memory_space<vmem>>, vector<1x8x8xf32>
    %12 = vector.shape_cast %11 : vector<1x8x8xf32> to vector<8x8xf32>
    %c0_9 = arith.constant 0 : index
    %c0_10 = arith.constant 0 : index
    %13 = vector.load %arg5[%c0_9, %c0_10] : memref<32x32xbf16, #tpu.memory_space<vmem>>, vector<32x32xbf16>
    %c0_11 = arith.constant 0 : index
    %c0_12 = arith.constant 0 : index
    %14 = vector.load %arg6[%c0_11, %c0_12] : memref<1x32xf32, #tpu.memory_space<vmem>>, vector<1x32xf32>
    %cst_13 = arith.constant 0.000000e+00 : f32
    %15 = vector.broadcast %cst_13 : f32 to vector<8x32xf32>
    %16 = vector.extract_strided_slice %8 {offsets = [0, 0], sizes = [8, 8], strides = [1, 1]} : vector<8x32xf32> to vector<8x8xf32>
    %17 = arith.truncf %16 : vector<8x8xf32> to vector<8x8xbf16>
    %18 = vector.extract_strided_slice %9 {offsets = [0, 0], sizes = [8, 8], strides = [1, 1]} : vector<8x32xf32> to vector<8x8xf32>
    %19 = arith.truncf %18 : vector<8x8xf32> to vector<8x8xbf16>
    %cst_14 = arith.constant dense<0.000000e+00> : vector<8x8xf32>
    %20 = tpu.matmul %17, %19, %cst_14 {dimension_numbers = #tpu.dot_dimension_numbers<[1], [1], [0], [0], [0, 0, 1, 0], [], []>} : vector<8x8xbf16>, vector<8x8xbf16>, vector<8x8xf32> -> vector<8x8xf32>
    %cst_15 = arith.constant 0.353553385 : f32
    %21 = vector.broadcast %cst_15 : f32 to vector<8x8xf32>
    %22 = arith.mulf %20, %21 : vector<8x8xf32>
    %23 = arith.addf %22, %12 : vector<8x8xf32>
    %cst_16 = arith.constant dense<0xFF800000> : vector<8xf32>
    %24 = vector.multi_reduction <maximumf>, %23, %cst_16 [1] : vector<8x8xf32> to vector<8xf32>
    %25 = vector.shape_cast %24 : vector<8xf32> to vector<8x1xf32>
    %26 = vector.broadcast %25 : vector<8x1xf32> to vector<8x8xf32>
    %27 = arith.subf %23, %26 : vector<8x8xf32>
    %28 = math.exp %27 : vector<8x8xf32>
    %cst_17 = arith.constant dense<0.000000e+00> : vector<8xf32>
    %29 = vector.multi_reduction <add>, %28, %cst_17 [1] : vector<8x8xf32> to vector<8xf32>
    %30 = vector.shape_cast %29 : vector<8xf32> to vector<8x1xf32>
    %31 = tpu.reciprocal %30 {approx = true} : vector<8x1xf32> -> vector<8x1xf32>
    %32 = vector.broadcast %31 : vector<8x1xf32> to vector<8x8xf32>
    %33 = arith.mulf %28, %32 : vector<8x8xf32>
    %34 = arith.truncf %33 : vector<8x8xf32> to vector<8x8xbf16>
    %35 = vector.extract_strided_slice %10 {offsets = [0, 0], sizes = [8, 8], strides = [1, 1]} : vector<8x32xf32> to vector<8x8xf32>
    %36 = arith.truncf %35 : vector<8x8xf32> to vector<8x8xbf16>
    %cst_18 = arith.constant dense<0.000000e+00> : vector<8x8xf32>
    %37 = tpu.matmul %34, %36, %cst_18 {dimension_numbers = #tpu.dot_dimension_numbers<[1], [0], [0], [1], [0, 0, 1, 1], [], []>} : vector<8x8xbf16>, vector<8x8xbf16>, vector<8x8xf32> -> vector<8x8xf32>
    %38 = arith.truncf %37 : vector<8x8xf32> to vector<8x8xbf16>
    %39 = vector.extract_strided_slice %13 {offsets = [0, 0], sizes = [8, 32], strides = [1, 1]} : vector<32x32xbf16> to vector<8x32xbf16>
    %cst_19 = arith.constant dense<0.000000e+00> : vector<8x32xf32>
    %40 = tpu.matmul %38, %39, %cst_19 {dimension_numbers = #tpu.dot_dimension_numbers<[1], [0], [0], [1], [0, 0, 1, 1], [], []>} : vector<8x8xbf16>, vector<8x32xbf16>, vector<8x32xf32> -> vector<8x32xf32>
    %41 = arith.addf %15, %40 : vector<8x32xf32>
    %42 = vector.extract_strided_slice %8 {offsets = [0, 8], sizes = [8, 8], strides = [1, 1]} : vector<8x32xf32> to vector<8x8xf32>
    %43 = arith.truncf %42 : vector<8x8xf32> to vector<8x8xbf16>
    %44 = vector.extract_strided_slice %9 {offsets = [0, 8], sizes = [8, 8], strides = [1, 1]} : vector<8x32xf32> to vector<8x8xf32>
    %45 = arith.truncf %44 : vector<8x8xf32> to vector<8x8xbf16>
    %cst_20 = arith.constant dense<0.000000e+00> : vector<8x8xf32>
    %46 = tpu.matmul %43, %45, %cst_20 {dimension_numbers = #tpu.dot_dimension_numbers<[1], [1], [0], [0], [0, 0, 1, 0], [], []>} : vector<8x8xbf16>, vector<8x8xbf16>, vector<8x8xf32> -> vector<8x8xf32>
    %cst_21 = arith.constant 0.353553385 : f32
    %47 = vector.broadcast %cst_21 : f32 to vector<8x8xf32>
    %48 = arith.mulf %46, %47 : vector<8x8xf32>
    %49 = arith.addf %48, %12 : vector<8x8xf32>
    %cst_22 = arith.constant dense<0xFF800000> : vector<8xf32>
    %50 = vector.multi_reduction <maximumf>, %49, %cst_22 [1] : vector<8x8xf32> to vector<8xf32>
    %51 = vector.shape_cast %50 : vector<8xf32> to vector<8x1xf32>
    %52 = vector.broadcast %51 : vector<8x1xf32> to vector<8x8xf32>
    %53 = arith.subf %49, %52 : vector<8x8xf32>
    %54 = math.exp %53 : vector<8x8xf32>
    %cst_23 = arith.constant dense<0.000000e+00> : vector<8xf32>
    %55 = vector.multi_reduction <add>, %54, %cst_23 [1] : vector<8x8xf32> to vector<8xf32>
    %56 = vector.shape_cast %55 : vector<8xf32> to vector<8x1xf32>
    %57 = tpu.reciprocal %56 {approx = true} : vector<8x1xf32> -> vector<8x1xf32>
    %58 = vector.broadcast %57 : vector<8x1xf32> to vector<8x8xf32>
    %59 = arith.mulf %54, %58 : vector<8x8xf32>
    %60 = arith.truncf %59 : vector<8x8xf32> to vector<8x8xbf16>
    %61 = vector.extract_strided_slice %10 {offsets = [0, 8], sizes = [8, 8], strides = [1, 1]} : vector<8x32xf32> to vector<8x8xf32>
    %62 = arith.truncf %61 : vector<8x8xf32> to vector<8x8xbf16>
    %cst_24 = arith.constant dense<0.000000e+00> : vector<8x8xf32>
    %63 = tpu.matmul %60, %62, %cst_24 {dimension_numbers = #tpu.dot_dimension_numbers<[1], [0], [0], [1], [0, 0, 1, 1], [], []>} : vector<8x8xbf16>, vector<8x8xbf16>, vector<8x8xf32> -> vector<8x8xf32>
    %64 = arith.truncf %63 : vector<8x8xf32> to vector<8x8xbf16>
    %65 = vector.extract_strided_slice %13 {offsets = [8, 0], sizes = [8, 32], strides = [1, 1]} : vector<32x32xbf16> to vector<8x32xbf16>
    %cst_25 = arith.constant dense<0.000000e+00> : vector<8x32xf32>
    %66 = tpu.matmul %64, %65, %cst_25 {dimension_numbers = #tpu.dot_dimension_numbers<[1], [0], [0], [1], [0, 0, 1, 1], [], []>} : vector<8x8xbf16>, vector<8x32xbf16>, vector<8x32xf32> -> vector<8x32xf32>
    %67 = arith.addf %41, %66 : vector<8x32xf32>
    %68 = vector.extract_strided_slice %8 {offsets = [0, 16], sizes = [8, 8], strides = [1, 1]} : vector<8x32xf32> to vector<8x8xf32>
    %69 = arith.truncf %68 : vector<8x8xf32> to vector<8x8xbf16>
    %70 = vector.extract_strided_slice %9 {offsets = [0, 16], sizes = [8, 8], strides = [1, 1]} : vector<8x32xf32> to vector<8x8xf32>
    %71 = arith.truncf %70 : vector<8x8xf32> to vector<8x8xbf16>
    %cst_26 = arith.constant dense<0.000000e+00> : vector<8x8xf32>
    %72 = tpu.matmul %69, %71, %cst_26 {dimension_numbers = #tpu.dot_dimension_numbers<[1], [1], [0], [0], [0, 0, 1, 0], [], []>} : vector<8x8xbf16>, vector<8x8xbf16>, vector<8x8xf32> -> vector<8x8xf32>
    %cst_27 = arith.constant 0.353553385 : f32
    %73 = vector.broadcast %cst_27 : f32 to vector<8x8xf32>
    %74 = arith.mulf %72, %73 : vector<8x8xf32>
    %75 = arith.addf %74, %12 : vector<8x8xf32>
    %cst_28 = arith.constant dense<0xFF800000> : vector<8xf32>
    %76 = vector.multi_reduction <maximumf>, %75, %cst_28 [1] : vector<8x8xf32> to vector<8xf32>
    %77 = vector.shape_cast %76 : vector<8xf32> to vector<8x1xf32>
    %78 = vector.broadcast %77 : vector<8x1xf32> to vector<8x8xf32>
    %79 = arith.subf %75, %78 : vector<8x8xf32>
    %80 = math.exp %79 : vector<8x8xf32>
    %cst_29 = arith.constant dense<0.000000e+00> : vector<8xf32>
    %81 = vector.multi_reduction <add>, %80, %cst_29 [1] : vector<8x8xf32> to vector<8xf32>
    %82 = vector.shape_cast %81 : vector<8xf32> to vector<8x1xf32>
    %83 = tpu.reciprocal %82 {approx = true} : vector<8x1xf32> -> vector<8x1xf32>
    %84 = vector.broadcast %83 : vector<8x1xf32> to vector<8x8xf32>
    %85 = arith.mulf %80, %84 : vector<8x8xf32>
    %86 = arith.truncf %85 : vector<8x8xf32> to vector<8x8xbf16>
    %87 = vector.extract_strided_slice %10 {offsets = [0, 16], sizes = [8, 8], strides = [1, 1]} : vector<8x32xf32> to vector<8x8xf32>
    %88 = arith.truncf %87 : vector<8x8xf32> to vector<8x8xbf16>
    %cst_30 = arith.constant dense<0.000000e+00> : vector<8x8xf32>
    %89 = tpu.matmul %86, %88, %cst_30 {dimension_numbers = #tpu.dot_dimension_numbers<[1], [0], [0], [1], [0, 0, 1, 1], [], []>} : vector<8x8xbf16>, vector<8x8xbf16>, vector<8x8xf32> -> vector<8x8xf32>
    %90 = arith.truncf %89 : vector<8x8xf32> to vector<8x8xbf16>
    %91 = vector.extract_strided_slice %13 {offsets = [16, 0], sizes = [8, 32], strides = [1, 1]} : vector<32x32xbf16> to vector<8x32xbf16>
    %cst_31 = arith.constant dense<0.000000e+00> : vector<8x32xf32>
    %92 = tpu.matmul %90, %91, %cst_31 {dimension_numbers = #tpu.dot_dimension_numbers<[1], [0], [0], [1], [0, 0, 1, 1], [], []>} : vector<8x8xbf16>, vector<8x32xbf16>, vector<8x32xf32> -> vector<8x32xf32>
    %93 = arith.addf %67, %92 : vector<8x32xf32>
    %94 = vector.extract_strided_slice %8 {offsets = [0, 24], sizes = [8, 8], strides = [1, 1]} : vector<8x32xf32> to vector<8x8xf32>
    %95 = arith.truncf %94 : vector<8x8xf32> to vector<8x8xbf16>
    %96 = vector.extract_strided_slice %9 {offsets = [0, 24], sizes = [8, 8], strides = [1, 1]} : vector<8x32xf32> to vector<8x8xf32>
    %97 = arith.truncf %96 : vector<8x8xf32> to vector<8x8xbf16>
    %cst_32 = arith.constant dense<0.000000e+00> : vector<8x8xf32>
    %98 = tpu.matmul %95, %97, %cst_32 {dimension_numbers = #tpu.dot_dimension_numbers<[1], [1], [0], [0], [0, 0, 1, 0], [], []>} : vector<8x8xbf16>, vector<8x8xbf16>, vector<8x8xf32> -> vector<8x8xf32>
    %cst_33 = arith.constant 0.353553385 : f32
    %99 = vector.broadcast %cst_33 : f32 to vector<8x8xf32>
    %100 = arith.mulf %98, %99 : vector<8x8xf32>
    %101 = arith.addf %100, %12 : vector<8x8xf32>
    %cst_34 = arith.constant dense<0xFF800000> : vector<8xf32>
    %102 = vector.multi_reduction <maximumf>, %101, %cst_34 [1] : vector<8x8xf32> to vector<8xf32>
    %103 = vector.shape_cast %102 : vector<8xf32> to vector<8x1xf32>
    %104 = vector.broadcast %103 : vector<8x1xf32> to vector<8x8xf32>
    %105 = arith.subf %101, %104 : vector<8x8xf32>
    %106 = math.exp %105 : vector<8x8xf32>
    %cst_35 = arith.constant dense<0.000000e+00> : vector<8xf32>
    %107 = vector.multi_reduction <add>, %106, %cst_35 [1] : vector<8x8xf32> to vector<8xf32>
    %108 = vector.shape_cast %107 : vector<8xf32> to vector<8x1xf32>
    %109 = tpu.reciprocal %108 {approx = true} : vector<8x1xf32> -> vector<8x1xf32>
    %110 = vector.broadcast %109 : vector<8x1xf32> to vector<8x8xf32>
    %111 = arith.mulf %106, %110 : vector<8x8xf32>
    %112 = arith.truncf %111 : vector<8x8xf32> to vector<8x8xbf16>
    %113 = vector.extract_strided_slice %10 {offsets = [0, 24], sizes = [8, 8], strides = [1, 1]} : vector<8x32xf32> to vector<8x8xf32>
    %114 = arith.truncf %113 : vector<8x8xf32> to vector<8x8xbf16>
    %cst_36 = arith.constant dense<0.000000e+00> : vector<8x8xf32>
    %115 = tpu.matmul %112, %114, %cst_36 {dimension_numbers = #tpu.dot_dimension_numbers<[1], [0], [0], [1], [0, 0, 1, 1], [], []>} : vector<8x8xbf16>, vector<8x8xbf16>, vector<8x8xf32> -> vector<8x8xf32>
    %116 = arith.truncf %115 : vector<8x8xf32> to vector<8x8xbf16>
    %117 = vector.extract_strided_slice %13 {offsets = [24, 0], sizes = [8, 32], strides = [1, 1]} : vector<32x32xbf16> to vector<8x32xbf16>
    %cst_37 = arith.constant dense<0.000000e+00> : vector<8x32xf32>
    %118 = tpu.matmul %116, %117, %cst_37 {dimension_numbers = #tpu.dot_dimension_numbers<[1], [0], [0], [1], [0, 0, 1, 1], [], []>} : vector<8x8xbf16>, vector<8x32xbf16>, vector<8x32xf32> -> vector<8x32xf32>
    %119 = arith.addf %93, %118 : vector<8x32xf32>
    %120 = vector.broadcast %14 : vector<1x32xf32> to vector<8x32xf32>
    %121 = arith.addf %119, %120 : vector<8x32xf32>
    %122 = arith.addf %121, %2 : vector<8x32xf32>
    %c0_38 = arith.constant 0 : index
    %c0_39 = arith.constant 0 : index
    %123 = vector.load %arg7[%c0_38, %c0_39] : memref<1x32xf32, #tpu.memory_space<vmem>>, vector<1x32xf32>
    %c0_40 = arith.constant 0 : index
    %c0_41 = arith.constant 0 : index
    %124 = vector.load %arg8[%c0_40, %c0_41] : memref<1x32xf32, #tpu.memory_space<vmem>>, vector<1x32xf32>
    %cst_42 = arith.constant dense<0.000000e+00> : vector<8xf32>
    %125 = vector.multi_reduction <add>, %122, %cst_42 [1] : vector<8x32xf32> to vector<8xf32>
    %126 = vector.shape_cast %125 : vector<8xf32> to vector<8x1xf32>
    %cst_43 = arith.constant 3.200000e+01 : f32
    %127 = vector.broadcast %cst_43 : f32 to vector<8x1xf32>
    %128 = arith.divf %126, %127 : vector<8x1xf32>
    %129 = vector.broadcast %128 : vector<8x1xf32> to vector<8x32xf32>
    %130 = arith.subf %122, %129 : vector<8x32xf32>
    %131 = arith.mulf %130, %130 : vector<8x32xf32>
    %cst_44 = arith.constant dense<0.000000e+00> : vector<8xf32>
    %132 = vector.multi_reduction <add>, %131, %cst_44 [1] : vector<8x32xf32> to vector<8xf32>
    %133 = vector.shape_cast %132 : vector<8xf32> to vector<8x1xf32>
    %cst_45 = arith.constant 3.200000e+01 : f32
    %134 = vector.broadcast %cst_45 : f32 to vector<8x1xf32>
    %135 = arith.divf %133, %134 : vector<8x1xf32>
    %136 = vector.broadcast %128 : vector<8x1xf32> to vector<8x32xf32>
    %137 = arith.subf %122, %136 : vector<8x32xf32>
    %cst_46 = arith.constant 9.99999974E-6 : f32
    %138 = vector.broadcast %cst_46 : f32 to vector<8x1xf32>
    %139 = arith.addf %135, %138 : vector<8x1xf32>
    %140 = math.rsqrt %139 : vector<8x1xf32>
    %141 = vector.broadcast %140 : vector<8x1xf32> to vector<8x32xf32>
    %142 = arith.mulf %137, %141 : vector<8x32xf32>
    %143 = vector.broadcast %123 : vector<1x32xf32> to vector<8x32xf32>
    %144 = arith.mulf %143, %142 : vector<8x32xf32>
    %145 = vector.broadcast %124 : vector<1x32xf32> to vector<8x32xf32>
    %146 = arith.addf %144, %145 : vector<8x32xf32>
    %c0_47 = arith.constant 0 : index
    %c0_48 = arith.constant 0 : index
    %147 = vector.load %arg9[%c0_47, %c0_48] : memref<32x64xbf16, #tpu.memory_space<vmem>>, vector<32x64xbf16>
    %c0_49 = arith.constant 0 : index
    %c0_50 = arith.constant 0 : index
    %148 = vector.load %arg10[%c0_49, %c0_50] : memref<1x64xf32, #tpu.memory_space<vmem>>, vector<1x64xf32>
    %c0_51 = arith.constant 0 : index
    %c0_52 = arith.constant 0 : index
    %149 = vector.load %arg11[%c0_51, %c0_52] : memref<64x32xbf16, #tpu.memory_space<vmem>>, vector<64x32xbf16>
    %c0_53 = arith.constant 0 : index
    %c0_54 = arith.constant 0 : index
    %150 = vector.load %arg12[%c0_53, %c0_54] : memref<1x32xf32, #tpu.memory_space<vmem>>, vector<1x32xf32>
    %c0_55 = arith.constant 0 : index
    %c0_56 = arith.constant 0 : index
    %151 = vector.load %arg13[%c0_55, %c0_56] : memref<1x32xf32, #tpu.memory_space<vmem>>, vector<1x32xf32>
    %c0_57 = arith.constant 0 : index
    %c0_58 = arith.constant 0 : index
    %152 = vector.load %arg14[%c0_57, %c0_58] : memref<1x32xf32, #tpu.memory_space<vmem>>, vector<1x32xf32>
    %153 = arith.truncf %146 : vector<8x32xf32> to vector<8x32xbf16>
    %cst_59 = arith.constant dense<0.000000e+00> : vector<8x64xf32>
    %154 = tpu.matmul %153, %147, %cst_59 {dimension_numbers = #tpu.dot_dimension_numbers<[1], [0], [0], [1], [0, 0, 1, 1], [], []>} : vector<8x32xbf16>, vector<32x64xbf16>, vector<8x64xf32> -> vector<8x64xf32>
    %155 = vector.broadcast %148 : vector<1x64xf32> to vector<8x64xf32>
    %156 = arith.addf %154, %155 : vector<8x64xf32>
    %cst_60 = arith.constant 0.000000e+00 : f32
    %157 = vector.broadcast %cst_60 : f32 to vector<8x64xf32>
    %158 = arith.maximumf %156, %157 : vector<8x64xf32>
    %159 = arith.truncf %158 : vector<8x64xf32> to vector<8x64xbf16>
    %cst_61 = arith.constant dense<0.000000e+00> : vector<8x32xf32>
    %160 = tpu.matmul %159, %149, %cst_61 {dimension_numbers = #tpu.dot_dimension_numbers<[1], [0], [0], [1], [0, 0, 1, 1], [], []>} : vector<8x64xbf16>, vector<64x32xbf16>, vector<8x32xf32> -> vector<8x32xf32>
    %161 = vector.broadcast %150 : vector<1x32xf32> to vector<8x32xf32>
    %162 = arith.addf %160, %161 : vector<8x32xf32>
    %163 = arith.addf %162, %146 : vector<8x32xf32>
    %cst_62 = arith.constant dense<0.000000e+00> : vector<8xf32>
    %164 = vector.multi_reduction <add>, %163, %cst_62 [1] : vector<8x32xf32> to vector<8xf32>
    %165 = vector.shape_cast %164 : vector<8xf32> to vector<8x1xf32>
    %cst_63 = arith.constant 3.200000e+01 : f32
    %166 = vector.broadcast %cst_63 : f32 to vector<8x1xf32>
    %167 = arith.divf %165, %166 : vector<8x1xf32>
    %168 = vector.broadcast %167 : vector<8x1xf32> to vector<8x32xf32>
    %169 = arith.subf %163, %168 : vector<8x32xf32>
    %170 = arith.mulf %169, %169 : vector<8x32xf32>
    %cst_64 = arith.constant dense<0.000000e+00> : vector<8xf32>
    %171 = vector.multi_reduction <add>, %170, %cst_64 [1] : vector<8x32xf32> to vector<8xf32>
    %172 = vector.shape_cast %171 : vector<8xf32> to vector<8x1xf32>
    %cst_65 = arith.constant 3.200000e+01 : f32
    %173 = vector.broadcast %cst_65 : f32 to vector<8x1xf32>
    %174 = arith.divf %172, %173 : vector<8x1xf32>
    %175 = vector.broadcast %167 : vector<8x1xf32> to vector<8x32xf32>
    %176 = arith.subf %163, %175 : vector<8x32xf32>
    %cst_66 = arith.constant 9.99999974E-6 : f32
    %177 = vector.broadcast %cst_66 : f32 to vector<8x1xf32>
    %178 = arith.addf %174, %177 : vector<8x1xf32>
    %179 = math.rsqrt %178 : vector<8x1xf32>
    %180 = vector.broadcast %179 : vector<8x1xf32> to vector<8x32xf32>
    %181 = arith.mulf %176, %180 : vector<8x32xf32>
    %182 = vector.broadcast %151 : vector<1x32xf32> to vector<8x32xf32>
    %183 = arith.mulf %182, %181 : vector<8x32xf32>
    %184 = vector.broadcast %152 : vector<1x32xf32> to vector<8x32xf32>
    %185 = arith.addf %183, %184 : vector<8x32xf32>
    %186 = arith.truncf %185 : vector<8x32xf32> to vector<8x32xbf16>
    %c0_67 = arith.constant 0 : index
    %c0_68 = arith.constant 0 : index
    %c0_69 = arith.constant 0 : index
    %187 = vector.load %arg15[%c0_67, %c0_68, %c0_69] : memref<1x8x32xbf16, #tpu.memory_space<vmem>>, vector<1x8x32xbf16>
    %188 = vector.shape_cast %187 : vector<1x8x32xbf16> to vector<8x32xbf16>
    %189 = vector.shape_cast %186 : vector<8x32xbf16> to vector<1x8x32xbf16>
    tpu.vector_store %arg15[%c0_67, %c0_68, %c0_69], %189 {strides = array<i32>} : memref<1x8x32xbf16, #tpu.memory_space<vmem>>, vector<1x8x32xbf16>,
    return
  }
  func.func @transform_0(%arg0: i32) -> (i32, i32, i32) {
    %c0_i32 = arith.constant 0 : i32
    %c0_i32_0 = arith.constant 0 : i32
    %c0_i32_1 = arith.constant 0 : i32
    return %arg0, %c0_i32, %c0_i32_0 : i32, i32, i32
  }
  func.func @transform_1(%arg0: i32) -> (i32, i32, i32) {
    %c0_i32 = arith.constant 0 : i32
    %c0_i32_0 = arith.constant 0 : i32
    %c0_i32_1 = arith.constant 0 : i32
    return %arg0, %c0_i32, %c0_i32_0 : i32, i32, i32
  }
  func.func @transform_2(%arg0: i32) -> (i32, i32) {
    %c0_i32 = arith.constant 0 : i32
    %c0_i32_0 = arith.constant 0 : i32
    %c0_i32_1 = arith.constant 0 : i32
    return %c0_i32, %c0_i32_0 : i32, i32
  }
  func.func @transform_3(%arg0: i32) -> (i32, i32) {
    %c0_i32 = arith.constant 0 : i32
    %c0_i32_0 = arith.constant 0 : i32
    %c0_i32_1 = arith.constant 0 : i32
    return %c0_i32, %c0_i32_0 : i32, i32
  }
  func.func @transform_4(%arg0: i32) -> (i32, i32) {
    %c0_i32 = arith.constant 0 : i32
    %c0_i32_0 = arith.constant 0 : i32
    %c0_i32_1 = arith.constant 0 : i32
    return %c0_i32, %c0_i32_0 : i32, i32
  }
  func.func @transform_5(%arg0: i32) -> (i32, i32) {
    %c0_i32 = arith.constant 0 : i32
    %c0_i32_0 = arith.constant 0 : i32
    %c0_i32_1 = arith.constant 0 : i32
    return %c0_i32, %c0_i32_0 : i32, i32
  }
  func.func @transform_6(%arg0: i32) -> (i32, i32) {
    %c0_i32 = arith.constant 0 : i32
    %c0_i32_0 = arith.constant 0 : i32
    %c0_i32_1 = arith.constant 0 : i32
    return %c0_i32, %c0_i32_0 : i32, i32
  }
  func.func @transform_7(%arg0: i32) -> (i32, i32) {
    %c0_i32 = arith.constant 0 : i32
    %c0_i32_0 = arith.constant 0 : i32
    %c0_i32_1 = arith.constant 0 : i32
    return %c0_i32, %c0_i32_0 : i32, i32
  }
  func.func @transform_8(%arg0: i32) -> (i32, i32) {
    %c0_i32 = arith.constant 0 : i32
    %c0_i32_0 = arith.constant 0 : i32
    %c0_i32_1 = arith.constant 0 : i32
    return %c0_i32, %c0_i32_0 : i32, i32
  }
  func.func @transform_9(%arg0: i32) -> (i32, i32) {
    %c0_i32 = arith.constant 0 : i32
    %c0_i32_0 = arith.constant 0 : i32
    %c0_i32_1 = arith.constant 0 : i32
    return %c0_i32, %c0_i32_0 : i32, i32
  }
  func.func @transform_10(%arg0: i32) -> (i32, i32) {
    %c0_i32 = arith.constant 0 : i32
    %c0_i32_0 = arith.constant 0 : i32
    %c0_i32_1 = arith.constant 0 : i32
    return %c0_i32, %c0_i32_0 : i32, i32
  }
  func.func @transform_11(%arg0: i32) -> (i32, i32) {
    %c0_i32 = arith.constant 0 : i32
    %c0_i32_0 = arith.constant 0 : i32
    %c0_i32_1 = arith.constant 0 : i32
    return %c0_i32, %c0_i32_0 : i32, i32
  }
  func.func @transform_12(%arg0: i32) -> (i32, i32) {
    %c0_i32 = arith.constant 0 : i32
    %c0_i32_0 = arith.constant 0 : i32
    %c0_i32_1 = arith.constant 0 : i32
    return %c0_i32, %c0_i32_0 : i32, i32
  }
  func.func @transform_13(%arg0: i32) -> (i32, i32) {
    %c0_i32 = arith.constant 0 : i32
    %c0_i32_0 = arith.constant 0 : i32
    %c0_i32_1 = arith.constant 0 : i32
    return %c0_i32, %c0_i32_0 : i32, i32
  }
  func.func @transform_14(%arg0: i32) -> (i32, i32, i32) {
    %c0_i32 = arith.constant 0 : i32
    %c0_i32_0 = arith.constant 0 : i32
    %c0_i32_1 = arith.constant 0 : i32
    return %arg0, %c0_i32, %c0_i32_0 : i32, i32, i32
  }
}

module attributes {stable_mosaic.version = 11 : i64} {
  func.func @kernel(%arg0: i32, %arg1: memref<1x8x32xbf16, #tpu.memory_space<vmem>>, %arg2: memref<1x8x32xbf16, #tpu.memory_space<vmem>>, %arg3: memref<1x8x8xf32, #tpu.memory_space<vmem>>, %arg4: memref<1x8x8xf32, #tpu.memory_space<vmem>>, %arg5: memref<32x96xbf16, #tpu.memory_space<vmem>>, %arg6: memref<1x96xf32, #tpu.memory_space<vmem>>, %arg7: memref<32x32xbf16, #tpu.memory_space<vmem>>, %arg8: memref<1x32xf32, #tpu.memory_space<vmem>>, %arg9: memref<1x32xf32, #tpu.memory_space<vmem>>, %arg10: memref<1x32xf32, #tpu.memory_space<vmem>>, %arg11: memref<32x64xbf16, #tpu.memory_space<vmem>>, %arg12: memref<1x64xf32, #tpu.memory_space<vmem>>, %arg13: memref<32x32xbf16, #tpu.memory_space<vmem>>, %arg14: memref<1x32xf32, #tpu.memory_space<vmem>>, %arg15: memref<32x32xbf16, #tpu.memory_space<vmem>>, %arg16: memref<1x32xf32, #tpu.memory_space<vmem>>, %arg17: memref<1x32xf32, #tpu.memory_space<vmem>>, %arg18: memref<1x32xf32, #tpu.memory_space<vmem>>, %arg19: memref<32x64xbf16, #tpu.memory_space<vmem>>, %arg20: memref<1x64xf32, #tpu.memory_space<vmem>>, %arg21: memref<64x32xbf16, #tpu.memory_space<vmem>>, %arg22: memref<1x32xf32, #tpu.memory_space<vmem>>, %arg23: memref<1x32xf32, #tpu.memory_space<vmem>>, %arg24: memref<1x32xf32, #tpu.memory_space<vmem>>, %arg25: memref<1x8x32xbf16, #tpu.memory_space<vmem>>) attributes {dimension_semantics = [#tpu.dimension_semantics<parallel>], iteration_bounds = array<i64: 2>, scalar_prefetch = 0 : i64, scratch_operands = 0 : i64, tpu.core_type = #tpu.core_type<tc>, window_params = [{transform_indices = @transform_0, window_bounds = array<i64: 1, 8, 32>}, {transform_indices = @transform_1, window_bounds = array<i64: 1, 8, 32>}, {transform_indices = @transform_2, window_bounds = array<i64: 1, 8, 8>}, {transform_indices = @transform_3, window_bounds = array<i64: 1, 8, 8>}, {pipeline_mode = #tpu.pipeline_mode<synchronous>, transform_indices = @transform_4, window_bounds = array<i64: 32, 96>}, {pipeline_mode = #tpu.pipeline_mode<synchronous>, transform_indices = @transform_5, window_bounds = array<i64: 1, 96>}, {pipeline_mode = #tpu.pipeline_mode<synchronous>, transform_indices = @transform_6, window_bounds = array<i64: 32, 32>}, {pipeline_mode = #tpu.pipeline_mode<synchronous>, transform_indices = @transform_7, window_bounds = array<i64: 1, 32>}, {pipeline_mode = #tpu.pipeline_mode<synchronous>, transform_indices = @transform_8, window_bounds = array<i64: 1, 32>}, {pipeline_mode = #tpu.pipeline_mode<synchronous>, transform_indices = @transform_9, window_bounds = array<i64: 1, 32>}, {pipeline_mode = #tpu.pipeline_mode<synchronous>, transform_indices = @transform_10, window_bounds = array<i64: 32, 64>}, {pipeline_mode = #tpu.pipeline_mode<synchronous>, transform_indices = @transform_11, window_bounds = array<i64: 1, 64>}, {pipeline_mode = #tpu.pipeline_mode<synchronous>, transform_indices = @transform_12, window_bounds = array<i64: 32, 32>}, {pipeline_mode = #tpu.pipeline_mode<synchronous>, transform_indices = @transform_13, window_bounds = array<i64: 1, 32>}, {pipeline_mode = #tpu.pipeline_mode<synchronous>, transform_indices = @transform_14, window_bounds = array<i64: 32, 32>}, {pipeline_mode = #tpu.pipeline_mode<synchronous>, transform_indices = @transform_15, window_bounds = array<i64: 1, 32>}, {pipeline_mode = #tpu.pipeline_mode<synchronous>, transform_indices = @transform_16, window_bounds = array<i64: 1, 32>}, {pipeline_mode = #tpu.pipeline_mode<synchronous>, transform_indices = @transform_17, window_bounds = array<i64: 1, 32>}, {pipeline_mode = #tpu.pipeline_mode<synchronous>, transform_indices = @transform_18, window_bounds = array<i64: 32, 64>}, {pipeline_mode = #tpu.pipeline_mode<synchronous>, transform_indices = @transform_19, window_bounds = array<i64: 1, 64>}, {pipeline_mode = #tpu.pipeline_mode<synchronous>, transform_indices = @transform_20, window_bounds = array<i64: 64, 32>}, {pipeline_mode = #tpu.pipeline_mode<synchronous>, transform_indices = @transform_21, window_bounds = array<i64: 1, 32>}, {pipeline_mode = #tpu.pipeline_mode<synchronous>, transform_indices = @transform_22, window_bounds = array<i64: 1, 32>}, {pipeline_mode = #tpu.pipeline_mode<synchronous>, transform_indices = @transform_23, window_bounds = array<i64: 1, 32>}, {transform_indices = @transform_24, window_bounds = array<i64: 1, 8, 32>}]} {
    %c0 = arith.constant 0 : index
    %c0_0 = arith.constant 0 : index
    %c0_1 = arith.constant 0 : index
    %0 = vector.load %arg2[%c0, %c0_0, %c0_1] : memref<1x8x32xbf16, #tpu.memory_space<vmem>>, vector<1x8x32xbf16>
    %1 = vector.shape_cast %0 : vector<1x8x32xbf16> to vector<8x32xbf16>
    %2 = arith.extf %1 : vector<8x32xbf16> to vector<8x32xf32>
    %c0_2 = arith.constant 0 : index
    %c0_3 = arith.constant 0 : index
    %c0_4 = arith.constant 0 : index
    %3 = vector.load %arg3[%c0_2, %c0_3, %c0_4] : memref<1x8x8xf32, #tpu.memory_space<vmem>>, vector<1x8x8xf32>
    %4 = vector.shape_cast %3 : vector<1x8x8xf32> to vector<8x8xf32>
    %c0_5 = arith.constant 0 : index
    %c0_6 = arith.constant 0 : index
    %5 = vector.load %arg5[%c0_5, %c0_6] : memref<32x96xbf16, #tpu.memory_space<vmem>>, vector<32x96xbf16>
    %cst = arith.constant dense<0.000000e+00> : vector<8x96xf32>
    %6 = tpu.matmul %1, %5, %cst {dimension_numbers = #tpu.dot_dimension_numbers<[1], [0], [0], [1], [0, 0, 1, 1], [], []>} : vector<8x32xbf16>, vector<32x96xbf16>, vector<8x96xf32> -> vector<8x96xf32>
    %c0_7 = arith.constant 0 : index
    %c0_8 = arith.constant 0 : index
    %7 = vector.load %arg6[%c0_7, %c0_8] : memref<1x96xf32, #tpu.memory_space<vmem>>, vector<1x96xf32>
    %8 = vector.broadcast %7 : vector<1x96xf32> to vector<8x96xf32>
    %9 = arith.addf %6, %8 : vector<8x96xf32>
    %10 = vector.extract_strided_slice %9 {offsets = [0, 0], sizes = [8, 32], strides = [1, 1]} : vector<8x96xf32> to vector<8x32xf32>
    %11 = vector.extract_strided_slice %9 {offsets = [0, 32], sizes = [8, 32], strides = [1, 1]} : vector<8x96xf32> to vector<8x32xf32>
    %12 = vector.extract_strided_slice %9 {offsets = [0, 64], sizes = [8, 32], strides = [1, 1]} : vector<8x96xf32> to vector<8x32xf32>
    %c0_9 = arith.constant 0 : index
    %c0_10 = arith.constant 0 : index
    %13 = vector.load %arg7[%c0_9, %c0_10] : memref<32x32xbf16, #tpu.memory_space<vmem>>, vector<32x32xbf16>
    %c0_11 = arith.constant 0 : index
    %c0_12 = arith.constant 0 : index
    %14 = vector.load %arg8[%c0_11, %c0_12] : memref<1x32xf32, #tpu.memory_space<vmem>>, vector<1x32xf32>
    %cst_13 = arith.constant 0.000000e+00 : f32
    %15 = vector.broadcast %cst_13 : f32 to vector<8x32xf32>
    %16 = vector.extract_strided_slice %10 {offsets = [0, 0], sizes = [8, 8], strides = [1, 1]} : vector<8x32xf32> to vector<8x8xf32>
    %17 = arith.truncf %16 : vector<8x8xf32> to vector<8x8xbf16>
    %18 = vector.extract_strided_slice %11 {offsets = [0, 0], sizes = [8, 8], strides = [1, 1]} : vector<8x32xf32> to vector<8x8xf32>
    %19 = arith.truncf %18 : vector<8x8xf32> to vector<8x8xbf16>
    %cst_14 = arith.constant dense<0.000000e+00> : vector<8x8xf32>
    %20 = tpu.matmul %17, %19, %cst_14 {dimension_numbers = #tpu.dot_dimension_numbers<[1], [1], [0], [0], [0, 0, 1, 0], [], []>} : vector<8x8xbf16>, vector<8x8xbf16>, vector<8x8xf32> -> vector<8x8xf32>
    %cst_15 = arith.constant 0.353553385 : f32
    %21 = vector.broadcast %cst_15 : f32 to vector<8x8xf32>
    %22 = arith.mulf %20, %21 : vector<8x8xf32>
    %23 = arith.addf %22, %4 : vector<8x8xf32>
    %cst_16 = arith.constant dense<0xFF800000> : vector<8xf32>
    %24 = vector.multi_reduction <maximumf>, %23, %cst_16 [1] : vector<8x8xf32> to vector<8xf32>
    %25 = vector.shape_cast %24 : vector<8xf32> to vector<8x1xf32>
    %26 = vector.broadcast %25 : vector<8x1xf32> to vector<8x8xf32>
    %27 = arith.subf %23, %26 : vector<8x8xf32>
    %28 = math.exp %27 : vector<8x8xf32>
    %cst_17 = arith.constant dense<0.000000e+00> : vector<8xf32>
    %29 = vector.multi_reduction <add>, %28, %cst_17 [1] : vector<8x8xf32> to vector<8xf32>
    %30 = vector.shape_cast %29 : vector<8xf32> to vector<8x1xf32>
    %31 = tpu.reciprocal %30 {approx = true} : vector<8x1xf32> -> vector<8x1xf32>
    %32 = vector.broadcast %31 : vector<8x1xf32> to vector<8x8xf32>
    %33 = arith.mulf %28, %32 : vector<8x8xf32>
    %34 = arith.truncf %33 : vector<8x8xf32> to vector<8x8xbf16>
    %35 = vector.extract_strided_slice %12 {offsets = [0, 0], sizes = [8, 8], strides = [1, 1]} : vector<8x32xf32> to vector<8x8xf32>
    %36 = arith.truncf %35 : vector<8x8xf32> to vector<8x8xbf16>
    %cst_18 = arith.constant dense<0.000000e+00> : vector<8x8xf32>
    %37 = tpu.matmul %34, %36, %cst_18 {dimension_numbers = #tpu.dot_dimension_numbers<[1], [0], [0], [1], [0, 0, 1, 1], [], []>} : vector<8x8xbf16>, vector<8x8xbf16>, vector<8x8xf32> -> vector<8x8xf32>
    %38 = arith.truncf %37 : vector<8x8xf32> to vector<8x8xbf16>
    %39 = vector.extract_strided_slice %13 {offsets = [0, 0], sizes = [8, 32], strides = [1, 1]} : vector<32x32xbf16> to vector<8x32xbf16>
    %cst_19 = arith.constant dense<0.000000e+00> : vector<8x32xf32>
    %40 = tpu.matmul %38, %39, %cst_19 {dimension_numbers = #tpu.dot_dimension_numbers<[1], [0], [0], [1], [0, 0, 1, 1], [], []>} : vector<8x8xbf16>, vector<8x32xbf16>, vector<8x32xf32> -> vector<8x32xf32>
    %41 = arith.addf %15, %40 : vector<8x32xf32>
    %42 = vector.extract_strided_slice %10 {offsets = [0, 8], sizes = [8, 8], strides = [1, 1]} : vector<8x32xf32> to vector<8x8xf32>
    %43 = arith.truncf %42 : vector<8x8xf32> to vector<8x8xbf16>
    %44 = vector.extract_strided_slice %11 {offsets = [0, 8], sizes = [8, 8], strides = [1, 1]} : vector<8x32xf32> to vector<8x8xf32>
    %45 = arith.truncf %44 : vector<8x8xf32> to vector<8x8xbf16>
    %cst_20 = arith.constant dense<0.000000e+00> : vector<8x8xf32>
    %46 = tpu.matmul %43, %45, %cst_20 {dimension_numbers = #tpu.dot_dimension_numbers<[1], [1], [0], [0], [0, 0, 1, 0], [], []>} : vector<8x8xbf16>, vector<8x8xbf16>, vector<8x8xf32> -> vector<8x8xf32>
    %cst_21 = arith.constant 0.353553385 : f32
    %47 = vector.broadcast %cst_21 : f32 to vector<8x8xf32>
    %48 = arith.mulf %46, %47 : vector<8x8xf32>
    %49 = arith.addf %48, %4 : vector<8x8xf32>
    %cst_22 = arith.constant dense<0xFF800000> : vector<8xf32>
    %50 = vector.multi_reduction <maximumf>, %49, %cst_22 [1] : vector<8x8xf32> to vector<8xf32>
    %51 = vector.shape_cast %50 : vector<8xf32> to vector<8x1xf32>
    %52 = vector.broadcast %51 : vector<8x1xf32> to vector<8x8xf32>
    %53 = arith.subf %49, %52 : vector<8x8xf32>
    %54 = math.exp %53 : vector<8x8xf32>
    %cst_23 = arith.constant dense<0.000000e+00> : vector<8xf32>
    %55 = vector.multi_reduction <add>, %54, %cst_23 [1] : vector<8x8xf32> to vector<8xf32>
    %56 = vector.shape_cast %55 : vector<8xf32> to vector<8x1xf32>
    %57 = tpu.reciprocal %56 {approx = true} : vector<8x1xf32> -> vector<8x1xf32>
    %58 = vector.broadcast %57 : vector<8x1xf32> to vector<8x8xf32>
    %59 = arith.mulf %54, %58 : vector<8x8xf32>
    %60 = arith.truncf %59 : vector<8x8xf32> to vector<8x8xbf16>
    %61 = vector.extract_strided_slice %12 {offsets = [0, 8], sizes = [8, 8], strides = [1, 1]} : vector<8x32xf32> to vector<8x8xf32>
    %62 = arith.truncf %61 : vector<8x8xf32> to vector<8x8xbf16>
    %cst_24 = arith.constant dense<0.000000e+00> : vector<8x8xf32>
    %63 = tpu.matmul %60, %62, %cst_24 {dimension_numbers = #tpu.dot_dimension_numbers<[1], [0], [0], [1], [0, 0, 1, 1], [], []>} : vector<8x8xbf16>, vector<8x8xbf16>, vector<8x8xf32> -> vector<8x8xf32>
    %64 = arith.truncf %63 : vector<8x8xf32> to vector<8x8xbf16>
    %65 = vector.extract_strided_slice %13 {offsets = [8, 0], sizes = [8, 32], strides = [1, 1]} : vector<32x32xbf16> to vector<8x32xbf16>
    %cst_25 = arith.constant dense<0.000000e+00> : vector<8x32xf32>
    %66 = tpu.matmul %64, %65, %cst_25 {dimension_numbers = #tpu.dot_dimension_numbers<[1], [0], [0], [1], [0, 0, 1, 1], [], []>} : vector<8x8xbf16>, vector<8x32xbf16>, vector<8x32xf32> -> vector<8x32xf32>
    %67 = arith.addf %41, %66 : vector<8x32xf32>
    %68 = vector.extract_strided_slice %10 {offsets = [0, 16], sizes = [8, 8], strides = [1, 1]} : vector<8x32xf32> to vector<8x8xf32>
    %69 = arith.truncf %68 : vector<8x8xf32> to vector<8x8xbf16>
    %70 = vector.extract_strided_slice %11 {offsets = [0, 16], sizes = [8, 8], strides = [1, 1]} : vector<8x32xf32> to vector<8x8xf32>
    %71 = arith.truncf %70 : vector<8x8xf32> to vector<8x8xbf16>
    %cst_26 = arith.constant dense<0.000000e+00> : vector<8x8xf32>
    %72 = tpu.matmul %69, %71, %cst_26 {dimension_numbers = #tpu.dot_dimension_numbers<[1], [1], [0], [0], [0, 0, 1, 0], [], []>} : vector<8x8xbf16>, vector<8x8xbf16>, vector<8x8xf32> -> vector<8x8xf32>
    %cst_27 = arith.constant 0.353553385 : f32
    %73 = vector.broadcast %cst_27 : f32 to vector<8x8xf32>
    %74 = arith.mulf %72, %73 : vector<8x8xf32>
    %75 = arith.addf %74, %4 : vector<8x8xf32>
    %cst_28 = arith.constant dense<0xFF800000> : vector<8xf32>
    %76 = vector.multi_reduction <maximumf>, %75, %cst_28 [1] : vector<8x8xf32> to vector<8xf32>
    %77 = vector.shape_cast %76 : vector<8xf32> to vector<8x1xf32>
    %78 = vector.broadcast %77 : vector<8x1xf32> to vector<8x8xf32>
    %79 = arith.subf %75, %78 : vector<8x8xf32>
    %80 = math.exp %79 : vector<8x8xf32>
    %cst_29 = arith.constant dense<0.000000e+00> : vector<8xf32>
    %81 = vector.multi_reduction <add>, %80, %cst_29 [1] : vector<8x8xf32> to vector<8xf32>
    %82 = vector.shape_cast %81 : vector<8xf32> to vector<8x1xf32>
    %83 = tpu.reciprocal %82 {approx = true} : vector<8x1xf32> -> vector<8x1xf32>
    %84 = vector.broadcast %83 : vector<8x1xf32> to vector<8x8xf32>
    %85 = arith.mulf %80, %84 : vector<8x8xf32>
    %86 = arith.truncf %85 : vector<8x8xf32> to vector<8x8xbf16>
    %87 = vector.extract_strided_slice %12 {offsets = [0, 16], sizes = [8, 8], strides = [1, 1]} : vector<8x32xf32> to vector<8x8xf32>
    %88 = arith.truncf %87 : vector<8x8xf32> to vector<8x8xbf16>
    %cst_30 = arith.constant dense<0.000000e+00> : vector<8x8xf32>
    %89 = tpu.matmul %86, %88, %cst_30 {dimension_numbers = #tpu.dot_dimension_numbers<[1], [0], [0], [1], [0, 0, 1, 1], [], []>} : vector<8x8xbf16>, vector<8x8xbf16>, vector<8x8xf32> -> vector<8x8xf32>
    %90 = arith.truncf %89 : vector<8x8xf32> to vector<8x8xbf16>
    %91 = vector.extract_strided_slice %13 {offsets = [16, 0], sizes = [8, 32], strides = [1, 1]} : vector<32x32xbf16> to vector<8x32xbf16>
    %cst_31 = arith.constant dense<0.000000e+00> : vector<8x32xf32>
    %92 = tpu.matmul %90, %91, %cst_31 {dimension_numbers = #tpu.dot_dimension_numbers<[1], [0], [0], [1], [0, 0, 1, 1], [], []>} : vector<8x8xbf16>, vector<8x32xbf16>, vector<8x32xf32> -> vector<8x32xf32>
    %93 = arith.addf %67, %92 : vector<8x32xf32>
    %94 = vector.extract_strided_slice %10 {offsets = [0, 24], sizes = [8, 8], strides = [1, 1]} : vector<8x32xf32> to vector<8x8xf32>
    %95 = arith.truncf %94 : vector<8x8xf32> to vector<8x8xbf16>
    %96 = vector.extract_strided_slice %11 {offsets = [0, 24], sizes = [8, 8], strides = [1, 1]} : vector<8x32xf32> to vector<8x8xf32>
    %97 = arith.truncf %96 : vector<8x8xf32> to vector<8x8xbf16>
    %cst_32 = arith.constant dense<0.000000e+00> : vector<8x8xf32>
    %98 = tpu.matmul %95, %97, %cst_32 {dimension_numbers = #tpu.dot_dimension_numbers<[1], [1], [0], [0], [0, 0, 1, 0], [], []>} : vector<8x8xbf16>, vector<8x8xbf16>, vector<8x8xf32> -> vector<8x8xf32>
    %cst_33 = arith.constant 0.353553385 : f32
    %99 = vector.broadcast %cst_33 : f32 to vector<8x8xf32>
    %100 = arith.mulf %98, %99 : vector<8x8xf32>
    %101 = arith.addf %100, %4 : vector<8x8xf32>
    %cst_34 = arith.constant dense<0xFF800000> : vector<8xf32>
    %102 = vector.multi_reduction <maximumf>, %101, %cst_34 [1] : vector<8x8xf32> to vector<8xf32>
    %103 = vector.shape_cast %102 : vector<8xf32> to vector<8x1xf32>
    %104 = vector.broadcast %103 : vector<8x1xf32> to vector<8x8xf32>
    %105 = arith.subf %101, %104 : vector<8x8xf32>
    %106 = math.exp %105 : vector<8x8xf32>
    %cst_35 = arith.constant dense<0.000000e+00> : vector<8xf32>
    %107 = vector.multi_reduction <add>, %106, %cst_35 [1] : vector<8x8xf32> to vector<8xf32>
    %108 = vector.shape_cast %107 : vector<8xf32> to vector<8x1xf32>
    %109 = tpu.reciprocal %108 {approx = true} : vector<8x1xf32> -> vector<8x1xf32>
    %110 = vector.broadcast %109 : vector<8x1xf32> to vector<8x8xf32>
    %111 = arith.mulf %106, %110 : vector<8x8xf32>
    %112 = arith.truncf %111 : vector<8x8xf32> to vector<8x8xbf16>
    %113 = vector.extract_strided_slice %12 {offsets = [0, 24], sizes = [8, 8], strides = [1, 1]} : vector<8x32xf32> to vector<8x8xf32>
    %114 = arith.truncf %113 : vector<8x8xf32> to vector<8x8xbf16>
    %cst_36 = arith.constant dense<0.000000e+00> : vector<8x8xf32>
    %115 = tpu.matmul %112, %114, %cst_36 {dimension_numbers = #tpu.dot_dimension_numbers<[1], [0], [0], [1], [0, 0, 1, 1], [], []>} : vector<8x8xbf16>, vector<8x8xbf16>, vector<8x8xf32> -> vector<8x8xf32>
    %116 = arith.truncf %115 : vector<8x8xf32> to vector<8x8xbf16>
    %117 = vector.extract_strided_slice %13 {offsets = [24, 0], sizes = [8, 32], strides = [1, 1]} : vector<32x32xbf16> to vector<8x32xbf16>
    %cst_37 = arith.constant dense<0.000000e+00> : vector<8x32xf32>
    %118 = tpu.matmul %116, %117, %cst_37 {dimension_numbers = #tpu.dot_dimension_numbers<[1], [0], [0], [1], [0, 0, 1, 1], [], []>} : vector<8x8xbf16>, vector<8x32xbf16>, vector<8x32xf32> -> vector<8x32xf32>
    %119 = arith.addf %93, %118 : vector<8x32xf32>
    %120 = vector.broadcast %14 : vector<1x32xf32> to vector<8x32xf32>
    %121 = arith.addf %119, %120 : vector<8x32xf32>
    %122 = arith.truncf %121 : vector<8x32xf32> to vector<8x32xbf16>
    %c0_38 = arith.constant 0 : index
    %c0_39 = arith.constant 0 : index
    %123 = vector.load %arg5[%c0_38, %c0_39] : memref<32x96xbf16, #tpu.memory_space<vmem>>, vector<32x96xbf16>
    %cst_40 = arith.constant dense<0.000000e+00> : vector<8x96xf32>
    %124 = tpu.matmul %122, %123, %cst_40 {dimension_numbers = #tpu.dot_dimension_numbers<[1], [0], [0], [1], [0, 0, 1, 1], [], []>} : vector<8x32xbf16>, vector<32x96xbf16>, vector<8x96xf32> -> vector<8x96xf32>
    %c0_41 = arith.constant 0 : index
    %c0_42 = arith.constant 0 : index
    %125 = vector.load %arg6[%c0_41, %c0_42] : memref<1x96xf32, #tpu.memory_space<vmem>>, vector<1x96xf32>
    %126 = vector.broadcast %125 : vector<1x96xf32> to vector<8x96xf32>
    %127 = arith.addf %124, %126 : vector<8x96xf32>
    %128 = vector.extract_strided_slice %127 {offsets = [0, 0], sizes = [8, 32], strides = [1, 1]} : vector<8x96xf32> to vector<8x32xf32>
    %129 = vector.extract_strided_slice %127 {offsets = [0, 32], sizes = [8, 32], strides = [1, 1]} : vector<8x96xf32> to vector<8x32xf32>
    %130 = vector.extract_strided_slice %127 {offsets = [0, 64], sizes = [8, 32], strides = [1, 1]} : vector<8x96xf32> to vector<8x32xf32>
    %c0_43 = arith.constant 0 : index
    %c0_44 = arith.constant 0 : index
    %131 = vector.load %arg7[%c0_43, %c0_44] : memref<32x32xbf16, #tpu.memory_space<vmem>>, vector<32x32xbf16>
    %c0_45 = arith.constant 0 : index
    %c0_46 = arith.constant 0 : index
    %132 = vector.load %arg8[%c0_45, %c0_46] : memref<1x32xf32, #tpu.memory_space<vmem>>, vector<1x32xf32>
    %cst_47 = arith.constant 0.000000e+00 : f32
    %133 = vector.broadcast %cst_47 : f32 to vector<8x32xf32>
    %134 = vector.extract_strided_slice %128 {offsets = [0, 0], sizes = [8, 8], strides = [1, 1]} : vector<8x32xf32> to vector<8x8xf32>
    %135 = arith.truncf %134 : vector<8x8xf32> to vector<8x8xbf16>
    %136 = vector.extract_strided_slice %129 {offsets = [0, 0], sizes = [8, 8], strides = [1, 1]} : vector<8x32xf32> to vector<8x8xf32>
    %137 = arith.truncf %136 : vector<8x8xf32> to vector<8x8xbf16>
    %cst_48 = arith.constant dense<0.000000e+00> : vector<8x8xf32>
    %138 = tpu.matmul %135, %137, %cst_48 {dimension_numbers = #tpu.dot_dimension_numbers<[1], [1], [0], [0], [0, 0, 1, 0], [], []>} : vector<8x8xbf16>, vector<8x8xbf16>, vector<8x8xf32> -> vector<8x8xf32>
    %cst_49 = arith.constant 0.353553385 : f32
    %139 = vector.broadcast %cst_49 : f32 to vector<8x8xf32>
    %140 = arith.mulf %138, %139 : vector<8x8xf32>
    %141 = arith.addf %140, %4 : vector<8x8xf32>
    %cst_50 = arith.constant dense<0xFF800000> : vector<8xf32>
    %142 = vector.multi_reduction <maximumf>, %141, %cst_50 [1] : vector<8x8xf32> to vector<8xf32>
    %143 = vector.shape_cast %142 : vector<8xf32> to vector<8x1xf32>
    %144 = vector.broadcast %143 : vector<8x1xf32> to vector<8x8xf32>
    %145 = arith.subf %141, %144 : vector<8x8xf32>
    %146 = math.exp %145 : vector<8x8xf32>
    %cst_51 = arith.constant dense<0.000000e+00> : vector<8xf32>
    %147 = vector.multi_reduction <add>, %146, %cst_51 [1] : vector<8x8xf32> to vector<8xf32>
    %148 = vector.shape_cast %147 : vector<8xf32> to vector<8x1xf32>
    %149 = tpu.reciprocal %148 {approx = true} : vector<8x1xf32> -> vector<8x1xf32>
    %150 = vector.broadcast %149 : vector<8x1xf32> to vector<8x8xf32>
    %151 = arith.mulf %146, %150 : vector<8x8xf32>
    %152 = arith.truncf %151 : vector<8x8xf32> to vector<8x8xbf16>
    %153 = vector.extract_strided_slice %130 {offsets = [0, 0], sizes = [8, 8], strides = [1, 1]} : vector<8x32xf32> to vector<8x8xf32>
    %154 = arith.truncf %153 : vector<8x8xf32> to vector<8x8xbf16>
    %cst_52 = arith.constant dense<0.000000e+00> : vector<8x8xf32>
    %155 = tpu.matmul %152, %154, %cst_52 {dimension_numbers = #tpu.dot_dimension_numbers<[1], [0], [0], [1], [0, 0, 1, 1], [], []>} : vector<8x8xbf16>, vector<8x8xbf16>, vector<8x8xf32> -> vector<8x8xf32>
    %156 = arith.truncf %155 : vector<8x8xf32> to vector<8x8xbf16>
    %157 = vector.extract_strided_slice %131 {offsets = [0, 0], sizes = [8, 32], strides = [1, 1]} : vector<32x32xbf16> to vector<8x32xbf16>
    %cst_53 = arith.constant dense<0.000000e+00> : vector<8x32xf32>
    %158 = tpu.matmul %156, %157, %cst_53 {dimension_numbers = #tpu.dot_dimension_numbers<[1], [0], [0], [1], [0, 0, 1, 1], [], []>} : vector<8x8xbf16>, vector<8x32xbf16>, vector<8x32xf32> -> vector<8x32xf32>
    %159 = arith.addf %133, %158 : vector<8x32xf32>
    %160 = vector.extract_strided_slice %128 {offsets = [0, 8], sizes = [8, 8], strides = [1, 1]} : vector<8x32xf32> to vector<8x8xf32>
    %161 = arith.truncf %160 : vector<8x8xf32> to vector<8x8xbf16>
    %162 = vector.extract_strided_slice %129 {offsets = [0, 8], sizes = [8, 8], strides = [1, 1]} : vector<8x32xf32> to vector<8x8xf32>
    %163 = arith.truncf %162 : vector<8x8xf32> to vector<8x8xbf16>
    %cst_54 = arith.constant dense<0.000000e+00> : vector<8x8xf32>
    %164 = tpu.matmul %161, %163, %cst_54 {dimension_numbers = #tpu.dot_dimension_numbers<[1], [1], [0], [0], [0, 0, 1, 0], [], []>} : vector<8x8xbf16>, vector<8x8xbf16>, vector<8x8xf32> -> vector<8x8xf32>
    %cst_55 = arith.constant 0.353553385 : f32
    %165 = vector.broadcast %cst_55 : f32 to vector<8x8xf32>
    %166 = arith.mulf %164, %165 : vector<8x8xf32>
    %167 = arith.addf %166, %4 : vector<8x8xf32>
    %cst_56 = arith.constant dense<0xFF800000> : vector<8xf32>
    %168 = vector.multi_reduction <maximumf>, %167, %cst_56 [1] : vector<8x8xf32> to vector<8xf32>
    %169 = vector.shape_cast %168 : vector<8xf32> to vector<8x1xf32>
    %170 = vector.broadcast %169 : vector<8x1xf32> to vector<8x8xf32>
    %171 = arith.subf %167, %170 : vector<8x8xf32>
    %172 = math.exp %171 : vector<8x8xf32>
    %cst_57 = arith.constant dense<0.000000e+00> : vector<8xf32>
    %173 = vector.multi_reduction <add>, %172, %cst_57 [1] : vector<8x8xf32> to vector<8xf32>
    %174 = vector.shape_cast %173 : vector<8xf32> to vector<8x1xf32>
    %175 = tpu.reciprocal %174 {approx = true} : vector<8x1xf32> -> vector<8x1xf32>
    %176 = vector.broadcast %175 : vector<8x1xf32> to vector<8x8xf32>
    %177 = arith.mulf %172, %176 : vector<8x8xf32>
    %178 = arith.truncf %177 : vector<8x8xf32> to vector<8x8xbf16>
    %179 = vector.extract_strided_slice %130 {offsets = [0, 8], sizes = [8, 8], strides = [1, 1]} : vector<8x32xf32> to vector<8x8xf32>
    %180 = arith.truncf %179 : vector<8x8xf32> to vector<8x8xbf16>
    %cst_58 = arith.constant dense<0.000000e+00> : vector<8x8xf32>
    %181 = tpu.matmul %178, %180, %cst_58 {dimension_numbers = #tpu.dot_dimension_numbers<[1], [0], [0], [1], [0, 0, 1, 1], [], []>} : vector<8x8xbf16>, vector<8x8xbf16>, vector<8x8xf32> -> vector<8x8xf32>
    %182 = arith.truncf %181 : vector<8x8xf32> to vector<8x8xbf16>
    %183 = vector.extract_strided_slice %131 {offsets = [8, 0], sizes = [8, 32], strides = [1, 1]} : vector<32x32xbf16> to vector<8x32xbf16>
    %cst_59 = arith.constant dense<0.000000e+00> : vector<8x32xf32>
    %184 = tpu.matmul %182, %183, %cst_59 {dimension_numbers = #tpu.dot_dimension_numbers<[1], [0], [0], [1], [0, 0, 1, 1], [], []>} : vector<8x8xbf16>, vector<8x32xbf16>, vector<8x32xf32> -> vector<8x32xf32>
    %185 = arith.addf %159, %184 : vector<8x32xf32>
    %186 = vector.extract_strided_slice %128 {offsets = [0, 16], sizes = [8, 8], strides = [1, 1]} : vector<8x32xf32> to vector<8x8xf32>
    %187 = arith.truncf %186 : vector<8x8xf32> to vector<8x8xbf16>
    %188 = vector.extract_strided_slice %129 {offsets = [0, 16], sizes = [8, 8], strides = [1, 1]} : vector<8x32xf32> to vector<8x8xf32>
    %189 = arith.truncf %188 : vector<8x8xf32> to vector<8x8xbf16>
    %cst_60 = arith.constant dense<0.000000e+00> : vector<8x8xf32>
    %190 = tpu.matmul %187, %189, %cst_60 {dimension_numbers = #tpu.dot_dimension_numbers<[1], [1], [0], [0], [0, 0, 1, 0], [], []>} : vector<8x8xbf16>, vector<8x8xbf16>, vector<8x8xf32> -> vector<8x8xf32>
    %cst_61 = arith.constant 0.353553385 : f32
    %191 = vector.broadcast %cst_61 : f32 to vector<8x8xf32>
    %192 = arith.mulf %190, %191 : vector<8x8xf32>
    %193 = arith.addf %192, %4 : vector<8x8xf32>
    %cst_62 = arith.constant dense<0xFF800000> : vector<8xf32>
    %194 = vector.multi_reduction <maximumf>, %193, %cst_62 [1] : vector<8x8xf32> to vector<8xf32>
    %195 = vector.shape_cast %194 : vector<8xf32> to vector<8x1xf32>
    %196 = vector.broadcast %195 : vector<8x1xf32> to vector<8x8xf32>
    %197 = arith.subf %193, %196 : vector<8x8xf32>
    %198 = math.exp %197 : vector<8x8xf32>
    %cst_63 = arith.constant dense<0.000000e+00> : vector<8xf32>
    %199 = vector.multi_reduction <add>, %198, %cst_63 [1] : vector<8x8xf32> to vector<8xf32>
    %200 = vector.shape_cast %199 : vector<8xf32> to vector<8x1xf32>
    %201 = tpu.reciprocal %200 {approx = true} : vector<8x1xf32> -> vector<8x1xf32>
    %202 = vector.broadcast %201 : vector<8x1xf32> to vector<8x8xf32>
    %203 = arith.mulf %198, %202 : vector<8x8xf32>
    %204 = arith.truncf %203 : vector<8x8xf32> to vector<8x8xbf16>
    %205 = vector.extract_strided_slice %130 {offsets = [0, 16], sizes = [8, 8], strides = [1, 1]} : vector<8x32xf32> to vector<8x8xf32>
    %206 = arith.truncf %205 : vector<8x8xf32> to vector<8x8xbf16>
    %cst_64 = arith.constant dense<0.000000e+00> : vector<8x8xf32>
    %207 = tpu.matmul %204, %206, %cst_64 {dimension_numbers = #tpu.dot_dimension_numbers<[1], [0], [0], [1], [0, 0, 1, 1], [], []>} : vector<8x8xbf16>, vector<8x8xbf16>, vector<8x8xf32> -> vector<8x8xf32>
    %208 = arith.truncf %207 : vector<8x8xf32> to vector<8x8xbf16>
    %209 = vector.extract_strided_slice %131 {offsets = [16, 0], sizes = [8, 32], strides = [1, 1]} : vector<32x32xbf16> to vector<8x32xbf16>
    %cst_65 = arith.constant dense<0.000000e+00> : vector<8x32xf32>
    %210 = tpu.matmul %208, %209, %cst_65 {dimension_numbers = #tpu.dot_dimension_numbers<[1], [0], [0], [1], [0, 0, 1, 1], [], []>} : vector<8x8xbf16>, vector<8x32xbf16>, vector<8x32xf32> -> vector<8x32xf32>
    %211 = arith.addf %185, %210 : vector<8x32xf32>
    %212 = vector.extract_strided_slice %128 {offsets = [0, 24], sizes = [8, 8], strides = [1, 1]} : vector<8x32xf32> to vector<8x8xf32>
    %213 = arith.truncf %212 : vector<8x8xf32> to vector<8x8xbf16>
    %214 = vector.extract_strided_slice %129 {offsets = [0, 24], sizes = [8, 8], strides = [1, 1]} : vector<8x32xf32> to vector<8x8xf32>
    %215 = arith.truncf %214 : vector<8x8xf32> to vector<8x8xbf16>
    %cst_66 = arith.constant dense<0.000000e+00> : vector<8x8xf32>
    %216 = tpu.matmul %213, %215, %cst_66 {dimension_numbers = #tpu.dot_dimension_numbers<[1], [1], [0], [0], [0, 0, 1, 0], [], []>} : vector<8x8xbf16>, vector<8x8xbf16>, vector<8x8xf32> -> vector<8x8xf32>
    %cst_67 = arith.constant 0.353553385 : f32
    %217 = vector.broadcast %cst_67 : f32 to vector<8x8xf32>
    %218 = arith.mulf %216, %217 : vector<8x8xf32>
    %219 = arith.addf %218, %4 : vector<8x8xf32>
    %cst_68 = arith.constant dense<0xFF800000> : vector<8xf32>
    %220 = vector.multi_reduction <maximumf>, %219, %cst_68 [1] : vector<8x8xf32> to vector<8xf32>
    %221 = vector.shape_cast %220 : vector<8xf32> to vector<8x1xf32>
    %222 = vector.broadcast %221 : vector<8x1xf32> to vector<8x8xf32>
    %223 = arith.subf %219, %222 : vector<8x8xf32>
    %224 = math.exp %223 : vector<8x8xf32>
    %cst_69 = arith.constant dense<0.000000e+00> : vector<8xf32>
    %225 = vector.multi_reduction <add>, %224, %cst_69 [1] : vector<8x8xf32> to vector<8xf32>
    %226 = vector.shape_cast %225 : vector<8xf32> to vector<8x1xf32>
    %227 = tpu.reciprocal %226 {approx = true} : vector<8x1xf32> -> vector<8x1xf32>
    %228 = vector.broadcast %227 : vector<8x1xf32> to vector<8x8xf32>
    %229 = arith.mulf %224, %228 : vector<8x8xf32>
    %230 = arith.truncf %229 : vector<8x8xf32> to vector<8x8xbf16>
    %231 = vector.extract_strided_slice %130 {offsets = [0, 24], sizes = [8, 8], strides = [1, 1]} : vector<8x32xf32> to vector<8x8xf32>
    %232 = arith.truncf %231 : vector<8x8xf32> to vector<8x8xbf16>
    %cst_70 = arith.constant dense<0.000000e+00> : vector<8x8xf32>
    %233 = tpu.matmul %230, %232, %cst_70 {dimension_numbers = #tpu.dot_dimension_numbers<[1], [0], [0], [1], [0, 0, 1, 1], [], []>} : vector<8x8xbf16>, vector<8x8xbf16>, vector<8x8xf32> -> vector<8x8xf32>
    %234 = arith.truncf %233 : vector<8x8xf32> to vector<8x8xbf16>
    %235 = vector.extract_strided_slice %131 {offsets = [24, 0], sizes = [8, 32], strides = [1, 1]} : vector<32x32xbf16> to vector<8x32xbf16>
    %cst_71 = arith.constant dense<0.000000e+00> : vector<8x32xf32>
    %236 = tpu.matmul %234, %235, %cst_71 {dimension_numbers = #tpu.dot_dimension_numbers<[1], [0], [0], [1], [0, 0, 1, 1], [], []>} : vector<8x8xbf16>, vector<8x32xbf16>, vector<8x32xf32> -> vector<8x32xf32>
    %237 = arith.addf %211, %236 : vector<8x32xf32>
    %238 = vector.broadcast %132 : vector<1x32xf32> to vector<8x32xf32>
    %239 = arith.addf %237, %238 : vector<8x32xf32>
    %240 = arith.addf %239, %2 : vector<8x32xf32>
    %c0_72 = arith.constant 0 : index
    %c0_73 = arith.constant 0 : index
    %241 = vector.load %arg9[%c0_72, %c0_73] : memref<1x32xf32, #tpu.memory_space<vmem>>, vector<1x32xf32>
    %c0_74 = arith.constant 0 : index
    %c0_75 = arith.constant 0 : index
    %242 = vector.load %arg10[%c0_74, %c0_75] : memref<1x32xf32, #tpu.memory_space<vmem>>, vector<1x32xf32>
    %cst_76 = arith.constant dense<0.000000e+00> : vector<8xf32>
    %243 = vector.multi_reduction <add>, %240, %cst_76 [1] : vector<8x32xf32> to vector<8xf32>
    %244 = vector.shape_cast %243 : vector<8xf32> to vector<8x1xf32>
    %cst_77 = arith.constant 3.200000e+01 : f32
    %245 = vector.broadcast %cst_77 : f32 to vector<8x1xf32>
    %246 = arith.divf %244, %245 : vector<8x1xf32>
    %247 = vector.broadcast %246 : vector<8x1xf32> to vector<8x32xf32>
    %248 = arith.subf %240, %247 : vector<8x32xf32>
    %249 = arith.mulf %248, %248 : vector<8x32xf32>
    %cst_78 = arith.constant dense<0.000000e+00> : vector<8xf32>
    %250 = vector.multi_reduction <add>, %249, %cst_78 [1] : vector<8x32xf32> to vector<8xf32>
    %251 = vector.shape_cast %250 : vector<8xf32> to vector<8x1xf32>
    %cst_79 = arith.constant 3.200000e+01 : f32
    %252 = vector.broadcast %cst_79 : f32 to vector<8x1xf32>
    %253 = arith.divf %251, %252 : vector<8x1xf32>
    %254 = vector.broadcast %246 : vector<8x1xf32> to vector<8x32xf32>
    %255 = arith.subf %240, %254 : vector<8x32xf32>
    %cst_80 = arith.constant 9.99999974E-6 : f32
    %256 = vector.broadcast %cst_80 : f32 to vector<8x1xf32>
    %257 = arith.addf %253, %256 : vector<8x1xf32>
    %258 = math.rsqrt %257 : vector<8x1xf32>
    %259 = vector.broadcast %258 : vector<8x1xf32> to vector<8x32xf32>
    %260 = arith.mulf %255, %259 : vector<8x32xf32>
    %261 = vector.broadcast %241 : vector<1x32xf32> to vector<8x32xf32>
    %262 = arith.mulf %261, %260 : vector<8x32xf32>
    %263 = vector.broadcast %242 : vector<1x32xf32> to vector<8x32xf32>
    %264 = arith.addf %262, %263 : vector<8x32xf32>
    %c0_81 = arith.constant 0 : index
    %c0_82 = arith.constant 0 : index
    %c0_83 = arith.constant 0 : index
    %265 = vector.load %arg1[%c0_81, %c0_82, %c0_83] : memref<1x8x32xbf16, #tpu.memory_space<vmem>>, vector<1x8x32xbf16>
    %266 = vector.shape_cast %265 : vector<1x8x32xbf16> to vector<8x32xbf16>
    %c0_84 = arith.constant 0 : index
    %c0_85 = arith.constant 0 : index
    %267 = vector.load %arg11[%c0_84, %c0_85] : memref<32x64xbf16, #tpu.memory_space<vmem>>, vector<32x64xbf16>
    %cst_86 = arith.constant dense<0.000000e+00> : vector<8x64xf32>
    %268 = tpu.matmul %266, %267, %cst_86 {dimension_numbers = #tpu.dot_dimension_numbers<[1], [0], [0], [1], [0, 0, 1, 1], [], []>} : vector<8x32xbf16>, vector<32x64xbf16>, vector<8x64xf32> -> vector<8x64xf32>
    %c0_87 = arith.constant 0 : index
    %c0_88 = arith.constant 0 : index
    %269 = vector.load %arg12[%c0_87, %c0_88] : memref<1x64xf32, #tpu.memory_space<vmem>>, vector<1x64xf32>
    %270 = vector.broadcast %269 : vector<1x64xf32> to vector<8x64xf32>
    %271 = arith.addf %268, %270 : vector<8x64xf32>
    %272 = arith.truncf %264 : vector<8x32xf32> to vector<8x32xbf16>
    %c0_89 = arith.constant 0 : index
    %c0_90 = arith.constant 0 : index
    %273 = vector.load %arg13[%c0_89, %c0_90] : memref<32x32xbf16, #tpu.memory_space<vmem>>, vector<32x32xbf16>
    %cst_91 = arith.constant dense<0.000000e+00> : vector<8x32xf32>
    %274 = tpu.matmul %272, %273, %cst_91 {dimension_numbers = #tpu.dot_dimension_numbers<[1], [0], [0], [1], [0, 0, 1, 1], [], []>} : vector<8x32xbf16>, vector<32x32xbf16>, vector<8x32xf32> -> vector<8x32xf32>
    %c0_92 = arith.constant 0 : index
    %c0_93 = arith.constant 0 : index
    %275 = vector.load %arg14[%c0_92, %c0_93] : memref<1x32xf32, #tpu.memory_space<vmem>>, vector<1x32xf32>
    %276 = vector.broadcast %275 : vector<1x32xf32> to vector<8x32xf32>
    %277 = arith.addf %274, %276 : vector<8x32xf32>
    %278 = vector.extract_strided_slice %271 {offsets = [0, 0], sizes = [8, 32], strides = [1, 1]} : vector<8x64xf32> to vector<8x32xf32>
    %279 = vector.extract_strided_slice %271 {offsets = [0, 32], sizes = [8, 32], strides = [1, 1]} : vector<8x64xf32> to vector<8x32xf32>
    %c0_94 = arith.constant 0 : index
    %c0_95 = arith.constant 0 : index
    %c0_96 = arith.constant 0 : index
    %280 = vector.load %arg4[%c0_94, %c0_95, %c0_96] : memref<1x8x8xf32, #tpu.memory_space<vmem>>, vector<1x8x8xf32>
    %281 = vector.shape_cast %280 : vector<1x8x8xf32> to vector<8x8xf32>
    %c0_97 = arith.constant 0 : index
    %c0_98 = arith.constant 0 : index
    %282 = vector.load %arg15[%c0_97, %c0_98] : memref<32x32xbf16, #tpu.memory_space<vmem>>, vector<32x32xbf16>
    %c0_99 = arith.constant 0 : index
    %c0_100 = arith.constant 0 : index
    %283 = vector.load %arg16[%c0_99, %c0_100] : memref<1x32xf32, #tpu.memory_space<vmem>>, vector<1x32xf32>
    %cst_101 = arith.constant 0.000000e+00 : f32
    %284 = vector.broadcast %cst_101 : f32 to vector<8x32xf32>
    %285 = vector.extract_strided_slice %277 {offsets = [0, 0], sizes = [8, 8], strides = [1, 1]} : vector<8x32xf32> to vector<8x8xf32>
    %286 = arith.truncf %285 : vector<8x8xf32> to vector<8x8xbf16>
    %287 = vector.extract_strided_slice %278 {offsets = [0, 0], sizes = [8, 8], strides = [1, 1]} : vector<8x32xf32> to vector<8x8xf32>
    %288 = arith.truncf %287 : vector<8x8xf32> to vector<8x8xbf16>
    %cst_102 = arith.constant dense<0.000000e+00> : vector<8x8xf32>
    %289 = tpu.matmul %286, %288, %cst_102 {dimension_numbers = #tpu.dot_dimension_numbers<[1], [1], [0], [0], [0, 0, 1, 0], [], []>} : vector<8x8xbf16>, vector<8x8xbf16>, vector<8x8xf32> -> vector<8x8xf32>
    %cst_103 = arith.constant 0.353553385 : f32
    %290 = vector.broadcast %cst_103 : f32 to vector<8x8xf32>
    %291 = arith.mulf %289, %290 : vector<8x8xf32>
    %292 = arith.addf %291, %281 : vector<8x8xf32>
    %cst_104 = arith.constant dense<0xFF800000> : vector<8xf32>
    %293 = vector.multi_reduction <maximumf>, %292, %cst_104 [1] : vector<8x8xf32> to vector<8xf32>
    %294 = vector.shape_cast %293 : vector<8xf32> to vector<8x1xf32>
    %295 = vector.broadcast %294 : vector<8x1xf32> to vector<8x8xf32>
    %296 = arith.subf %292, %295 : vector<8x8xf32>
    %297 = math.exp %296 : vector<8x8xf32>
    %cst_105 = arith.constant dense<0.000000e+00> : vector<8xf32>
    %298 = vector.multi_reduction <add>, %297, %cst_105 [1] : vector<8x8xf32> to vector<8xf32>
    %299 = vector.shape_cast %298 : vector<8xf32> to vector<8x1xf32>
    %300 = tpu.reciprocal %299 {approx = true} : vector<8x1xf32> -> vector<8x1xf32>
    %301 = vector.broadcast %300 : vector<8x1xf32> to vector<8x8xf32>
    %302 = arith.mulf %297, %301 : vector<8x8xf32>
    %303 = arith.truncf %302 : vector<8x8xf32> to vector<8x8xbf16>
    %304 = vector.extract_strided_slice %279 {offsets = [0, 0], sizes = [8, 8], strides = [1, 1]} : vector<8x32xf32> to vector<8x8xf32>
    %305 = arith.truncf %304 : vector<8x8xf32> to vector<8x8xbf16>
    %cst_106 = arith.constant dense<0.000000e+00> : vector<8x8xf32>
    %306 = tpu.matmul %303, %305, %cst_106 {dimension_numbers = #tpu.dot_dimension_numbers<[1], [0], [0], [1], [0, 0, 1, 1], [], []>} : vector<8x8xbf16>, vector<8x8xbf16>, vector<8x8xf32> -> vector<8x8xf32>
    %307 = arith.truncf %306 : vector<8x8xf32> to vector<8x8xbf16>
    %308 = vector.extract_strided_slice %282 {offsets = [0, 0], sizes = [8, 32], strides = [1, 1]} : vector<32x32xbf16> to vector<8x32xbf16>
    %cst_107 = arith.constant dense<0.000000e+00> : vector<8x32xf32>
    %309 = tpu.matmul %307, %308, %cst_107 {dimension_numbers = #tpu.dot_dimension_numbers<[1], [0], [0], [1], [0, 0, 1, 1], [], []>} : vector<8x8xbf16>, vector<8x32xbf16>, vector<8x32xf32> -> vector<8x32xf32>
    %310 = arith.addf %284, %309 : vector<8x32xf32>
    %311 = vector.extract_strided_slice %277 {offsets = [0, 8], sizes = [8, 8], strides = [1, 1]} : vector<8x32xf32> to vector<8x8xf32>
    %312 = arith.truncf %311 : vector<8x8xf32> to vector<8x8xbf16>
    %313 = vector.extract_strided_slice %278 {offsets = [0, 8], sizes = [8, 8], strides = [1, 1]} : vector<8x32xf32> to vector<8x8xf32>
    %314 = arith.truncf %313 : vector<8x8xf32> to vector<8x8xbf16>
    %cst_108 = arith.constant dense<0.000000e+00> : vector<8x8xf32>
    %315 = tpu.matmul %312, %314, %cst_108 {dimension_numbers = #tpu.dot_dimension_numbers<[1], [1], [0], [0], [0, 0, 1, 0], [], []>} : vector<8x8xbf16>, vector<8x8xbf16>, vector<8x8xf32> -> vector<8x8xf32>
    %cst_109 = arith.constant 0.353553385 : f32
    %316 = vector.broadcast %cst_109 : f32 to vector<8x8xf32>
    %317 = arith.mulf %315, %316 : vector<8x8xf32>
    %318 = arith.addf %317, %281 : vector<8x8xf32>
    %cst_110 = arith.constant dense<0xFF800000> : vector<8xf32>
    %319 = vector.multi_reduction <maximumf>, %318, %cst_110 [1] : vector<8x8xf32> to vector<8xf32>
    %320 = vector.shape_cast %319 : vector<8xf32> to vector<8x1xf32>
    %321 = vector.broadcast %320 : vector<8x1xf32> to vector<8x8xf32>
    %322 = arith.subf %318, %321 : vector<8x8xf32>
    %323 = math.exp %322 : vector<8x8xf32>
    %cst_111 = arith.constant dense<0.000000e+00> : vector<8xf32>
    %324 = vector.multi_reduction <add>, %323, %cst_111 [1] : vector<8x8xf32> to vector<8xf32>
    %325 = vector.shape_cast %324 : vector<8xf32> to vector<8x1xf32>
    %326 = tpu.reciprocal %325 {approx = true} : vector<8x1xf32> -> vector<8x1xf32>
    %327 = vector.broadcast %326 : vector<8x1xf32> to vector<8x8xf32>
    %328 = arith.mulf %323, %327 : vector<8x8xf32>
    %329 = arith.truncf %328 : vector<8x8xf32> to vector<8x8xbf16>
    %330 = vector.extract_strided_slice %279 {offsets = [0, 8], sizes = [8, 8], strides = [1, 1]} : vector<8x32xf32> to vector<8x8xf32>
    %331 = arith.truncf %330 : vector<8x8xf32> to vector<8x8xbf16>
    %cst_112 = arith.constant dense<0.000000e+00> : vector<8x8xf32>
    %332 = tpu.matmul %329, %331, %cst_112 {dimension_numbers = #tpu.dot_dimension_numbers<[1], [0], [0], [1], [0, 0, 1, 1], [], []>} : vector<8x8xbf16>, vector<8x8xbf16>, vector<8x8xf32> -> vector<8x8xf32>
    %333 = arith.truncf %332 : vector<8x8xf32> to vector<8x8xbf16>
    %334 = vector.extract_strided_slice %282 {offsets = [8, 0], sizes = [8, 32], strides = [1, 1]} : vector<32x32xbf16> to vector<8x32xbf16>
    %cst_113 = arith.constant dense<0.000000e+00> : vector<8x32xf32>
    %335 = tpu.matmul %333, %334, %cst_113 {dimension_numbers = #tpu.dot_dimension_numbers<[1], [0], [0], [1], [0, 0, 1, 1], [], []>} : vector<8x8xbf16>, vector<8x32xbf16>, vector<8x32xf32> -> vector<8x32xf32>
    %336 = arith.addf %310, %335 : vector<8x32xf32>
    %337 = vector.extract_strided_slice %277 {offsets = [0, 16], sizes = [8, 8], strides = [1, 1]} : vector<8x32xf32> to vector<8x8xf32>
    %338 = arith.truncf %337 : vector<8x8xf32> to vector<8x8xbf16>
    %339 = vector.extract_strided_slice %278 {offsets = [0, 16], sizes = [8, 8], strides = [1, 1]} : vector<8x32xf32> to vector<8x8xf32>
    %340 = arith.truncf %339 : vector<8x8xf32> to vector<8x8xbf16>
    %cst_114 = arith.constant dense<0.000000e+00> : vector<8x8xf32>
    %341 = tpu.matmul %338, %340, %cst_114 {dimension_numbers = #tpu.dot_dimension_numbers<[1], [1], [0], [0], [0, 0, 1, 0], [], []>} : vector<8x8xbf16>, vector<8x8xbf16>, vector<8x8xf32> -> vector<8x8xf32>
    %cst_115 = arith.constant 0.353553385 : f32
    %342 = vector.broadcast %cst_115 : f32 to vector<8x8xf32>
    %343 = arith.mulf %341, %342 : vector<8x8xf32>
    %344 = arith.addf %343, %281 : vector<8x8xf32>
    %cst_116 = arith.constant dense<0xFF800000> : vector<8xf32>
    %345 = vector.multi_reduction <maximumf>, %344, %cst_116 [1] : vector<8x8xf32> to vector<8xf32>
    %346 = vector.shape_cast %345 : vector<8xf32> to vector<8x1xf32>
    %347 = vector.broadcast %346 : vector<8x1xf32> to vector<8x8xf32>
    %348 = arith.subf %344, %347 : vector<8x8xf32>
    %349 = math.exp %348 : vector<8x8xf32>
    %cst_117 = arith.constant dense<0.000000e+00> : vector<8xf32>
    %350 = vector.multi_reduction <add>, %349, %cst_117 [1] : vector<8x8xf32> to vector<8xf32>
    %351 = vector.shape_cast %350 : vector<8xf32> to vector<8x1xf32>
    %352 = tpu.reciprocal %351 {approx = true} : vector<8x1xf32> -> vector<8x1xf32>
    %353 = vector.broadcast %352 : vector<8x1xf32> to vector<8x8xf32>
    %354 = arith.mulf %349, %353 : vector<8x8xf32>
    %355 = arith.truncf %354 : vector<8x8xf32> to vector<8x8xbf16>
    %356 = vector.extract_strided_slice %279 {offsets = [0, 16], sizes = [8, 8], strides = [1, 1]} : vector<8x32xf32> to vector<8x8xf32>
    %357 = arith.truncf %356 : vector<8x8xf32> to vector<8x8xbf16>
    %cst_118 = arith.constant dense<0.000000e+00> : vector<8x8xf32>
    %358 = tpu.matmul %355, %357, %cst_118 {dimension_numbers = #tpu.dot_dimension_numbers<[1], [0], [0], [1], [0, 0, 1, 1], [], []>} : vector<8x8xbf16>, vector<8x8xbf16>, vector<8x8xf32> -> vector<8x8xf32>
    %359 = arith.truncf %358 : vector<8x8xf32> to vector<8x8xbf16>
    %360 = vector.extract_strided_slice %282 {offsets = [16, 0], sizes = [8, 32], strides = [1, 1]} : vector<32x32xbf16> to vector<8x32xbf16>
    %cst_119 = arith.constant dense<0.000000e+00> : vector<8x32xf32>
    %361 = tpu.matmul %359, %360, %cst_119 {dimension_numbers = #tpu.dot_dimension_numbers<[1], [0], [0], [1], [0, 0, 1, 1], [], []>} : vector<8x8xbf16>, vector<8x32xbf16>, vector<8x32xf32> -> vector<8x32xf32>
    %362 = arith.addf %336, %361 : vector<8x32xf32>
    %363 = vector.extract_strided_slice %277 {offsets = [0, 24], sizes = [8, 8], strides = [1, 1]} : vector<8x32xf32> to vector<8x8xf32>
    %364 = arith.truncf %363 : vector<8x8xf32> to vector<8x8xbf16>
    %365 = vector.extract_strided_slice %278 {offsets = [0, 24], sizes = [8, 8], strides = [1, 1]} : vector<8x32xf32> to vector<8x8xf32>
    %366 = arith.truncf %365 : vector<8x8xf32> to vector<8x8xbf16>
    %cst_120 = arith.constant dense<0.000000e+00> : vector<8x8xf32>
    %367 = tpu.matmul %364, %366, %cst_120 {dimension_numbers = #tpu.dot_dimension_numbers<[1], [1], [0], [0], [0, 0, 1, 0], [], []>} : vector<8x8xbf16>, vector<8x8xbf16>, vector<8x8xf32> -> vector<8x8xf32>
    %cst_121 = arith.constant 0.353553385 : f32
    %368 = vector.broadcast %cst_121 : f32 to vector<8x8xf32>
    %369 = arith.mulf %367, %368 : vector<8x8xf32>
    %370 = arith.addf %369, %281 : vector<8x8xf32>
    %cst_122 = arith.constant dense<0xFF800000> : vector<8xf32>
    %371 = vector.multi_reduction <maximumf>, %370, %cst_122 [1] : vector<8x8xf32> to vector<8xf32>
    %372 = vector.shape_cast %371 : vector<8xf32> to vector<8x1xf32>
    %373 = vector.broadcast %372 : vector<8x1xf32> to vector<8x8xf32>
    %374 = arith.subf %370, %373 : vector<8x8xf32>
    %375 = math.exp %374 : vector<8x8xf32>
    %cst_123 = arith.constant dense<0.000000e+00> : vector<8xf32>
    %376 = vector.multi_reduction <add>, %375, %cst_123 [1] : vector<8x8xf32> to vector<8xf32>
    %377 = vector.shape_cast %376 : vector<8xf32> to vector<8x1xf32>
    %378 = tpu.reciprocal %377 {approx = true} : vector<8x1xf32> -> vector<8x1xf32>
    %379 = vector.broadcast %378 : vector<8x1xf32> to vector<8x8xf32>
    %380 = arith.mulf %375, %379 : vector<8x8xf32>
    %381 = arith.truncf %380 : vector<8x8xf32> to vector<8x8xbf16>
    %382 = vector.extract_strided_slice %279 {offsets = [0, 24], sizes = [8, 8], strides = [1, 1]} : vector<8x32xf32> to vector<8x8xf32>
    %383 = arith.truncf %382 : vector<8x8xf32> to vector<8x8xbf16>
    %cst_124 = arith.constant dense<0.000000e+00> : vector<8x8xf32>
    %384 = tpu.matmul %381, %383, %cst_124 {dimension_numbers = #tpu.dot_dimension_numbers<[1], [0], [0], [1], [0, 0, 1, 1], [], []>} : vector<8x8xbf16>, vector<8x8xbf16>, vector<8x8xf32> -> vector<8x8xf32>
    %385 = arith.truncf %384 : vector<8x8xf32> to vector<8x8xbf16>
    %386 = vector.extract_strided_slice %282 {offsets = [24, 0], sizes = [8, 32], strides = [1, 1]} : vector<32x32xbf16> to vector<8x32xbf16>
    %cst_125 = arith.constant dense<0.000000e+00> : vector<8x32xf32>
    %387 = tpu.matmul %385, %386, %cst_125 {dimension_numbers = #tpu.dot_dimension_numbers<[1], [0], [0], [1], [0, 0, 1, 1], [], []>} : vector<8x8xbf16>, vector<8x32xbf16>, vector<8x32xf32> -> vector<8x32xf32>
    %388 = arith.addf %362, %387 : vector<8x32xf32>
    %389 = vector.broadcast %283 : vector<1x32xf32> to vector<8x32xf32>
    %390 = arith.addf %388, %389 : vector<8x32xf32>
    %391 = arith.addf %390, %264 : vector<8x32xf32>
    %c0_126 = arith.constant 0 : index
    %c0_127 = arith.constant 0 : index
    %392 = vector.load %arg17[%c0_126, %c0_127] : memref<1x32xf32, #tpu.memory_space<vmem>>, vector<1x32xf32>
    %c0_128 = arith.constant 0 : index
    %c0_129 = arith.constant 0 : index
    %393 = vector.load %arg18[%c0_128, %c0_129] : memref<1x32xf32, #tpu.memory_space<vmem>>, vector<1x32xf32>
    %cst_130 = arith.constant dense<0.000000e+00> : vector<8xf32>
    %394 = vector.multi_reduction <add>, %391, %cst_130 [1] : vector<8x32xf32> to vector<8xf32>
    %395 = vector.shape_cast %394 : vector<8xf32> to vector<8x1xf32>
    %cst_131 = arith.constant 3.200000e+01 : f32
    %396 = vector.broadcast %cst_131 : f32 to vector<8x1xf32>
    %397 = arith.divf %395, %396 : vector<8x1xf32>
    %398 = vector.broadcast %397 : vector<8x1xf32> to vector<8x32xf32>
    %399 = arith.subf %391, %398 : vector<8x32xf32>
    %400 = arith.mulf %399, %399 : vector<8x32xf32>
    %cst_132 = arith.constant dense<0.000000e+00> : vector<8xf32>
    %401 = vector.multi_reduction <add>, %400, %cst_132 [1] : vector<8x32xf32> to vector<8xf32>
    %402 = vector.shape_cast %401 : vector<8xf32> to vector<8x1xf32>
    %cst_133 = arith.constant 3.200000e+01 : f32
    %403 = vector.broadcast %cst_133 : f32 to vector<8x1xf32>
    %404 = arith.divf %402, %403 : vector<8x1xf32>
    %405 = vector.broadcast %397 : vector<8x1xf32> to vector<8x32xf32>
    %406 = arith.subf %391, %405 : vector<8x32xf32>
    %cst_134 = arith.constant 9.99999974E-6 : f32
    %407 = vector.broadcast %cst_134 : f32 to vector<8x1xf32>
    %408 = arith.addf %404, %407 : vector<8x1xf32>
    %409 = math.rsqrt %408 : vector<8x1xf32>
    %410 = vector.broadcast %409 : vector<8x1xf32> to vector<8x32xf32>
    %411 = arith.mulf %406, %410 : vector<8x32xf32>
    %412 = vector.broadcast %392 : vector<1x32xf32> to vector<8x32xf32>
    %413 = arith.mulf %412, %411 : vector<8x32xf32>
    %414 = vector.broadcast %393 : vector<1x32xf32> to vector<8x32xf32>
    %415 = arith.addf %413, %414 : vector<8x32xf32>
    %c0_135 = arith.constant 0 : index
    %c0_136 = arith.constant 0 : index
    %416 = vector.load %arg19[%c0_135, %c0_136] : memref<32x64xbf16, #tpu.memory_space<vmem>>, vector<32x64xbf16>
    %c0_137 = arith.constant 0 : index
    %c0_138 = arith.constant 0 : index
    %417 = vector.load %arg20[%c0_137, %c0_138] : memref<1x64xf32, #tpu.memory_space<vmem>>, vector<1x64xf32>
    %c0_139 = arith.constant 0 : index
    %c0_140 = arith.constant 0 : index
    %418 = vector.load %arg21[%c0_139, %c0_140] : memref<64x32xbf16, #tpu.memory_space<vmem>>, vector<64x32xbf16>
    %c0_141 = arith.constant 0 : index
    %c0_142 = arith.constant 0 : index
    %419 = vector.load %arg22[%c0_141, %c0_142] : memref<1x32xf32, #tpu.memory_space<vmem>>, vector<1x32xf32>
    %c0_143 = arith.constant 0 : index
    %c0_144 = arith.constant 0 : index
    %420 = vector.load %arg23[%c0_143, %c0_144] : memref<1x32xf32, #tpu.memory_space<vmem>>, vector<1x32xf32>
    %c0_145 = arith.constant 0 : index
    %c0_146 = arith.constant 0 : index
    %421 = vector.load %arg24[%c0_145, %c0_146] : memref<1x32xf32, #tpu.memory_space<vmem>>, vector<1x32xf32>
    %422 = arith.truncf %415 : vector<8x32xf32> to vector<8x32xbf16>
    %cst_147 = arith.constant dense<0.000000e+00> : vector<8x64xf32>
    %423 = tpu.matmul %422, %416, %cst_147 {dimension_numbers = #tpu.dot_dimension_numbers<[1], [0], [0], [1], [0, 0, 1, 1], [], []>} : vector<8x32xbf16>, vector<32x64xbf16>, vector<8x64xf32> -> vector<8x64xf32>
    %424 = vector.broadcast %417 : vector<1x64xf32> to vector<8x64xf32>
    %425 = arith.addf %423, %424 : vector<8x64xf32>
    %cst_148 = arith.constant 0.000000e+00 : f32
    %426 = vector.broadcast %cst_148 : f32 to vector<8x64xf32>
    %427 = arith.maximumf %425, %426 : vector<8x64xf32>
    %428 = arith.truncf %427 : vector<8x64xf32> to vector<8x64xbf16>
    %cst_149 = arith.constant dense<0.000000e+00> : vector<8x32xf32>
    %429 = tpu.matmul %428, %418, %cst_149 {dimension_numbers = #tpu.dot_dimension_numbers<[1], [0], [0], [1], [0, 0, 1, 1], [], []>} : vector<8x64xbf16>, vector<64x32xbf16>, vector<8x32xf32> -> vector<8x32xf32>
    %430 = vector.broadcast %419 : vector<1x32xf32> to vector<8x32xf32>
    %431 = arith.addf %429, %430 : vector<8x32xf32>
    %432 = arith.addf %431, %415 : vector<8x32xf32>
    %cst_150 = arith.constant dense<0.000000e+00> : vector<8xf32>
    %433 = vector.multi_reduction <add>, %432, %cst_150 [1] : vector<8x32xf32> to vector<8xf32>
    %434 = vector.shape_cast %433 : vector<8xf32> to vector<8x1xf32>
    %cst_151 = arith.constant 3.200000e+01 : f32
    %435 = vector.broadcast %cst_151 : f32 to vector<8x1xf32>
    %436 = arith.divf %434, %435 : vector<8x1xf32>
    %437 = vector.broadcast %436 : vector<8x1xf32> to vector<8x32xf32>
    %438 = arith.subf %432, %437 : vector<8x32xf32>
    %439 = arith.mulf %438, %438 : vector<8x32xf32>
    %cst_152 = arith.constant dense<0.000000e+00> : vector<8xf32>
    %440 = vector.multi_reduction <add>, %439, %cst_152 [1] : vector<8x32xf32> to vector<8xf32>
    %441 = vector.shape_cast %440 : vector<8xf32> to vector<8x1xf32>
    %cst_153 = arith.constant 3.200000e+01 : f32
    %442 = vector.broadcast %cst_153 : f32 to vector<8x1xf32>
    %443 = arith.divf %441, %442 : vector<8x1xf32>
    %444 = vector.broadcast %436 : vector<8x1xf32> to vector<8x32xf32>
    %445 = arith.subf %432, %444 : vector<8x32xf32>
    %cst_154 = arith.constant 9.99999974E-6 : f32
    %446 = vector.broadcast %cst_154 : f32 to vector<8x1xf32>
    %447 = arith.addf %443, %446 : vector<8x1xf32>
    %448 = math.rsqrt %447 : vector<8x1xf32>
    %449 = vector.broadcast %448 : vector<8x1xf32> to vector<8x32xf32>
    %450 = arith.mulf %445, %449 : vector<8x32xf32>
    %451 = vector.broadcast %420 : vector<1x32xf32> to vector<8x32xf32>
    %452 = arith.mulf %451, %450 : vector<8x32xf32>
    %453 = vector.broadcast %421 : vector<1x32xf32> to vector<8x32xf32>
    %454 = arith.addf %452, %453 : vector<8x32xf32>
    %455 = arith.truncf %454 : vector<8x32xf32> to vector<8x32xbf16>
    %c0_155 = arith.constant 0 : index
    %c0_156 = arith.constant 0 : index
    %c0_157 = arith.constant 0 : index
    %456 = vector.load %arg25[%c0_155, %c0_156, %c0_157] : memref<1x8x32xbf16, #tpu.memory_space<vmem>>, vector<1x8x32xbf16>
    %457 = vector.shape_cast %456 : vector<1x8x32xbf16> to vector<8x32xbf16>
    %458 = vector.shape_cast %455 : vector<8x32xbf16> to vector<1x8x32xbf16>
    tpu.vector_store %arg25[%c0_155, %c0_156, %c0_157], %458 {strides = array<i32>} : memref<1x8x32xbf16, #tpu.memory_space<vmem>>, vector<1x8x32xbf16>,
    return
  }
  func.func @transform_0(%arg0: i32) -> (i32, i32, i32) {
    %c0_i32 = arith.constant 0 : i32
    %c0_i32_0 = arith.constant 0 : i32
    %c0_i32_1 = arith.constant 0 : i32
    return %arg0, %c0_i32, %c0_i32_0 : i32, i32, i32
  }
  func.func @transform_1(%arg0: i32) -> (i32, i32, i32) {
    %c0_i32 = arith.constant 0 : i32
    %c0_i32_0 = arith.constant 0 : i32
    %c0_i32_1 = arith.constant 0 : i32
    return %arg0, %c0_i32, %c0_i32_0 : i32, i32, i32
  }
  func.func @transform_2(%arg0: i32) -> (i32, i32, i32) {
    %c0_i32 = arith.constant 0 : i32
    %c0_i32_0 = arith.constant 0 : i32
    %c0_i32_1 = arith.constant 0 : i32
    return %arg0, %c0_i32, %c0_i32_0 : i32, i32, i32
  }
  func.func @transform_3(%arg0: i32) -> (i32, i32, i32) {
    %c0_i32 = arith.constant 0 : i32
    %c0_i32_0 = arith.constant 0 : i32
    %c0_i32_1 = arith.constant 0 : i32
    return %arg0, %c0_i32, %c0_i32_0 : i32, i32, i32
  }
  func.func @transform_4(%arg0: i32) -> (i32, i32) {
    %c0_i32 = arith.constant 0 : i32
    %c0_i32_0 = arith.constant 0 : i32
    %c0_i32_1 = arith.constant 0 : i32
    return %c0_i32, %c0_i32_0 : i32, i32
  }
  func.func @transform_5(%arg0: i32) -> (i32, i32) {
    %c0_i32 = arith.constant 0 : i32
    %c0_i32_0 = arith.constant 0 : i32
    %c0_i32_1 = arith.constant 0 : i32
    return %c0_i32, %c0_i32_0 : i32, i32
  }
  func.func @transform_6(%arg0: i32) -> (i32, i32) {
    %c0_i32 = arith.constant 0 : i32
    %c0_i32_0 = arith.constant 0 : i32
    %c0_i32_1 = arith.constant 0 : i32
    return %c0_i32, %c0_i32_0 : i32, i32
  }
  func.func @transform_7(%arg0: i32) -> (i32, i32) {
    %c0_i32 = arith.constant 0 : i32
    %c0_i32_0 = arith.constant 0 : i32
    %c0_i32_1 = arith.constant 0 : i32
    return %c0_i32, %c0_i32_0 : i32, i32
  }
  func.func @transform_8(%arg0: i32) -> (i32, i32) {
    %c0_i32 = arith.constant 0 : i32
    %c0_i32_0 = arith.constant 0 : i32
    %c0_i32_1 = arith.constant 0 : i32
    return %c0_i32, %c0_i32_0 : i32, i32
  }
  func.func @transform_9(%arg0: i32) -> (i32, i32) {
    %c0_i32 = arith.constant 0 : i32
    %c0_i32_0 = arith.constant 0 : i32
    %c0_i32_1 = arith.constant 0 : i32
    return %c0_i32, %c0_i32_0 : i32, i32
  }
  func.func @transform_10(%arg0: i32) -> (i32, i32) {
    %c0_i32 = arith.constant 0 : i32
    %c0_i32_0 = arith.constant 0 : i32
    %c0_i32_1 = arith.constant 0 : i32
    return %c0_i32, %c0_i32_0 : i32, i32
  }
  func.func @transform_11(%arg0: i32) -> (i32, i32) {
    %c0_i32 = arith.constant 0 : i32
    %c0_i32_0 = arith.constant 0 : i32
    %c0_i32_1 = arith.constant 0 : i32
    return %c0_i32, %c0_i32_0 : i32, i32
  }
  func.func @transform_12(%arg0: i32) -> (i32, i32) {
    %c0_i32 = arith.constant 0 : i32
    %c0_i32_0 = arith.constant 0 : i32
    %c0_i32_1 = arith.constant 0 : i32
    return %c0_i32, %c0_i32_0 : i32, i32
  }
  func.func @transform_13(%arg0: i32) -> (i32, i32) {
    %c0_i32 = arith.constant 0 : i32
    %c0_i32_0 = arith.constant 0 : i32
    %c0_i32_1 = arith.constant 0 : i32
    return %c0_i32, %c0_i32_0 : i32, i32
  }
  func.func @transform_14(%arg0: i32) -> (i32, i32) {
    %c0_i32 = arith.constant 0 : i32
    %c0_i32_0 = arith.constant 0 : i32
    %c0_i32_1 = arith.constant 0 : i32
    return %c0_i32, %c0_i32_0 : i32, i32
  }
  func.func @transform_15(%arg0: i32) -> (i32, i32) {
    %c0_i32 = arith.constant 0 : i32
    %c0_i32_0 = arith.constant 0 : i32
    %c0_i32_1 = arith.constant 0 : i32
    return %c0_i32, %c0_i32_0 : i32, i32
  }
  func.func @transform_16(%arg0: i32) -> (i32, i32) {
    %c0_i32 = arith.constant 0 : i32
    %c0_i32_0 = arith.constant 0 : i32
    %c0_i32_1 = arith.constant 0 : i32
    return %c0_i32, %c0_i32_0 : i32, i32
  }
  func.func @transform_17(%arg0: i32) -> (i32, i32) {
    %c0_i32 = arith.constant 0 : i32
    %c0_i32_0 = arith.constant 0 : i32
    %c0_i32_1 = arith.constant 0 : i32
    return %c0_i32, %c0_i32_0 : i32, i32
  }
  func.func @transform_18(%arg0: i32) -> (i32, i32) {
    %c0_i32 = arith.constant 0 : i32
    %c0_i32_0 = arith.constant 0 : i32
    %c0_i32_1 = arith.constant 0 : i32
    return %c0_i32, %c0_i32_0 : i32, i32
  }
  func.func @transform_19(%arg0: i32) -> (i32, i32) {
    %c0_i32 = arith.constant 0 : i32
    %c0_i32_0 = arith.constant 0 : i32
    %c0_i32_1 = arith.constant 0 : i32
    return %c0_i32, %c0_i32_0 : i32, i32
  }
  func.func @transform_20(%arg0: i32) -> (i32, i32) {
    %c0_i32 = arith.constant 0 : i32
    %c0_i32_0 = arith.constant 0 : i32
    %c0_i32_1 = arith.constant 0 : i32
    return %c0_i32, %c0_i32_0 : i32, i32
  }
  func.func @transform_21(%arg0: i32) -> (i32, i32) {
    %c0_i32 = arith.constant 0 : i32
    %c0_i32_0 = arith.constant 0 : i32
    %c0_i32_1 = arith.constant 0 : i32
    return %c0_i32, %c0_i32_0 : i32, i32
  }
  func.func @transform_22(%arg0: i32) -> (i32, i32) {
    %c0_i32 = arith.constant 0 : i32
    %c0_i32_0 = arith.constant 0 : i32
    %c0_i32_1 = arith.constant 0 : i32
    return %c0_i32, %c0_i32_0 : i32, i32
  }
  func.func @transform_23(%arg0: i32) -> (i32, i32) {
    %c0_i32 = arith.constant 0 : i32
    %c0_i32_0 = arith.constant 0 : i32
    %c0_i32_1 = arith.constant 0 : i32
    return %c0_i32, %c0_i32_0 : i32, i32
  }
  func.func @transform_24(%arg0: i32) -> (i32, i32, i32) {
    %c0_i32 = arith.constant 0 : i32
    %c0_i32_0 = arith.constant 0 : i32
    %c0_i32_1 = arith.constant 0 : i32
    return %arg0, %c0_i32, %c0_i32_0 : i32, i32, i32
  }
}

module attributes {stable_mosaic.version = 11 : i64} {
  func.func @kernel(%arg0: i32, %arg1: i32, %arg2: i32, %arg3: memref<16x128xbf16, #tpu.memory_space<vmem>>, %arg4: memref<128x128xbf16, #tpu.memory_space<vmem>>, %arg5: memref<1x128xf32, #tpu.memory_space<vmem>>, %arg6: memref<16x128xf32, #tpu.memory_space<vmem>>, %arg7: memref<16x128xf32, #tpu.memory_space<vmem>>) attributes {dimension_semantics = [#tpu.dimension_semantics<parallel>, #tpu.dimension_semantics<parallel>, #tpu.dimension_semantics<arbitrary>], iteration_bounds = array<i64: 1, 1, 1>, scalar_prefetch = 0 : i64, scratch_operands = 1 : i64, tpu.core_type = #tpu.core_type<tc>, window_params = [{transform_indices = @transform_0, window_bounds = array<i64: 16, 128>}, {transform_indices = @transform_1, window_bounds = array<i64: 128, 128>}, {transform_indices = @transform_2, window_bounds = array<i64: 1, 128>}, {transform_indices = @transform_3, window_bounds = array<i64: 16, 128>}]} {
    %c0_i32 = arith.constant 0 : i32
    %0 = arith.cmpi eq, %arg2, %c0_i32 : i32
    %1 = arith.extui %0 : i1 to i32
    %c0_i32_0 = arith.constant 0 : i32
    %2 = arith.cmpi ne, %1, %c0_i32_0 : i32
    scf.if %2 {
      %cst_10 = arith.constant 0.000000e+00 : f32
      %12 = vector.broadcast %cst_10 : f32 to vector<16x128xf32>
      %c0_11 = arith.constant 0 : index
      %c0_12 = arith.constant 0 : index
      %13 = vector.load %arg7[%c0_11, %c0_12] : memref<16x128xf32, #tpu.memory_space<vmem>>, vector<16x128xf32>
      tpu.vector_store %arg7[%c0_11, %c0_12], %12 {strides = array<i32>} : memref<16x128xf32, #tpu.memory_space<vmem>>, vector<16x128xf32>,
    } else {
    }
    %c0 = arith.constant 0 : index
    %c0_1 = arith.constant 0 : index
    %3 = vector.load %arg7[%c0, %c0_1] : memref<16x128xf32, #tpu.memory_space<vmem>>, vector<16x128xf32>
    %c0_2 = arith.constant 0 : index
    %c0_3 = arith.constant 0 : index
    %4 = vector.load %arg3[%c0_2, %c0_3] : memref<16x128xbf16, #tpu.memory_space<vmem>>, vector<16x128xbf16>
    %c0_4 = arith.constant 0 : index
    %c0_5 = arith.constant 0 : index
    %5 = vector.load %arg4[%c0_4, %c0_5] : memref<128x128xbf16, #tpu.memory_space<vmem>>, vector<128x128xbf16>
    %cst = arith.constant dense<0.000000e+00> : vector<16x128xf32>
    %6 = tpu.matmul %4, %5, %cst {dimension_numbers = #tpu.dot_dimension_numbers<[1], [0], [0], [1], [0, 0, 1, 1], [], []>} : vector<16x128xbf16>, vector<128x128xbf16>, vector<16x128xf32> -> vector<16x128xf32>
    %7 = arith.addf %3, %6 : vector<16x128xf32>
    %c0_6 = arith.constant 0 : index
    %c0_7 = arith.constant 0 : index
    %8 = vector.load %arg7[%c0_6, %c0_7] : memref<16x128xf32, #tpu.memory_space<vmem>>, vector<16x128xf32>
    tpu.vector_store %arg7[%c0_6, %c0_7], %7 {strides = array<i32>} : memref<16x128xf32, #tpu.memory_space<vmem>>, vector<16x128xf32>,
    %c0_i32_8 = arith.constant 0 : i32
    %9 = arith.cmpi eq, %arg2, %c0_i32_8 : i32
    %10 = arith.extui %9 : i1 to i32
    %c0_i32_9 = arith.constant 0 : i32
    %11 = arith.cmpi ne, %10, %c0_i32_9 : i32
    scf.if %11 {
      %c0_10 = arith.constant 0 : index
      %c0_11 = arith.constant 0 : index
      %12 = vector.load %arg7[%c0_10, %c0_11] : memref<16x128xf32, #tpu.memory_space<vmem>>, vector<16x128xf32>
      %c0_12 = arith.constant 0 : index
      %c0_13 = arith.constant 0 : index
      %13 = vector.load %arg5[%c0_12, %c0_13] : memref<1x128xf32, #tpu.memory_space<vmem>>, vector<1x128xf32>
      %14 = vector.broadcast %13 : vector<1x128xf32> to vector<16x128xf32>
      %15 = arith.addf %12, %14 : vector<16x128xf32>
      %c0_14 = arith.constant 0 : index
      %c0_15 = arith.constant 0 : index
      %16 = vector.load %arg6[%c0_14, %c0_15] : memref<16x128xf32, #tpu.memory_space<vmem>>, vector<16x128xf32>
      tpu.vector_store %arg6[%c0_14, %c0_15], %15 {strides = array<i32>} : memref<16x128xf32, #tpu.memory_space<vmem>>, vector<16x128xf32>,
    } else {
    }
    return
  }
  func.func @transform_0(%arg0: i32, %arg1: i32, %arg2: i32) -> (i32, i32) {
    %c0_i32 = arith.constant 0 : i32
    return %arg0, %arg2 : i32, i32
  }
  func.func @transform_1(%arg0: i32, %arg1: i32, %arg2: i32) -> (i32, i32) {
    %c0_i32 = arith.constant 0 : i32
    return %arg2, %arg1 : i32, i32
  }
  func.func @transform_2(%arg0: i32, %arg1: i32, %arg2: i32) -> (i32, i32) {
    %c0_i32 = arith.constant 0 : i32
    %c0_i32_0 = arith.constant 0 : i32
    return %c0_i32, %arg1 : i32, i32
  }
  func.func @transform_3(%arg0: i32, %arg1: i32, %arg2: i32) -> (i32, i32) {
    %c0_i32 = arith.constant 0 : i32
    return %arg0, %arg1 : i32, i32
  }
}

</mosaic_0001>

<llo_original>
// kernel: transformer_forward.5
$region0: #{transformer_forward.5}
  #allocation0 [shape = 'u32[]', space=smem, size = 0x4, offset = 0x4, fixed_abs, tag = 'smem constant byte address 0x4 - core index']
  #allocation1 [shape = 'u32[144,128]{1,0:T(1,128)}', space=vmem, size = 0x12000, scoped, tag = 'internal scratch']
  #allocation2 [shape = 'f32[16,128]{1,0:T(8,128)}', space=vmem, size = 0x2000, scoped, tag = 'scratch operand']
  %s0 = inlined_call_operand.hbm [shape: bf16[16,128], index: 0, kind: input, shape index: {}]
  %s1 = inlined_call_operand.hbm [shape: bf16[128,128], index: 1, kind: input, shape index: {}]
  %s2 = inlined_call_operand.hbm [shape: f32[1,128], index: 2, kind: input, shape index: {}]
  %s3 = inlined_call_operand.hbm [shape: f32[16,128], index: 3, kind: output, shape index: {}]
  %s4 = sld [smem:[#allocation0]]
  $region42: #{transformer_forward.5} parent=0
    _
  %s6 = ssub.s32 1, %s4
  %s7 = scalar_select 0, %s6, %s4
  $region1: #{transformer_forward.5} parent=0
    #allocation3 [shape = 'u8[4096]{0}', space=vmem, size = 0x1000, scoped, tag = 'input window, operand 0, single buffered']
    #allocation4 [shape = 's32[1]{0}', space=sflag, size = 0x4, scoped, tag = 'scoped memory for transformer_forward.5']
    #allocation5 [shape = 's32[1]{0}', space=sflag, size = 0x4, scoped, tag = 'scoped memory for transformer_forward.5']
    #allocation6 [shape = 'u8[32768]{0}', space=vmem, size = 0x8000, scoped, tag = 'input window, operand 1, single buffered']
    #allocation7 [shape = 's32[1]{0}', space=sflag, size = 0x4, scoped, tag = 'scoped memory for transformer_forward.5']
    #allocation8 [shape = 'u8[512]{0}', space=vmem, size = 0x400, scoped, tag = 'input window, operand 2, single buffered']
    #allocation9 [shape = 'u8[8192]{0}', space=vmem, size = 0x2000, scoped, tag = 'output window, operand 0, single buffered']
    %8 = vsyncpa [#allocation4], 0
    %9 = vsyncpa [#allocation7], 0
    %10 = vsyncpa [#allocation5], 0
    // Predicated region
    $region2: #{transformer_forward.5} parent=1 // pred_check
      _
    $region3: #{transformer_forward.5} parent=1 // pred_check_branch
      %12 = sbr.rel (0) target = $region5
    $region4: #{transformer_forward.5} parent=1 // pred_region
      %s14 = ssub.s32 128, 128
      %15 = vsyncadd [#allocation4], %s14
      %s16 = sshll.u32 [#allocation3], 4
      %s17 = int_to_ptr.vmem [resolvable:$true] %s16
      %22 = dma.hbm_to_vmem [thread:$0]  %s0, 128, %s17, [#allocation4], 64, 64, 4
    $region5: #{transformer_forward.5} parent=1 // pred_fallthru
      _
    // Predicated region
    $region6: #{transformer_forward.5} parent=1 // pred_check
      _
    $region7: #{transformer_forward.5} parent=1 // pred_check_branch
      %24 = sbr.rel (0) target = $region9
    $region8: #{transformer_forward.5} parent=1 // pred_region
      %s26 = ssub.s32 1024, 1024
      %27 = vsyncadd [#allocation7], %s26
      %s28 = sshll.u32 [#allocation6], 4
      %s29 = int_to_ptr.vmem [resolvable:$true] %s28
      %34 = dma.hbm_to_vmem [thread:$0]  %s1, 1024, %s29, [#allocation7], 64, 64, 4
    $region9: #{transformer_forward.5} parent=1 // pred_fallthru
      _
    // Predicated region
    $region10: #{transformer_forward.5} parent=1 // pred_check
      _
    $region11: #{transformer_forward.5} parent=1 // pred_check_branch
      %36 = sbr.rel (0) target = $region13
    $region12: #{transformer_forward.5} parent=1 // pred_region
      %s38 = ssub.s32 16, 16
      %39 = vsyncadd [#allocation7], %s38
      %s41 = sshll.u32 [#allocation8], 4
      %s42 = int_to_ptr.vmem [resolvable:$true] %s41
      %44 = dma.hbm_to_vmem [thread:$0]  %s2, 16, %s42, [#allocation7]
    $region13: #{transformer_forward.5} parent=1 // pred_fallthru
      _
    // Predicated region
    $region14: #{transformer_forward.5} parent=1 // pred_check
      _
    $region15: #{transformer_forward.5} parent=1 // pred_check_branch
      %46 = sbr.rel (0) target = $region17
    $region16: #{transformer_forward.5} parent=1 // pred_region
      %47 = dma.done [#allocation4], 128
    $region17: #{transformer_forward.5} parent=1 // pred_fallthru
      _
    // Predicated region
    $region18: #{transformer_forward.5} parent=1 // pred_check
      _
    $region19: #{transformer_forward.5} parent=1 // pred_check_branch
      %49 = sbr.rel (0) target = $region21
    $region20: #{transformer_forward.5} parent=1 // pred_region
      %50 = dma.done [#allocation7], 1024
    $region21: #{transformer_forward.5} parent=1 // pred_fallthru
      _
    // Predicated region
    $region22: #{transformer_forward.5} parent=1 // pred_check
      _
    $region23: #{transformer_forward.5} parent=1 // pred_check_branch
      %52 = sbr.rel (0) target = $region25
    $region24: #{transformer_forward.5} parent=1 // pred_region
      %53 = dma.done [#allocation7], 16
    $region25: #{transformer_forward.5} parent=1 // pred_fallthru
      _
    %p55 = scmp.eq.s32.totalorder 0, 0
    // Predicated region
    $region26: #{transformer_forward.5} parent=1 // pred_check
      %p56 = pneg %p55
    $region27: #{transformer_forward.5} parent=1 // pred_check_branch
      %58 = sbr.rel (%p56) target = $region29
    $region28: #{transformer_forward.5} parent=1 // pred_region
      %59 = vst [vmem:[#allocation2] sm:$0xff] 0.0
      %60 = vst [vmem:[#allocation2 + $0x8] sm:$0xff] 0.0
    $region29: #{transformer_forward.5} parent=1 // pred_fallthru
      _
    %v61 = vld [vmem:[#allocation2] sm:$0xff]
    %v62 = vld [vmem:[#allocation2 + $0x8] sm:$0xff]
    %v63 = vld [vmem:[#allocation3] sm:$0xf]
    %v64 = vld [vmem:[#allocation3 + $0x4] sm:$0xf]
    %v65 = vld [vmem:[#allocation6] sm:$0xf]
    %v66 = vld [vmem:[#allocation6 + $0x4] sm:$0xf]
    %v67 = vld [vmem:[#allocation6 + $0x8] sm:$0xf]
    %v68 = vld [vmem:[#allocation6 + $0xc] sm:$0xf]
    %v69 = vld [vmem:[#allocation6 + $0x10] sm:$0xf]
    %v70 = vld [vmem:[#allocation6 + $0x14] sm:$0xf]
    %v71 = vld [vmem:[#allocation6 + $0x18] sm:$0xf]
    %v72 = vld [vmem:[#allocation6 + $0x1c] sm:$0xf]
    %v73 = vld [vmem:[#allocation6 + $0x20] sm:$0xf]
    %v74 = vld [vmem:[#allocation6 + $0x24] sm:$0xf]
    %v75 = vld [vmem:[#allocation6 + $0x28] sm:$0xf]
    %v76 = vld [vmem:[#allocation6 + $0x2c] sm:$0xf]
    %v77 = vld [vmem:[#allocation6 + $0x30] sm:$0xf]
    %v78 = vld [vmem:[#allocation6 + $0x34] sm:$0xf]
    %v79 = vld [vmem:[#allocation6 + $0x38] sm:$0xf]
    %v80 = vld [vmem:[#allocation6 + $0x3c] sm:$0xf]
    %v83 = vunpack.c.l.b16 %v63
    %v84 = vunpack.c.l.b16 %v64
    %v85 = vpack.c.b16 %v84, %v83
    %v103 = vunpack.c.l.b16 %v65
    %v104 = vunpack.c.l.b16 %v66
    %v105 = vunpack.c.l.b16 %v67
    %v106 = vunpack.c.l.b16 %v68
    %v107 = vunpack.c.l.b16 %v69
    %v108 = vunpack.c.l.b16 %v70
    %v109 = vunpack.c.l.b16 %v71
    %v110 = vunpack.c.l.b16 %v72
    %v111 = vunpack.c.l.b16 %v73
    %v112 = vunpack.c.l.b16 %v74
    %v113 = vunpack.c.l.b16 %v75
    %v114 = vunpack.c.l.b16 %v76
    %v115 = vunpack.c.l.b16 %v77
    %v116 = vunpack.c.l.b16 %v78
    %v117 = vunpack.c.l.b16 %v79
    %v118 = vunpack.c.l.b16 %v80
    %v119 = vpack.c.b16 %v104, %v103
    %v120 = vpack.c.b16 %v106, %v105
    %v121 = vpack.c.b16 %v108, %v107
    %v122 = vpack.c.b16 %v110, %v109
    %v123 = vpack.c.b16 %v112, %v111
    %v124 = vpack.c.b16 %v114, %v113
    %v125 = vpack.c.b16 %v116, %v115
    %v126 = vpack.c.b16 %v118, %v117
    %135 = vmatprep.subr.bf16.mxu0 0
    %136 = vmatpush1.bf16.msra.mxu0 %v119
    %137 = vmatprep.subr.bf16.mxu0 0
    %138 = vmatpush1.bf16.msra.mxu0 %v120
    %139 = vmatprep.subr.bf16.mxu0 0
    %140 = vmatpush1.bf16.msra.mxu0 %v121
    %141 = vmatprep.subr.bf16.mxu0 0
    %142 = vmatpush1.bf16.msra.mxu0 %v122
    %143 = vmatprep.subr.bf16.mxu0 0
    %144 = vmatpush1.bf16.msra.mxu0 %v123
    %145 = vmatprep.subr.bf16.mxu0 0
    %146 = vmatpush1.bf16.msra.mxu0 %v124
    %147 = vmatprep.subr.bf16.mxu0 0
    %148 = vmatpush1.bf16.msra.mxu0 %v125
    %149 = vmatprep.subr.bf16.mxu0 0
    %150 = vmatpush1.bf16.msra.mxu0 %v126
    %151 = vmatprep.subr.bf16.mxu0 0
    %152 = vmatpush1.bf16.msra.mxu0 0
    %153 = vmatprep.subr.bf16.mxu0 0
    %154 = vmatpush1.bf16.msra.mxu0 0
    %155 = vmatprep.subr.bf16.mxu0 0
    %156 = vmatpush1.bf16.msra.mxu0 0
    %157 = vmatprep.subr.bf16.mxu0 0
    %158 = vmatpush1.bf16.msra.mxu0 0
    %159 = vmatprep.subr.bf16.mxu0 0
    %160 = vmatpush1.bf16.msra.mxu0 0
    %161 = vmatprep.subr.bf16.mxu0 0
    %162 = vmatpush1.bf16.msra.mxu0 0
    %163 = vmatprep.subr.bf16.mxu0 0
    %164 = vmatpush1.bf16.msra.mxu0 0
    %165 = vmatprep.subr.bf16.mxu0 0
    %166 = vmatpush1.bf16.msra.mxu0 0
    %167 = vmatprep.mubr.bf16.mxu0 0
    %168 = vmatmul.mubr.bf16.gmra.mrb[0].mxu0 %v85
    %v169 = vpop.f32.mrb[0].mxu0
    %v170 = vadd.f32 0.0, %v169
    %v171 = vpop.f32.mrb[0].mxu0
    %v172 = vpop.f32.mrb[0].mxu0
    %v173 = vadd.f32 0.0, %v172
    %v174 = vpop.f32.mrb[0].mxu0
    %175 = vdwg.mxu0
    %v176 = vadd.f32 %v61, %v170
    %v177 = vadd.f32 %v62, %v173
    %178 = vst [vmem:[#allocation2] sm:$0xff] %v176
    %179 = vst [vmem:[#allocation2 + $0x8] sm:$0xff] %v177
    // Predicated region
    $region30: #{transformer_forward.5} parent=1 // pred_check
      %p180 = pneg %p55
    $region31: #{transformer_forward.5} parent=1 // pred_check_branch
      %182 = sbr.rel (%p180) target = $region33
    $region32: #{transformer_forward.5} parent=1 // pred_region
      %v183 = vld [vmem:[#allocation2] sm:$0xff]
      %v184 = vld [vmem:[#allocation2 + $0x8] sm:$0xff]
      %v185 = vld [vmem:[#allocation8] sm:$0x1]
      %v187 = vlaneseq
      %v188 = vshrl.u32 %v187, 7
      %v189 = vsub.s32 0, %v188
      %v190 = vrot.slane %v185, %v189
      %v192 = vadd.f32 %v183, %v190
      %v193 = vadd.f32 %v184, %v190
      %194 = vst [vmem:[#allocation9] sm:$0xff] %v192
      %195 = vst [vmem:[#allocation9 + $0x8] sm:$0xff] %v193
    $region33: #{transformer_forward.5} parent=1 // pred_fallthru
      _
    // Predicated region
    $region34: #{transformer_forward.5} parent=1 // pred_check
      _
    $region35: #{transformer_forward.5} parent=1 // pred_check_branch
      %197 = sbr.rel (0) target = $region37
    $region36: #{transformer_forward.5} parent=1 // pred_region
      %s199 = ssub.s32 256, 256
      %200 = vsyncadd [#allocation5], %s199
      %s201 = sshll.u32 [#allocation9], 4
      %s202 = int_to_ptr.vmem [resolvable:$true] %s201
      %207 = dma.vmem_to_hbm [thread:$0]  %s202, 256, %s3, [#allocation5], 128, 128, 8
    $region37: #{transformer_forward.5} parent=1 // pred_fallthru
      _
    // Predicated region
    $region38: #{transformer_forward.5} parent=1 // pred_check
      _
    $region39: #{transformer_forward.5} parent=1 // pred_check_branch
      %209 = sbr.rel (0) target = $region41
    $region40: #{transformer_forward.5} parent=1 // pred_region
      %210 = dma.done [#allocation5], 256
    $region41: #{transformer_forward.5} parent=1 // pred_fallthru
      _
    %211 = vsyncpa [#allocation4], 1
    %212 = vsyncpa [#allocation7], 1
    %213 = vsyncpa [#allocation5], 1

// kernel: transformer_forward.3
$region0: #{transformer_forward.3}
  #allocation0 [shape = 'u32[]', space=smem, size = 0x4, offset = 0x4, fixed_abs, tag = 'smem constant byte address 0x4 - core index']
  #allocation1 [shape = 'u32[144,128]{1,0:T(1,128)}', space=vmem, size = 0x12000, scoped, tag = 'internal scratch']
  %s0 = inlined_call_operand.hbm [shape: bf16[2,8,32], index: 0, kind: input, shape index: {}]
  %s1 = inlined_call_operand.hbm [shape: f32[2,8,8], index: 1, kind: input, shape index: {}]
  %s2 = inlined_call_operand.hbm [shape: bf16[32,96], index: 2, kind: input, shape index: {}]
  %s3 = inlined_call_operand.hbm [shape: f32[1,96], index: 3, kind: input, shape index: {}]
  %s4 = inlined_call_operand.hbm [shape: bf16[32,32], index: 4, kind: input, shape index: {}]
  %s5 = inlined_call_operand.hbm [shape: f32[1,32], index: 5, kind: input, shape index: {}]
  %s6 = inlined_call_operand.hbm [shape: f32[1,32], index: 6, kind: input, shape index: {}]
  %s7 = inlined_call_operand.hbm [shape: f32[1,32], index: 7, kind: input, shape index: {}]
  %s8 = inlined_call_operand.hbm [shape: bf16[32,64], index: 8, kind: input, shape index: {}]
  %s9 = inlined_call_operand.hbm [shape: f32[1,64], index: 9, kind: input, shape index: {}]
  %s10 = inlined_call_operand.hbm [shape: bf16[64,32], index: 10, kind: input, shape index: {}]
  %s11 = inlined_call_operand.hbm [shape: f32[1,32], index: 11, kind: input, shape index: {}]
  %s12 = inlined_call_operand.hbm [shape: f32[1,32], index: 12, kind: input, shape index: {}]
  %s13 = inlined_call_operand.hbm [shape: f32[1,32], index: 13, kind: input, shape index: {}]
  %s14 = inlined_call_operand.hbm [shape: bf16[2,8,32], index: 14, kind: output, shape index: {}]
  %s15 = sld [smem:[#allocation0]]
  $region145: #{transformer_forward.3} parent=0
    _
  %s17 = ssub.s32 1, %s15
  %s18 = scalar_select 0, %s17, %s15
  $region1: #{transformer_forward.3} parent=0
    #allocation2 [shape = 'u8[4096]{0}', space=vmem, size = 0x1000, scoped, tag = 'input window, operand 0']
    #allocation3 [shape = 's32[2]{0}', space=sflag, size = 0x8, scoped, tag = 'scoped memory for transformer_forward.3']
    #allocation4 [shape = 's32[2]{0}', space=sflag, size = 0x8, scoped, tag = 'scoped memory for transformer_forward.3']
    #allocation5 [shape = 'u8[8192]{0}', space=vmem, size = 0x2000, scoped, tag = 'input window, operand 1']
    #allocation6 [shape = 's32[2]{0}', space=sflag, size = 0x8, scoped, tag = 'scoped memory for transformer_forward.3']
    #allocation7 [shape = 'u8[8192]{0}', space=vmem, size = 0x2000, scoped, tag = 'input window, operand 2, single buffered']
    #allocation8 [shape = 'u8[512]{0}', space=vmem, size = 0x400, scoped, tag = 'input window, operand 3, single buffered']
    #allocation9 [shape = 's32[1]{0}', space=sflag, size = 0x4, scoped, tag = 'scoped memory for transformer_forward.3']
    #allocation10 [shape = 'u8[8192]{0}', space=vmem, size = 0x2000, scoped, tag = 'input window, operand 4, single buffered']
    #allocation11 [shape = 'u8[512]{0}', space=vmem, size = 0x400, scoped, tag = 'input window, operand 5, single buffered']
    #allocation12 [shape = 's32[1]{0}', space=sflag, size = 0x4, scoped, tag = 'scoped memory for transformer_forward.3']
    #allocation13 [shape = 'u8[512]{0}', space=vmem, size = 0x400, scoped, tag = 'input window, operand 6, single buffered']
    #allocation14 [shape = 'u8[512]{0}', space=vmem, size = 0x400, scoped, tag = 'input window, operand 7, single buffered']
    #allocation15 [shape = 's32[1]{0}', space=sflag, size = 0x4, scoped, tag = 'scoped memory for transformer_forward.3']
    #allocation16 [shape = 'u8[8192]{0}', space=vmem, size = 0x2000, scoped, tag = 'input window, operand 8, single buffered']
    #allocation17 [shape = 'u8[512]{0}', space=vmem, size = 0x400, scoped, tag = 'input window, operand 9, single buffered']
    #allocation18 [shape = 's32[1]{0}', space=sflag, size = 0x4, scoped, tag = 'scoped memory for transformer_forward.3']
    #allocation19 [shape = 'u8[16384]{0}', space=vmem, size = 0x4000, scoped, tag = 'input window, operand 10, single buffered']
    #allocation20 [shape = 'u8[512]{0}', space=vmem, size = 0x400, scoped, tag = 'input window, operand 11, single buffered']
    #allocation21 [shape = 's32[1]{0}', space=sflag, size = 0x4, scoped, tag = 'scoped memory for transformer_forward.3']
    #allocation22 [shape = 'u8[512]{0}', space=vmem, size = 0x400, scoped, tag = 'input window, operand 12, single buffered']
    #allocation23 [shape = 'u8[512]{0}', space=vmem, size = 0x400, scoped, tag = 'input window, operand 13, single buffered']
    #allocation24 [shape = 's32[1]{0}', space=sflag, size = 0x4, scoped, tag = 'scoped memory for transformer_forward.3']
    #allocation25 [shape = 'u8[4096]{0}', space=vmem, size = 0x1000, scoped, tag = 'output window, operand 0']
    %19 = vsyncpa [#allocation3], 0
    %s20 = scalar_lea.sflag [#allocation3], 1
    %21 = vsyncpa %s20, 0
    %22 = vsyncpa [#allocation6], 0
    %s23 = scalar_lea.sflag [#allocation6], 1
    %24 = vsyncpa %s23, 0
    %25 = vsyncpa [#allocation9], 0
    %26 = vsyncpa [#allocation12], 0
    %27 = vsyncpa [#allocation15], 0
    %28 = vsyncpa [#allocation18], 0
    %29 = vsyncpa [#allocation21], 0
    %30 = vsyncpa [#allocation24], 0
    %31 = vsyncpa [#allocation4], 0
    %s32 = scalar_lea.sflag [#allocation4], 1
    %33 = vsyncpa %s32, 0
    loop: start=0, step=1, limit=4
    $region2: #{transformer_forward.3} parent=1 // loop_pre_header
      _
    $region3: #{transformer_forward.3} parent=1 // loop_header
      %s35 = sphi 0, %s39
      %p36 = scmp.ge.s32.totalorder %s35, 4
      %s45 = sphi 0, %s47
      %s48 = sphi 0, %s45
      %s49 = sphi 0, %s48
      %s65 = sphi 0, %s49
      %s71 = sphi 0, %s73
      %s74 = sphi 0, %s71
      %s75 = sphi 0, %s74
      %s91 = sphi 0, %s75
      %s95 = sphi 0, %s95
      %s97 = sphi 0, %s95
      %s98 = sphi 0, %s97
      %s112 = sphi 0, %s98
      %s116 = sphi 0, %s116
      %s118 = sphi 0, %s116
      %s119 = sphi 0, %s118
      %s133 = sphi 0, %s119
      %s137 = sphi 0, %s137
      %s139 = sphi 0, %s137
      %s140 = sphi 0, %s139
      %s154 = sphi 0, %s140
      %s158 = sphi 0, %s158
      %s160 = sphi 0, %s158
      %s161 = sphi 0, %s160
      %s175 = sphi 0, %s161
      %s179 = sphi 0, %s179
      %s181 = sphi 0, %s179
      %s182 = sphi 0, %s181
      %s196 = sphi 0, %s182
      %s200 = sphi 0, %s200
      %s202 = sphi 0, %s200
      %s203 = sphi 0, %s202
      %s217 = sphi 0, %s203
      %s221 = sphi 0, %s221
      %s223 = sphi 0, %s221
      %s224 = sphi 0, %s223
      %s238 = sphi 0, %s224
      %s242 = sphi 0, %s242
      %s244 = sphi 0, %s242
      %s245 = sphi 0, %s244
      %s259 = sphi 0, %s245
      %s263 = sphi 0, %s263
      %s265 = sphi 0, %s263
      %s266 = sphi 0, %s265
      %s280 = sphi 0, %s266
      %s284 = sphi 0, %s284
      %s286 = sphi 0, %s284
      %s287 = sphi 0, %s286
      %s301 = sphi 0, %s287
      %s305 = sphi 0, %s305
      %s307 = sphi 0, %s305
      %s308 = sphi 0, %s307
      %s322 = sphi 0, %s308
      %s326 = sphi 0, %s326
      %s328 = sphi 0, %s326
      %s329 = sphi 0, %s328
      %s343 = sphi 0, %s329
      %s349 = sphi 0, %s351
      %s352 = sphi 0, %s349
      %s353 = sphi 0, %s352
      %s369 = sphi 0, %s353
    $region4: #{transformer_forward.3} parent=1 // loop_header_branch
      %38 = sbr.rel (%p36) target = $region8
    $region5: #{transformer_forward.3} parent=1 // loop_body
      %s40 = ssub.s32 %s35, 1
      %s41 = ssub.s32 %s35, 2
      %s42 = sadd.s32 %s35, 1
      %s43 = ssub.s32 %s35, %s42
      %p44 = scmp.eq.s32.totalorder %s43, 0
      %s46 = sadd.s32 %s45, 1
      %s47 = scalar_select %p44, %s45, %s46
      %p50 = pneg %p44
      %p51 = scmp.eq.s32.totalorder %s35, 1
      %p52 = por %p50, %p51
      %p53 = scmp.ne.s32.totalorder %s45, %s48
      %p54 = scmp.eq.s32.totalorder %s35, 0
      %p55 = por %p53, %p54
      %p56 = scmp.ne.s32.totalorder %s45, %s48
      %p57 = scmp.eq.s32.totalorder %s40, 1
      %p58 = por %p56, %p57
      %p59 = scmp.ne.s32.totalorder %s48, %s49
      %p60 = scmp.eq.s32.totalorder %s40, 0
      %p61 = por %p59, %p60
      %p62 = scmp.ne.s32.totalorder %s48, %s49
      %p63 = scmp.eq.s32.totalorder %s41, 1
      %p64 = por %p62, %p63
      %p66 = scmp.ne.s32.totalorder %s49, %s65
      %p67 = scmp.eq.s32.totalorder %s41, 0
      %p68 = por %p66, %p67
      %s69 = ssub.s32 %s35, %s42
      %p70 = scmp.eq.s32.totalorder %s69, 0
      %s72 = sadd.s32 %s71, 1
      %s73 = scalar_select %p70, %s71, %s72
      %p76 = pneg %p70
      %p77 = scmp.eq.s32.totalorder %s35, 1
      %p78 = por %p76, %p77
      %p79 = scmp.ne.s32.totalorder %s71, %s74
      %p80 = scmp.eq.s32.totalorder %s35, 0
      %p81 = por %p79, %p80
      %p82 = scmp.ne.s32.totalorder %s71, %s74
      %p83 = scmp.eq.s32.totalorder %s40, 1
      %p84 = por %p82, %p83
      %p85 = scmp.ne.s32.totalorder %s74, %s75
      %p86 = scmp.eq.s32.totalorder %s40, 0
      %p87 = por %p85, %p86
      %p88 = scmp.ne.s32.totalorder %s74, %s75
      %p89 = scmp.eq.s32.totalorder %s41, 1
      %p90 = por %p88, %p89
      %p92 = scmp.ne.s32.totalorder %s75, %s91
      %p93 = scmp.eq.s32.totalorder %s41, 0
      %p94 = por %p92, %p93
      %s96 = sadd.s32 %s95, 1
      %p99 = scmp.eq.s32.totalorder %s35, 1
      %p100 = scmp.ne.s32.totalorder %s95, %s97
      %p101 = scmp.eq.s32.totalorder %s35, 0
      %p102 = por %p100, %p101
      %p103 = scmp.ne.s32.totalorder %s95, %s97
      %p104 = scmp.eq.s32.totalorder %s40, 1
      %p105 = por %p103, %p104
      %p106 = scmp.ne.s32.totalorder %s97, %s98
      %p107 = scmp.eq.s32.totalorder %s40, 0
      %p108 = por %p106, %p107
      %p109 = scmp.ne.s32.totalorder %s97, %s98
      %p110 = scmp.eq.s32.totalorder %s41, 1
      %p111 = por %p109, %p110
      %p113 = scmp.ne.s32.totalorder %s98, %s112
      %p114 = scmp.eq.s32.totalorder %s41, 0
      %p115 = por %p113, %p114
      %s117 = sadd.s32 %s116, 1
      %p120 = scmp.eq.s32.totalorder %s35, 1
      %p121 = scmp.ne.s32.totalorder %s116, %s118
      %p122 = scmp.eq.s32.totalorder %s35, 0
      %p123 = por %p121, %p122
      %p124 = scmp.ne.s32.totalorder %s116, %s118
      %p125 = scmp.eq.s32.totalorder %s40, 1
      %p126 = por %p124, %p125
      %p127 = scmp.ne.s32.totalorder %s118, %s119
      %p128 = scmp.eq.s32.totalorder %s40, 0
      %p129 = por %p127, %p128
      %p130 = scmp.ne.s32.totalorder %s118, %s119
      %p131 = scmp.eq.s32.totalorder %s41, 1
      %p132 = por %p130, %p131
      %p134 = scmp.ne.s32.totalorder %s119, %s133
      %p135 = scmp.eq.s32.totalorder %s41, 0
      %p136 = por %p134, %p135
      %s138 = sadd.s32 %s137, 1
      %p141 = scmp.eq.s32.totalorder %s35, 1
      %p142 = scmp.ne.s32.totalorder %s137, %s139
      %p143 = scmp.eq.s32.totalorder %s35, 0
      %p144 = por %p142, %p143
      %p145 = scmp.ne.s32.totalorder %s137, %s139
      %p146 = scmp.eq.s32.totalorder %s40, 1
      %p147 = por %p145, %p146
      %p148 = scmp.ne.s32.totalorder %s139, %s140
      %p149 = scmp.eq.s32.totalorder %s40, 0
      %p150 = por %p148, %p149
      %p151 = scmp.ne.s32.totalorder %s139, %s140
      %p152 = scmp.eq.s32.totalorder %s41, 1
      %p153 = por %p151, %p152
      %p155 = scmp.ne.s32.totalorder %s140, %s154
      %p156 = scmp.eq.s32.totalorder %s41, 0
      %p157 = por %p155, %p156
      %s159 = sadd.s32 %s158, 1
      %p162 = scmp.eq.s32.totalorder %s35, 1
      %p163 = scmp.ne.s32.totalorder %s158, %s160
      %p164 = scmp.eq.s32.totalorder %s35, 0
      %p165 = por %p163, %p164
      %p166 = scmp.ne.s32.totalorder %s158, %s160
      %p167 = scmp.eq.s32.totalorder %s40, 1
      %p168 = por %p166, %p167
      %p169 = scmp.ne.s32.totalorder %s160, %s161
      %p170 = scmp.eq.s32.totalorder %s40, 0
      %p171 = por %p169, %p170
      %p172 = scmp.ne.s32.totalorder %s160, %s161
      %p173 = scmp.eq.s32.totalorder %s41, 1
      %p174 = por %p172, %p173
      %p176 = scmp.ne.s32.totalorder %s161, %s175
      %p177 = scmp.eq.s32.totalorder %s41, 0
      %p178 = por %p176, %p177
      %s180 = sadd.s32 %s179, 1
      %p183 = scmp.eq.s32.totalorder %s35, 1
      %p184 = scmp.ne.s32.totalorder %s179, %s181
      %p185 = scmp.eq.s32.totalorder %s35, 0
      %p186 = por %p184, %p185
      %p187 = scmp.ne.s32.totalorder %s179, %s181
      %p188 = scmp.eq.s32.totalorder %s40, 1
      %p189 = por %p187, %p188
      %p190 = scmp.ne.s32.totalorder %s181, %s182
      %p191 = scmp.eq.s32.totalorder %s40, 0
      %p192 = por %p190, %p191
      %p193 = scmp.ne.s32.totalorder %s181, %s182
      %p194 = scmp.eq.s32.totalorder %s41, 1
      %p195 = por %p193, %p194
      %p197 = scmp.ne.s32.totalorder %s182, %s196
      %p198 = scmp.eq.s32.totalorder %s41, 0
      %p199 = por %p197, %p198
      %s201 = sadd.s32 %s200, 1
      %p204 = scmp.eq.s32.totalorder %s35, 1
      %p205 = scmp.ne.s32.totalorder %s200, %s202
      %p206 = scmp.eq.s32.totalorder %s35, 0
      %p207 = por %p205, %p206
      %p208 = scmp.ne.s32.totalorder %s200, %s202
      %p209 = scmp.eq.s32.totalorder %s40, 1
      %p210 = por %p208, %p209
      %p211 = scmp.ne.s32.totalorder %s202, %s203
      %p212 = scmp.eq.s32.totalorder %s40, 0
      %p213 = por %p211, %p212
      %p214 = scmp.ne.s32.totalorder %s202, %s203
      %p215 = scmp.eq.s32.totalorder %s41, 1
      %p216 = por %p214, %p215
      %p218 = scmp.ne.s32.totalorder %s203, %s217
      %p219 = scmp.eq.s32.totalorder %s41, 0
      %p220 = por %p218, %p219
      %s222 = sadd.s32 %s221, 1
      %p225 = scmp.eq.s32.totalorder %s35, 1
      %p226 = scmp.ne.s32.totalorder %s221, %s223
      %p227 = scmp.eq.s32.totalorder %s35, 0
      %p228 = por %p226, %p227
      %p229 = scmp.ne.s32.totalorder %s221, %s223
      %p230 = scmp.eq.s32.totalorder %s40, 1
      %p231 = por %p229, %p230
      %p232 = scmp.ne.s32.totalorder %s223, %s224
      %p233 = scmp.eq.s32.totalorder %s40, 0
      %p234 = por %p232, %p233
      %p235 = scmp.ne.s32.totalorder %s223, %s224
      %p236 = scmp.eq.s32.totalorder %s41, 1
      %p237 = por %p235, %p236
      %p239 = scmp.ne.s32.totalorder %s224, %s238
      %p240 = scmp.eq.s32.totalorder %s41, 0
      %p241 = por %p239, %p240
      %s243 = sadd.s32 %s242, 1
      %p246 = scmp.eq.s32.totalorder %s35, 1
      %p247 = scmp.ne.s32.totalorder %s242, %s244
      %p248 = scmp.eq.s32.totalorder %s35, 0
      %p249 = por %p247, %p248
      %p250 = scmp.ne.s32.totalorder %s242, %s244
      %p251 = scmp.eq.s32.totalorder %s40, 1
      %p252 = por %p250, %p251
      %p253 = scmp.ne.s32.totalorder %s244, %s245
      %p254 = scmp.eq.s32.totalorder %s40, 0
      %p255 = por %p253, %p254
      %p256 = scmp.ne.s32.totalorder %s244, %s245
      %p257 = scmp.eq.s32.totalorder %s41, 1
      %p258 = por %p256, %p257
      %p260 = scmp.ne.s32.totalorder %s245, %s259
      %p261 = scmp.eq.s32.totalorder %s41, 0
      %p262 = por %p260, %p261
      %s264 = sadd.s32 %s263, 1
      %p267 = scmp.eq.s32.totalorder %s35, 1
      %p268 = scmp.ne.s32.totalorder %s263, %s265
      %p269 = scmp.eq.s32.totalorder %s35, 0
      %p270 = por %p268, %p269
      %p271 = scmp.ne.s32.totalorder %s263, %s265
      %p272 = scmp.eq.s32.totalorder %s40, 1
      %p273 = por %p271, %p272
      %p274 = scmp.ne.s32.totalorder %s265, %s266
      %p275 = scmp.eq.s32.totalorder %s40, 0
      %p276 = por %p274, %p275
      %p277 = scmp.ne.s32.totalorder %s265, %s266
      %p278 = scmp.eq.s32.totalorder %s41, 1
      %p279 = por %p277, %p278
      %p281 = scmp.ne.s32.totalorder %s266, %s280
      %p282 = scmp.eq.s32.totalorder %s41, 0
      %p283 = por %p281, %p282
      %s285 = sadd.s32 %s284, 1
      %p288 = scmp.eq.s32.totalorder %s35, 1
      %p289 = scmp.ne.s32.totalorder %s284, %s286
      %p290 = scmp.eq.s32.totalorder %s35, 0
      %p291 = por %p289, %p290
      %p292 = scmp.ne.s32.totalorder %s284, %s286
      %p293 = scmp.eq.s32.totalorder %s40, 1
      %p294 = por %p292, %p293
      %p295 = scmp.ne.s32.totalorder %s286, %s287
      %p296 = scmp.eq.s32.totalorder %s40, 0
      %p297 = por %p295, %p296
      %p298 = scmp.ne.s32.totalorder %s286, %s287
      %p299 = scmp.eq.s32.totalorder %s41, 1
      %p300 = por %p298, %p299
      %p302 = scmp.ne.s32.totalorder %s287, %s301
      %p303 = scmp.eq.s32.totalorder %s41, 0
      %p304 = por %p302, %p303
      %s306 = sadd.s32 %s305, 1
      %p309 = scmp.eq.s32.totalorder %s35, 1
      %p310 = scmp.ne.s32.totalorder %s305, %s307
      %p311 = scmp.eq.s32.totalorder %s35, 0
      %p312 = por %p310, %p311
      %p313 = scmp.ne.s32.totalorder %s305, %s307
      %p314 = scmp.eq.s32.totalorder %s40, 1
      %p315 = por %p313, %p314
      %p316 = scmp.ne.s32.totalorder %s307, %s308
      %p317 = scmp.eq.s32.totalorder %s40, 0
      %p318 = por %p316, %p317
      %p319 = scmp.ne.s32.totalorder %s307, %s308
      %p320 = scmp.eq.s32.totalorder %s41, 1
      %p321 = por %p319, %p320
      %p323 = scmp.ne.s32.totalorder %s308, %s322
      %p324 = scmp.eq.s32.totalorder %s41, 0
      %p325 = por %p323, %p324
      %s327 = sadd.s32 %s326, 1
      %p330 = scmp.eq.s32.totalorder %s35, 1
      %p331 = scmp.ne.s32.totalorder %s326, %s328
      %p332 = scmp.eq.s32.totalorder %s35, 0
      %p333 = por %p331, %p332
      %p334 = scmp.ne.s32.totalorder %s326, %s328
      %p335 = scmp.eq.s32.totalorder %s40, 1
      %p336 = por %p334, %p335
      %p337 = scmp.ne.s32.totalorder %s328, %s329
      %p338 = scmp.eq.s32.totalorder %s40, 0
      %p339 = por %p337, %p338
      %p340 = scmp.ne.s32.totalorder %s328, %s329
      %p341 = scmp.eq.s32.totalorder %s41, 1
      %p342 = por %p340, %p341
      %p344 = scmp.ne.s32.totalorder %s329, %s343
      %p345 = scmp.eq.s32.totalorder %s41, 0
      %p346 = por %p344, %p345
      %s347 = ssub.s32 %s35, %s42
      %p348 = scmp.eq.s32.totalorder %s347, 0
      %s350 = sadd.s32 %s349, 1
      %s351 = scalar_select %p348, %s349, %s350
      %p354 = pneg %p348
      %p355 = scmp.eq.s32.totalorder %s35, 1
      %p356 = por %p354, %p355
      %p357 = scmp.ne.s32.totalorder %s349, %s352
      %p358 = scmp.eq.s32.totalorder %s35, 0
      %p359 = por %p357, %p358
      %p360 = scmp.ne.s32.totalorder %s349, %s352
      %p361 = scmp.eq.s32.totalorder %s40, 1
      %p362 = por %p360, %p361
      %p363 = scmp.ne.s32.totalorder %s352, %s353
      %p364 = scmp.eq.s32.totalorder %s40, 0
      %p365 = por %p363, %p364
      %p366 = scmp.ne.s32.totalorder %s352, %s353
      %p367 = scmp.eq.s32.totalorder %s41, 1
      %p368 = por %p366, %p367
      %p370 = scmp.ne.s32.totalorder %s353, %s369
      %p371 = scmp.eq.s32.totalorder %s41, 0
      %p372 = por %p370, %p371
      %p373 = scmp.le.s32.totalorder 1, %s35
      %p374 = scmp.lt.s32.totalorder %s35, 3
      %p375 = pnand %p373, %p374
      %p376 = pneg %p375
      // Predicated region
      $region9: #{transformer_forward.3} parent=5 // pred_check
        _
      $region10: #{transformer_forward.3} parent=5 // pred_check_branch
        %378 = sbr.rel (%p375) target = $region12
      $region11: #{transformer_forward.3} parent=5 // pred_region
        %s379 = ssub.s32 %s35, 1
        // Predicated region
        $region13: #{transformer_forward.3} parent=11 // pred_check
          %p380 = pneg %p108
        $region14: #{transformer_forward.3} parent=11 // pred_check_branch
          %382 = sbr.rel (%p380) target = $region16
        $region15: #{transformer_forward.3} parent=11 // pred_region
          %s384 = ssub.s32 256, 256
          %385 = vsyncadd [#allocation6], %s384
          %s386 = sshll.u32 [#allocation7], 4
          %s387 = int_to_ptr.vmem [resolvable:$true] %s386
          %392 = dma.hbm_to_vmem [thread:$0]  %s2, 256, %s387, [#allocation6], 64, 64, 4
        $region16: #{transformer_forward.3} parent=11 // pred_fallthru
          _
        // Predicated region
        $region17: #{transformer_forward.3} parent=11 // pred_check
          %p393 = pneg %p129
        $region18: #{transformer_forward.3} parent=11 // pred_check_branch
          %395 = sbr.rel (%p393) target = $region20
        $region19: #{transformer_forward.3} parent=11 // pred_region
          %s397 = ssub.s32 16, 16
          %398 = vsyncadd [#allocation9], %s397
          %s400 = sshll.u32 [#allocation8], 4
          %s401 = int_to_ptr.vmem [resolvable:$true] %s400
          %403 = dma.hbm_to_vmem [thread:$0]  %s3, 16, %s401, [#allocation9]
        $region20: #{transformer_forward.3} parent=11 // pred_fallthru
          _
        // Predicated region
        $region21: #{transformer_forward.3} parent=11 // pred_check
          %p404 = pneg %p150
        $region22: #{transformer_forward.3} parent=11 // pred_check_branch
          %406 = sbr.rel (%p404) target = $region24
        $region23: #{transformer_forward.3} parent=11 // pred_region
          %s408 = ssub.s32 256, 256
          %409 = vsyncadd [#allocation9], %s408
          %s410 = sshll.u32 [#allocation10], 4
          %s411 = int_to_ptr.vmem [resolvable:$true] %s410
          %416 = dma.hbm_to_vmem [thread:$0]  %s4, 256, %s411, [#allocation9], 64, 64, 4
        $region24: #{transformer_forward.3} parent=11 // pred_fallthru
          _
        // Predicated region
        $region25: #{transformer_forward.3} parent=11 // pred_check
          %p417 = pneg %p171
        $region26: #{transformer_forward.3} parent=11 // pred_check_branch
          %419 = sbr.rel (%p417) target = $region28
        $region27: #{transformer_forward.3} parent=11 // pred_region
          %s421 = ssub.s32 16, 16
          %422 = vsyncadd [#allocation12], %s421
          %s424 = sshll.u32 [#allocation11], 4
          %s425 = int_to_ptr.vmem [resolvable:$true] %s424
          %427 = dma.hbm_to_vmem [thread:$0]  %s5, 16, %s425, [#allocation12]
        $region28: #{transformer_forward.3} parent=11 // pred_fallthru
          _
        // Predicated region
        $region29: #{transformer_forward.3} parent=11 // pred_check
          %p428 = pneg %p192
        $region30: #{transformer_forward.3} parent=11 // pred_check_branch
          %430 = sbr.rel (%p428) target = $region32
        $region31: #{transformer_forward.3} parent=11 // pred_region
          %s432 = ssub.s32 16, 16
          %433 = vsyncadd [#allocation12], %s432
          %s435 = sshll.u32 [#allocation13], 4
          %s436 = int_to_ptr.vmem [resolvable:$true] %s435
          %438 = dma.hbm_to_vmem [thread:$0]  %s6, 16, %s436, [#allocation12]
        $region32: #{transformer_forward.3} parent=11 // pred_fallthru
          _
        // Predicated region
        $region33: #{transformer_forward.3} parent=11 // pred_check
          %p439 = pneg %p213
        $region34: #{transformer_forward.3} parent=11 // pred_check_branch
          %441 = sbr.rel (%p439) target = $region36
        $region35: #{transformer_forward.3} parent=11 // pred_region
          %s443 = ssub.s32 16, 16
          %444 = vsyncadd [#allocation15], %s443
          %s446 = sshll.u32 [#allocation14], 4
          %s447 = int_to_ptr.vmem [resolvable:$true] %s446
          %449 = dma.hbm_to_vmem [thread:$0]  %s7, 16, %s447, [#allocation15]
        $region36: #{transformer_forward.3} parent=11 // pred_fallthru
          _
        // Predicated region
        $region37: #{transformer_forward.3} parent=11 // pred_check
          %p450 = pneg %p234
        $region38: #{transformer_forward.3} parent=11 // pred_check_branch
          %452 = sbr.rel (%p450) target = $region40
        $region39: #{transformer_forward.3} parent=11 // pred_region
          %s454 = ssub.s32 256, 256
          %455 = vsyncadd [#allocation15], %s454
          %s456 = sshll.u32 [#allocation16], 4
          %s457 = int_to_ptr.vmem [resolvable:$true] %s456
          %462 = dma.hbm_to_vmem [thread:$0]  %s8, 256, %s457, [#allocation15], 64, 64, 4
        $region40: #{transformer_forward.3} parent=11 // pred_fallthru
          _
        // Predicated region
        $region41: #{transformer_forward.3} parent=11 // pred_check
          %p463 = pneg %p255
        $region42: #{transformer_forward.3} parent=11 // pred_check_branch
          %465 = sbr.rel (%p463) target = $region44
        $region43: #{transformer_forward.3} parent=11 // pred_region
          %s467 = ssub.s32 16, 16
          %468 = vsyncadd [#allocation18], %s467
          %s470 = sshll.u32 [#allocation17], 4
          %s471 = int_to_ptr.vmem [resolvable:$true] %s470
          %473 = dma.hbm_to_vmem [thread:$0]  %s9, 16, %s471, [#allocation18]
        $region44: #{transformer_forward.3} parent=11 // pred_fallthru
          _
        // Predicated region
        $region45: #{transformer_forward.3} parent=11 // pred_check
          %p474 = pneg %p276
        $region46: #{transformer_forward.3} parent=11 // pred_check_branch
          %476 = sbr.rel (%p474) target = $region48
        $region47: #{transformer_forward.3} parent=11 // pred_region
          %s478 = ssub.s32 512, 512
          %479 = vsyncadd [#allocation18], %s478
          %s480 = sshll.u32 [#allocation19], 4
          %s481 = int_to_ptr.vmem [resolvable:$true] %s480
          %486 = dma.hbm_to_vmem [thread:$0]  %s10, 512, %s481, [#allocation18], 64, 64, 4
        $region48: #{transformer_forward.3} parent=11 // pred_fallthru
          _
        // Predicated region
        $region49: #{transformer_forward.3} parent=11 // pred_check
          %p487 = pneg %p297
        $region50: #{transformer_forward.3} parent=11 // pred_check_branch
          %489 = sbr.rel (%p487) target = $region52
        $region51: #{transformer_forward.3} parent=11 // pred_region
          %s491 = ssub.s32 16, 16
          %492 = vsyncadd [#allocation21], %s491
          %s494 = sshll.u32 [#allocation20], 4
          %s495 = int_to_ptr.vmem [resolvable:$true] %s494
          %497 = dma.hbm_to_vmem [thread:$0]  %s11, 16, %s495, [#allocation21]
        $region52: #{transformer_forward.3} parent=11 // pred_fallthru
          _
        // Predicated region
        $region53: #{transformer_forward.3} parent=11 // pred_check
          %p498 = pneg %p318
        $region54: #{transformer_forward.3} parent=11 // pred_check_branch
          %500 = sbr.rel (%p498) target = $region56
        $region55: #{transformer_forward.3} parent=11 // pred_region
          %s502 = ssub.s32 16, 16
          %503 = vsyncadd [#allocation21], %s502
          %s505 = sshll.u32 [#allocation22], 4
          %s506 = int_to_ptr.vmem [resolvable:$true] %s505
          %508 = dma.hbm_to_vmem [thread:$0]  %s12, 16, %s506, [#allocation21]
        $region56: #{transformer_forward.3} parent=11 // pred_fallthru
          _
        // Predicated region
        $region57: #{transformer_forward.3} parent=11 // pred_check
          %p509 = pneg %p339
        $region58: #{transformer_forward.3} parent=11 // pred_check_branch
          %511 = sbr.rel (%p509) target = $region60
        $region59: #{transformer_forward.3} parent=11 // pred_region
          %s513 = ssub.s32 16, 16
          %514 = vsyncadd [#allocation24], %s513
          %s516 = sshll.u32 [#allocation23], 4
          %s517 = int_to_ptr.vmem [resolvable:$true] %s516
          %519 = dma.hbm_to_vmem [thread:$0]  %s13, 16, %s517, [#allocation24]
        $region60: #{transformer_forward.3} parent=11 // pred_fallthru
          _
      $region12: #{transformer_forward.3} parent=5 // pred_fallthru
        _
      %p520 = scmp.lt.s32.totalorder %s35, 2
      // Predicated region
      $region61: #{transformer_forward.3} parent=5 // pred_check
        %p521 = pneg %p520
      $region62: #{transformer_forward.3} parent=5 // pred_check_branch
        %523 = sbr.rel (%p521) target = $region64
      $region63: #{transformer_forward.3} parent=5 // pred_region
        // Predicated region
        $region65: #{transformer_forward.3} parent=63 // pred_check
          %p524 = pneg %p55
        $region66: #{transformer_forward.3} parent=63 // pred_check_branch
          %526 = sbr.rel (%p524) target = $region68
        $region67: #{transformer_forward.3} parent=63 // pred_region
          %s527 = sand.u32 %s45, 1
          %s528 = scalar_lea.sflag [#allocation3], %s527
          %s529 = sand.u32 %s45, 1
          %s530 = smul.addr %s529, 4
          %s531 = scalar_lea.vmem [#allocation2], %s530
          %s533 = ssub.s32 64, 64
          %534 = vsyncadd %s528, %s533
          %s535 = smul.addr %s35, 64
          %s536 = scalar_lea.hbm %s0, %s535
          %s538 = sshll.u32 %s531, 4
          %s539 = int_to_ptr.vmem [resolvable:$true] %s538
          %541 = dma.hbm_to_vmem [thread:$0]  %s536, 64, %s539, %s528
        $region68: #{transformer_forward.3} parent=63 // pred_fallthru
          _
        // Predicated region
        $region69: #{transformer_forward.3} parent=63 // pred_check
          %p542 = pneg %p81
        $region70: #{transformer_forward.3} parent=63 // pred_check_branch
          %544 = sbr.rel (%p542) target = $region72
        $region71: #{transformer_forward.3} parent=63 // pred_region
          %s545 = sand.u32 %s35, 1
          %s546 = scalar_lea.sflag [#allocation6], %s545
          %s547 = sand.u32 %s71, 1
          %s548 = smul.addr %s547, 8
          %s549 = scalar_lea.vmem [#allocation5], %s548
          %s551 = ssub.s32 128, 128
          %552 = vsyncadd %s546, %s551
          %s553 = smul.addr %s35, 128
          %s554 = scalar_lea.hbm %s1, %s553
          %s556 = sshll.u32 %s549, 4
          %s557 = int_to_ptr.vmem [resolvable:$true] %s556
          %559 = dma.hbm_to_vmem [thread:$0]  %s554, 128, %s557, %s546
        $region72: #{transformer_forward.3} parent=63 // pred_fallthru
          _
      $region64: #{transformer_forward.3} parent=5 // pred_fallthru
        _
      %p560 = scmp.le.s32.totalorder 1, %s35
      %p561 = scmp.lt.s32.totalorder %s35, 3
      %p562 = pnand %p560, %p561
      %p563 = pneg %p562
      // Predicated region
      $region73: #{transformer_forward.3} parent=5 // pred_check
        _
      $region74: #{transformer_forward.3} parent=5 // pred_check_branch
        %565 = sbr.rel (%p562) target = $region76
      $region75: #{transformer_forward.3} parent=5 // pred_region
        %s566 = ssub.s32 %s35, 1
        %s567 = sand.u32 %s48, 1
        %s568 = scalar_lea.sflag [#allocation3], %s567
        %s569 = sand.u32 %s48, 1
        %s570 = smul.addr %s569, 4
        %s571 = scalar_lea.vmem [#allocation2], %s570
        // Predicated region
        $region77: #{transformer_forward.3} parent=75 // pred_check
          %p572 = pneg %p61
        $region78: #{transformer_forward.3} parent=75 // pred_check_branch
          %574 = sbr.rel (%p572) target = $region80
        $region79: #{transformer_forward.3} parent=75 // pred_region
          %575 = dma.done %s568, 64
        $region80: #{transformer_forward.3} parent=75 // pred_fallthru
          _
        %s576 = sand.u32 %s40, 1
        %s577 = scalar_lea.sflag [#allocation6], %s576
        %s578 = sand.u32 %s74, 1
        %s579 = smul.addr %s578, 8
        %s580 = scalar_lea.vmem [#allocation5], %s579
        // Predicated region
        $region81: #{transformer_forward.3} parent=75 // pred_check
          %p581 = pneg %p87
        $region82: #{transformer_forward.3} parent=75 // pred_check_branch
          %583 = sbr.rel (%p581) target = $region84
        $region83: #{transformer_forward.3} parent=75 // pred_region
          %584 = dma.done %s577, 128
        $region84: #{transformer_forward.3} parent=75 // pred_fallthru
          _
        // Predicated region
        $region85: #{transformer_forward.3} parent=75 // pred_check
          %p585 = pneg %p108
        $region86: #{transformer_forward.3} parent=75 // pred_check_branch
          %587 = sbr.rel (%p585) target = $region88
        $region87: #{transformer_forward.3} parent=75 // pred_region
          %588 = dma.done [#allocation6], 256
        $region88: #{transformer_forward.3} parent=75 // pred_fallthru
          _
        // Predicated region
        $region89: #{transformer_forward.3} parent=75 // pred_check
          %p589 = pneg %p129
        $region90: #{transformer_forward.3} parent=75 // pred_check_branch
          %591 = sbr.rel (%p589) target = $region92
        $region91: #{transformer_forward.3} parent=75 // pred_region
          %592 = dma.done [#allocation9], 16
        $region92: #{transformer_forward.3} parent=75 // pred_fallthru
          _
        // Predicated region
        $region93: #{transformer_forward.3} parent=75 // pred_check
          %p593 = pneg %p150
        $region94: #{transformer_forward.3} parent=75 // pred_check_branch
          %595 = sbr.rel (%p593) target = $region96
        $region95: #{transformer_forward.3} parent=75 // pred_region
          %596 = dma.done [#allocation9], 256
        $region96: #{transformer_forward.3} parent=75 // pred_fallthru
          _
        // Predicated region
        $region97: #{transformer_forward.3} parent=75 // pred_check
          %p597 = pneg %p171
        $region98: #{transformer_forward.3} parent=75 // pred_check_branch
          %599 = sbr.rel (%p597) target = $region100
        $region99: #{transformer_forward.3} parent=75 // pred_region
          %600 = dma.done [#allocation12], 16
        $region100: #{transformer_forward.3} parent=75 // pred_fallthru
          _
        // Predicated region
        $region101: #{transformer_forward.3} parent=75 // pred_check
          %p601 = pneg %p192
        $region102: #{transformer_forward.3} parent=75 // pred_check_branch
          %603 = sbr.rel (%p601) target = $region104
        $region103: #{transformer_forward.3} parent=75 // pred_region
          %604 = dma.done [#allocation12], 16
        $region104: #{transformer_forward.3} parent=75 // pred_fallthru
          _
        // Predicated region
        $region105: #{transformer_forward.3} parent=75 // pred_check
          %p605 = pneg %p213
        $region106: #{transformer_forward.3} parent=75 // pred_check_branch
          %607 = sbr.rel (%p605) target = $region108
        $region107: #{transformer_forward.3} parent=75 // pred_region
          %608 = dma.done [#allocation15], 16
        $region108: #{transformer_forward.3} parent=75 // pred_fallthru
          _
        // Predicated region
        $region109: #{transformer_forward.3} parent=75 // pred_check
          %p609 = pneg %p234
        $region110: #{transformer_forward.3} parent=75 // pred_check_branch
          %611 = sbr.rel (%p609) target = $region112
        $region111: #{transformer_forward.3} parent=75 // pred_region
          %612 = dma.done [#allocation15], 256
        $region112: #{transformer_forward.3} parent=75 // pred_fallthru
          _
        // Predicated region
        $region113: #{transformer_forward.3} parent=75 // pred_check
          %p613 = pneg %p255
        $region114: #{transformer_forward.3} parent=75 // pred_check_branch
          %615 = sbr.rel (%p613) target = $region116
        $region115: #{transformer_forward.3} parent=75 // pred_region
          %616 = dma.done [#allocation18], 16
        $region116: #{transformer_forward.3} parent=75 // pred_fallthru
          _
        // Predicated region
        $region117: #{transformer_forward.3} parent=75 // pred_check
          %p617 = pneg %p276
        $region118: #{transformer_forward.3} parent=75 // pred_check_branch
          %619 = sbr.rel (%p617) target = $region120
        $region119: #{transformer_forward.3} parent=75 // pred_region
          %620 = dma.done [#allocation18], 512
        $region120: #{transformer_forward.3} parent=75 // pred_fallthru
          _
        // Predicated region
        $region121: #{transformer_forward.3} parent=75 // pred_check
          %p621 = pneg %p297
        $region122: #{transformer_forward.3} parent=75 // pred_check_branch
          %623 = sbr.rel (%p621) target = $region124
        $region123: #{transformer_forward.3} parent=75 // pred_region
          %624 = dma.done [#allocation21], 16
        $region124: #{transformer_forward.3} parent=75 // pred_fallthru
          _
        // Predicated region
        $region125: #{transformer_forward.3} parent=75 // pred_check
          %p625 = pneg %p318
        $region126: #{transformer_forward.3} parent=75 // pred_check_branch
          %627 = sbr.rel (%p625) target = $region128
        $region127: #{transformer_forward.3} parent=75 // pred_region
          %628 = dma.done [#allocation21], 16
        $region128: #{transformer_forward.3} parent=75 // pred_fallthru
          _
        // Predicated region
        $region129: #{transformer_forward.3} parent=75 // pred_check
          %p629 = pneg %p339
        $region130: #{transformer_forward.3} parent=75 // pred_check_branch
          %631 = sbr.rel (%p629) target = $region132
        $region131: #{transformer_forward.3} parent=75 // pred_region
          %632 = dma.done [#allocation24], 16
        $region132: #{transformer_forward.3} parent=75 // pred_fallthru
          _
        %s633 = sand.u32 %s48, 1
        %s634 = scalar_lea.sflag [#allocation3], %s633
        %s635 = sand.u32 %s48, 1
        %s636 = smul.addr %s635, 4
        %s637 = scalar_lea.vmem [#allocation2], %s636
        %p638 = pneg %p61
        %p639 = pneg %p58
        %s640 = sand.u32 %s40, 1
        %s641 = scalar_lea.sflag [#allocation6], %s640
        %s642 = sand.u32 %s74, 1
        %s643 = smul.addr %s642, 8
        %s644 = scalar_lea.vmem [#allocation5], %s643
        %p645 = pneg %p87
        %p646 = pneg %p84
        %p647 = pneg %p108
        %p648 = pneg %p105
        %p649 = pneg %p129
        %p650 = pneg %p126
        %p651 = pneg %p150
        %p652 = pneg %p147
        %p653 = pneg %p171
        %p654 = pneg %p168
        %p655 = pneg %p192
        %p656 = pneg %p189
        %p657 = pneg %p213
        %p658 = pneg %p210
        %p659 = pneg %p234
        %p660 = pneg %p231
        %p661 = pneg %p255
        %p662 = pneg %p252
        %p663 = pneg %p276
        %p664 = pneg %p273
        %p665 = pneg %p297
        %p666 = pneg %p294
        %p667 = pneg %p318
        %p668 = pneg %p315
        %p669 = pneg %p339
        %p670 = pneg %p336
        %p671 = pneg %p365
        %p672 = pneg %p362
        %s673 = sand.u32 %s352, 1
        %s674 = scalar_lea.sflag [#allocation4], %s673
        %s675 = sand.u32 %s352, 1
        %s676 = smul.addr %s675, 4
        %s677 = scalar_lea.vmem [#allocation25], %s676
        %v679 = vld [vmem:[%s571] sm:$0xf]
        %v680 = vunpack.c.l.bf16 %v679
        %v681 = vld [vmem:[#allocation7] sm:$0xf]
        %v682 = vld [vmem:[#allocation7 + $0x4] sm:$0xf]
        %v683 = vld [vmem:[#allocation7 + $0x8] sm:$0xf]
        %v684 = vld [vmem:[#allocation7 + $0xc] sm:$0xf]
        %v685 = vld [vmem:[#allocation8] sm:$0x1]
        %v687 = vlaneseq
        %v688 = vshrl.u32 %v687, 7
        %v689 = vsub.s32 0, %v688
        %v690 = vrot.slane %v685, %v689
        %v696 = vunpack.c.l.b16 %v681
        %v697 = vunpack.c.l.b16 %v682
        %v698 = vunpack.c.l.b16 %v683
        %v699 = vunpack.c.l.b16 %v684
        %v700 = vpack.c.b16 %v697, %v696
        %v701 = vpack.c.b16 %v699, %v698
        %vm704 = vcmask 261120
        %v706 = vsel %vm704, %v679, 0
        %708 = vmatprep.subr.bf16.mxu0 0
        %709 = vmatpush1.bf16.msra.mxu0 %v700
        %710 = vmatprep.subr.bf16.mxu0 0
        %711 = vmatpush1.bf16.msra.mxu0 %v701
        %712 = vmatprep.subr.bf16.mxu0 0
        %713 = vmatpush1.bf16.msra.mxu0 0
        %714 = vmatprep.subr.bf16.mxu0 0
        %715 = vmatpush1.bf16.msra.mxu0 0
        %716 = vmatprep.subr.bf16.mxu0 0
        %717 = vmatpush1.bf16.msra.mxu0 0
        %718 = vmatprep.subr.bf16.mxu0 0
        %719 = vmatpush1.bf16.msra.mxu0 0
        %720 = vmatprep.subr.bf16.mxu0 0
        %721 = vmatpush1.bf16.msra.mxu0 0
        %722 = vmatprep.subr.bf16.mxu0 0
        %723 = vmatpush1.bf16.msra.mxu0 0
        %724 = vmatprep.subr.bf16.mxu0 0
        %725 = vmatpush1.bf16.msra.mxu0 0
        %726 = vmatprep.subr.bf16.mxu0 0
        %727 = vmatpush1.bf16.msra.mxu0 0
        %728 = vmatprep.subr.bf16.mxu0 0
        %729 = vmatpush1.bf16.msra.mxu0 0
        %730 = vmatprep.subr.bf16.mxu0 0
        %731 = vmatpush1.bf16.msra.mxu0 0
        %732 = vmatprep.subr.bf16.mxu0 0
        %733 = vmatpush1.bf16.msra.mxu0 0
        %734 = vmatprep.subr.bf16.mxu0 0
        %735 = vmatpush1.bf16.msra.mxu0 0
        %736 = vmatprep.subr.bf16.mxu0 0
        %737 = vmatpush1.bf16.msra.mxu0 0
        %738 = vmatprep.subr.bf16.mxu0 0
        %739 = vmatpush1.bf16.msra.mxu0 0
        %740 = vmatprep.mubr.bf16.mxu0 0
        %741 = vmatmul.mubr.bf16.gmra.mrb[0].mxu0 %v706
        %v742 = vpop.f32.mrb[0].mxu0
        %v743 = vadd.f32 %v690, %v742
        %v744 = vpop.f32.mrb[0].mxu0
        %v745 = vpop.f32.mrb[0].mxu0
        %v746 = vpop.f32.mrb[0].mxu0
        %747 = vdwg.mxu0
        %v748 = vld [vmem:[%s580] sm:$0xff]
        %v749 = vld [vmem:[#allocation10] sm:$0xf]
        %v750 = vld [vmem:[#allocation10 + $0x4] sm:$0xf]
        %v751 = vld [vmem:[#allocation10 + $0x8] sm:$0xf]
        %v752 = vld [vmem:[#allocation10 + $0xc] sm:$0xf]
        %v753 = vld [vmem:[#allocation11] sm:$0x1]
        %v754 = vpack.c.bf16 %v743, %v743
        %756 = vrot.lane.b32.xlu0 %v754, 96
        %v757 = vpop.permute.xlu0 %756
        %vm758 = vcmask 64512
        %v760 = vsel %vm758, %v754, 0
        %v763 = vsel %vm758, %v757, 0
        %765 = vmatprep.subr.bf16.mxu0 0
        %766 = vmatpush1.bf16.xpose.msra.mxu0 %v763
        %767 = vmatprep.subr.bf16.mxu0 0
        %768 = vmatpush1.bf16.xpose.msra.mxu0 0
        %769 = vmatprep.subr.bf16.mxu0 0
        %770 = vmatpush1.bf16.xpose.msra.mxu0 0
        %771 = vmatprep.subr.bf16.mxu0 0
        %772 = vmatpush1.bf16.xpose.msra.mxu0 0
        %773 = vmatprep.subr.bf16.mxu0 0
        %774 = vmatpush1.bf16.xpose.msra.mxu0 0
        %775 = vmatprep.subr.bf16.mxu0 0
        %776 = vmatpush1.bf16.xpose.msra.mxu0 0
        %777 = vmatprep.subr.bf16.mxu0 0
        %778 = vmatpush1.bf16.xpose.msra.mxu0 0
        %779 = vmatprep.subr.bf16.mxu0 0
        %780 = vmatpush1.bf16.xpose.msra.mxu0 0
        %781 = vmatprep.subr.bf16.mxu0 0
        %782 = vmatpush1.bf16.xpose.msra.mxu0 0
        %783 = vmatprep.subr.bf16.mxu0 0
        %784 = vmatpush1.bf16.xpose.msra.mxu0 0
        %785 = vmatprep.subr.bf16.mxu0 0
        %786 = vmatpush1.bf16.xpose.msra.mxu0 0
        %787 = vmatprep.subr.bf16.mxu0 0
        %788 = vmatpush1.bf16.xpose.msra.mxu0 0
        %789 = vmatprep.subr.bf16.mxu0 0
        %790 = vmatpush1.bf16.xpose.msra.mxu0 0
        %791 = vmatprep.subr.bf16.mxu0 0
        %792 = vmatpush1.bf16.xpose.msra.mxu0 0
        %793 = vmatprep.subr.bf16.mxu0 0
        %794 = vmatpush1.bf16.xpose.msra.mxu0 0
        %795 = vmatprep.subr.bf16.mxu0 0
        %796 = vmatpush1.bf16.xpose.msra.mxu0 0
        %797 = vmatprep.mubr.bf16.mxu0 0
        %798 = vmatmul.mubr.bf16.gmra.mrb[0].mxu0 %v760
        %v799 = vpop.f32.mrb[0].mxu0
        %v800 = vadd.f32 0.0, %v799
        %v801 = vpop.f32.mrb[0].mxu0
        %v802 = vpop.f32.mrb[0].mxu0
        %v803 = vpop.f32.mrb[0].mxu0
        %804 = vdwg.mxu0
        %v805 = vmul.f32 %v800, 0.35355338
        %v806 = vadd.f32 %v805, %v748
        %v807 = vsel %vm758, %v806, -inf
        %808 = vmax.xlane.f32.xlu0 %v807
        %v809 = vpop.xlane.xlu0 %808
        %v810 = vsub.f32 %v806, %v809
        %v811 = vmul.f32 %v810, 1.442695
        %v812 = vpow.pop %v811
        %v813 = vsel %vm758, %v812, 0.0
        %814 = vadd.xlane.f32.xlu0 %v813
        %v815 = vpop.xlane.xlu0 %814
        %v816 = vrcp.pop %v815
        %v817 = vmul.f32 %v812, %v816
        %v818 = vpack.c.bf16 %v817, %v817
        %819 = vrot.lane.b32.xlu0 %v754, 64
        %v820 = vpop.permute.xlu0 %819
        %v822 = vsel %vm758, %v818, 0
        %vm824 = vcmask 1043456
        %v826 = vsel %vm824, %v820, 0
        %828 = vmatprep.subr.bf16.mxu0 0
        %829 = vmatpush1.bf16.msra.mxu0 %v826
        %830 = vmatprep.subr.bf16.mxu0 0
        %831 = vmatpush1.bf16.msra.mxu0 0
        %832 = vmatprep.subr.bf16.mxu0 0
        %833 = vmatpush1.bf16.msra.mxu0 0
        %834 = vmatprep.subr.bf16.mxu0 0
        %835 = vmatpush1.bf16.msra.mxu0 0
        %836 = vmatprep.subr.bf16.mxu0 0
        %837 = vmatpush1.bf16.msra.mxu0 0
        %838 = vmatprep.subr.bf16.mxu0 0
        %839 = vmatpush1.bf16.msra.mxu0 0
        %840 = vmatprep.subr.bf16.mxu0 0
        %841 = vmatpush1.bf16.msra.mxu0 0
        %842 = vmatprep.subr.bf16.mxu0 0
        %843 = vmatpush1.bf16.msra.mxu0 0
        %844 = vmatprep.subr.bf16.mxu0 0
        %845 = vmatpush1.bf16.msra.mxu0 0
        %846 = vmatprep.subr.bf16.mxu0 0
        %847 = vmatpush1.bf16.msra.mxu0 0
        %848 = vmatprep.subr.bf16.mxu0 0
        %849 = vmatpush1.bf16.msra.mxu0 0
        %850 = vmatprep.subr.bf16.mxu0 0
        %851 = vmatpush1.bf16.msra.mxu0 0
        %852 = vmatprep.subr.bf16.mxu0 0
        %853 = vmatpush1.bf16.msra.mxu0 0
        %854 = vmatprep.subr.bf16.mxu0 0
        %855 = vmatpush1.bf16.msra.mxu0 0
        %856 = vmatprep.subr.bf16.mxu0 0
        %857 = vmatpush1.bf16.msra.mxu0 0
        %858 = vmatprep.subr.bf16.mxu0 0
        %859 = vmatpush1.bf16.msra.mxu0 0
        %860 = vmatprep.mubr.bf16.mxu0 0
        %861 = vmatmul.mubr.bf16.gmra.mrb[0].mxu0 %v822
        %v862 = vpop.f32.mrb[0].mxu0
        %v863 = vadd.f32 0.0, %v862
        %v864 = vpop.f32.mrb[0].mxu0
        %v865 = vpop.f32.mrb[0].mxu0
        %v866 = vpop.f32.mrb[0].mxu0
        %867 = vdwg.mxu0
        %v868 = vpack.c.bf16 %v863, %v863
        %869 = vrot.lane.b32.xlu0 %v754, 120
        %v870 = vpop.permute.xlu0 %869
        %871 = vrot.lane.b32.xlu0 %v754, 88
        %v872 = vpop.permute.xlu0 %871
        %v874 = vsel %vm758, %v870, 0
        %v877 = vsel %vm758, %v872, 0
        %879 = vmatprep.subr.bf16.mxu0 0
        %880 = vmatpush1.bf16.xpose.msra.mxu0 %v877
        %881 = vmatprep.subr.bf16.mxu0 0
        %882 = vmatpush1.bf16.xpose.msra.mxu0 0
        %883 = vmatprep.subr.bf16.mxu0 0
        %884 = vmatpush1.bf16.xpose.msra.mxu0 0
        %885 = vmatprep.subr.bf16.mxu0 0
        %886 = vmatpush1.bf16.xpose.msra.mxu0 0
        %887 = vmatprep.subr.bf16.mxu0 0
        %888 = vmatpush1.bf16.xpose.msra.mxu0 0
        %889 = vmatprep.subr.bf16.mxu0 0
        %890 = vmatpush1.bf16.xpose.msra.mxu0 0
        %891 = vmatprep.subr.bf16.mxu0 0
        %892 = vmatpush1.bf16.xpose.msra.mxu0 0
        %893 = vmatprep.subr.bf16.mxu0 0
        %894 = vmatpush1.bf16.xpose.msra.mxu0 0
        %895 = vmatprep.subr.bf16.mxu0 0
        %896 = vmatpush1.bf16.xpose.msra.mxu0 0
        %897 = vmatprep.subr.bf16.mxu0 0
        %898 = vmatpush1.bf16.xpose.msra.mxu0 0
        %899 = vmatprep.subr.bf16.mxu0 0
        %900 = vmatpush1.bf16.xpose.msra.mxu0 0
        %901 = vmatprep.subr.bf16.mxu0 0
        %902 = vmatpush1.bf16.xpose.msra.mxu0 0
        %903 = vmatprep.subr.bf16.mxu0 0
        %904 = vmatpush1.bf16.xpose.msra.mxu0 0
        %905 = vmatprep.subr.bf16.mxu0 0
        %906 = vmatpush1.bf16.xpose.msra.mxu0 0
        %907 = vmatprep.subr.bf16.mxu0 0
        %908 = vmatpush1.bf16.xpose.msra.mxu0 0
        %909 = vmatprep.subr.bf16.mxu0 0
        %910 = vmatpush1.bf16.xpose.msra.mxu0 0
        %911 = vmatprep.mubr.bf16.mxu0 0
        %912 = vmatmul.mubr.bf16.gmra.mrb[0].mxu0 %v874
        %v913 = vpop.f32.mrb[0].mxu0
        %v914 = vadd.f32 0.0, %v913
        %v915 = vpop.f32.mrb[0].mxu0
        %v916 = vpop.f32.mrb[0].mxu0
        %v917 = vpop.f32.mrb[0].mxu0
        %918 = vdwg.mxu0
        %v919 = vmul.f32 %v914, 0.35355338
        %v920 = vadd.f32 %v919, %v748
        %v921 = vsel %vm758, %v920, -inf
        %922 = vmax.xlane.f32.xlu0 %v921
        %v923 = vpop.xlane.xlu0 %922
        %v924 = vsub.f32 %v920, %v923
        %v925 = vmul.f32 %v924, 1.442695
        %v926 = vpow.pop %v925
        %v927 = vsel %vm758, %v926, 0.0
        %928 = vadd.xlane.f32.xlu0 %v927
        %v929 = vpop.xlane.xlu0 %928
        %v930 = vrcp.pop %v929
        %v931 = vmul.f32 %v926, %v930
        %v932 = vpack.c.bf16 %v931, %v931
        %933 = vrot.lane.b32.xlu0 %v754, 56
        %v934 = vpop.permute.xlu0 %933
        %v936 = vsel %vm758, %v932, 0
        %v939 = vsel %vm824, %v934, 0
        %941 = vmatprep.subr.bf16.mxu0 0
        %942 = vmatpush1.bf16.msra.mxu0 %v939
        %943 = vmatprep.subr.bf16.mxu0 0
        %944 = vmatpush1.bf16.msra.mxu0 0
        %945 = vmatprep.subr.bf16.mxu0 0
        %946 = vmatpush1.bf16.msra.mxu0 0
        %947 = vmatprep.subr.bf16.mxu0 0
        %948 = vmatpush1.bf16.msra.mxu0 0
        %949 = vmatprep.subr.bf16.mxu0 0
        %950 = vmatpush1.bf16.msra.mxu0 0
        %951 = vmatprep.subr.bf16.mxu0 0
        %952 = vmatpush1.bf16.msra.mxu0 0
        %953 = vmatprep.subr.bf16.mxu0 0
        %954 = vmatpush1.bf16.msra.mxu0 0
        %955 = vmatprep.subr.bf16.mxu0 0
        %956 = vmatpush1.bf16.msra.mxu0 0
        %957 = vmatprep.subr.bf16.mxu0 0
        %958 = vmatpush1.bf16.msra.mxu0 0
        %959 = vmatprep.subr.bf16.mxu0 0
        %960 = vmatpush1.bf16.msra.mxu0 0
        %961 = vmatprep.subr.bf16.mxu0 0
        %962 = vmatpush1.bf16.msra.mxu0 0
        %963 = vmatprep.subr.bf16.mxu0 0
        %964 = vmatpush1.bf16.msra.mxu0 0
        %965 = vmatprep.subr.bf16.mxu0 0
        %966 = vmatpush1.bf16.msra.mxu0 0
        %967 = vmatprep.subr.bf16.mxu0 0
        %968 = vmatpush1.bf16.msra.mxu0 0
        %969 = vmatprep.subr.bf16.mxu0 0
        %970 = vmatpush1.bf16.msra.mxu0 0
        %971 = vmatprep.subr.bf16.mxu0 0
        %972 = vmatpush1.bf16.msra.mxu0 0
        %973 = vmatprep.mubr.bf16.mxu0 0
        %974 = vmatmul.mubr.bf16.gmra.mrb[0].mxu0 %v936
        %v975 = vpop.f32.mrb[0].mxu0
        %v976 = vadd.f32 0.0, %v975
        %v977 = vpop.f32.mrb[0].mxu0
        %v978 = vpop.f32.mrb[0].mxu0
        %v979 = vpop.f32.mrb[0].mxu0
        %980 = vdwg.mxu0
        %v981 = vpack.c.bf16 %v976, %v976
        %v983 = vsel %vm758, %v981, 0
        %v986 = vsel %vm824, %v750, 0
        %988 = vmatprep.subr.bf16.mxu0 0
        %989 = vmatpush1.bf16.msra.mxu0 %v986
        %990 = vmatprep.subr.bf16.mxu0 0
        %991 = vmatpush1.bf16.msra.mxu0 0
        %992 = vmatprep.subr.bf16.mxu0 0
        %993 = vmatpush1.bf16.msra.mxu0 0
        %994 = vmatprep.subr.bf16.mxu0 0
        %995 = vmatpush1.bf16.msra.mxu0 0
        %996 = vmatprep.subr.bf16.mxu0 0
        %997 = vmatpush1.bf16.msra.mxu0 0
        %998 = vmatprep.subr.bf16.mxu0 0
        %999 = vmatpush1.bf16.msra.mxu0 0
        %1000 = vmatprep.subr.bf16.mxu0 0
        %1001 = vmatpush1.bf16.msra.mxu0 0
        %1002 = vmatprep.subr.bf16.mxu0 0
        %1003 = vmatpush1.bf16.msra.mxu0 0
        %1004 = vmatprep.subr.bf16.mxu0 0
        %1005 = vmatpush1.bf16.msra.mxu0 0
        %1006 = vmatprep.subr.bf16.mxu0 0
        %1007 = vmatpush1.bf16.msra.mxu0 0
        %1008 = vmatprep.subr.bf16.mxu0 0
        %1009 = vmatpush1.bf16.msra.mxu0 0
        %1010 = vmatprep.subr.bf16.mxu0 0
        %1011 = vmatpush1.bf16.msra.mxu0 0
        %1012 = vmatprep.subr.bf16.mxu0 0
        %1013 = vmatpush1.bf16.msra.mxu0 0
        %1014 = vmatprep.subr.bf16.mxu0 0
        %1015 = vmatpush1.bf16.msra.mxu0 0
        %1016 = vmatprep.subr.bf16.mxu0 0
        %1017 = vmatpush1.bf16.msra.mxu0 0
        %1018 = vmatprep.subr.bf16.mxu0 0
        %1019 = vmatpush1.bf16.msra.mxu0 0
        %1020 = vmatprep.mubr.bf16.mxu0 0
        %1021 = vmatmul.mubr.bf16.gmra.mrb[0].mxu0 %v983
        %v1022 = vpop.f32.mrb[0].mxu0
        %v1023 = vadd.f32 0.0, %v1022
        %v1024 = vpop.f32.mrb[0].mxu0
        %v1025 = vpop.f32.mrb[0].mxu0
        %v1026 = vpop.f32.mrb[0].mxu0
        %1027 = vdwg.mxu0
        %v1029 = vsel %vm758, %v868, 0
        %v1032 = vsel %vm824, %v749, 0
        %1034 = vmatprep.subr.bf16.mxu0 0
        %1035 = vmatpush1.bf16.msra.mxu0 %v1032
        %1036 = vmatprep.subr.bf16.mxu0 0
        %1037 = vmatpush1.bf16.msra.mxu0 0
        %1038 = vmatprep.subr.bf16.mxu0 0
        %1039 = vmatpush1.bf16.msra.mxu0 0
        %1040 = vmatprep.subr.bf16.mxu0 0
        %1041 = vmatpush1.bf16.msra.mxu0 0
        %1042 = vmatprep.subr.bf16.mxu0 0
        %1043 = vmatpush1.bf16.msra.mxu0 0
        %1044 = vmatprep.subr.bf16.mxu0 0
        %1045 = vmatpush1.bf16.msra.mxu0 0
        %1046 = vmatprep.subr.bf16.mxu0 0
        %1047 = vmatpush1.bf16.msra.mxu0 0
        %1048 = vmatprep.subr.bf16.mxu0 0
        %1049 = vmatpush1.bf16.msra.mxu0 0
        %1050 = vmatprep.subr.bf16.mxu0 0
        %1051 = vmatpush1.bf16.msra.mxu0 0
        %1052 = vmatprep.subr.bf16.mxu0 0
        %1053 = vmatpush1.bf16.msra.mxu0 0
        %1054 = vmatprep.subr.bf16.mxu0 0
        %1055 = vmatpush1.bf16.msra.mxu0 0
        %1056 = vmatprep.subr.bf16.mxu0 0
        %1057 = vmatpush1.bf16.msra.mxu0 0
        %1058 = vmatprep.subr.bf16.mxu0 0
        %1059 = vmatpush1.bf16.msra.mxu0 0
        %1060 = vmatprep.subr.bf16.mxu0 0
        %1061 = vmatpush1.bf16.msra.mxu0 0
        %1062 = vmatprep.subr.bf16.mxu0 0
        %1063 = vmatpush1.bf16.msra.mxu0 0
        %1064 = vmatprep.subr.bf16.mxu0 0
        %1065 = vmatpush1.bf16.msra.mxu0 0
        %1066 = vmatprep.mubr.bf16.mxu0 0
        %1067 = vmatmul.mubr.bf16.gmra.mrb[0].mxu0 %v1029
        %v1068 = vpop.f32.mrb[0].mxu0
        %v1069 = vadd.f32 %v1023, %v1068
        %v1070 = vpop.f32.mrb[0].mxu0
        %v1071 = vpop.f32.mrb[0].mxu0
        %v1072 = vpop.f32.mrb[0].mxu0
        %1073 = vdwg.mxu0
        %1074 = vrot.lane.b32.xlu0 %v754, 112
        %v1075 = vpop.permute.xlu0 %1074
        %1076 = vrot.lane.b32.xlu0 %v754, 80
        %v1077 = vpop.permute.xlu0 %1076
        %v1079 = vsel %vm758, %v1075, 0
        %v1082 = vsel %vm758, %v1077, 0
        %1084 = vmatprep.subr.bf16.mxu0 0
        %1085 = vmatpush1.bf16.xpose.msra.mxu0 %v1082
        %1086 = vmatprep.subr.bf16.mxu0 0
        %1087 = vmatpush1.bf16.xpose.msra.mxu0 0
        %1088 = vmatprep.subr.bf16.mxu0 0
        %1089 = vmatpush1.bf16.xpose.msra.mxu0 0
        %1090 = vmatprep.subr.bf16.mxu0 0
        %1091 = vmatpush1.bf16.xpose.msra.mxu0 0
        %1092 = vmatprep.subr.bf16.mxu0 0
        %1093 = vmatpush1.bf16.xpose.msra.mxu0 0
        %1094 = vmatprep.subr.bf16.mxu0 0
        %1095 = vmatpush1.bf16.xpose.msra.mxu0 0
        %1096 = vmatprep.subr.bf16.mxu0 0
        %1097 = vmatpush1.bf16.xpose.msra.mxu0 0
        %1098 = vmatprep.subr.bf16.mxu0 0
        %1099 = vmatpush1.bf16.xpose.msra.mxu0 0
        %1100 = vmatprep.subr.bf16.mxu0 0
        %1101 = vmatpush1.bf16.xpose.msra.mxu0 0
        %1102 = vmatprep.subr.bf16.mxu0 0
        %1103 = vmatpush1.bf16.xpose.msra.mxu0 0
        %1104 = vmatprep.subr.bf16.mxu0 0
        %1105 = vmatpush1.bf16.xpose.msra.mxu0 0
        %1106 = vmatprep.subr.bf16.mxu0 0
        %1107 = vmatpush1.bf16.xpose.msra.mxu0 0
        %1108 = vmatprep.subr.bf16.mxu0 0
        %1109 = vmatpush1.bf16.xpose.msra.mxu0 0
        %1110 = vmatprep.subr.bf16.mxu0 0
        %1111 = vmatpush1.bf16.xpose.msra.mxu0 0
        %1112 = vmatprep.subr.bf16.mxu0 0
        %1113 = vmatpush1.bf16.xpose.msra.mxu0 0
        %1114 = vmatprep.subr.bf16.mxu0 0
        %1115 = vmatpush1.bf16.xpose.msra.mxu0 0
        %1116 = vmatprep.mubr.bf16.mxu0 0
        %1117 = vmatmul.mubr.bf16.gmra.mrb[0].mxu0 %v1079
        %v1118 = vpop.f32.mrb[0].mxu0
        %v1119 = vadd.f32 0.0, %v1118
        %v1120 = vpop.f32.mrb[0].mxu0
        %v1121 = vpop.f32.mrb[0].mxu0
        %v1122 = vpop.f32.mrb[0].mxu0
        %1123 = vdwg.mxu0
        %v1124 = vmul.f32 %v1119, 0.35355338
        %v1125 = vadd.f32 %v1124, %v748
        %v1126 = vsel %vm758, %v1125, -inf
        %1127 = vmax.xlane.f32.xlu0 %v1126
        %v1128 = vpop.xlane.xlu0 %1127
        %v1129 = vsub.f32 %v1125, %v1128
        %v1130 = vmul.f32 %v1129, 1.442695
        %v1131 = vpow.pop %v1130
        %v1132 = vsel %vm758, %v1131, 0.0
        %1133 = vadd.xlane.f32.xlu0 %v1132
        %v1134 = vpop.xlane.xlu0 %1133
        %v1135 = vrcp.pop %v1134
        %v1136 = vmul.f32 %v1131, %v1135
        %v1137 = vpack.c.bf16 %v1136, %v1136
        %1138 = vrot.lane.b32.xlu0 %v754, 48
        %v1139 = vpop.permute.xlu0 %1138
        %v1141 = vsel %vm758, %v1137, 0
        %v1144 = vsel %vm824, %v1139, 0
        %1146 = vmatprep.subr.bf16.mxu0 0
        %1147 = vmatpush1.bf16.msra.mxu0 %v1144
        %1148 = vmatprep.subr.bf16.mxu0 0
        %1149 = vmatpush1.bf16.msra.mxu0 0
        %1150 = vmatprep.subr.bf16.mxu0 0
        %1151 = vmatpush1.bf16.msra.mxu0 0
        %1152 = vmatprep.subr.bf16.mxu0 0
        %1153 = vmatpush1.bf16.msra.mxu0 0
        %1154 = vmatprep.subr.bf16.mxu0 0
        %1155 = vmatpush1.bf16.msra.mxu0 0
        %1156 = vmatprep.subr.bf16.mxu0 0
        %1157 = vmatpush1.bf16.msra.mxu0 0
        %1158 = vmatprep.subr.bf16.mxu0 0
        %1159 = vmatpush1.bf16.msra.mxu0 0
        %1160 = vmatprep.subr.bf16.mxu0 0
        %1161 = vmatpush1.bf16.msra.mxu0 0
        %1162 = vmatprep.subr.bf16.mxu0 0
        %1163 = vmatpush1.bf16.msra.mxu0 0
        %1164 = vmatprep.subr.bf16.mxu0 0
        %1165 = vmatpush1.bf16.msra.mxu0 0
        %1166 = vmatprep.subr.bf16.mxu0 0
        %1167 = vmatpush1.bf16.msra.mxu0 0
        %1168 = vmatprep.subr.bf16.mxu0 0
        %1169 = vmatpush1.bf16.msra.mxu0 0
        %1170 = vmatprep.subr.bf16.mxu0 0
        %1171 = vmatpush1.bf16.msra.mxu0 0
        %1172 = vmatprep.subr.bf16.mxu0 0
        %1173 = vmatpush1.bf16.msra.mxu0 0
        %1174 = vmatprep.subr.bf16.mxu0 0
        %1175 = vmatpush1.bf16.msra.mxu0 0
        %1176 = vmatprep.subr.bf16.mxu0 0
        %1177 = vmatpush1.bf16.msra.mxu0 0
        %1178 = vmatprep.mubr.bf16.mxu0 0
        %1179 = vmatmul.mubr.bf16.gmra.mrb[0].mxu0 %v1141
        %v1180 = vpop.f32.mrb[0].mxu0
        %v1181 = vadd.f32 0.0, %v1180
        %v1182 = vpop.f32.mrb[0].mxu0
        %v1183 = vpop.f32.mrb[0].mxu0
        %v1184 = vpop.f32.mrb[0].mxu0
        %1185 = vdwg.mxu0
        %v1186 = vpack.c.bf16 %v1181, %v1181
        %v1188 = vsel %vm758, %v1186, 0
        %v1191 = vsel %vm824, %v751, 0
        %1193 = vmatprep.subr.bf16.mxu0 0
        %1194 = vmatpush1.bf16.msra.mxu0 %v1191
        %1195 = vmatprep.subr.bf16.mxu0 0
        %1196 = vmatpush1.bf16.msra.mxu0 0
        %1197 = vmatprep.subr.bf16.mxu0 0
        %1198 = vmatpush1.bf16.msra.mxu0 0
        %1199 = vmatprep.subr.bf16.mxu0 0
        %1200 = vmatpush1.bf16.msra.mxu0 0
        %1201 = vmatprep.subr.bf16.mxu0 0
        %1202 = vmatpush1.bf16.msra.mxu0 0
        %1203 = vmatprep.subr.bf16.mxu0 0
        %1204 = vmatpush1.bf16.msra.mxu0 0
        %1205 = vmatprep.subr.bf16.mxu0 0
        %1206 = vmatpush1.bf16.msra.mxu0 0
        %1207 = vmatprep.subr.bf16.mxu0 0
        %1208 = vmatpush1.bf16.msra.mxu0 0
        %1209 = vmatprep.subr.bf16.mxu0 0
        %1210 = vmatpush1.bf16.msra.mxu0 0
        %1211 = vmatprep.subr.bf16.mxu0 0
        %1212 = vmatpush1.bf16.msra.mxu0 0
        %1213 = vmatprep.subr.bf16.mxu0 0
        %1214 = vmatpush1.bf16.msra.mxu0 0
        %1215 = vmatprep.subr.bf16.mxu0 0
        %1216 = vmatpush1.bf16.msra.mxu0 0
        %1217 = vmatprep.subr.bf16.mxu0 0
        %1218 = vmatpush1.bf16.msra.mxu0 0
        %1219 = vmatprep.subr.bf16.mxu0 0
        %1220 = vmatpush1.bf16.msra.mxu0 0
        %1221 = vmatprep.subr.bf16.mxu0 0
        %1222 = vmatpush1.bf16.msra.mxu0 0
        %1223 = vmatprep.subr.bf16.mxu0 0
        %1224 = vmatpush1.bf16.msra.mxu0 0
        %1225 = vmatprep.mubr.bf16.mxu0 0
        %1226 = vmatmul.mubr.bf16.gmra.mrb[0].mxu0 %v1188
        %v1227 = vpop.f32.mrb[0].mxu0
        %v1228 = vadd.f32 0.0, %v1227
        %v1229 = vpop.f32.mrb[0].mxu0
        %v1230 = vpop.f32.mrb[0].mxu0
        %v1231 = vpop.f32.mrb[0].mxu0
        %1232 = vdwg.mxu0
        %v1233 = vadd.f32 %v1069, %v1228
        %1234 = vrot.lane.b32.xlu0 %v754, 104
        %v1235 = vpop.permute.xlu0 %1234
        %1236 = vrot.lane.b32.xlu0 %v754, 72
        %v1237 = vpop.permute.xlu0 %1236
        %v1239 = vsel %vm758, %v1235, 0
        %v1242 = vsel %vm758, %v1237, 0
        %1244 = vmatprep.subr.bf16.mxu0 0
        %1245 = vmatpush1.bf16.xpose.msra.mxu0 %v1242
        %1246 = vmatprep.subr.bf16.mxu0 0
        %1247 = vmatpush1.bf16.xpose.msra.mxu0 0
        %1248 = vmatprep.subr.bf16.mxu0 0
        %1249 = vmatpush1.bf16.xpose.msra.mxu0 0
        %1250 = vmatprep.subr.bf16.mxu0 0
        %1251 = vmatpush1.bf16.xpose.msra.mxu0 0
        %1252 = vmatprep.subr.bf16.mxu0 0
        %1253 = vmatpush1.bf16.xpose.msra.mxu0 0
        %1254 = vmatprep.subr.bf16.mxu0 0
        %1255 = vmatpush1.bf16.xpose.msra.mxu0 0
        %1256 = vmatprep.subr.bf16.mxu0 0
        %1257 = vmatpush1.bf16.xpose.msra.mxu0 0
        %1258 = vmatprep.subr.bf16.mxu0 0
        %1259 = vmatpush1.bf16.xpose.msra.mxu0 0
        %1260 = vmatprep.subr.bf16.mxu0 0
        %1261 = vmatpush1.bf16.xpose.msra.mxu0 0
        %1262 = vmatprep.subr.bf16.mxu0 0
        %1263 = vmatpush1.bf16.xpose.msra.mxu0 0
        %1264 = vmatprep.subr.bf16.mxu0 0
        %1265 = vmatpush1.bf16.xpose.msra.mxu0 0
        %1266 = vmatprep.subr.bf16.mxu0 0
        %1267 = vmatpush1.bf16.xpose.msra.mxu0 0
        %1268 = vmatprep.subr.bf16.mxu0 0
        %1269 = vmatpush1.bf16.xpose.msra.mxu0 0
        %1270 = vmatprep.subr.bf16.mxu0 0
        %1271 = vmatpush1.bf16.xpose.msra.mxu0 0
        %1272 = vmatprep.subr.bf16.mxu0 0
        %1273 = vmatpush1.bf16.xpose.msra.mxu0 0
        %1274 = vmatprep.subr.bf16.mxu0 0
        %1275 = vmatpush1.bf16.xpose.msra.mxu0 0
        %1276 = vmatprep.mubr.bf16.mxu0 0
        %1277 = vmatmul.mubr.bf16.gmra.mrb[0].mxu0 %v1239
        %v1278 = vpop.f32.mrb[0].mxu0
        %v1279 = vadd.f32 0.0, %v1278
        %v1280 = vpop.f32.mrb[0].mxu0
        %v1281 = vpop.f32.mrb[0].mxu0
        %v1282 = vpop.f32.mrb[0].mxu0
        %1283 = vdwg.mxu0
        %v1284 = vmul.f32 %v1279, 0.35355338
        %v1285 = vadd.f32 %v1284, %v748
        %v1286 = vsel %vm758, %v1285, -inf
        %1287 = vmax.xlane.f32.xlu0 %v1286
        %v1288 = vpop.xlane.xlu0 %1287
        %v1289 = vsub.f32 %v1285, %v1288
        %v1290 = vmul.f32 %v1289, 1.442695
        %v1291 = vpow.pop %v1290
        %v1292 = vsel %vm758, %v1291, 0.0
        %1293 = vadd.xlane.f32.xlu0 %v1292
        %v1294 = vpop.xlane.xlu0 %1293
        %v1295 = vrcp.pop %v1294
        %v1296 = vmul.f32 %v1291, %v1295
        %v1297 = vpack.c.bf16 %v1296, %v1296
        %1298 = vrot.lane.b32.xlu0 %v754, 40
        %v1299 = vpop.permute.xlu0 %1298
        %v1301 = vsel %vm758, %v1297, 0
        %v1304 = vsel %vm824, %v1299, 0
        %1306 = vmatprep.subr.bf16.mxu0 0
        %1307 = vmatpush1.bf16.msra.mxu0 %v1304
        %1308 = vmatprep.subr.bf16.mxu0 0
        %1309 = vmatpush1.bf16.msra.mxu0 0
        %1310 = vmatprep.subr.bf16.mxu0 0
        %1311 = vmatpush1.bf16.msra.mxu0 0
        %1312 = vmatprep.subr.bf16.mxu0 0
        %1313 = vmatpush1.bf16.msra.mxu0 0
        %1314 = vmatprep.subr.bf16.mxu0 0
        %1315 = vmatpush1.bf16.msra.mxu0 0
        %1316 = vmatprep.subr.bf16.mxu0 0
        %1317 = vmatpush1.bf16.msra.mxu0 0
        %1318 = vmatprep.subr.bf16.mxu0 0
        %1319 = vmatpush1.bf16.msra.mxu0 0
        %1320 = vmatprep.subr.bf16.mxu0 0
        %1321 = vmatpush1.bf16.msra.mxu0 0
        %1322 = vmatprep.subr.bf16.mxu0 0
        %1323 = vmatpush1.bf16.msra.mxu0 0
        %1324 = vmatprep.subr.bf16.mxu0 0
        %1325 = vmatpush1.bf16.msra.mxu0 0
        %1326 = vmatprep.subr.bf16.mxu0 0
        %1327 = vmatpush1.bf16.msra.mxu0 0
        %1328 = vmatprep.subr.bf16.mxu0 0
        %1329 = vmatpush1.bf16.msra.mxu0 0
        %1330 = vmatprep.subr.bf16.mxu0 0
        %1331 = vmatpush1.bf16.msra.mxu0 0
        %1332 = vmatprep.subr.bf16.mxu0 0
        %1333 = vmatpush1.bf16.msra.mxu0 0
        %1334 = vmatprep.subr.bf16.mxu0 0
        %1335 = vmatpush1.bf16.msra.mxu0 0
        %1336 = vmatprep.subr.bf16.mxu0 0
        %1337 = vmatpush1.bf16.msra.mxu0 0
        %1338 = vmatprep.mubr.bf16.mxu0 0
        %1339 = vmatmul.mubr.bf16.gmra.mrb[0].mxu0 %v1301
        %v1340 = vpop.f32.mrb[0].mxu0
        %v1341 = vadd.f32 0.0, %v1340
        %v1342 = vpop.f32.mrb[0].mxu0
        %v1343 = vpop.f32.mrb[0].mxu0
        %v1344 = vpop.f32.mrb[0].mxu0
        %1345 = vdwg.mxu0
        %v1346 = vpack.c.bf16 %v1341, %v1341
        %v1348 = vsel %vm758, %v1346, 0
        %v1351 = vsel %vm824, %v752, 0
        %1353 = vmatprep.subr.bf16.mxu0 0
        %1354 = vmatpush1.bf16.msra.mxu0 %v1351
        %1355 = vmatprep.subr.bf16.mxu0 0
        %1356 = vmatpush1.bf16.msra.mxu0 0
        %1357 = vmatprep.subr.bf16.mxu0 0
        %1358 = vmatpush1.bf16.msra.mxu0 0
        %1359 = vmatprep.subr.bf16.mxu0 0
        %1360 = vmatpush1.bf16.msra.mxu0 0
        %1361 = vmatprep.subr.bf16.mxu0 0
        %1362 = vmatpush1.bf16.msra.mxu0 0
        %1363 = vmatprep.subr.bf16.mxu0 0
        %1364 = vmatpush1.bf16.msra.mxu0 0
        %1365 = vmatprep.subr.bf16.mxu0 0
        %1366 = vmatpush1.bf16.msra.mxu0 0
        %1367 = vmatprep.subr.bf16.mxu0 0
        %1368 = vmatpush1.bf16.msra.mxu0 0
        %1369 = vmatprep.subr.bf16.mxu0 0
        %1370 = vmatpush1.bf16.msra.mxu0 0
        %1371 = vmatprep.subr.bf16.mxu0 0
        %1372 = vmatpush1.bf16.msra.mxu0 0
        %1373 = vmatprep.subr.bf16.mxu0 0
        %1374 = vmatpush1.bf16.msra.mxu0 0
        %1375 = vmatprep.subr.bf16.mxu0 0
        %1376 = vmatpush1.bf16.msra.mxu0 0
        %1377 = vmatprep.subr.bf16.mxu0 0
        %1378 = vmatpush1.bf16.msra.mxu0 0
        %1379 = vmatprep.subr.bf16.mxu0 0
        %1380 = vmatpush1.bf16.msra.mxu0 0
        %1381 = vmatprep.subr.bf16.mxu0 0
        %1382 = vmatpush1.bf16.msra.mxu0 0
        %1383 = vmatprep.subr.bf16.mxu0 0
        %1384 = vmatpush1.bf16.msra.mxu0 0
        %1385 = vmatprep.mubr.bf16.mxu0 0
        %1386 = vmatmul.mubr.bf16.gmra.mrb[0].mxu0 %v1348
        %v1387 = vpop.f32.mrb[0].mxu0
        %v1388 = vadd.f32 0.0, %v1387
        %v1389 = vpop.f32.mrb[0].mxu0
        %v1390 = vpop.f32.mrb[0].mxu0
        %v1391 = vpop.f32.mrb[0].mxu0
        %1392 = vdwg.mxu0
        %v1393 = vadd.f32 %v1233, %v1388
        %v1395 = vlaneseq
        %v1396 = vshrl.u32 %v1395, 7
        %v1397 = vsub.s32 0, %v1396
        %v1398 = vrot.slane %v753, %v1397
        %v1400 = vadd.f32 %v1393, %v1398
        %v1401 = vadd.f32 %v1400, %v680
        %v1402 = vld [vmem:[#allocation13] sm:$0x1]
        %v1403 = vld [vmem:[#allocation14] sm:$0x1]
        %v1404 = vsel %vm704, %v1401, 0.0
        %1405 = vadd.xlane.f32.xlu0 %v1404
        %v1406 = vpop.xlane.xlu0 %1405
        %v1407 = vrcp.pop 32.0
        %v1408 = vmul.f32 %v1406, %v1407
        %v1409 = vsub.f32 %v1401, %v1408
        %v1410 = vmul.f32 %v1409, %v1409
        %v1411 = vsel %vm704, %v1410, 0.0
        %1412 = vadd.xlane.f32.xlu0 %v1411
        %v1413 = vpop.xlane.xlu0 %1412
        %v1414 = vmul.f32 %v1413, %v1407
        %v1415 = vadd.f32 %v1414, 1e-05
        %v1416 = vrsqrt.pop %v1415
        %v1417 = vmul.f32 %v1409, %v1416
        %v1419 = vlaneseq
        %v1420 = vshrl.u32 %v1419, 7
        %v1421 = vsub.s32 0, %v1420
        %v1422 = vrot.slane %v1402, %v1421
        %v1424 = vmul.f32 %v1422, %v1417
        %v1426 = vlaneseq
        %v1427 = vshrl.u32 %v1426, 7
        %v1428 = vsub.s32 0, %v1427
        %v1429 = vrot.slane %v1403, %v1428
        %v1431 = vadd.f32 %v1424, %v1429
        %v1432 = vld [vmem:[#allocation16] sm:$0xf]
        %v1433 = vld [vmem:[#allocation16 + $0x4] sm:$0xf]
        %v1434 = vld [vmem:[#allocation16 + $0x8] sm:$0xf]
        %v1435 = vld [vmem:[#allocation16 + $0xc] sm:$0xf]
        %v1436 = vld [vmem:[#allocation17] sm:$0x1]
        %v1437 = vld [vmem:[#allocation19] sm:$0xf]
        %v1438 = vld [vmem:[#allocation19 + $0x4] sm:$0xf]
        %v1439 = vld [vmem:[#allocation19 + $0x8] sm:$0xf]
        %v1440 = vld [vmem:[#allocation19 + $0xc] sm:$0xf]
        %v1441 = vld [vmem:[#allocation19 + $0x10] sm:$0xf]
        %v1442 = vld [vmem:[#allocation19 + $0x14] sm:$0xf]
        %v1443 = vld [vmem:[#allocation19 + $0x18] sm:$0xf]
        %v1444 = vld [vmem:[#allocation19 + $0x1c] sm:$0xf]
        %v1445 = vld [vmem:[#allocation20] sm:$0x1]
        %v1446 = vld [vmem:[#allocation22] sm:$0x1]
        %v1447 = vld [vmem:[#allocation23] sm:$0x1]
        %v1448 = vpack.c.bf16 %v1431, %v1431
        %v1450 = vlaneseq
        %v1451 = vshrl.u32 %v1450, 7
        %v1452 = vsub.s32 0, %v1451
        %v1453 = vrot.slane %v1436, %v1452
        %v1459 = vunpack.c.l.b16 %v1432
        %v1460 = vunpack.c.l.b16 %v1433
        %v1461 = vunpack.c.l.b16 %v1434
        %v1462 = vunpack.c.l.b16 %v1435
        %v1463 = vpack.c.b16 %v1460, %v1459
        %v1464 = vpack.c.b16 %v1462, %v1461
        %v1468 = vsel %vm704, %v1448, 0
        %1470 = vmatprep.subr.bf16.mxu0 0
        %1471 = vmatpush1.bf16.msra.mxu0 %v1463
        %1472 = vmatprep.subr.bf16.mxu0 0
        %1473 = vmatpush1.bf16.msra.mxu0 %v1464
        %1474 = vmatprep.subr.bf16.mxu0 0
        %1475 = vmatpush1.bf16.msra.mxu0 0
        %1476 = vmatprep.subr.bf16.mxu0 0
        %1477 = vmatpush1.bf16.msra.mxu0 0
        %1478 = vmatprep.subr.bf16.mxu0 0
        %1479 = vmatpush1.bf16.msra.mxu0 0
        %1480 = vmatprep.subr.bf16.mxu0 0
        %1481 = vmatpush1.bf16.msra.mxu0 0
        %1482 = vmatprep.subr.bf16.mxu0 0
        %1483 = vmatpush1.bf16.msra.mxu0 0
        %1484 = vmatprep.subr.bf16.mxu0 0
        %1485 = vmatpush1.bf16.msra.mxu0 0
        %1486 = vmatprep.subr.bf16.mxu0 0
        %1487 = vmatpush1.bf16.msra.mxu0 0
        %1488 = vmatprep.subr.bf16.mxu0 0
        %1489 = vmatpush1.bf16.msra.mxu0 0
        %1490 = vmatprep.subr.bf16.mxu0 0
        %1491 = vmatpush1.bf16.msra.mxu0 0
        %1492 = vmatprep.subr.bf16.mxu0 0
        %1493 = vmatpush1.bf16.msra.mxu0 0
        %1494 = vmatprep.subr.bf16.mxu0 0
        %1495 = vmatpush1.bf16.msra.mxu0 0
        %1496 = vmatprep.subr.bf16.mxu0 0
        %1497 = vmatpush1.bf16.msra.mxu0 0
        %1498 = vmatprep.subr.bf16.mxu0 0
        %1499 = vmatpush1.bf16.msra.mxu0 0
        %1500 = vmatprep.subr.bf16.mxu0 0
        %1501 = vmatpush1.bf16.msra.mxu0 0
        %1502 = vmatprep.mubr.bf16.mxu0 0
        %1503 = vmatmul.mubr.bf16.gmra.mrb[0].mxu0 %v1468
        %v1504 = vpop.f32.mrb[0].mxu0
        %v1505 = vadd.f32 %v1453, %v1504
        %v1506 = vpop.f32.mrb[0].mxu0
        %v1507 = vpop.f32.mrb[0].mxu0
        %v1508 = vpop.f32.mrb[0].mxu0
        %1509 = vdwg.mxu0
        %v1510 = vmax.f32 %v1505, 0.0
        %v1511 = vpack.c.bf16 %v1510, %v1510
        %v1513 = vlaneseq
        %v1514 = vshrl.u32 %v1513, 7
        %v1515 = vsub.s32 0, %v1514
        %v1516 = vrot.slane %v1445, %v1515
        %v1526 = vunpack.c.l.b16 %v1437
        %v1527 = vunpack.c.l.b16 %v1438
        %v1528 = vunpack.c.l.b16 %v1439
        %v1529 = vunpack.c.l.b16 %v1440
        %v1530 = vunpack.c.l.b16 %v1441
        %v1531 = vunpack.c.l.b16 %v1442
        %v1532 = vunpack.c.l.b16 %v1443
        %v1533 = vunpack.c.l.b16 %v1444
        %v1534 = vpack.c.b16 %v1527, %v1526
        %v1535 = vpack.c.b16 %v1529, %v1528
        %v1536 = vpack.c.b16 %v1531, %v1530
        %v1537 = vpack.c.b16 %v1533, %v1532
        %vm1542 = vcmask 523264
        %v1544 = vsel %vm1542, %v1511, 0
        %1546 = vmatprep.subr.bf16.mxu0 0
        %1547 = vmatpush1.bf16.msra.mxu0 %v1534
        %1548 = vmatprep.subr.bf16.mxu0 0
        %1549 = vmatpush1.bf16.msra.mxu0 %v1535
        %1550 = vmatprep.subr.bf16.mxu0 0
        %1551 = vmatpush1.bf16.msra.mxu0 %v1536
        %1552 = vmatprep.subr.bf16.mxu0 0
        %1553 = vmatpush1.bf16.msra.mxu0 %v1537
        %1554 = vmatprep.subr.bf16.mxu0 0
        %1555 = vmatpush1.bf16.msra.mxu0 0
        %1556 = vmatprep.subr.bf16.mxu0 0
        %1557 = vmatpush1.bf16.msra.mxu0 0
        %1558 = vmatprep.subr.bf16.mxu0 0
        %1559 = vmatpush1.bf16.msra.mxu0 0
        %1560 = vmatprep.subr.bf16.mxu0 0
        %1561 = vmatpush1.bf16.msra.mxu0 0
        %1562 = vmatprep.subr.bf16.mxu0 0
        %1563 = vmatpush1.bf16.msra.mxu0 0
        %1564 = vmatprep.subr.bf16.mxu0 0
        %1565 = vmatpush1.bf16.msra.mxu0 0
        %1566 = vmatprep.subr.bf16.mxu0 0
        %1567 = vmatpush1.bf16.msra.mxu0 0
        %1568 = vmatprep.subr.bf16.mxu0 0
        %1569 = vmatpush1.bf16.msra.mxu0 0
        %1570 = vmatprep.subr.bf16.mxu0 0
        %1571 = vmatpush1.bf16.msra.mxu0 0
        %1572 = vmatprep.subr.bf16.mxu0 0
        %1573 = vmatpush1.bf16.msra.mxu0 0
        %1574 = vmatprep.subr.bf16.mxu0 0
        %1575 = vmatpush1.bf16.msra.mxu0 0
        %1576 = vmatprep.subr.bf16.mxu0 0
        %1577 = vmatpush1.bf16.msra.mxu0 0
        %1578 = vmatprep.mubr.bf16.mxu0 0
        %1579 = vmatmul.mubr.bf16.gmra.mrb[0].mxu0 %v1544
        %v1580 = vpop.f32.mrb[0].mxu0
        %v1581 = vadd.f32 %v1516, %v1580
        %v1582 = vpop.f32.mrb[0].mxu0
        %v1583 = vpop.f32.mrb[0].mxu0
        %v1584 = vpop.f32.mrb[0].mxu0
        %1585 = vdwg.mxu0
        %v1586 = vadd.f32 %v1581, %v1431
        %v1587 = vsel %vm704, %v1586, 0.0
        %1588 = vadd.xlane.f32.xlu0 %v1587
        %v1589 = vpop.xlane.xlu0 %1588
        %v1590 = vmul.f32 %v1589, %v1407
        %v1591 = vsub.f32 %v1586, %v1590
        %v1592 = vmul.f32 %v1591, %v1591
        %v1593 = vsel %vm704, %v1592, 0.0
        %1594 = vadd.xlane.f32.xlu0 %v1593
        %v1595 = vpop.xlane.xlu0 %1594
        %v1596 = vmul.f32 %v1595, %v1407
        %v1597 = vadd.f32 %v1596, 1e-05
        %v1598 = vrsqrt.pop %v1597
        %v1599 = vmul.f32 %v1591, %v1598
        %v1601 = vlaneseq
        %v1602 = vshrl.u32 %v1601, 7
        %v1603 = vsub.s32 0, %v1602
        %v1604 = vrot.slane %v1446, %v1603
        %v1606 = vmul.f32 %v1604, %v1599
        %v1608 = vlaneseq
        %v1609 = vshrl.u32 %v1608, 7
        %v1610 = vsub.s32 0, %v1609
        %v1611 = vrot.slane %v1447, %v1610
        %v1613 = vadd.f32 %v1606, %v1611
        %v1614 = vpack.c.bf16 %v1613, %v1613
        %vm1615 = vcmask 257024
        %1616 = vst.msk [vmem:[%s677] sm:$0xf] %vm1615, %v1614
        %s1617 = sand.u32 %s352, 1
        %s1618 = scalar_lea.sflag [#allocation4], %s1617
        %s1619 = sand.u32 %s352, 1
        %s1620 = smul.addr %s1619, 4
        %s1621 = scalar_lea.vmem [#allocation25], %s1620
        // Predicated region
        $region133: #{transformer_forward.3} parent=75 // pred_check
          %p1622 = pneg %p362
        $region134: #{transformer_forward.3} parent=75 // pred_check_branch
          %1624 = sbr.rel (%p1622) target = $region136
        $region135: #{transformer_forward.3} parent=75 // pred_region
          %s1626 = ssub.s32 64, 64
          %1627 = vsyncadd %s1618, %s1626
          %s1628 = smul.addr %s40, 64
          %s1629 = scalar_lea.hbm %s14, %s1628
          %s1631 = sshll.u32 %s1621, 4
          %s1632 = int_to_ptr.vmem [resolvable:$true] %s1631
          %1634 = dma.vmem_to_hbm [thread:$0]  %s1632, 64, %s1629, %s1618
        $region136: #{transformer_forward.3} parent=75 // pred_fallthru
          _
      $region76: #{transformer_forward.3} parent=5 // pred_fallthru
        _
      %p1635 = scmp.le.s32.totalorder 2, %s35
      // Predicated region
      $region137: #{transformer_forward.3} parent=5 // pred_check
        %p1636 = pneg %p1635
      $region138: #{transformer_forward.3} parent=5 // pred_check_branch
        %1638 = sbr.rel (%p1636) target = $region140
      $region139: #{transformer_forward.3} parent=5 // pred_region
        %s1639 = ssub.s32 %s35, 2
        // Predicated region
        $region141: #{transformer_forward.3} parent=139 // pred_check
          %p1640 = pneg %p368
        $region142: #{transformer_forward.3} parent=139 // pred_check_branch
          %1642 = sbr.rel (%p1640) target = $region144
        $region143: #{transformer_forward.3} parent=139 // pred_region
          %s1643 = sand.u32 %s353, 1
          %s1644 = scalar_lea.sflag [#allocation4], %s1643
          %s1645 = sand.u32 %s353, 1
          %s1646 = smul.addr %s1645, 4
          %s1647 = scalar_lea.vmem [#allocation25], %s1646
          %1648 = dma.done %s1644, 64
        $region144: #{transformer_forward.3} parent=139 // pred_fallthru
          _
      $region140: #{transformer_forward.3} parent=5 // pred_fallthru
        _
    $region6: #{transformer_forward.3} parent=1 // loop_footer
      %s39 = sadd.s32 1, %s35
    $region7: #{transformer_forward.3} parent=1 // loop_footer_branch
      %34 = sbr.rel target = $region3
    $region8: #{transformer_forward.3} parent=1 // loop_exit
      _
    %1649 = vsyncpa [#allocation3], 1
    %s1650 = scalar_lea.sflag [#allocation3], 1
    %1651 = vsyncpa %s1650, 1
    %1652 = vsyncpa [#allocation6], 1
    %s1653 = scalar_lea.sflag [#allocation6], 1
    %1654 = vsyncpa %s1653, 1
    %1655 = vsyncpa [#allocation9], 1
    %1656 = vsyncpa [#allocation12], 1
    %1657 = vsyncpa [#allocation15], 1
    %1658 = vsyncpa [#allocation18], 1
    %1659 = vsyncpa [#allocation21], 1
    %1660 = vsyncpa [#allocation24], 1
    %1661 = vsyncpa [#allocation4], 1
    %s1662 = scalar_lea.sflag [#allocation4], 1
    %1663 = vsyncpa %s1662, 1

// kernel: transformer_forward.4
$region0: #{transformer_forward.4}
  #allocation0 [shape = 'u32[]', space=smem, size = 0x4, offset = 0x4, fixed_abs, tag = 'smem constant byte address 0x4 - core index']
  #allocation1 [shape = 'u32[144,128]{1,0:T(1,128)}', space=vmem, size = 0x12000, scoped, tag = 'internal scratch']
  %s0 = inlined_call_operand.hbm [shape: bf16[2,8,32], index: 0, kind: input, shape index: {}]
  %s1 = inlined_call_operand.hbm [shape: bf16[2,8,32], index: 1, kind: input, shape index: {}]
  %s2 = inlined_call_operand.hbm [shape: f32[2,8,8], index: 2, kind: input, shape index: {}]
  %s3 = inlined_call_operand.hbm [shape: f32[2,8,8], index: 3, kind: input, shape index: {}]
  %s4 = inlined_call_operand.hbm [shape: bf16[32,96], index: 4, kind: input, shape index: {}]
  %s5 = inlined_call_operand.hbm [shape: f32[1,96], index: 5, kind: input, shape index: {}]
  %s6 = inlined_call_operand.hbm [shape: bf16[32,32], index: 6, kind: input, shape index: {}]
  %s7 = inlined_call_operand.hbm [shape: f32[1,32], index: 7, kind: input, shape index: {}]
  %s8 = inlined_call_operand.hbm [shape: f32[1,32], index: 8, kind: input, shape index: {}]
  %s9 = inlined_call_operand.hbm [shape: f32[1,32], index: 9, kind: input, shape index: {}]
  %s10 = inlined_call_operand.hbm [shape: bf16[32,64], index: 10, kind: input, shape index: {}]
  %s11 = inlined_call_operand.hbm [shape: f32[1,64], index: 11, kind: input, shape index: {}]
  %s12 = inlined_call_operand.hbm [shape: bf16[32,32], index: 12, kind: input, shape index: {}]
  %s13 = inlined_call_operand.hbm [shape: f32[1,32], index: 13, kind: input, shape index: {}]
  %s14 = inlined_call_operand.hbm [shape: bf16[32,32], index: 14, kind: input, shape index: {}]
  %s15 = inlined_call_operand.hbm [shape: f32[1,32], index: 15, kind: input, shape index: {}]
  %s16 = inlined_call_operand.hbm [shape: f32[1,32], index: 16, kind: input, shape index: {}]
  %s17 = inlined_call_operand.hbm [shape: f32[1,32], index: 17, kind: input, shape index: {}]
  %s18 = inlined_call_operand.hbm [shape: bf16[32,64], index: 18, kind: input, shape index: {}]
  %s19 = inlined_call_operand.hbm [shape: f32[1,64], index: 19, kind: input, shape index: {}]
  %s20 = inlined_call_operand.hbm [shape: bf16[64,32], index: 20, kind: input, shape index: {}]
  %s21 = inlined_call_operand.hbm [shape: f32[1,32], index: 21, kind: input, shape index: {}]
  %s22 = inlined_call_operand.hbm [shape: f32[1,32], index: 22, kind: input, shape index: {}]
  %s23 = inlined_call_operand.hbm [shape: f32[1,32], index: 23, kind: input, shape index: {}]
  %s24 = inlined_call_operand.hbm [shape: bf16[2,8,32], index: 24, kind: output, shape index: {}]
  %s25 = sld [smem:[#allocation0]]
  $region225: #{transformer_forward.4} parent=0
    _
  %s27 = ssub.s32 1, %s25
  %s28 = scalar_select 0, %s27, %s25
  $region1: #{transformer_forward.4} parent=0
    #allocation2 [shape = 'u8[4096]{0}', space=vmem, size = 0x1000, scoped, tag = 'input window, operand 0']
    #allocation3 [shape = 's32[2]{0}', space=sflag, size = 0x8, scoped, tag = 'scoped memory for transformer_forward.4']
    #allocation4 [shape = 's32[2]{0}', space=sflag, size = 0x8, scoped, tag = 'scoped memory for transformer_forward.4']
    #allocation5 [shape = 'u8[4096]{0}', space=vmem, size = 0x1000, scoped, tag = 'input window, operand 1']
    #allocation6 [shape = 's32[2]{0}', space=sflag, size = 0x8, scoped, tag = 'scoped memory for transformer_forward.4']
    #allocation7 [shape = 'u8[8192]{0}', space=vmem, size = 0x2000, scoped, tag = 'input window, operand 2']
    #allocation8 [shape = 'u8[8192]{0}', space=vmem, size = 0x2000, scoped, tag = 'input window, operand 3']
    #allocation9 [shape = 's32[2]{0}', space=sflag, size = 0x8, scoped, tag = 'scoped memory for transformer_forward.4']
    #allocation10 [shape = 'u8[8192]{0}', space=vmem, size = 0x2000, scoped, tag = 'input window, operand 4, single buffered']
    #allocation11 [shape = 'u8[512]{0}', space=vmem, size = 0x400, scoped, tag = 'input window, operand 5, single buffered']
    #allocation12 [shape = 's32[1]{0}', space=sflag, size = 0x4, scoped, tag = 'scoped memory for transformer_forward.4']
    #allocation13 [shape = 'u8[8192]{0}', space=vmem, size = 0x2000, scoped, tag = 'input window, operand 6, single buffered']
    #allocation14 [shape = 'u8[512]{0}', space=vmem, size = 0x400, scoped, tag = 'input window, operand 7, single buffered']
    #allocation15 [shape = 's32[1]{0}', space=sflag, size = 0x4, scoped, tag = 'scoped memory for transformer_forward.4']
    #allocation16 [shape = 'u8[512]{0}', space=vmem, size = 0x400, scoped, tag = 'input window, operand 8, single buffered']
    #allocation17 [shape = 'u8[512]{0}', space=vmem, size = 0x400, scoped, tag = 'input window, operand 9, single buffered']
    #allocation18 [shape = 's32[1]{0}', space=sflag, size = 0x4, scoped, tag = 'scoped memory for transformer_forward.4']
    #allocation19 [shape = 'u8[8192]{0}', space=vmem, size = 0x2000, scoped, tag = 'input window, operand 10, single buffered']
    #allocation20 [shape = 'u8[512]{0}', space=vmem, size = 0x400, scoped, tag = 'input window, operand 11, single buffered']
    #allocation21 [shape = 's32[1]{0}', space=sflag, size = 0x4, scoped, tag = 'scoped memory for transformer_forward.4']
    #allocation22 [shape = 'u8[8192]{0}', space=vmem, size = 0x2000, scoped, tag = 'input window, operand 12, single buffered']
    #allocation23 [shape = 'u8[512]{0}', space=vmem, size = 0x400, scoped, tag = 'input window, operand 13, single buffered']
    #allocation24 [shape = 's32[1]{0}', space=sflag, size = 0x4, scoped, tag = 'scoped memory for transformer_forward.4']
    #allocation25 [shape = 'u8[8192]{0}', space=vmem, size = 0x2000, scoped, tag = 'input window, operand 14, single buffered']
    #allocation26 [shape = 'u8[512]{0}', space=vmem, size = 0x400, scoped, tag = 'input window, operand 15, single buffered']
    #allocation27 [shape = 's32[1]{0}', space=sflag, size = 0x4, scoped, tag = 'scoped memory for transformer_forward.4']
    #allocation28 [shape = 'u8[512]{0}', space=vmem, size = 0x400, scoped, tag = 'input window, operand 16, single buffered']
    #allocation29 [shape = 'u8[512]{0}', space=vmem, size = 0x400, scoped, tag = 'input window, operand 17, single buffered']
    #allocation30 [shape = 's32[1]{0}', space=sflag, size = 0x4, scoped, tag = 'scoped memory for transformer_forward.4']
    #allocation31 [shape = 'u8[8192]{0}', space=vmem, size = 0x2000, scoped, tag = 'input window, operand 18, single buffered']
    #allocation32 [shape = 'u8[512]{0}', space=vmem, size = 0x400, scoped, tag = 'input window, operand 19, single buffered']
    #allocation33 [shape = 's32[1]{0}', space=sflag, size = 0x4, scoped, tag = 'scoped memory for transformer_forward.4']
    #allocation34 [shape = 'u8[16384]{0}', space=vmem, size = 0x4000, scoped, tag = 'input window, operand 20, single buffered']
    #allocation35 [shape = 'u8[512]{0}', space=vmem, size = 0x400, scoped, tag = 'input window, operand 21, single buffered']
    #allocation36 [shape = 's32[1]{0}', space=sflag, size = 0x4, scoped, tag = 'scoped memory for transformer_forward.4']
    #allocation37 [shape = 'u8[512]{0}', space=vmem, size = 0x400, scoped, tag = 'input window, operand 22, single buffered']
    #allocation38 [shape = 'u8[512]{0}', space=vmem, size = 0x400, scoped, tag = 'input window, operand 23, single buffered']
    #allocation39 [shape = 's32[1]{0}', space=sflag, size = 0x4, scoped, tag = 'scoped memory for transformer_forward.4']
    #allocation40 [shape = 'u8[4096]{0}', space=vmem, size = 0x1000, scoped, tag = 'output window, operand 0']
    %29 = vsyncpa [#allocation3], 0
    %s30 = scalar_lea.sflag [#allocation3], 1
    %31 = vsyncpa %s30, 0
    %32 = vsyncpa [#allocation6], 0
    %s33 = scalar_lea.sflag [#allocation6], 1
    %34 = vsyncpa %s33, 0
    %35 = vsyncpa [#allocation9], 0
    %s36 = scalar_lea.sflag [#allocation9], 1
    %37 = vsyncpa %s36, 0
    %38 = vsyncpa [#allocation12], 0
    %39 = vsyncpa [#allocation15], 0
    %40 = vsyncpa [#allocation18], 0
    %41 = vsyncpa [#allocation21], 0
    %42 = vsyncpa [#allocation24], 0
    %43 = vsyncpa [#allocation27], 0
    %44 = vsyncpa [#allocation30], 0
    %45 = vsyncpa [#allocation33], 0
    %46 = vsyncpa [#allocation36], 0
    %47 = vsyncpa [#allocation39], 0
    %48 = vsyncpa [#allocation4], 0
    %s49 = scalar_lea.sflag [#allocation4], 1
    %50 = vsyncpa %s49, 0
    loop: start=0, step=1, limit=4
    $region2: #{transformer_forward.4} parent=1 // loop_pre_header
      _
    $region3: #{transformer_forward.4} parent=1 // loop_header
      %s52 = sphi 0, %s56
      %p53 = scmp.ge.s32.totalorder %s52, 4
      %s62 = sphi 0, %s64
      %s65 = sphi 0, %s62
      %s66 = sphi 0, %s65
      %s82 = sphi 0, %s66
      %s88 = sphi 0, %s90
      %s91 = sphi 0, %s88
      %s92 = sphi 0, %s91
      %s108 = sphi 0, %s92
      %s114 = sphi 0, %s116
      %s117 = sphi 0, %s114
      %s118 = sphi 0, %s117
      %s134 = sphi 0, %s118
      %s140 = sphi 0, %s142
      %s143 = sphi 0, %s140
      %s144 = sphi 0, %s143
      %s160 = sphi 0, %s144
      %s164 = sphi 0, %s164
      %s166 = sphi 0, %s164
      %s167 = sphi 0, %s166
      %s181 = sphi 0, %s167
      %s185 = sphi 0, %s185
      %s187 = sphi 0, %s185
      %s188 = sphi 0, %s187
      %s202 = sphi 0, %s188
      %s206 = sphi 0, %s206
      %s208 = sphi 0, %s206
      %s209 = sphi 0, %s208
      %s223 = sphi 0, %s209
      %s227 = sphi 0, %s227
      %s229 = sphi 0, %s227
      %s230 = sphi 0, %s229
      %s244 = sphi 0, %s230
      %s248 = sphi 0, %s248
      %s250 = sphi 0, %s248
      %s251 = sphi 0, %s250
      %s265 = sphi 0, %s251
      %s269 = sphi 0, %s269
      %s271 = sphi 0, %s269
      %s272 = sphi 0, %s271
      %s286 = sphi 0, %s272
      %s290 = sphi 0, %s290
      %s292 = sphi 0, %s290
      %s293 = sphi 0, %s292
      %s307 = sphi 0, %s293
      %s311 = sphi 0, %s311
      %s313 = sphi 0, %s311
      %s314 = sphi 0, %s313
      %s328 = sphi 0, %s314
      %s332 = sphi 0, %s332
      %s334 = sphi 0, %s332
      %s335 = sphi 0, %s334
      %s349 = sphi 0, %s335
      %s353 = sphi 0, %s353
      %s355 = sphi 0, %s353
      %s356 = sphi 0, %s355
      %s370 = sphi 0, %s356
      %s374 = sphi 0, %s374
      %s376 = sphi 0, %s374
      %s377 = sphi 0, %s376
      %s391 = sphi 0, %s377
      %s395 = sphi 0, %s395
      %s397 = sphi 0, %s395
      %s398 = sphi 0, %s397
      %s412 = sphi 0, %s398
      %s416 = sphi 0, %s416
      %s418 = sphi 0, %s416
      %s419 = sphi 0, %s418
      %s433 = sphi 0, %s419
      %s437 = sphi 0, %s437
      %s439 = sphi 0, %s437
      %s440 = sphi 0, %s439
      %s454 = sphi 0, %s440
      %s458 = sphi 0, %s458
      %s460 = sphi 0, %s458
      %s461 = sphi 0, %s460
      %s475 = sphi 0, %s461
      %s479 = sphi 0, %s479
      %s481 = sphi 0, %s479
      %s482 = sphi 0, %s481
      %s496 = sphi 0, %s482
      %s500 = sphi 0, %s500
      %s502 = sphi 0, %s500
      %s503 = sphi 0, %s502
      %s517 = sphi 0, %s503
      %s521 = sphi 0, %s521
      %s523 = sphi 0, %s521
      %s524 = sphi 0, %s523
      %s538 = sphi 0, %s524
      %s542 = sphi 0, %s542
      %s544 = sphi 0, %s542
      %s545 = sphi 0, %s544
      %s559 = sphi 0, %s545
      %s563 = sphi 0, %s563
      %s565 = sphi 0, %s563
      %s566 = sphi 0, %s565
      %s580 = sphi 0, %s566
      %s586 = sphi 0, %s588
      %s589 = sphi 0, %s586
      %s590 = sphi 0, %s589
      %s606 = sphi 0, %s590
    $region4: #{transformer_forward.4} parent=1 // loop_header_branch
      %55 = sbr.rel (%p53) target = $region8
    $region5: #{transformer_forward.4} parent=1 // loop_body
      %s57 = ssub.s32 %s52, 1
      %s58 = ssub.s32 %s52, 2
      %s59 = sadd.s32 %s52, 1
      %s60 = ssub.s32 %s52, %s59
      %p61 = scmp.eq.s32.totalorder %s60, 0
      %s63 = sadd.s32 %s62, 1
      %s64 = scalar_select %p61, %s62, %s63
      %p67 = pneg %p61
      %p68 = scmp.eq.s32.totalorder %s52, 1
      %p69 = por %p67, %p68
      %p70 = scmp.ne.s32.totalorder %s62, %s65
      %p71 = scmp.eq.s32.totalorder %s52, 0
      %p72 = por %p70, %p71
      %p73 = scmp.ne.s32.totalorder %s62, %s65
      %p74 = scmp.eq.s32.totalorder %s57, 1
      %p75 = por %p73, %p74
      %p76 = scmp.ne.s32.totalorder %s65, %s66
      %p77 = scmp.eq.s32.totalorder %s57, 0
      %p78 = por %p76, %p77
      %p79 = scmp.ne.s32.totalorder %s65, %s66
      %p80 = scmp.eq.s32.totalorder %s58, 1
      %p81 = por %p79, %p80
      %p83 = scmp.ne.s32.totalorder %s66, %s82
      %p84 = scmp.eq.s32.totalorder %s58, 0
      %p85 = por %p83, %p84
      %s86 = ssub.s32 %s52, %s59
      %p87 = scmp.eq.s32.totalorder %s86, 0
      %s89 = sadd.s32 %s88, 1
      %s90 = scalar_select %p87, %s88, %s89
      %p93 = pneg %p87
      %p94 = scmp.eq.s32.totalorder %s52, 1
      %p95 = por %p93, %p94
      %p96 = scmp.ne.s32.totalorder %s88, %s91
      %p97 = scmp.eq.s32.totalorder %s52, 0
      %p98 = por %p96, %p97
      %p99 = scmp.ne.s32.totalorder %s88, %s91
      %p100 = scmp.eq.s32.totalorder %s57, 1
      %p101 = por %p99, %p100
      %p102 = scmp.ne.s32.totalorder %s91, %s92
      %p103 = scmp.eq.s32.totalorder %s57, 0
      %p104 = por %p102, %p103
      %p105 = scmp.ne.s32.totalorder %s91, %s92
      %p106 = scmp.eq.s32.totalorder %s58, 1
      %p107 = por %p105, %p106
      %p109 = scmp.ne.s32.totalorder %s92, %s108
      %p110 = scmp.eq.s32.totalorder %s58, 0
      %p111 = por %p109, %p110
      %s112 = ssub.s32 %s52, %s59
      %p113 = scmp.eq.s32.totalorder %s112, 0
      %s115 = sadd.s32 %s114, 1
      %s116 = scalar_select %p113, %s114, %s115
      %p119 = pneg %p113
      %p120 = scmp.eq.s32.totalorder %s52, 1
      %p121 = por %p119, %p120
      %p122 = scmp.ne.s32.totalorder %s114, %s117
      %p123 = scmp.eq.s32.totalorder %s52, 0
      %p124 = por %p122, %p123
      %p125 = scmp.ne.s32.totalorder %s114, %s117
      %p126 = scmp.eq.s32.totalorder %s57, 1
      %p127 = por %p125, %p126
      %p128 = scmp.ne.s32.totalorder %s117, %s118
      %p129 = scmp.eq.s32.totalorder %s57, 0
      %p130 = por %p128, %p129
      %p131 = scmp.ne.s32.totalorder %s117, %s118
      %p132 = scmp.eq.s32.totalorder %s58, 1
      %p133 = por %p131, %p132
      %p135 = scmp.ne.s32.totalorder %s118, %s134
      %p136 = scmp.eq.s32.totalorder %s58, 0
      %p137 = por %p135, %p136
      %s138 = ssub.s32 %s52, %s59
      %p139 = scmp.eq.s32.totalorder %s138, 0
      %s141 = sadd.s32 %s140, 1
      %s142 = scalar_select %p139, %s140, %s141
      %p145 = pneg %p139
      %p146 = scmp.eq.s32.totalorder %s52, 1
      %p147 = por %p145, %p146
      %p148 = scmp.ne.s32.totalorder %s140, %s143
      %p149 = scmp.eq.s32.totalorder %s52, 0
      %p150 = por %p148, %p149
      %p151 = scmp.ne.s32.totalorder %s140, %s143
      %p152 = scmp.eq.s32.totalorder %s57, 1
      %p153 = por %p151, %p152
      %p154 = scmp.ne.s32.totalorder %s143, %s144
      %p155 = scmp.eq.s32.totalorder %s57, 0
      %p156 = por %p154, %p155
      %p157 = scmp.ne.s32.totalorder %s143, %s144
      %p158 = scmp.eq.s32.totalorder %s58, 1
      %p159 = por %p157, %p158
      %p161 = scmp.ne.s32.totalorder %s144, %s160
      %p162 = scmp.eq.s32.totalorder %s58, 0
      %p163 = por %p161, %p162
      %s165 = sadd.s32 %s164, 1
      %p168 = scmp.eq.s32.totalorder %s52, 1
      %p169 = scmp.ne.s32.totalorder %s164, %s166
      %p170 = scmp.eq.s32.totalorder %s52, 0
      %p171 = por %p169, %p170
      %p172 = scmp.ne.s32.totalorder %s164, %s166
      %p173 = scmp.eq.s32.totalorder %s57, 1
      %p174 = por %p172, %p173
      %p175 = scmp.ne.s32.totalorder %s166, %s167
      %p176 = scmp.eq.s32.totalorder %s57, 0
      %p177 = por %p175, %p176
      %p178 = scmp.ne.s32.totalorder %s166, %s167
      %p179 = scmp.eq.s32.totalorder %s58, 1
      %p180 = por %p178, %p179
      %p182 = scmp.ne.s32.totalorder %s167, %s181
      %p183 = scmp.eq.s32.totalorder %s58, 0
      %p184 = por %p182, %p183
      %s186 = sadd.s32 %s185, 1
      %p189 = scmp.eq.s32.totalorder %s52, 1
      %p190 = scmp.ne.s32.totalorder %s185, %s187
      %p191 = scmp.eq.s32.totalorder %s52, 0
      %p192 = por %p190, %p191
      %p193 = scmp.ne.s32.totalorder %s185, %s187
      %p194 = scmp.eq.s32.totalorder %s57, 1
      %p195 = por %p193, %p194
      %p196 = scmp.ne.s32.totalorder %s187, %s188
      %p197 = scmp.eq.s32.totalorder %s57, 0
      %p198 = por %p196, %p197
      %p199 = scmp.ne.s32.totalorder %s187, %s188
      %p200 = scmp.eq.s32.totalorder %s58, 1
      %p201 = por %p199, %p200
      %p203 = scmp.ne.s32.totalorder %s188, %s202
      %p204 = scmp.eq.s32.totalorder %s58, 0
      %p205 = por %p203, %p204
      %s207 = sadd.s32 %s206, 1
      %p210 = scmp.eq.s32.totalorder %s52, 1
      %p211 = scmp.ne.s32.totalorder %s206, %s208
      %p212 = scmp.eq.s32.totalorder %s52, 0
      %p213 = por %p211, %p212
      %p214 = scmp.ne.s32.totalorder %s206, %s208
      %p215 = scmp.eq.s32.totalorder %s57, 1
      %p216 = por %p214, %p215
      %p217 = scmp.ne.s32.totalorder %s208, %s209
      %p218 = scmp.eq.s32.totalorder %s57, 0
      %p219 = por %p217, %p218
      %p220 = scmp.ne.s32.totalorder %s208, %s209
      %p221 = scmp.eq.s32.totalorder %s58, 1
      %p222 = por %p220, %p221
      %p224 = scmp.ne.s32.totalorder %s209, %s223
      %p225 = scmp.eq.s32.totalorder %s58, 0
      %p226 = por %p224, %p225
      %s228 = sadd.s32 %s227, 1
      %p231 = scmp.eq.s32.totalorder %s52, 1
      %p232 = scmp.ne.s32.totalorder %s227, %s229
      %p233 = scmp.eq.s32.totalorder %s52, 0
      %p234 = por %p232, %p233
      %p235 = scmp.ne.s32.totalorder %s227, %s229
      %p236 = scmp.eq.s32.totalorder %s57, 1
      %p237 = por %p235, %p236
      %p238 = scmp.ne.s32.totalorder %s229, %s230
      %p239 = scmp.eq.s32.totalorder %s57, 0
      %p240 = por %p238, %p239
      %p241 = scmp.ne.s32.totalorder %s229, %s230
      %p242 = scmp.eq.s32.totalorder %s58, 1
      %p243 = por %p241, %p242
      %p245 = scmp.ne.s32.totalorder %s230, %s244
      %p246 = scmp.eq.s32.totalorder %s58, 0
      %p247 = por %p245, %p246
      %s249 = sadd.s32 %s248, 1
      %p252 = scmp.eq.s32.totalorder %s52, 1
      %p253 = scmp.ne.s32.totalorder %s248, %s250
      %p254 = scmp.eq.s32.totalorder %s52, 0
      %p255 = por %p253, %p254
      %p256 = scmp.ne.s32.totalorder %s248, %s250
      %p257 = scmp.eq.s32.totalorder %s57, 1
      %p258 = por %p256, %p257
      %p259 = scmp.ne.s32.totalorder %s250, %s251
      %p260 = scmp.eq.s32.totalorder %s57, 0
      %p261 = por %p259, %p260
      %p262 = scmp.ne.s32.totalorder %s250, %s251
      %p263 = scmp.eq.s32.totalorder %s58, 1
      %p264 = por %p262, %p263
      %p266 = scmp.ne.s32.totalorder %s251, %s265
      %p267 = scmp.eq.s32.totalorder %s58, 0
      %p268 = por %p266, %p267
      %s270 = sadd.s32 %s269, 1
      %p273 = scmp.eq.s32.totalorder %s52, 1
      %p274 = scmp.ne.s32.totalorder %s269, %s271
      %p275 = scmp.eq.s32.totalorder %s52, 0
      %p276 = por %p274, %p275
      %p277 = scmp.ne.s32.totalorder %s269, %s271
      %p278 = scmp.eq.s32.totalorder %s57, 1
      %p279 = por %p277, %p278
      %p280 = scmp.ne.s32.totalorder %s271, %s272
      %p281 = scmp.eq.s32.totalorder %s57, 0
      %p282 = por %p280, %p281
      %p283 = scmp.ne.s32.totalorder %s271, %s272
      %p284 = scmp.eq.s32.totalorder %s58, 1
      %p285 = por %p283, %p284
      %p287 = scmp.ne.s32.totalorder %s272, %s286
      %p288 = scmp.eq.s32.totalorder %s58, 0
      %p289 = por %p287, %p288
      %s291 = sadd.s32 %s290, 1
      %p294 = scmp.eq.s32.totalorder %s52, 1
      %p295 = scmp.ne.s32.totalorder %s290, %s292
      %p296 = scmp.eq.s32.totalorder %s52, 0
      %p297 = por %p295, %p296
      %p298 = scmp.ne.s32.totalorder %s290, %s292
      %p299 = scmp.eq.s32.totalorder %s57, 1
      %p300 = por %p298, %p299
      %p301 = scmp.ne.s32.totalorder %s292, %s293
      %p302 = scmp.eq.s32.totalorder %s57, 0
      %p303 = por %p301, %p302
      %p304 = scmp.ne.s32.totalorder %s292, %s293
      %p305 = scmp.eq.s32.totalorder %s58, 1
      %p306 = por %p304, %p305
      %p308 = scmp.ne.s32.totalorder %s293, %s307
      %p309 = scmp.eq.s32.totalorder %s58, 0
      %p310 = por %p308, %p309
      %s312 = sadd.s32 %s311, 1
      %p315 = scmp.eq.s32.totalorder %s52, 1
      %p316 = scmp.ne.s32.totalorder %s311, %s313
      %p317 = scmp.eq.s32.totalorder %s52, 0
      %p318 = por %p316, %p317
      %p319 = scmp.ne.s32.totalorder %s311, %s313
      %p320 = scmp.eq.s32.totalorder %s57, 1
      %p321 = por %p319, %p320
      %p322 = scmp.ne.s32.totalorder %s313, %s314
      %p323 = scmp.eq.s32.totalorder %s57, 0
      %p324 = por %p322, %p323
      %p325 = scmp.ne.s32.totalorder %s313, %s314
      %p326 = scmp.eq.s32.totalorder %s58, 1
      %p327 = por %p325, %p326
      %p329 = scmp.ne.s32.totalorder %s314, %s328
      %p330 = scmp.eq.s32.totalorder %s58, 0
      %p331 = por %p329, %p330
      %s333 = sadd.s32 %s332, 1
      %p336 = scmp.eq.s32.totalorder %s52, 1
      %p337 = scmp.ne.s32.totalorder %s332, %s334
      %p338 = scmp.eq.s32.totalorder %s52, 0
      %p339 = por %p337, %p338
      %p340 = scmp.ne.s32.totalorder %s332, %s334
      %p341 = scmp.eq.s32.totalorder %s57, 1
      %p342 = por %p340, %p341
      %p343 = scmp.ne.s32.totalorder %s334, %s335
      %p344 = scmp.eq.s32.totalorder %s57, 0
      %p345 = por %p343, %p344
      %p346 = scmp.ne.s32.totalorder %s334, %s335
      %p347 = scmp.eq.s32.totalorder %s58, 1
      %p348 = por %p346, %p347
      %p350 = scmp.ne.s32.totalorder %s335, %s349
      %p351 = scmp.eq.s32.totalorder %s58, 0
      %p352 = por %p350, %p351
      %s354 = sadd.s32 %s353, 1
      %p357 = scmp.eq.s32.totalorder %s52, 1
      %p358 = scmp.ne.s32.totalorder %s353, %s355
      %p359 = scmp.eq.s32.totalorder %s52, 0
      %p360 = por %p358, %p359
      %p361 = scmp.ne.s32.totalorder %s353, %s355
      %p362 = scmp.eq.s32.totalorder %s57, 1
      %p363 = por %p361, %p362
      %p364 = scmp.ne.s32.totalorder %s355, %s356
      %p365 = scmp.eq.s32.totalorder %s57, 0
      %p366 = por %p364, %p365
      %p367 = scmp.ne.s32.totalorder %s355, %s356
      %p368 = scmp.eq.s32.totalorder %s58, 1
      %p369 = por %p367, %p368
      %p371 = scmp.ne.s32.totalorder %s356, %s370
      %p372 = scmp.eq.s32.totalorder %s58, 0
      %p373 = por %p371, %p372
      %s375 = sadd.s32 %s374, 1
      %p378 = scmp.eq.s32.totalorder %s52, 1
      %p379 = scmp.ne.s32.totalorder %s374, %s376
      %p380 = scmp.eq.s32.totalorder %s52, 0
      %p381 = por %p379, %p380
      %p382 = scmp.ne.s32.totalorder %s374, %s376
      %p383 = scmp.eq.s32.totalorder %s57, 1
      %p384 = por %p382, %p383
      %p385 = scmp.ne.s32.totalorder %s376, %s377
      %p386 = scmp.eq.s32.totalorder %s57, 0
      %p387 = por %p385, %p386
      %p388 = scmp.ne.s32.totalorder %s376, %s377
      %p389 = scmp.eq.s32.totalorder %s58, 1
      %p390 = por %p388, %p389
      %p392 = scmp.ne.s32.totalorder %s377, %s391
      %p393 = scmp.eq.s32.totalorder %s58, 0
      %p394 = por %p392, %p393
      %s396 = sadd.s32 %s395, 1
      %p399 = scmp.eq.s32.totalorder %s52, 1
      %p400 = scmp.ne.s32.totalorder %s395, %s397
      %p401 = scmp.eq.s32.totalorder %s52, 0
      %p402 = por %p400, %p401
      %p403 = scmp.ne.s32.totalorder %s395, %s397
      %p404 = scmp.eq.s32.totalorder %s57, 1
      %p405 = por %p403, %p404
      %p406 = scmp.ne.s32.totalorder %s397, %s398
      %p407 = scmp.eq.s32.totalorder %s57, 0
      %p408 = por %p406, %p407
      %p409 = scmp.ne.s32.totalorder %s397, %s398
      %p410 = scmp.eq.s32.totalorder %s58, 1
      %p411 = por %p409, %p410
      %p413 = scmp.ne.s32.totalorder %s398, %s412
      %p414 = scmp.eq.s32.totalorder %s58, 0
      %p415 = por %p413, %p414
      %s417 = sadd.s32 %s416, 1
      %p420 = scmp.eq.s32.totalorder %s52, 1
      %p421 = scmp.ne.s32.totalorder %s416, %s418
      %p422 = scmp.eq.s32.totalorder %s52, 0
      %p423 = por %p421, %p422
      %p424 = scmp.ne.s32.totalorder %s416, %s418
      %p425 = scmp.eq.s32.totalorder %s57, 1
      %p426 = por %p424, %p425
      %p427 = scmp.ne.s32.totalorder %s418, %s419
      %p428 = scmp.eq.s32.totalorder %s57, 0
      %p429 = por %p427, %p428
      %p430 = scmp.ne.s32.totalorder %s418, %s419
      %p431 = scmp.eq.s32.totalorder %s58, 1
      %p432 = por %p430, %p431
      %p434 = scmp.ne.s32.totalorder %s419, %s433
      %p435 = scmp.eq.s32.totalorder %s58, 0
      %p436 = por %p434, %p435
      %s438 = sadd.s32 %s437, 1
      %p441 = scmp.eq.s32.totalorder %s52, 1
      %p442 = scmp.ne.s32.totalorder %s437, %s439
      %p443 = scmp.eq.s32.totalorder %s52, 0
      %p444 = por %p442, %p443
      %p445 = scmp.ne.s32.totalorder %s437, %s439
      %p446 = scmp.eq.s32.totalorder %s57, 1
      %p447 = por %p445, %p446
      %p448 = scmp.ne.s32.totalorder %s439, %s440
      %p449 = scmp.eq.s32.totalorder %s57, 0
      %p450 = por %p448, %p449
      %p451 = scmp.ne.s32.totalorder %s439, %s440
      %p452 = scmp.eq.s32.totalorder %s58, 1
      %p453 = por %p451, %p452
      %p455 = scmp.ne.s32.totalorder %s440, %s454
      %p456 = scmp.eq.s32.totalorder %s58, 0
      %p457 = por %p455, %p456
      %s459 = sadd.s32 %s458, 1
      %p462 = scmp.eq.s32.totalorder %s52, 1
      %p463 = scmp.ne.s32.totalorder %s458, %s460
      %p464 = scmp.eq.s32.totalorder %s52, 0
      %p465 = por %p463, %p464
      %p466 = scmp.ne.s32.totalorder %s458, %s460
      %p467 = scmp.eq.s32.totalorder %s57, 1
      %p468 = por %p466, %p467
      %p469 = scmp.ne.s32.totalorder %s460, %s461
      %p470 = scmp.eq.s32.totalorder %s57, 0
      %p471 = por %p469, %p470
      %p472 = scmp.ne.s32.totalorder %s460, %s461
      %p473 = scmp.eq.s32.totalorder %s58, 1
      %p474 = por %p472, %p473
      %p476 = scmp.ne.s32.totalorder %s461, %s475
      %p477 = scmp.eq.s32.totalorder %s58, 0
      %p478 = por %p476, %p477
      %s480 = sadd.s32 %s479, 1
      %p483 = scmp.eq.s32.totalorder %s52, 1
      %p484 = scmp.ne.s32.totalorder %s479, %s481
      %p485 = scmp.eq.s32.totalorder %s52, 0
      %p486 = por %p484, %p485
      %p487 = scmp.ne.s32.totalorder %s479, %s481
      %p488 = scmp.eq.s32.totalorder %s57, 1
      %p489 = por %p487, %p488
      %p490 = scmp.ne.s32.totalorder %s481, %s482
      %p491 = scmp.eq.s32.totalorder %s57, 0
      %p492 = por %p490, %p491
      %p493 = scmp.ne.s32.totalorder %s481, %s482
      %p494 = scmp.eq.s32.totalorder %s58, 1
      %p495 = por %p493, %p494
      %p497 = scmp.ne.s32.totalorder %s482, %s496
      %p498 = scmp.eq.s32.totalorder %s58, 0
      %p499 = por %p497, %p498
      %s501 = sadd.s32 %s500, 1
      %p504 = scmp.eq.s32.totalorder %s52, 1
      %p505 = scmp.ne.s32.totalorder %s500, %s502
      %p506 = scmp.eq.s32.totalorder %s52, 0
      %p507 = por %p505, %p506
      %p508 = scmp.ne.s32.totalorder %s500, %s502
      %p509 = scmp.eq.s32.totalorder %s57, 1
      %p510 = por %p508, %p509
      %p511 = scmp.ne.s32.totalorder %s502, %s503
      %p512 = scmp.eq.s32.totalorder %s57, 0
      %p513 = por %p511, %p512
      %p514 = scmp.ne.s32.totalorder %s502, %s503
      %p515 = scmp.eq.s32.totalorder %s58, 1
      %p516 = por %p514, %p515
      %p518 = scmp.ne.s32.totalorder %s503, %s517
      %p519 = scmp.eq.s32.totalorder %s58, 0
      %p520 = por %p518, %p519
      %s522 = sadd.s32 %s521, 1
      %p525 = scmp.eq.s32.totalorder %s52, 1
      %p526 = scmp.ne.s32.totalorder %s521, %s523
      %p527 = scmp.eq.s32.totalorder %s52, 0
      %p528 = por %p526, %p527
      %p529 = scmp.ne.s32.totalorder %s521, %s523
      %p530 = scmp.eq.s32.totalorder %s57, 1
      %p531 = por %p529, %p530
      %p532 = scmp.ne.s32.totalorder %s523, %s524
      %p533 = scmp.eq.s32.totalorder %s57, 0
      %p534 = por %p532, %p533
      %p535 = scmp.ne.s32.totalorder %s523, %s524
      %p536 = scmp.eq.s32.totalorder %s58, 1
      %p537 = por %p535, %p536
      %p539 = scmp.ne.s32.totalorder %s524, %s538
      %p540 = scmp.eq.s32.totalorder %s58, 0
      %p541 = por %p539, %p540
      %s543 = sadd.s32 %s542, 1
      %p546 = scmp.eq.s32.totalorder %s52, 1
      %p547 = scmp.ne.s32.totalorder %s542, %s544
      %p548 = scmp.eq.s32.totalorder %s52, 0
      %p549 = por %p547, %p548
      %p550 = scmp.ne.s32.totalorder %s542, %s544
      %p551 = scmp.eq.s32.totalorder %s57, 1
      %p552 = por %p550, %p551
      %p553 = scmp.ne.s32.totalorder %s544, %s545
      %p554 = scmp.eq.s32.totalorder %s57, 0
      %p555 = por %p553, %p554
      %p556 = scmp.ne.s32.totalorder %s544, %s545
      %p557 = scmp.eq.s32.totalorder %s58, 1
      %p558 = por %p556, %p557
      %p560 = scmp.ne.s32.totalorder %s545, %s559
      %p561 = scmp.eq.s32.totalorder %s58, 0
      %p562 = por %p560, %p561
      %s564 = sadd.s32 %s563, 1
      %p567 = scmp.eq.s32.totalorder %s52, 1
      %p568 = scmp.ne.s32.totalorder %s563, %s565
      %p569 = scmp.eq.s32.totalorder %s52, 0
      %p570 = por %p568, %p569
      %p571 = scmp.ne.s32.totalorder %s563, %s565
      %p572 = scmp.eq.s32.totalorder %s57, 1
      %p573 = por %p571, %p572
      %p574 = scmp.ne.s32.totalorder %s565, %s566
      %p575 = scmp.eq.s32.totalorder %s57, 0
      %p576 = por %p574, %p575
      %p577 = scmp.ne.s32.totalorder %s565, %s566
      %p578 = scmp.eq.s32.totalorder %s58, 1
      %p579 = por %p577, %p578
      %p581 = scmp.ne.s32.totalorder %s566, %s580
      %p582 = scmp.eq.s32.totalorder %s58, 0
      %p583 = por %p581, %p582
      %s584 = ssub.s32 %s52, %s59
      %p585 = scmp.eq.s32.totalorder %s584, 0
      %s587 = sadd.s32 %s586, 1
      %s588 = scalar_select %p585, %s586, %s587
      %p591 = pneg %p585
      %p592 = scmp.eq.s32.totalorder %s52, 1
      %p593 = por %p591, %p592
      %p594 = scmp.ne.s32.totalorder %s586, %s589
      %p595 = scmp.eq.s32.totalorder %s52, 0
      %p596 = por %p594, %p595
      %p597 = scmp.ne.s32.totalorder %s586, %s589
      %p598 = scmp.eq.s32.totalorder %s57, 1
      %p599 = por %p597, %p598
      %p600 = scmp.ne.s32.totalorder %s589, %s590
      %p601 = scmp.eq.s32.totalorder %s57, 0
      %p602 = por %p600, %p601
      %p603 = scmp.ne.s32.totalorder %s589, %s590
      %p604 = scmp.eq.s32.totalorder %s58, 1
      %p605 = por %p603, %p604
      %p607 = scmp.ne.s32.totalorder %s590, %s606
      %p608 = scmp.eq.s32.totalorder %s58, 0
      %p609 = por %p607, %p608
      %p610 = scmp.le.s32.totalorder 1, %s52
      %p611 = scmp.lt.s32.totalorder %s52, 3
      %p612 = pnand %p610, %p611
      %p613 = pneg %p612
      // Predicated region
      $region9: #{transformer_forward.4} parent=5 // pred_check
        _
      $region10: #{transformer_forward.4} parent=5 // pred_check_branch
        %615 = sbr.rel (%p612) target = $region12
      $region11: #{transformer_forward.4} parent=5 // pred_region
        %s616 = ssub.s32 %s52, 1
        // Predicated region
        $region13: #{transformer_forward.4} parent=11 // pred_check
          %p617 = pneg %p177
        $region14: #{transformer_forward.4} parent=11 // pred_check_branch
          %619 = sbr.rel (%p617) target = $region16
        $region15: #{transformer_forward.4} parent=11 // pred_region
          %s621 = ssub.s32 256, 256
          %622 = vsyncadd [#allocation9], %s621
          %s623 = sshll.u32 [#allocation10], 4
          %s624 = int_to_ptr.vmem [resolvable:$true] %s623
          %629 = dma.hbm_to_vmem [thread:$0]  %s4, 256, %s624, [#allocation9], 64, 64, 4
        $region16: #{transformer_forward.4} parent=11 // pred_fallthru
          _
        // Predicated region
        $region17: #{transformer_forward.4} parent=11 // pred_check
          %p630 = pneg %p198
        $region18: #{transformer_forward.4} parent=11 // pred_check_branch
          %632 = sbr.rel (%p630) target = $region20
        $region19: #{transformer_forward.4} parent=11 // pred_region
          %s634 = ssub.s32 16, 16
          %635 = vsyncadd [#allocation12], %s634
          %s637 = sshll.u32 [#allocation11], 4
          %s638 = int_to_ptr.vmem [resolvable:$true] %s637
          %640 = dma.hbm_to_vmem [thread:$0]  %s5, 16, %s638, [#allocation12]
        $region20: #{transformer_forward.4} parent=11 // pred_fallthru
          _
        // Predicated region
        $region21: #{transformer_forward.4} parent=11 // pred_check
          %p641 = pneg %p219
        $region22: #{transformer_forward.4} parent=11 // pred_check_branch
          %643 = sbr.rel (%p641) target = $region24
        $region23: #{transformer_forward.4} parent=11 // pred_region
          %s645 = ssub.s32 256, 256
          %646 = vsyncadd [#allocation12], %s645
          %s647 = sshll.u32 [#allocation13], 4
          %s648 = int_to_ptr.vmem [resolvable:$true] %s647
          %653 = dma.hbm_to_vmem [thread:$0]  %s6, 256, %s648, [#allocation12], 64, 64, 4
        $region24: #{transformer_forward.4} parent=11 // pred_fallthru
          _
        // Predicated region
        $region25: #{transformer_forward.4} parent=11 // pred_check
          %p654 = pneg %p240
        $region26: #{transformer_forward.4} parent=11 // pred_check_branch
          %656 = sbr.rel (%p654) target = $region28
        $region27: #{transformer_forward.4} parent=11 // pred_region
          %s658 = ssub.s32 16, 16
          %659 = vsyncadd [#allocation15], %s658
          %s661 = sshll.u32 [#allocation14], 4
          %s662 = int_to_ptr.vmem [resolvable:$true] %s661
          %664 = dma.hbm_to_vmem [thread:$0]  %s7, 16, %s662, [#allocation15]
        $region28: #{transformer_forward.4} parent=11 // pred_fallthru
          _
        // Predicated region
        $region29: #{transformer_forward.4} parent=11 // pred_check
          %p665 = pneg %p261
        $region30: #{transformer_forward.4} parent=11 // pred_check_branch
          %667 = sbr.rel (%p665) target = $region32
        $region31: #{transformer_forward.4} parent=11 // pred_region
          %s669 = ssub.s32 16, 16
          %670 = vsyncadd [#allocation15], %s669
          %s672 = sshll.u32 [#allocation16], 4
          %s673 = int_to_ptr.vmem [resolvable:$true] %s672
          %675 = dma.hbm_to_vmem [thread:$0]  %s8, 16, %s673, [#allocation15]
        $region32: #{transformer_forward.4} parent=11 // pred_fallthru
          _
        // Predicated region
        $region33: #{transformer_forward.4} parent=11 // pred_check
          %p676 = pneg %p282
        $region34: #{transformer_forward.4} parent=11 // pred_check_branch
          %678 = sbr.rel (%p676) target = $region36
        $region35: #{transformer_forward.4} parent=11 // pred_region
          %s680 = ssub.s32 16, 16
          %681 = vsyncadd [#allocation18], %s680
          %s683 = sshll.u32 [#allocation17], 4
          %s684 = int_to_ptr.vmem [resolvable:$true] %s683
          %686 = dma.hbm_to_vmem [thread:$0]  %s9, 16, %s684, [#allocation18]
        $region36: #{transformer_forward.4} parent=11 // pred_fallthru
          _
        // Predicated region
        $region37: #{transformer_forward.4} parent=11 // pred_check
          %p687 = pneg %p303
        $region38: #{transformer_forward.4} parent=11 // pred_check_branch
          %689 = sbr.rel (%p687) target = $region40
        $region39: #{transformer_forward.4} parent=11 // pred_region
          %s691 = ssub.s32 256, 256
          %692 = vsyncadd [#allocation18], %s691
          %s693 = sshll.u32 [#allocation19], 4
          %s694 = int_to_ptr.vmem [resolvable:$true] %s693
          %699 = dma.hbm_to_vmem [thread:$0]  %s10, 256, %s694, [#allocation18], 64, 64, 4
        $region40: #{transformer_forward.4} parent=11 // pred_fallthru
          _
        // Predicated region
        $region41: #{transformer_forward.4} parent=11 // pred_check
          %p700 = pneg %p324
        $region42: #{transformer_forward.4} parent=11 // pred_check_branch
          %702 = sbr.rel (%p700) target = $region44
        $region43: #{transformer_forward.4} parent=11 // pred_region
          %s704 = ssub.s32 16, 16
          %705 = vsyncadd [#allocation21], %s704
          %s707 = sshll.u32 [#allocation20], 4
          %s708 = int_to_ptr.vmem [resolvable:$true] %s707
          %710 = dma.hbm_to_vmem [thread:$0]  %s11, 16, %s708, [#allocation21]
        $region44: #{transformer_forward.4} parent=11 // pred_fallthru
          _
        // Predicated region
        $region45: #{transformer_forward.4} parent=11 // pred_check
          %p711 = pneg %p345
        $region46: #{transformer_forward.4} parent=11 // pred_check_branch
          %713 = sbr.rel (%p711) target = $region48
        $region47: #{transformer_forward.4} parent=11 // pred_region
          %s715 = ssub.s32 256, 256
          %716 = vsyncadd [#allocation21], %s715
          %s717 = sshll.u32 [#allocation22], 4
          %s718 = int_to_ptr.vmem [resolvable:$true] %s717
          %723 = dma.hbm_to_vmem [thread:$0]  %s12, 256, %s718, [#allocation21], 64, 64, 4
        $region48: #{transformer_forward.4} parent=11 // pred_fallthru
          _
        // Predicated region
        $region49: #{transformer_forward.4} parent=11 // pred_check
          %p724 = pneg %p366
        $region50: #{transformer_forward.4} parent=11 // pred_check_branch
          %726 = sbr.rel (%p724) target = $region52
        $region51: #{transformer_forward.4} parent=11 // pred_region
          %s728 = ssub.s32 16, 16
          %729 = vsyncadd [#allocation24], %s728
          %s731 = sshll.u32 [#allocation23], 4
          %s732 = int_to_ptr.vmem [resolvable:$true] %s731
          %734 = dma.hbm_to_vmem [thread:$0]  %s13, 16, %s732, [#allocation24]
        $region52: #{transformer_forward.4} parent=11 // pred_fallthru
          _
        // Predicated region
        $region53: #{transformer_forward.4} parent=11 // pred_check
          %p735 = pneg %p387
        $region54: #{transformer_forward.4} parent=11 // pred_check_branch
          %737 = sbr.rel (%p735) target = $region56
        $region55: #{transformer_forward.4} parent=11 // pred_region
          %s739 = ssub.s32 256, 256
          %740 = vsyncadd [#allocation24], %s739
          %s741 = sshll.u32 [#allocation25], 4
          %s742 = int_to_ptr.vmem [resolvable:$true] %s741
          %747 = dma.hbm_to_vmem [thread:$0]  %s14, 256, %s742, [#allocation24], 64, 64, 4
        $region56: #{transformer_forward.4} parent=11 // pred_fallthru
          _
        // Predicated region
        $region57: #{transformer_forward.4} parent=11 // pred_check
          %p748 = pneg %p408
        $region58: #{transformer_forward.4} parent=11 // pred_check_branch
          %750 = sbr.rel (%p748) target = $region60
        $region59: #{transformer_forward.4} parent=11 // pred_region
          %s752 = ssub.s32 16, 16
          %753 = vsyncadd [#allocation27], %s752
          %s755 = sshll.u32 [#allocation26], 4
          %s756 = int_to_ptr.vmem [resolvable:$true] %s755
          %758 = dma.hbm_to_vmem [thread:$0]  %s15, 16, %s756, [#allocation27]
        $region60: #{transformer_forward.4} parent=11 // pred_fallthru
          _
        // Predicated region
        $region61: #{transformer_forward.4} parent=11 // pred_check
          %p759 = pneg %p429
        $region62: #{transformer_forward.4} parent=11 // pred_check_branch
          %761 = sbr.rel (%p759) target = $region64
        $region63: #{transformer_forward.4} parent=11 // pred_region
          %s763 = ssub.s32 16, 16
          %764 = vsyncadd [#allocation27], %s763
          %s766 = sshll.u32 [#allocation28], 4
          %s767 = int_to_ptr.vmem [resolvable:$true] %s766
          %769 = dma.hbm_to_vmem [thread:$0]  %s16, 16, %s767, [#allocation27]
        $region64: #{transformer_forward.4} parent=11 // pred_fallthru
          _
        // Predicated region
        $region65: #{transformer_forward.4} parent=11 // pred_check
          %p770 = pneg %p450
        $region66: #{transformer_forward.4} parent=11 // pred_check_branch
          %772 = sbr.rel (%p770) target = $region68
        $region67: #{transformer_forward.4} parent=11 // pred_region
          %s774 = ssub.s32 16, 16
          %775 = vsyncadd [#allocation30], %s774
          %s777 = sshll.u32 [#allocation29], 4
          %s778 = int_to_ptr.vmem [resolvable:$true] %s777
          %780 = dma.hbm_to_vmem [thread:$0]  %s17, 16, %s778, [#allocation30]
        $region68: #{transformer_forward.4} parent=11 // pred_fallthru
          _
        // Predicated region
        $region69: #{transformer_forward.4} parent=11 // pred_check
          %p781 = pneg %p471
        $region70: #{transformer_forward.4} parent=11 // pred_check_branch
          %783 = sbr.rel (%p781) target = $region72
        $region71: #{transformer_forward.4} parent=11 // pred_region
          %s785 = ssub.s32 256, 256
          %786 = vsyncadd [#allocation30], %s785
          %s787 = sshll.u32 [#allocation31], 4
          %s788 = int_to_ptr.vmem [resolvable:$true] %s787
          %793 = dma.hbm_to_vmem [thread:$0]  %s18, 256, %s788, [#allocation30], 64, 64, 4
        $region72: #{transformer_forward.4} parent=11 // pred_fallthru
          _
        // Predicated region
        $region73: #{transformer_forward.4} parent=11 // pred_check
          %p794 = pneg %p492
        $region74: #{transformer_forward.4} parent=11 // pred_check_branch
          %796 = sbr.rel (%p794) target = $region76
        $region75: #{transformer_forward.4} parent=11 // pred_region
          %s798 = ssub.s32 16, 16
          %799 = vsyncadd [#allocation33], %s798
          %s801 = sshll.u32 [#allocation32], 4
          %s802 = int_to_ptr.vmem [resolvable:$true] %s801
          %804 = dma.hbm_to_vmem [thread:$0]  %s19, 16, %s802, [#allocation33]
        $region76: #{transformer_forward.4} parent=11 // pred_fallthru
          _
        // Predicated region
        $region77: #{transformer_forward.4} parent=11 // pred_check
          %p805 = pneg %p513
        $region78: #{transformer_forward.4} parent=11 // pred_check_branch
          %807 = sbr.rel (%p805) target = $region80
        $region79: #{transformer_forward.4} parent=11 // pred_region
          %s809 = ssub.s32 512, 512
          %810 = vsyncadd [#allocation33], %s809
          %s811 = sshll.u32 [#allocation34], 4
          %s812 = int_to_ptr.vmem [resolvable:$true] %s811
          %817 = dma.hbm_to_vmem [thread:$0]  %s20, 512, %s812, [#allocation33], 64, 64, 4
        $region80: #{transformer_forward.4} parent=11 // pred_fallthru
          _
        // Predicated region
        $region81: #{transformer_forward.4} parent=11 // pred_check
          %p818 = pneg %p534
        $region82: #{transformer_forward.4} parent=11 // pred_check_branch
          %820 = sbr.rel (%p818) target = $region84
        $region83: #{transformer_forward.4} parent=11 // pred_region
          %s822 = ssub.s32 16, 16
          %823 = vsyncadd [#allocation36], %s822
          %s825 = sshll.u32 [#allocation35], 4
          %s826 = int_to_ptr.vmem [resolvable:$true] %s825
          %828 = dma.hbm_to_vmem [thread:$0]  %s21, 16, %s826, [#allocation36]
        $region84: #{transformer_forward.4} parent=11 // pred_fallthru
          _
        // Predicated region
        $region85: #{transformer_forward.4} parent=11 // pred_check
          %p829 = pneg %p555
        $region86: #{transformer_forward.4} parent=11 // pred_check_branch
          %831 = sbr.rel (%p829) target = $region88
        $region87: #{transformer_forward.4} parent=11 // pred_region
          %s833 = ssub.s32 16, 16
          %834 = vsyncadd [#allocation36], %s833
          %s836 = sshll.u32 [#allocation37], 4
          %s837 = int_to_ptr.vmem [resolvable:$true] %s836
          %839 = dma.hbm_to_vmem [thread:$0]  %s22, 16, %s837, [#allocation36]
        $region88: #{transformer_forward.4} parent=11 // pred_fallthru
          _
        // Predicated region
        $region89: #{transformer_forward.4} parent=11 // pred_check
          %p840 = pneg %p576
        $region90: #{transformer_forward.4} parent=11 // pred_check_branch
          %842 = sbr.rel (%p840) target = $region92
        $region91: #{transformer_forward.4} parent=11 // pred_region
          %s844 = ssub.s32 16, 16
          %845 = vsyncadd [#allocation39], %s844
          %s847 = sshll.u32 [#allocation38], 4
          %s848 = int_to_ptr.vmem [resolvable:$true] %s847
          %850 = dma.hbm_to_vmem [thread:$0]  %s23, 16, %s848, [#allocation39]
        $region92: #{transformer_forward.4} parent=11 // pred_fallthru
          _
      $region12: #{transformer_forward.4} parent=5 // pred_fallthru
        _
      %p851 = scmp.lt.s32.totalorder %s52, 2
      // Predicated region
      $region93: #{transformer_forward.4} parent=5 // pred_check
        %p852 = pneg %p851
      $region94: #{transformer_forward.4} parent=5 // pred_check_branch
        %854 = sbr.rel (%p852) target = $region96
      $region95: #{transformer_forward.4} parent=5 // pred_region
        // Predicated region
        $region97: #{transformer_forward.4} parent=95 // pred_check
          %p855 = pneg %p72
        $region98: #{transformer_forward.4} parent=95 // pred_check_branch
          %857 = sbr.rel (%p855) target = $region100
        $region99: #{transformer_forward.4} parent=95 // pred_region
          %s858 = sand.u32 %s62, 1
          %s859 = scalar_lea.sflag [#allocation3], %s858
          %s860 = sand.u32 %s62, 1
          %s861 = smul.addr %s860, 4
          %s862 = scalar_lea.vmem [#allocation2], %s861
          %s864 = ssub.s32 64, 64
          %865 = vsyncadd %s859, %s864
          %s866 = smul.addr %s52, 64
          %s867 = scalar_lea.hbm %s0, %s866
          %s869 = sshll.u32 %s862, 4
          %s870 = int_to_ptr.vmem [resolvable:$true] %s869
          %872 = dma.hbm_to_vmem [thread:$0]  %s867, 64, %s870, %s859
        $region100: #{transformer_forward.4} parent=95 // pred_fallthru
          _
        // Predicated region
        $region101: #{transformer_forward.4} parent=95 // pred_check
          %p873 = pneg %p98
        $region102: #{transformer_forward.4} parent=95 // pred_check_branch
          %875 = sbr.rel (%p873) target = $region104
        $region103: #{transformer_forward.4} parent=95 // pred_region
          %s876 = sand.u32 %s52, 1
          %s877 = scalar_lea.sflag [#allocation6], %s876
          %s878 = sand.u32 %s88, 1
          %s879 = smul.addr %s878, 4
          %s880 = scalar_lea.vmem [#allocation5], %s879
          %s882 = ssub.s32 64, 64
          %883 = vsyncadd %s877, %s882
          %s884 = smul.addr %s52, 64
          %s885 = scalar_lea.hbm %s1, %s884
          %s887 = sshll.u32 %s880, 4
          %s888 = int_to_ptr.vmem [resolvable:$true] %s887
          %890 = dma.hbm_to_vmem [thread:$0]  %s885, 64, %s888, %s877
        $region104: #{transformer_forward.4} parent=95 // pred_fallthru
          _
        // Predicated region
        $region105: #{transformer_forward.4} parent=95 // pred_check
          %p891 = pneg %p124
        $region106: #{transformer_forward.4} parent=95 // pred_check_branch
          %893 = sbr.rel (%p891) target = $region108
        $region107: #{transformer_forward.4} parent=95 // pred_region
          %s894 = sand.u32 %s52, 1
          %s895 = scalar_lea.sflag [#allocation6], %s894
          %s896 = sand.u32 %s114, 1
          %s897 = smul.addr %s896, 8
          %s898 = scalar_lea.vmem [#allocation7], %s897
          %s900 = ssub.s32 128, 128
          %901 = vsyncadd %s895, %s900
          %s902 = smul.addr %s52, 128
          %s903 = scalar_lea.hbm %s2, %s902
          %s905 = sshll.u32 %s898, 4
          %s906 = int_to_ptr.vmem [resolvable:$true] %s905
          %908 = dma.hbm_to_vmem [thread:$0]  %s903, 128, %s906, %s895
        $region108: #{transformer_forward.4} parent=95 // pred_fallthru
          _
        // Predicated region
        $region109: #{transformer_forward.4} parent=95 // pred_check
          %p909 = pneg %p150
        $region110: #{transformer_forward.4} parent=95 // pred_check_branch
          %911 = sbr.rel (%p909) target = $region112
        $region111: #{transformer_forward.4} parent=95 // pred_region
          %s912 = sand.u32 %s52, 1
          %s913 = scalar_lea.sflag [#allocation9], %s912
          %s914 = sand.u32 %s140, 1
          %s915 = smul.addr %s914, 8
          %s916 = scalar_lea.vmem [#allocation8], %s915
          %s918 = ssub.s32 128, 128
          %919 = vsyncadd %s913, %s918
          %s920 = smul.addr %s52, 128
          %s921 = scalar_lea.hbm %s3, %s920
          %s923 = sshll.u32 %s916, 4
          %s924 = int_to_ptr.vmem [resolvable:$true] %s923
          %926 = dma.hbm_to_vmem [thread:$0]  %s921, 128, %s924, %s913
        $region112: #{transformer_forward.4} parent=95 // pred_fallthru
          _
      $region96: #{transformer_forward.4} parent=5 // pred_fallthru
        _
      %p927 = scmp.le.s32.totalorder 1, %s52
      %p928 = scmp.lt.s32.totalorder %s52, 3
      %p929 = pnand %p927, %p928
      %p930 = pneg %p929
      // Predicated region
      $region113: #{transformer_forward.4} parent=5 // pred_check
        _
      $region114: #{transformer_forward.4} parent=5 // pred_check_branch
        %932 = sbr.rel (%p929) target = $region116
      $region115: #{transformer_forward.4} parent=5 // pred_region
        %s933 = ssub.s32 %s52, 1
        %s934 = sand.u32 %s65, 1
        %s935 = scalar_lea.sflag [#allocation3], %s934
        %s936 = sand.u32 %s65, 1
        %s937 = smul.addr %s936, 4
        %s938 = scalar_lea.vmem [#allocation2], %s937
        // Predicated region
        $region117: #{transformer_forward.4} parent=115 // pred_check
          %p939 = pneg %p78
        $region118: #{transformer_forward.4} parent=115 // pred_check_branch
          %941 = sbr.rel (%p939) target = $region120
        $region119: #{transformer_forward.4} parent=115 // pred_region
          %942 = dma.done %s935, 64
        $region120: #{transformer_forward.4} parent=115 // pred_fallthru
          _
        %s943 = sand.u32 %s57, 1
        %s944 = scalar_lea.sflag [#allocation6], %s943
        %s945 = sand.u32 %s91, 1
        %s946 = smul.addr %s945, 4
        %s947 = scalar_lea.vmem [#allocation5], %s946
        // Predicated region
        $region121: #{transformer_forward.4} parent=115 // pred_check
          %p948 = pneg %p104
        $region122: #{transformer_forward.4} parent=115 // pred_check_branch
          %950 = sbr.rel (%p948) target = $region124
        $region123: #{transformer_forward.4} parent=115 // pred_region
          %951 = dma.done %s944, 64
        $region124: #{transformer_forward.4} parent=115 // pred_fallthru
          _
        %s952 = sand.u32 %s57, 1
        %s953 = scalar_lea.sflag [#allocation6], %s952
        %s954 = sand.u32 %s117, 1
        %s955 = smul.addr %s954, 8
        %s956 = scalar_lea.vmem [#allocation7], %s955
        // Predicated region
        $region125: #{transformer_forward.4} parent=115 // pred_check
          %p957 = pneg %p130
        $region126: #{transformer_forward.4} parent=115 // pred_check_branch
          %959 = sbr.rel (%p957) target = $region128
        $region127: #{transformer_forward.4} parent=115 // pred_region
          %960 = dma.done %s953, 128
        $region128: #{transformer_forward.4} parent=115 // pred_fallthru
          _
        %s961 = sand.u32 %s57, 1
        %s962 = scalar_lea.sflag [#allocation9], %s961
        %s963 = sand.u32 %s143, 1
        %s964 = smul.addr %s963, 8
        %s965 = scalar_lea.vmem [#allocation8], %s964
        // Predicated region
        $region129: #{transformer_forward.4} parent=115 // pred_check
          %p966 = pneg %p156
        $region130: #{transformer_forward.4} parent=115 // pred_check_branch
          %968 = sbr.rel (%p966) target = $region132
        $region131: #{transformer_forward.4} parent=115 // pred_region
          %969 = dma.done %s962, 128
        $region132: #{transformer_forward.4} parent=115 // pred_fallthru
          _
        // Predicated region
        $region133: #{transformer_forward.4} parent=115 // pred_check
          %p970 = pneg %p177
        $region134: #{transformer_forward.4} parent=115 // pred_check_branch
          %972 = sbr.rel (%p970) target = $region136
        $region135: #{transformer_forward.4} parent=115 // pred_region
          %973 = dma.done [#allocation9], 256
        $region136: #{transformer_forward.4} parent=115 // pred_fallthru
          _
        // Predicated region
        $region137: #{transformer_forward.4} parent=115 // pred_check
          %p974 = pneg %p198
        $region138: #{transformer_forward.4} parent=115 // pred_check_branch
          %976 = sbr.rel (%p974) target = $region140
        $region139: #{transformer_forward.4} parent=115 // pred_region
          %977 = dma.done [#allocation12], 16
        $region140: #{transformer_forward.4} parent=115 // pred_fallthru
          _
        // Predicated region
        $region141: #{transformer_forward.4} parent=115 // pred_check
          %p978 = pneg %p219
        $region142: #{transformer_forward.4} parent=115 // pred_check_branch
          %980 = sbr.rel (%p978) target = $region144
        $region143: #{transformer_forward.4} parent=115 // pred_region
          %981 = dma.done [#allocation12], 256
        $region144: #{transformer_forward.4} parent=115 // pred_fallthru
          _
        // Predicated region
        $region145: #{transformer_forward.4} parent=115 // pred_check
          %p982 = pneg %p240
        $region146: #{transformer_forward.4} parent=115 // pred_check_branch
          %984 = sbr.rel (%p982) target = $region148
        $region147: #{transformer_forward.4} parent=115 // pred_region
          %985 = dma.done [#allocation15], 16
        $region148: #{transformer_forward.4} parent=115 // pred_fallthru
          _
        // Predicated region
        $region149: #{transformer_forward.4} parent=115 // pred_check
          %p986 = pneg %p261
        $region150: #{transformer_forward.4} parent=115 // pred_check_branch
          %988 = sbr.rel (%p986) target = $region152
        $region151: #{transformer_forward.4} parent=115 // pred_region
          %989 = dma.done [#allocation15], 16
        $region152: #{transformer_forward.4} parent=115 // pred_fallthru
          _
        // Predicated region
        $region153: #{transformer_forward.4} parent=115 // pred_check
          %p990 = pneg %p282
        $region154: #{transformer_forward.4} parent=115 // pred_check_branch
          %992 = sbr.rel (%p990) target = $region156
        $region155: #{transformer_forward.4} parent=115 // pred_region
          %993 = dma.done [#allocation18], 16
        $region156: #{transformer_forward.4} parent=115 // pred_fallthru
          _
        // Predicated region
        $region157: #{transformer_forward.4} parent=115 // pred_check
          %p994 = pneg %p303
        $region158: #{transformer_forward.4} parent=115 // pred_check_branch
          %996 = sbr.rel (%p994) target = $region160
        $region159: #{transformer_forward.4} parent=115 // pred_region
          %997 = dma.done [#allocation18], 256
        $region160: #{transformer_forward.4} parent=115 // pred_fallthru
          _
        // Predicated region
        $region161: #{transformer_forward.4} parent=115 // pred_check
          %p998 = pneg %p324
        $region162: #{transformer_forward.4} parent=115 // pred_check_branch
          %1000 = sbr.rel (%p998) target = $region164
        $region163: #{transformer_forward.4} parent=115 // pred_region
          %1001 = dma.done [#allocation21], 16
        $region164: #{transformer_forward.4} parent=115 // pred_fallthru
          _
        // Predicated region
        $region165: #{transformer_forward.4} parent=115 // pred_check
          %p1002 = pneg %p345
        $region166: #{transformer_forward.4} parent=115 // pred_check_branch
          %1004 = sbr.rel (%p1002) target = $region168
        $region167: #{transformer_forward.4} parent=115 // pred_region
          %1005 = dma.done [#allocation21], 256
        $region168: #{transformer_forward.4} parent=115 // pred_fallthru
          _
        // Predicated region
        $region169: #{transformer_forward.4} parent=115 // pred_check
          %p1006 = pneg %p366
        $region170: #{transformer_forward.4} parent=115 // pred_check_branch
          %1008 = sbr.rel (%p1006) target = $region172
        $region171: #{transformer_forward.4} parent=115 // pred_region
          %1009 = dma.done [#allocation24], 16
        $region172: #{transformer_forward.4} parent=115 // pred_fallthru
          _
        // Predicated region
        $region173: #{transformer_forward.4} parent=115 // pred_check
          %p1010 = pneg %p387
        $region174: #{transformer_forward.4} parent=115 // pred_check_branch
          %1012 = sbr.rel (%p1010) target = $region176
        $region175: #{transformer_forward.4} parent=115 // pred_region
          %1013 = dma.done [#allocation24], 256
        $region176: #{transformer_forward.4} parent=115 // pred_fallthru
          _
        // Predicated region
        $region177: #{transformer_forward.4} parent=115 // pred_check
          %p1014 = pneg %p408
        $region178: #{transformer_forward.4} parent=115 // pred_check_branch
          %1016 = sbr.rel (%p1014) target = $region180
        $region179: #{transformer_forward.4} parent=115 // pred_region
          %1017 = dma.done [#allocation27], 16
        $region180: #{transformer_forward.4} parent=115 // pred_fallthru
          _
        // Predicated region
        $region181: #{transformer_forward.4} parent=115 // pred_check
          %p1018 = pneg %p429
        $region182: #{transformer_forward.4} parent=115 // pred_check_branch
          %1020 = sbr.rel (%p1018) target = $region184
        $region183: #{transformer_forward.4} parent=115 // pred_region
          %1021 = dma.done [#allocation27], 16
        $region184: #{transformer_forward.4} parent=115 // pred_fallthru
          _
        // Predicated region
        $region185: #{transformer_forward.4} parent=115 // pred_check
          %p1022 = pneg %p450
        $region186: #{transformer_forward.4} parent=115 // pred_check_branch
          %1024 = sbr.rel (%p1022) target = $region188
        $region187: #{transformer_forward.4} parent=115 // pred_region
          %1025 = dma.done [#allocation30], 16
        $region188: #{transformer_forward.4} parent=115 // pred_fallthru
          _
        // Predicated region
        $region189: #{transformer_forward.4} parent=115 // pred_check
          %p1026 = pneg %p471
        $region190: #{transformer_forward.4} parent=115 // pred_check_branch
          %1028 = sbr.rel (%p1026) target = $region192
        $region191: #{transformer_forward.4} parent=115 // pred_region
          %1029 = dma.done [#allocation30], 256
        $region192: #{transformer_forward.4} parent=115 // pred_fallthru
          _
        // Predicated region
        $region193: #{transformer_forward.4} parent=115 // pred_check
          %p1030 = pneg %p492
        $region194: #{transformer_forward.4} parent=115 // pred_check_branch
          %1032 = sbr.rel (%p1030) target = $region196
        $region195: #{transformer_forward.4} parent=115 // pred_region
          %1033 = dma.done [#allocation33], 16
        $region196: #{transformer_forward.4} parent=115 // pred_fallthru
          _
        // Predicated region
        $region197: #{transformer_forward.4} parent=115 // pred_check
          %p1034 = pneg %p513
        $region198: #{transformer_forward.4} parent=115 // pred_check_branch
          %1036 = sbr.rel (%p1034) target = $region200
        $region199: #{transformer_forward.4} parent=115 // pred_region
          %1037 = dma.done [#allocation33], 512
        $region200: #{transformer_forward.4} parent=115 // pred_fallthru
          _
        // Predicated region
        $region201: #{transformer_forward.4} parent=115 // pred_check
          %p1038 = pneg %p534
        $region202: #{transformer_forward.4} parent=115 // pred_check_branch
          %1040 = sbr.rel (%p1038) target = $region204
        $region203: #{transformer_forward.4} parent=115 // pred_region
          %1041 = dma.done [#allocation36], 16
        $region204: #{transformer_forward.4} parent=115 // pred_fallthru
          _
        // Predicated region
        $region205: #{transformer_forward.4} parent=115 // pred_check
          %p1042 = pneg %p555
        $region206: #{transformer_forward.4} parent=115 // pred_check_branch
          %1044 = sbr.rel (%p1042) target = $region208
        $region207: #{transformer_forward.4} parent=115 // pred_region
          %1045 = dma.done [#allocation36], 16
        $region208: #{transformer_forward.4} parent=115 // pred_fallthru
          _
        // Predicated region
        $region209: #{transformer_forward.4} parent=115 // pred_check
          %p1046 = pneg %p576
        $region210: #{transformer_forward.4} parent=115 // pred_check_branch
          %1048 = sbr.rel (%p1046) target = $region212
        $region211: #{transformer_forward.4} parent=115 // pred_region
          %1049 = dma.done [#allocation39], 16
        $region212: #{transformer_forward.4} parent=115 // pred_fallthru
          _
        %s1050 = sand.u32 %s65, 1
        %s1051 = scalar_lea.sflag [#allocation3], %s1050
        %s1052 = sand.u32 %s65, 1
        %s1053 = smul.addr %s1052, 4
        %s1054 = scalar_lea.vmem [#allocation2], %s1053
        %p1055 = pneg %p78
        %p1056 = pneg %p75
        %s1057 = sand.u32 %s57, 1
        %s1058 = scalar_lea.sflag [#allocation6], %s1057
        %s1059 = sand.u32 %s91, 1
        %s1060 = smul.addr %s1059, 4
        %s1061 = scalar_lea.vmem [#allocation5], %s1060
        %p1062 = pneg %p104
        %p1063 = pneg %p101
        %s1064 = sand.u32 %s57, 1
        %s1065 = scalar_lea.sflag [#allocation6], %s1064
        %s1066 = sand.u32 %s117, 1
        %s1067 = smul.addr %s1066, 8
        %s1068 = scalar_lea.vmem [#allocation7], %s1067
        %p1069 = pneg %p130
        %p1070 = pneg %p127
        %s1071 = sand.u32 %s57, 1
        %s1072 = scalar_lea.sflag [#allocation9], %s1071
        %s1073 = sand.u32 %s143, 1
        %s1074 = smul.addr %s1073, 8
        %s1075 = scalar_lea.vmem [#allocation8], %s1074
        %p1076 = pneg %p156
        %p1077 = pneg %p153
        %p1078 = pneg %p177
        %p1079 = pneg %p174
        %p1080 = pneg %p198
        %p1081 = pneg %p195
        %p1082 = pneg %p219
        %p1083 = pneg %p216
        %p1084 = pneg %p240
        %p1085 = pneg %p237
        %p1086 = pneg %p261
        %p1087 = pneg %p258
        %p1088 = pneg %p282
        %p1089 = pneg %p279
        %p1090 = pneg %p303
        %p1091 = pneg %p300
        %p1092 = pneg %p324
        %p1093 = pneg %p321
        %p1094 = pneg %p345
        %p1095 = pneg %p342
        %p1096 = pneg %p366
        %p1097 = pneg %p363
        %p1098 = pneg %p387
        %p1099 = pneg %p384
        %p1100 = pneg %p408
        %p1101 = pneg %p405
        %p1102 = pneg %p429
        %p1103 = pneg %p426
        %p1104 = pneg %p450
        %p1105 = pneg %p447
        %p1106 = pneg %p471
        %p1107 = pneg %p468
        %p1108 = pneg %p492
        %p1109 = pneg %p489
        %p1110 = pneg %p513
        %p1111 = pneg %p510
        %p1112 = pneg %p534
        %p1113 = pneg %p531
        %p1114 = pneg %p555
        %p1115 = pneg %p552
        %p1116 = pneg %p576
        %p1117 = pneg %p573
        %p1118 = pneg %p602
        %p1119 = pneg %p599
        %s1120 = sand.u32 %s589, 1
        %s1121 = scalar_lea.sflag [#allocation4], %s1120
        %s1122 = sand.u32 %s589, 1
        %s1123 = smul.addr %s1122, 4
        %s1124 = scalar_lea.vmem [#allocation40], %s1123
        %v1126 = vld [vmem:[%s947] sm:$0xf]
        %v1127 = vunpack.c.l.bf16 %v1126
        %v1128 = vld [vmem:[%s956] sm:$0xff]
        %v1129 = vld [vmem:[#allocation10] sm:$0xf]
        %v1130 = vld [vmem:[#allocation10 + $0x4] sm:$0xf]
        %v1131 = vld [vmem:[#allocation10 + $0x8] sm:$0xf]
        %v1132 = vld [vmem:[#allocation10 + $0xc] sm:$0xf]
        %v1133 = vld [vmem:[#allocation11] sm:$0x1]
        %v1135 = vlaneseq
        %v1136 = vshrl.u32 %v1135, 7
        %v1137 = vsub.s32 0, %v1136
        %v1138 = vrot.slane %v1133, %v1137
        %v1144 = vunpack.c.l.b16 %v1129
        %v1145 = vunpack.c.l.b16 %v1130
        %v1146 = vunpack.c.l.b16 %v1131
        %v1147 = vunpack.c.l.b16 %v1132
        %v1148 = vpack.c.b16 %v1145, %v1144
        %v1149 = vpack.c.b16 %v1147, %v1146
        %vm1152 = vcmask 261120
        %v1154 = vsel %vm1152, %v1126, 0
        %1156 = vmatprep.subr.bf16.mxu0 0
        %1157 = vmatpush1.bf16.msra.mxu0 %v1148
        %1158 = vmatprep.subr.bf16.mxu0 0
        %1159 = vmatpush1.bf16.msra.mxu0 %v1149
        %1160 = vmatprep.subr.bf16.mxu0 0
        %1161 = vmatpush1.bf16.msra.mxu0 0
        %1162 = vmatprep.subr.bf16.mxu0 0
        %1163 = vmatpush1.bf16.msra.mxu0 0
        %1164 = vmatprep.subr.bf16.mxu0 0
        %1165 = vmatpush1.bf16.msra.mxu0 0
        %1166 = vmatprep.subr.bf16.mxu0 0
        %1167 = vmatpush1.bf16.msra.mxu0 0
        %1168 = vmatprep.subr.bf16.mxu0 0
        %1169 = vmatpush1.bf16.msra.mxu0 0
        %1170 = vmatprep.subr.bf16.mxu0 0
        %1171 = vmatpush1.bf16.msra.mxu0 0
        %1172 = vmatprep.subr.bf16.mxu0 0
        %1173 = vmatpush1.bf16.msra.mxu0 0
        %1174 = vmatprep.subr.bf16.mxu0 0
        %1175 = vmatpush1.bf16.msra.mxu0 0
        %1176 = vmatprep.subr.bf16.mxu0 0
        %1177 = vmatpush1.bf16.msra.mxu0 0
        %1178 = vmatprep.subr.bf16.mxu0 0
        %1179 = vmatpush1.bf16.msra.mxu0 0
        %1180 = vmatprep.subr.bf16.mxu0 0
        %1181 = vmatpush1.bf16.msra.mxu0 0
        %1182 = vmatprep.subr.bf16.mxu0 0
        %1183 = vmatpush1.bf16.msra.mxu0 0
        %1184 = vmatprep.subr.bf16.mxu0 0
        %1185 = vmatpush1.bf16.msra.mxu0 0
        %1186 = vmatprep.subr.bf16.mxu0 0
        %1187 = vmatpush1.bf16.msra.mxu0 0
        %1188 = vmatprep.mubr.bf16.mxu0 0
        %1189 = vmatmul.mubr.bf16.gmra.mrb[0].mxu0 %v1154
        %v1190 = vpop.f32.mrb[0].mxu0
        %v1191 = vadd.f32 %v1138, %v1190
        %v1192 = vpop.f32.mrb[0].mxu0
        %v1193 = vpop.f32.mrb[0].mxu0
        %v1194 = vpop.f32.mrb[0].mxu0
        %1195 = vdwg.mxu0
        %v1196 = vld [vmem:[#allocation13] sm:$0xf]
        %v1197 = vld [vmem:[#allocation13 + $0x4] sm:$0xf]
        %v1198 = vld [vmem:[#allocation13 + $0x8] sm:$0xf]
        %v1199 = vld [vmem:[#allocation13 + $0xc] sm:$0xf]
        %v1200 = vld [vmem:[#allocation14] sm:$0x1]
        %v1201 = vpack.c.bf16 %v1191, %v1191
        %1203 = vrot.lane.b32.xlu0 %v1201, 96
        %v1204 = vpop.permute.xlu0 %1203
        %vm1205 = vcmask 64512
        %v1207 = vsel %vm1205, %v1201, 0
        %v1210 = vsel %vm1205, %v1204, 0
        %1212 = vmatprep.subr.bf16.mxu0 0
        %1213 = vmatpush1.bf16.xpose.msra.mxu0 %v1210
        %1214 = vmatprep.subr.bf16.mxu0 0
        %1215 = vmatpush1.bf16.xpose.msra.mxu0 0
        %1216 = vmatprep.subr.bf16.mxu0 0
        %1217 = vmatpush1.bf16.xpose.msra.mxu0 0
        %1218 = vmatprep.subr.bf16.mxu0 0
        %1219 = vmatpush1.bf16.xpose.msra.mxu0 0
        %1220 = vmatprep.subr.bf16.mxu0 0
        %1221 = vmatpush1.bf16.xpose.msra.mxu0 0
        %1222 = vmatprep.subr.bf16.mxu0 0
        %1223 = vmatpush1.bf16.xpose.msra.mxu0 0
        %1224 = vmatprep.subr.bf16.mxu0 0
        %1225 = vmatpush1.bf16.xpose.msra.mxu0 0
        %1226 = vmatprep.subr.bf16.mxu0 0
        %1227 = vmatpush1.bf16.xpose.msra.mxu0 0
        %1228 = vmatprep.subr.bf16.mxu0 0
        %1229 = vmatpush1.bf16.xpose.msra.mxu0 0
        %1230 = vmatprep.subr.bf16.mxu0 0
        %1231 = vmatpush1.bf16.xpose.msra.mxu0 0
        %1232 = vmatprep.subr.bf16.mxu0 0
        %1233 = vmatpush1.bf16.xpose.msra.mxu0 0
        %1234 = vmatprep.subr.bf16.mxu0 0
        %1235 = vmatpush1.bf16.xpose.msra.mxu0 0
        %1236 = vmatprep.subr.bf16.mxu0 0
        %1237 = vmatpush1.bf16.xpose.msra.mxu0 0
        %1238 = vmatprep.subr.bf16.mxu0 0
        %1239 = vmatpush1.bf16.xpose.msra.mxu0 0
        %1240 = vmatprep.subr.bf16.mxu0 0
        %1241 = vmatpush1.bf16.xpose.msra.mxu0 0
        %1242 = vmatprep.subr.bf16.mxu0 0
        %1243 = vmatpush1.bf16.xpose.msra.mxu0 0
        %1244 = vmatprep.mubr.bf16.mxu0 0
        %1245 = vmatmul.mubr.bf16.gmra.mrb[0].mxu0 %v1207
        %v1246 = vpop.f32.mrb[0].mxu0
        %v1247 = vadd.f32 0.0, %v1246
        %v1248 = vpop.f32.mrb[0].mxu0
        %v1249 = vpop.f32.mrb[0].mxu0
        %v1250 = vpop.f32.mrb[0].mxu0
        %1251 = vdwg.mxu0
        %v1252 = vmul.f32 %v1247, 0.35355338
        %v1253 = vadd.f32 %v1252, %v1128
        %v1254 = vsel %vm1205, %v1253, -inf
        %1255 = vmax.xlane.f32.xlu0 %v1254
        %v1256 = vpop.xlane.xlu0 %1255
        %v1257 = vsub.f32 %v1253, %v1256
        %v1258 = vmul.f32 %v1257, 1.442695
        %v1259 = vpow.pop %v1258
        %v1260 = vsel %vm1205, %v1259, 0.0
        %1261 = vadd.xlane.f32.xlu0 %v1260
        %v1262 = vpop.xlane.xlu0 %1261
        %v1263 = vrcp.pop %v1262
        %v1264 = vmul.f32 %v1259, %v1263
        %v1265 = vpack.c.bf16 %v1264, %v1264
        %1266 = vrot.lane.b32.xlu0 %v1201, 64
        %v1267 = vpop.permute.xlu0 %1266
        %v1269 = vsel %vm1205, %v1265, 0
        %vm1271 = vcmask 1043456
        %v1273 = vsel %vm1271, %v1267, 0
        %1275 = vmatprep.subr.bf16.mxu0 0
        %1276 = vmatpush1.bf16.msra.mxu0 %v1273
        %1277 = vmatprep.subr.bf16.mxu0 0
        %1278 = vmatpush1.bf16.msra.mxu0 0
        %1279 = vmatprep.subr.bf16.mxu0 0
        %1280 = vmatpush1.bf16.msra.mxu0 0
        %1281 = vmatprep.subr.bf16.mxu0 0
        %1282 = vmatpush1.bf16.msra.mxu0 0
        %1283 = vmatprep.subr.bf16.mxu0 0
        %1284 = vmatpush1.bf16.msra.mxu0 0
        %1285 = vmatprep.subr.bf16.mxu0 0
        %1286 = vmatpush1.bf16.msra.mxu0 0
        %1287 = vmatprep.subr.bf16.mxu0 0
        %1288 = vmatpush1.bf16.msra.mxu0 0
        %1289 = vmatprep.subr.bf16.mxu0 0
        %1290 = vmatpush1.bf16.msra.mxu0 0
        %1291 = vmatprep.subr.bf16.mxu0 0
        %1292 = vmatpush1.bf16.msra.mxu0 0
        %1293 = vmatprep.subr.bf16.mxu0 0
        %1294 = vmatpush1.bf16.msra.mxu0 0
        %1295 = vmatprep.subr.bf16.mxu0 0
        %1296 = vmatpush1.bf16.msra.mxu0 0
        %1297 = vmatprep.subr.bf16.mxu0 0
        %1298 = vmatpush1.bf16.msra.mxu0 0
        %1299 = vmatprep.subr.bf16.mxu0 0
        %1300 = vmatpush1.bf16.msra.mxu0 0
        %1301 = vmatprep.subr.bf16.mxu0 0
        %1302 = vmatpush1.bf16.msra.mxu0 0
        %1303 = vmatprep.subr.bf16.mxu0 0
        %1304 = vmatpush1.bf16.msra.mxu0 0
        %1305 = vmatprep.subr.bf16.mxu0 0
        %1306 = vmatpush1.bf16.msra.mxu0 0
        %1307 = vmatprep.mubr.bf16.mxu0 0
        %1308 = vmatmul.mubr.bf16.gmra.mrb[0].mxu0 %v1269
        %v1309 = vpop.f32.mrb[0].mxu0
        %v1310 = vadd.f32 0.0, %v1309
        %v1311 = vpop.f32.mrb[0].mxu0
        %v1312 = vpop.f32.mrb[0].mxu0
        %v1313 = vpop.f32.mrb[0].mxu0
        %1314 = vdwg.mxu0
        %v1315 = vpack.c.bf16 %v1310, %v1310
        %1316 = vrot.lane.b32.xlu0 %v1201, 120
        %v1317 = vpop.permute.xlu0 %1316
        %1318 = vrot.lane.b32.xlu0 %v1201, 88
        %v1319 = vpop.permute.xlu0 %1318
        %v1321 = vsel %vm1205, %v1317, 0
        %v1324 = vsel %vm1205, %v1319, 0
        %1326 = vmatprep.subr.bf16.mxu0 0
        %1327 = vmatpush1.bf16.xpose.msra.mxu0 %v1324
        %1328 = vmatprep.subr.bf16.mxu0 0
        %1329 = vmatpush1.bf16.xpose.msra.mxu0 0
        %1330 = vmatprep.subr.bf16.mxu0 0
        %1331 = vmatpush1.bf16.xpose.msra.mxu0 0
        %1332 = vmatprep.subr.bf16.mxu0 0
        %1333 = vmatpush1.bf16.xpose.msra.mxu0 0
        %1334 = vmatprep.subr.bf16.mxu0 0
        %1335 = vmatpush1.bf16.xpose.msra.mxu0 0
        %1336 = vmatprep.subr.bf16.mxu0 0
        %1337 = vmatpush1.bf16.xpose.msra.mxu0 0
        %1338 = vmatprep.subr.bf16.mxu0 0
        %1339 = vmatpush1.bf16.xpose.msra.mxu0 0
        %1340 = vmatprep.subr.bf16.mxu0 0
        %1341 = vmatpush1.bf16.xpose.msra.mxu0 0
        %1342 = vmatprep.subr.bf16.mxu0 0
        %1343 = vmatpush1.bf16.xpose.msra.mxu0 0
        %1344 = vmatprep.subr.bf16.mxu0 0
        %1345 = vmatpush1.bf16.xpose.msra.mxu0 0
        %1346 = vmatprep.subr.bf16.mxu0 0
        %1347 = vmatpush1.bf16.xpose.msra.mxu0 0
        %1348 = vmatprep.subr.bf16.mxu0 0
        %1349 = vmatpush1.bf16.xpose.msra.mxu0 0
        %1350 = vmatprep.subr.bf16.mxu0 0
        %1351 = vmatpush1.bf16.xpose.msra.mxu0 0
        %1352 = vmatprep.subr.bf16.mxu0 0
        %1353 = vmatpush1.bf16.xpose.msra.mxu0 0
        %1354 = vmatprep.subr.bf16.mxu0 0
        %1355 = vmatpush1.bf16.xpose.msra.mxu0 0
        %1356 = vmatprep.subr.bf16.mxu0 0
        %1357 = vmatpush1.bf16.xpose.msra.mxu0 0
        %1358 = vmatprep.mubr.bf16.mxu0 0
        %1359 = vmatmul.mubr.bf16.gmra.mrb[0].mxu0 %v1321
        %v1360 = vpop.f32.mrb[0].mxu0
        %v1361 = vadd.f32 0.0, %v1360
        %v1362 = vpop.f32.mrb[0].mxu0
        %v1363 = vpop.f32.mrb[0].mxu0
        %v1364 = vpop.f32.mrb[0].mxu0
        %1365 = vdwg.mxu0
        %v1366 = vmul.f32 %v1361, 0.35355338
        %v1367 = vadd.f32 %v1366, %v1128
        %v1368 = vsel %vm1205, %v1367, -inf
        %1369 = vmax.xlane.f32.xlu0 %v1368
        %v1370 = vpop.xlane.xlu0 %1369
        %v1371 = vsub.f32 %v1367, %v1370
        %v1372 = vmul.f32 %v1371, 1.442695
        %v1373 = vpow.pop %v1372
        %v1374 = vsel %vm1205, %v1373, 0.0
        %1375 = vadd.xlane.f32.xlu0 %v1374
        %v1376 = vpop.xlane.xlu0 %1375
        %v1377 = vrcp.pop %v1376
        %v1378 = vmul.f32 %v1373, %v1377
        %v1379 = vpack.c.bf16 %v1378, %v1378
        %1380 = vrot.lane.b32.xlu0 %v1201, 56
        %v1381 = vpop.permute.xlu0 %1380
        %v1383 = vsel %vm1205, %v1379, 0
        %v1386 = vsel %vm1271, %v1381, 0
        %1388 = vmatprep.subr.bf16.mxu0 0
        %1389 = vmatpush1.bf16.msra.mxu0 %v1386
        %1390 = vmatprep.subr.bf16.mxu0 0
        %1391 = vmatpush1.bf16.msra.mxu0 0
        %1392 = vmatprep.subr.bf16.mxu0 0
        %1393 = vmatpush1.bf16.msra.mxu0 0
        %1394 = vmatprep.subr.bf16.mxu0 0
        %1395 = vmatpush1.bf16.msra.mxu0 0
        %1396 = vmatprep.subr.bf16.mxu0 0
        %1397 = vmatpush1.bf16.msra.mxu0 0
        %1398 = vmatprep.subr.bf16.mxu0 0
        %1399 = vmatpush1.bf16.msra.mxu0 0
        %1400 = vmatprep.subr.bf16.mxu0 0
        %1401 = vmatpush1.bf16.msra.mxu0 0
        %1402 = vmatprep.subr.bf16.mxu0 0
        %1403 = vmatpush1.bf16.msra.mxu0 0
        %1404 = vmatprep.subr.bf16.mxu0 0
        %1405 = vmatpush1.bf16.msra.mxu0 0
        %1406 = vmatprep.subr.bf16.mxu0 0
        %1407 = vmatpush1.bf16.msra.mxu0 0
        %1408 = vmatprep.subr.bf16.mxu0 0
        %1409 = vmatpush1.bf16.msra.mxu0 0
        %1410 = vmatprep.subr.bf16.mxu0 0
        %1411 = vmatpush1.bf16.msra.mxu0 0
        %1412 = vmatprep.subr.bf16.mxu0 0
        %1413 = vmatpush1.bf16.msra.mxu0 0
        %1414 = vmatprep.subr.bf16.mxu0 0
        %1415 = vmatpush1.bf16.msra.mxu0 0
        %1416 = vmatprep.subr.bf16.mxu0 0
        %1417 = vmatpush1.bf16.msra.mxu0 0
        %1418 = vmatprep.subr.bf16.mxu0 0
        %1419 = vmatpush1.bf16.msra.mxu0 0
        %1420 = vmatprep.mubr.bf16.mxu0 0
        %1421 = vmatmul.mubr.bf16.gmra.mrb[0].mxu0 %v1383
        %v1422 = vpop.f32.mrb[0].mxu0
        %v1423 = vadd.f32 0.0, %v1422
        %v1424 = vpop.f32.mrb[0].mxu0
        %v1425 = vpop.f32.mrb[0].mxu0
        %v1426 = vpop.f32.mrb[0].mxu0
        %1427 = vdwg.mxu0
        %v1428 = vpack.c.bf16 %v1423, %v1423
        %v1430 = vsel %vm1205, %v1428, 0
        %v1433 = vsel %vm1271, %v1197, 0
        %1435 = vmatprep.subr.bf16.mxu0 0
        %1436 = vmatpush1.bf16.msra.mxu0 %v1433
        %1437 = vmatprep.subr.bf16.mxu0 0
        %1438 = vmatpush1.bf16.msra.mxu0 0
        %1439 = vmatprep.subr.bf16.mxu0 0
        %1440 = vmatpush1.bf16.msra.mxu0 0
        %1441 = vmatprep.subr.bf16.mxu0 0
        %1442 = vmatpush1.bf16.msra.mxu0 0
        %1443 = vmatprep.subr.bf16.mxu0 0
        %1444 = vmatpush1.bf16.msra.mxu0 0
        %1445 = vmatprep.subr.bf16.mxu0 0
        %1446 = vmatpush1.bf16.msra.mxu0 0
        %1447 = vmatprep.subr.bf16.mxu0 0
        %1448 = vmatpush1.bf16.msra.mxu0 0
        %1449 = vmatprep.subr.bf16.mxu0 0
        %1450 = vmatpush1.bf16.msra.mxu0 0
        %1451 = vmatprep.subr.bf16.mxu0 0
        %1452 = vmatpush1.bf16.msra.mxu0 0
        %1453 = vmatprep.subr.bf16.mxu0 0
        %1454 = vmatpush1.bf16.msra.mxu0 0
        %1455 = vmatprep.subr.bf16.mxu0 0
        %1456 = vmatpush1.bf16.msra.mxu0 0
        %1457 = vmatprep.subr.bf16.mxu0 0
        %1458 = vmatpush1.bf16.msra.mxu0 0
        %1459 = vmatprep.subr.bf16.mxu0 0
        %1460 = vmatpush1.bf16.msra.mxu0 0
        %1461 = vmatprep.subr.bf16.mxu0 0
        %1462 = vmatpush1.bf16.msra.mxu0 0
        %1463 = vmatprep.subr.bf16.mxu0 0
        %1464 = vmatpush1.bf16.msra.mxu0 0
        %1465 = vmatprep.subr.bf16.mxu0 0
        %1466 = vmatpush1.bf16.msra.mxu0 0
        %1467 = vmatprep.mubr.bf16.mxu0 0
        %1468 = vmatmul.mubr.bf16.gmra.mrb[0].mxu0 %v1430
        %v1469 = vpop.f32.mrb[0].mxu0
        %v1470 = vadd.f32 0.0, %v1469
        %v1471 = vpop.f32.mrb[0].mxu0
        %v1472 = vpop.f32.mrb[0].mxu0
        %v1473 = vpop.f32.mrb[0].mxu0
        %1474 = vdwg.mxu0
        %v1476 = vsel %vm1205, %v1315, 0
        %v1479 = vsel %vm1271, %v1196, 0
        %1481 = vmatprep.subr.bf16.mxu0 0
        %1482 = vmatpush1.bf16.msra.mxu0 %v1479
        %1483 = vmatprep.subr.bf16.mxu0 0
        %1484 = vmatpush1.bf16.msra.mxu0 0
        %1485 = vmatprep.subr.bf16.mxu0 0
        %1486 = vmatpush1.bf16.msra.mxu0 0
        %1487 = vmatprep.subr.bf16.mxu0 0
        %1488 = vmatpush1.bf16.msra.mxu0 0
        %1489 = vmatprep.subr.bf16.mxu0 0
        %1490 = vmatpush1.bf16.msra.mxu0 0
        %1491 = vmatprep.subr.bf16.mxu0 0
        %1492 = vmatpush1.bf16.msra.mxu0 0
        %1493 = vmatprep.subr.bf16.mxu0 0
        %1494 = vmatpush1.bf16.msra.mxu0 0
        %1495 = vmatprep.subr.bf16.mxu0 0
        %1496 = vmatpush1.bf16.msra.mxu0 0
        %1497 = vmatprep.subr.bf16.mxu0 0
        %1498 = vmatpush1.bf16.msra.mxu0 0
        %1499 = vmatprep.subr.bf16.mxu0 0
        %1500 = vmatpush1.bf16.msra.mxu0 0
        %1501 = vmatprep.subr.bf16.mxu0 0
        %1502 = vmatpush1.bf16.msra.mxu0 0
        %1503 = vmatprep.subr.bf16.mxu0 0
        %1504 = vmatpush1.bf16.msra.mxu0 0
        %1505 = vmatprep.subr.bf16.mxu0 0
        %1506 = vmatpush1.bf16.msra.mxu0 0
        %1507 = vmatprep.subr.bf16.mxu0 0
        %1508 = vmatpush1.bf16.msra.mxu0 0
        %1509 = vmatprep.subr.bf16.mxu0 0
        %1510 = vmatpush1.bf16.msra.mxu0 0
        %1511 = vmatprep.subr.bf16.mxu0 0
        %1512 = vmatpush1.bf16.msra.mxu0 0
        %1513 = vmatprep.mubr.bf16.mxu0 0
        %1514 = vmatmul.mubr.bf16.gmra.mrb[0].mxu0 %v1476
        %v1515 = vpop.f32.mrb[0].mxu0
        %v1516 = vadd.f32 %v1470, %v1515
        %v1517 = vpop.f32.mrb[0].mxu0
        %v1518 = vpop.f32.mrb[0].mxu0
        %v1519 = vpop.f32.mrb[0].mxu0
        %1520 = vdwg.mxu0
        %1521 = vrot.lane.b32.xlu0 %v1201, 112
        %v1522 = vpop.permute.xlu0 %1521
        %1523 = vrot.lane.b32.xlu0 %v1201, 80
        %v1524 = vpop.permute.xlu0 %1523
        %v1526 = vsel %vm1205, %v1522, 0
        %v1529 = vsel %vm1205, %v1524, 0
        %1531 = vmatprep.subr.bf16.mxu0 0
        %1532 = vmatpush1.bf16.xpose.msra.mxu0 %v1529
        %1533 = vmatprep.subr.bf16.mxu0 0
        %1534 = vmatpush1.bf16.xpose.msra.mxu0 0
        %1535 = vmatprep.subr.bf16.mxu0 0
        %1536 = vmatpush1.bf16.xpose.msra.mxu0 0
        %1537 = vmatprep.subr.bf16.mxu0 0
        %1538 = vmatpush1.bf16.xpose.msra.mxu0 0
        %1539 = vmatprep.subr.bf16.mxu0 0
        %1540 = vmatpush1.bf16.xpose.msra.mxu0 0
        %1541 = vmatprep.subr.bf16.mxu0 0
        %1542 = vmatpush1.bf16.xpose.msra.mxu0 0
        %1543 = vmatprep.subr.bf16.mxu0 0
        %1544 = vmatpush1.bf16.xpose.msra.mxu0 0
        %1545 = vmatprep.subr.bf16.mxu0 0
        %1546 = vmatpush1.bf16.xpose.msra.mxu0 0
        %1547 = vmatprep.subr.bf16.mxu0 0
        %1548 = vmatpush1.bf16.xpose.msra.mxu0 0
        %1549 = vmatprep.subr.bf16.mxu0 0
        %1550 = vmatpush1.bf16.xpose.msra.mxu0 0
        %1551 = vmatprep.subr.bf16.mxu0 0
        %1552 = vmatpush1.bf16.xpose.msra.mxu0 0
        %1553 = vmatprep.subr.bf16.mxu0 0
        %1554 = vmatpush1.bf16.xpose.msra.mxu0 0
        %1555 = vmatprep.subr.bf16.mxu0 0
        %1556 = vmatpush1.bf16.xpose.msra.mxu0 0
        %1557 = vmatprep.subr.bf16.mxu0 0
        %1558 = vmatpush1.bf16.xpose.msra.mxu0 0
        %1559 = vmatprep.subr.bf16.mxu0 0
        %1560 = vmatpush1.bf16.xpose.msra.mxu0 0
        %1561 = vmatprep.subr.bf16.mxu0 0
        %1562 = vmatpush1.bf16.xpose.msra.mxu0 0
        %1563 = vmatprep.mubr.bf16.mxu0 0
        %1564 = vmatmul.mubr.bf16.gmra.mrb[0].mxu0 %v1526
        %v1565 = vpop.f32.mrb[0].mxu0
        %v1566 = vadd.f32 0.0, %v1565
        %v1567 = vpop.f32.mrb[0].mxu0
        %v1568 = vpop.f32.mrb[0].mxu0
        %v1569 = vpop.f32.mrb[0].mxu0
        %1570 = vdwg.mxu0
        %v1571 = vmul.f32 %v1566, 0.35355338
        %v1572 = vadd.f32 %v1571, %v1128
        %v1573 = vsel %vm1205, %v1572, -inf
        %1574 = vmax.xlane.f32.xlu0 %v1573
        %v1575 = vpop.xlane.xlu0 %1574
        %v1576 = vsub.f32 %v1572, %v1575
        %v1577 = vmul.f32 %v1576, 1.442695
        %v1578 = vpow.pop %v1577
        %v1579 = vsel %vm1205, %v1578, 0.0
        %1580 = vadd.xlane.f32.xlu0 %v1579
        %v1581 = vpop.xlane.xlu0 %1580
        %v1582 = vrcp.pop %v1581
        %v1583 = vmul.f32 %v1578, %v1582
        %v1584 = vpack.c.bf16 %v1583, %v1583
        %1585 = vrot.lane.b32.xlu0 %v1201, 48
        %v1586 = vpop.permute.xlu0 %1585
        %v1588 = vsel %vm1205, %v1584, 0
        %v1591 = vsel %vm1271, %v1586, 0
        %1593 = vmatprep.subr.bf16.mxu0 0
        %1594 = vmatpush1.bf16.msra.mxu0 %v1591
        %1595 = vmatprep.subr.bf16.mxu0 0
        %1596 = vmatpush1.bf16.msra.mxu0 0
        %1597 = vmatprep.subr.bf16.mxu0 0
        %1598 = vmatpush1.bf16.msra.mxu0 0
        %1599 = vmatprep.subr.bf16.mxu0 0
        %1600 = vmatpush1.bf16.msra.mxu0 0
        %1601 = vmatprep.subr.bf16.mxu0 0
        %1602 = vmatpush1.bf16.msra.mxu0 0
        %1603 = vmatprep.subr.bf16.mxu0 0
        %1604 = vmatpush1.bf16.msra.mxu0 0
        %1605 = vmatprep.subr.bf16.mxu0 0
        %1606 = vmatpush1.bf16.msra.mxu0 0
        %1607 = vmatprep.subr.bf16.mxu0 0
        %1608 = vmatpush1.bf16.msra.mxu0 0
        %1609 = vmatprep.subr.bf16.mxu0 0
        %1610 = vmatpush1.bf16.msra.mxu0 0
        %1611 = vmatprep.subr.bf16.mxu0 0
        %1612 = vmatpush1.bf16.msra.mxu0 0
        %1613 = vmatprep.subr.bf16.mxu0 0
        %1614 = vmatpush1.bf16.msra.mxu0 0
        %1615 = vmatprep.subr.bf16.mxu0 0
        %1616 = vmatpush1.bf16.msra.mxu0 0
        %1617 = vmatprep.subr.bf16.mxu0 0
        %1618 = vmatpush1.bf16.msra.mxu0 0
        %1619 = vmatprep.subr.bf16.mxu0 0
        %1620 = vmatpush1.bf16.msra.mxu0 0
        %1621 = vmatprep.subr.bf16.mxu0 0
        %1622 = vmatpush1.bf16.msra.mxu0 0
        %1623 = vmatprep.subr.bf16.mxu0 0
        %1624 = vmatpush1.bf16.msra.mxu0 0
        %1625 = vmatprep.mubr.bf16.mxu0 0
        %1626 = vmatmul.mubr.bf16.gmra.mrb[0].mxu0 %v1588
        %v1627 = vpop.f32.mrb[0].mxu0
        %v1628 = vadd.f32 0.0, %v1627
        %v1629 = vpop.f32.mrb[0].mxu0
        %v1630 = vpop.f32.mrb[0].mxu0
        %v1631 = vpop.f32.mrb[0].mxu0
        %1632 = vdwg.mxu0
        %v1633 = vpack.c.bf16 %v1628, %v1628
        %v1635 = vsel %vm1205, %v1633, 0
        %v1638 = vsel %vm1271, %v1198, 0
        %1640 = vmatprep.subr.bf16.mxu0 0
        %1641 = vmatpush1.bf16.msra.mxu0 %v1638
        %1642 = vmatprep.subr.bf16.mxu0 0
        %1643 = vmatpush1.bf16.msra.mxu0 0
        %1644 = vmatprep.subr.bf16.mxu0 0
        %1645 = vmatpush1.bf16.msra.mxu0 0
        %1646 = vmatprep.subr.bf16.mxu0 0
        %1647 = vmatpush1.bf16.msra.mxu0 0
        %1648 = vmatprep.subr.bf16.mxu0 0
        %1649 = vmatpush1.bf16.msra.mxu0 0
        %1650 = vmatprep.subr.bf16.mxu0 0
        %1651 = vmatpush1.bf16.msra.mxu0 0
        %1652 = vmatprep.subr.bf16.mxu0 0
        %1653 = vmatpush1.bf16.msra.mxu0 0
        %1654 = vmatprep.subr.bf16.mxu0 0
        %1655 = vmatpush1.bf16.msra.mxu0 0
        %1656 = vmatprep.subr.bf16.mxu0 0
        %1657 = vmatpush1.bf16.msra.mxu0 0
        %1658 = vmatprep.subr.bf16.mxu0 0
        %1659 = vmatpush1.bf16.msra.mxu0 0
        %1660 = vmatprep.subr.bf16.mxu0 0
        %1661 = vmatpush1.bf16.msra.mxu0 0
        %1662 = vmatprep.subr.bf16.mxu0 0
        %1663 = vmatpush1.bf16.msra.mxu0 0
        %1664 = vmatprep.subr.bf16.mxu0 0
        %1665 = vmatpush1.bf16.msra.mxu0 0
        %1666 = vmatprep.subr.bf16.mxu0 0
        %1667 = vmatpush1.bf16.msra.mxu0 0
        %1668 = vmatprep.subr.bf16.mxu0 0
        %1669 = vmatpush1.bf16.msra.mxu0 0
        %1670 = vmatprep.subr.bf16.mxu0 0
        %1671 = vmatpush1.bf16.msra.mxu0 0
        %1672 = vmatprep.mubr.bf16.mxu0 0
        %1673 = vmatmul.mubr.bf16.gmra.mrb[0].mxu0 %v1635
        %v1674 = vpop.f32.mrb[0].mxu0
        %v1675 = vadd.f32 0.0, %v1674
        %v1676 = vpop.f32.mrb[0].mxu0
        %v1677 = vpop.f32.mrb[0].mxu0
        %v1678 = vpop.f32.mrb[0].mxu0
        %1679 = vdwg.mxu0
        %v1680 = vadd.f32 %v1516, %v1675
        %1681 = vrot.lane.b32.xlu0 %v1201, 104
        %v1682 = vpop.permute.xlu0 %1681
        %1683 = vrot.lane.b32.xlu0 %v1201, 72
        %v1684 = vpop.permute.xlu0 %1683
        %v1686 = vsel %vm1205, %v1682, 0
        %v1689 = vsel %vm1205, %v1684, 0
        %1691 = vmatprep.subr.bf16.mxu0 0
        %1692 = vmatpush1.bf16.xpose.msra.mxu0 %v1689
        %1693 = vmatprep.subr.bf16.mxu0 0
        %1694 = vmatpush1.bf16.xpose.msra.mxu0 0
        %1695 = vmatprep.subr.bf16.mxu0 0
        %1696 = vmatpush1.bf16.xpose.msra.mxu0 0
        %1697 = vmatprep.subr.bf16.mxu0 0
        %1698 = vmatpush1.bf16.xpose.msra.mxu0 0
        %1699 = vmatprep.subr.bf16.mxu0 0
        %1700 = vmatpush1.bf16.xpose.msra.mxu0 0
        %1701 = vmatprep.subr.bf16.mxu0 0
        %1702 = vmatpush1.bf16.xpose.msra.mxu0 0
        %1703 = vmatprep.subr.bf16.mxu0 0
        %1704 = vmatpush1.bf16.xpose.msra.mxu0 0
        %1705 = vmatprep.subr.bf16.mxu0 0
        %1706 = vmatpush1.bf16.xpose.msra.mxu0 0
        %1707 = vmatprep.subr.bf16.mxu0 0
        %1708 = vmatpush1.bf16.xpose.msra.mxu0 0
        %1709 = vmatprep.subr.bf16.mxu0 0
        %1710 = vmatpush1.bf16.xpose.msra.mxu0 0
        %1711 = vmatprep.subr.bf16.mxu0 0
        %1712 = vmatpush1.bf16.xpose.msra.mxu0 0
        %1713 = vmatprep.subr.bf16.mxu0 0
        %1714 = vmatpush1.bf16.xpose.msra.mxu0 0
        %1715 = vmatprep.subr.bf16.mxu0 0
        %1716 = vmatpush1.bf16.xpose.msra.mxu0 0
        %1717 = vmatprep.subr.bf16.mxu0 0
        %1718 = vmatpush1.bf16.xpose.msra.mxu0 0
        %1719 = vmatprep.subr.bf16.mxu0 0
        %1720 = vmatpush1.bf16.xpose.msra.mxu0 0
        %1721 = vmatprep.subr.bf16.mxu0 0
        %1722 = vmatpush1.bf16.xpose.msra.mxu0 0
        %1723 = vmatprep.mubr.bf16.mxu0 0
        %1724 = vmatmul.mubr.bf16.gmra.mrb[0].mxu0 %v1686
        %v1725 = vpop.f32.mrb[0].mxu0
        %v1726 = vadd.f32 0.0, %v1725
        %v1727 = vpop.f32.mrb[0].mxu0
        %v1728 = vpop.f32.mrb[0].mxu0
        %v1729 = vpop.f32.mrb[0].mxu0
        %1730 = vdwg.mxu0
        %v1731 = vmul.f32 %v1726, 0.35355338
        %v1732 = vadd.f32 %v1731, %v1128
        %v1733 = vsel %vm1205, %v1732, -inf
        %1734 = vmax.xlane.f32.xlu0 %v1733
        %v1735 = vpop.xlane.xlu0 %1734
        %v1736 = vsub.f32 %v1732, %v1735
        %v1737 = vmul.f32 %v1736, 1.442695
        %v1738 = vpow.pop %v1737
        %v1739 = vsel %vm1205, %v1738, 0.0
        %1740 = vadd.xlane.f32.xlu0 %v1739
        %v1741 = vpop.xlane.xlu0 %1740
        %v1742 = vrcp.pop %v1741
        %v1743 = vmul.f32 %v1738, %v1742
        %v1744 = vpack.c.bf16 %v1743, %v1743
        %1745 = vrot.lane.b32.xlu0 %v1201, 40
        %v1746 = vpop.permute.xlu0 %1745
        %v1748 = vsel %vm1205, %v1744, 0
        %v1751 = vsel %vm1271, %v1746, 0
        %1753 = vmatprep.subr.bf16.mxu0 0
        %1754 = vmatpush1.bf16.msra.mxu0 %v1751
        %1755 = vmatprep.subr.bf16.mxu0 0
        %1756 = vmatpush1.bf16.msra.mxu0 0
        %1757 = vmatprep.subr.bf16.mxu0 0
        %1758 = vmatpush1.bf16.msra.mxu0 0
        %1759 = vmatprep.subr.bf16.mxu0 0
        %1760 = vmatpush1.bf16.msra.mxu0 0
        %1761 = vmatprep.subr.bf16.mxu0 0
        %1762 = vmatpush1.bf16.msra.mxu0 0
        %1763 = vmatprep.subr.bf16.mxu0 0
        %1764 = vmatpush1.bf16.msra.mxu0 0
        %1765 = vmatprep.subr.bf16.mxu0 0
        %1766 = vmatpush1.bf16.msra.mxu0 0
        %1767 = vmatprep.subr.bf16.mxu0 0
        %1768 = vmatpush1.bf16.msra.mxu0 0
        %1769 = vmatprep.subr.bf16.mxu0 0
        %1770 = vmatpush1.bf16.msra.mxu0 0
        %1771 = vmatprep.subr.bf16.mxu0 0
        %1772 = vmatpush1.bf16.msra.mxu0 0
        %1773 = vmatprep.subr.bf16.mxu0 0
        %1774 = vmatpush1.bf16.msra.mxu0 0
        %1775 = vmatprep.subr.bf16.mxu0 0
        %1776 = vmatpush1.bf16.msra.mxu0 0
        %1777 = vmatprep.subr.bf16.mxu0 0
        %1778 = vmatpush1.bf16.msra.mxu0 0
        %1779 = vmatprep.subr.bf16.mxu0 0
        %1780 = vmatpush1.bf16.msra.mxu0 0
        %1781 = vmatprep.subr.bf16.mxu0 0
        %1782 = vmatpush1.bf16.msra.mxu0 0
        %1783 = vmatprep.subr.bf16.mxu0 0
        %1784 = vmatpush1.bf16.msra.mxu0 0
        %1785 = vmatprep.mubr.bf16.mxu0 0
        %1786 = vmatmul.mubr.bf16.gmra.mrb[0].mxu0 %v1748
        %v1787 = vpop.f32.mrb[0].mxu0
        %v1788 = vadd.f32 0.0, %v1787
        %v1789 = vpop.f32.mrb[0].mxu0
        %v1790 = vpop.f32.mrb[0].mxu0
        %v1791 = vpop.f32.mrb[0].mxu0
        %1792 = vdwg.mxu0
        %v1793 = vpack.c.bf16 %v1788, %v1788
        %v1795 = vsel %vm1205, %v1793, 0
        %v1798 = vsel %vm1271, %v1199, 0
        %1800 = vmatprep.subr.bf16.mxu0 0
        %1801 = vmatpush1.bf16.msra.mxu0 %v1798
        %1802 = vmatprep.subr.bf16.mxu0 0
        %1803 = vmatpush1.bf16.msra.mxu0 0
        %1804 = vmatprep.subr.bf16.mxu0 0
        %1805 = vmatpush1.bf16.msra.mxu0 0
        %1806 = vmatprep.subr.bf16.mxu0 0
        %1807 = vmatpush1.bf16.msra.mxu0 0
        %1808 = vmatprep.subr.bf16.mxu0 0
        %1809 = vmatpush1.bf16.msra.mxu0 0
        %1810 = vmatprep.subr.bf16.mxu0 0
        %1811 = vmatpush1.bf16.msra.mxu0 0
        %1812 = vmatprep.subr.bf16.mxu0 0
        %1813 = vmatpush1.bf16.msra.mxu0 0
        %1814 = vmatprep.subr.bf16.mxu0 0
        %1815 = vmatpush1.bf16.msra.mxu0 0
        %1816 = vmatprep.subr.bf16.mxu0 0
        %1817 = vmatpush1.bf16.msra.mxu0 0
        %1818 = vmatprep.subr.bf16.mxu0 0
        %1819 = vmatpush1.bf16.msra.mxu0 0
        %1820 = vmatprep.subr.bf16.mxu0 0
        %1821 = vmatpush1.bf16.msra.mxu0 0
        %1822 = vmatprep.subr.bf16.mxu0 0
        %1823 = vmatpush1.bf16.msra.mxu0 0
        %1824 = vmatprep.subr.bf16.mxu0 0
        %1825 = vmatpush1.bf16.msra.mxu0 0
        %1826 = vmatprep.subr.bf16.mxu0 0
        %1827 = vmatpush1.bf16.msra.mxu0 0
        %1828 = vmatprep.subr.bf16.mxu0 0
        %1829 = vmatpush1.bf16.msra.mxu0 0
        %1830 = vmatprep.subr.bf16.mxu0 0
        %1831 = vmatpush1.bf16.msra.mxu0 0
        %1832 = vmatprep.mubr.bf16.mxu0 0
        %1833 = vmatmul.mubr.bf16.gmra.mrb[0].mxu0 %v1795
        %v1834 = vpop.f32.mrb[0].mxu0
        %v1835 = vadd.f32 0.0, %v1834
        %v1836 = vpop.f32.mrb[0].mxu0
        %v1837 = vpop.f32.mrb[0].mxu0
        %v1838 = vpop.f32.mrb[0].mxu0
        %1839 = vdwg.mxu0
        %v1840 = vadd.f32 %v1680, %v1835
        %v1842 = vlaneseq
        %v1843 = vshrl.u32 %v1842, 7
        %v1844 = vsub.s32 0, %v1843
        %v1845 = vrot.slane %v1200, %v1844
        %v1847 = vadd.f32 %v1840, %v1845
        %v1848 = vpack.c.bf16 %v1847, %v1847
        %v1850 = vsel %vm1152, %v1848, 0
        %1852 = vmatprep.subr.bf16.mxu0 0
        %1853 = vmatpush1.bf16.msra.mxu0 %v1148
        %1854 = vmatprep.subr.bf16.mxu0 0
        %1855 = vmatpush1.bf16.msra.mxu0 %v1149
        %1856 = vmatprep.subr.bf16.mxu0 0
        %1857 = vmatpush1.bf16.msra.mxu0 0
        %1858 = vmatprep.subr.bf16.mxu0 0
        %1859 = vmatpush1.bf16.msra.mxu0 0
        %1860 = vmatprep.subr.bf16.mxu0 0
        %1861 = vmatpush1.bf16.msra.mxu0 0
        %1862 = vmatprep.subr.bf16.mxu0 0
        %1863 = vmatpush1.bf16.msra.mxu0 0
        %1864 = vmatprep.subr.bf16.mxu0 0
        %1865 = vmatpush1.bf16.msra.mxu0 0
        %1866 = vmatprep.subr.bf16.mxu0 0
        %1867 = vmatpush1.bf16.msra.mxu0 0
        %1868 = vmatprep.subr.bf16.mxu0 0
        %1869 = vmatpush1.bf16.msra.mxu0 0
        %1870 = vmatprep.subr.bf16.mxu0 0
        %1871 = vmatpush1.bf16.msra.mxu0 0
        %1872 = vmatprep.subr.bf16.mxu0 0
        %1873 = vmatpush1.bf16.msra.mxu0 0
        %1874 = vmatprep.subr.bf16.mxu0 0
        %1875 = vmatpush1.bf16.msra.mxu0 0
        %1876 = vmatprep.subr.bf16.mxu0 0
        %1877 = vmatpush1.bf16.msra.mxu0 0
        %1878 = vmatprep.subr.bf16.mxu0 0
        %1879 = vmatpush1.bf16.msra.mxu0 0
        %1880 = vmatprep.subr.bf16.mxu0 0
        %1881 = vmatpush1.bf16.msra.mxu0 0
        %1882 = vmatprep.subr.bf16.mxu0 0
        %1883 = vmatpush1.bf16.msra.mxu0 0
        %1884 = vmatprep.mubr.bf16.mxu0 0
        %1885 = vmatmul.mubr.bf16.gmra.mrb[0].mxu0 %v1850
        %v1886 = vpop.f32.mrb[0].mxu0
        %v1887 = vadd.f32 %v1138, %v1886
        %v1888 = vpop.f32.mrb[0].mxu0
        %v1889 = vpop.f32.mrb[0].mxu0
        %v1890 = vpop.f32.mrb[0].mxu0
        %1891 = vdwg.mxu0
        %v1892 = vpack.c.bf16 %v1887, %v1887
        %1894 = vrot.lane.b32.xlu0 %v1892, 96
        %v1895 = vpop.permute.xlu0 %1894
        %v1897 = vsel %vm1205, %v1892, 0
        %v1900 = vsel %vm1205, %v1895, 0
        %1902 = vmatprep.subr.bf16.mxu0 0
        %1903 = vmatpush1.bf16.xpose.msra.mxu0 %v1900
        %1904 = vmatprep.subr.bf16.mxu0 0
        %1905 = vmatpush1.bf16.xpose.msra.mxu0 0
        %1906 = vmatprep.subr.bf16.mxu0 0
        %1907 = vmatpush1.bf16.xpose.msra.mxu0 0
        %1908 = vmatprep.subr.bf16.mxu0 0
        %1909 = vmatpush1.bf16.xpose.msra.mxu0 0
        %1910 = vmatprep.subr.bf16.mxu0 0
        %1911 = vmatpush1.bf16.xpose.msra.mxu0 0
        %1912 = vmatprep.subr.bf16.mxu0 0
        %1913 = vmatpush1.bf16.xpose.msra.mxu0 0
        %1914 = vmatprep.subr.bf16.mxu0 0
        %1915 = vmatpush1.bf16.xpose.msra.mxu0 0
        %1916 = vmatprep.subr.bf16.mxu0 0
        %1917 = vmatpush1.bf16.xpose.msra.mxu0 0
        %1918 = vmatprep.subr.bf16.mxu0 0
        %1919 = vmatpush1.bf16.xpose.msra.mxu0 0
        %1920 = vmatprep.subr.bf16.mxu0 0
        %1921 = vmatpush1.bf16.xpose.msra.mxu0 0
        %1922 = vmatprep.subr.bf16.mxu0 0
        %1923 = vmatpush1.bf16.xpose.msra.mxu0 0
        %1924 = vmatprep.subr.bf16.mxu0 0
        %1925 = vmatpush1.bf16.xpose.msra.mxu0 0
        %1926 = vmatprep.subr.bf16.mxu0 0
        %1927 = vmatpush1.bf16.xpose.msra.mxu0 0
        %1928 = vmatprep.subr.bf16.mxu0 0
        %1929 = vmatpush1.bf16.xpose.msra.mxu0 0
        %1930 = vmatprep.subr.bf16.mxu0 0
        %1931 = vmatpush1.bf16.xpose.msra.mxu0 0
        %1932 = vmatprep.subr.bf16.mxu0 0
        %1933 = vmatpush1.bf16.xpose.msra.mxu0 0
        %1934 = vmatprep.mubr.bf16.mxu0 0
        %1935 = vmatmul.mubr.bf16.gmra.mrb[0].mxu0 %v1897
        %v1936 = vpop.f32.mrb[0].mxu0
        %v1937 = vadd.f32 0.0, %v1936
        %v1938 = vpop.f32.mrb[0].mxu0
        %v1939 = vpop.f32.mrb[0].mxu0
        %v1940 = vpop.f32.mrb[0].mxu0
        %1941 = vdwg.mxu0
        %v1942 = vmul.f32 %v1937, 0.35355338
        %v1943 = vadd.f32 %v1942, %v1128
        %v1944 = vsel %vm1205, %v1943, -inf
        %1945 = vmax.xlane.f32.xlu0 %v1944
        %v1946 = vpop.xlane.xlu0 %1945
        %v1947 = vsub.f32 %v1943, %v1946
        %v1948 = vmul.f32 %v1947, 1.442695
        %v1949 = vpow.pop %v1948
        %v1950 = vsel %vm1205, %v1949, 0.0
        %1951 = vadd.xlane.f32.xlu0 %v1950
        %v1952 = vpop.xlane.xlu0 %1951
        %v1953 = vrcp.pop %v1952
        %v1954 = vmul.f32 %v1949, %v1953
        %v1955 = vpack.c.bf16 %v1954, %v1954
        %1956 = vrot.lane.b32.xlu0 %v1892, 64
        %v1957 = vpop.permute.xlu0 %1956
        %v1959 = vsel %vm1205, %v1955, 0
        %v1962 = vsel %vm1271, %v1957, 0
        %1964 = vmatprep.subr.bf16.mxu0 0
        %1965 = vmatpush1.bf16.msra.mxu0 %v1962
        %1966 = vmatprep.subr.bf16.mxu0 0
        %1967 = vmatpush1.bf16.msra.mxu0 0
        %1968 = vmatprep.subr.bf16.mxu0 0
        %1969 = vmatpush1.bf16.msra.mxu0 0
        %1970 = vmatprep.subr.bf16.mxu0 0
        %1971 = vmatpush1.bf16.msra.mxu0 0
        %1972 = vmatprep.subr.bf16.mxu0 0
        %1973 = vmatpush1.bf16.msra.mxu0 0
        %1974 = vmatprep.subr.bf16.mxu0 0
        %1975 = vmatpush1.bf16.msra.mxu0 0
        %1976 = vmatprep.subr.bf16.mxu0 0
        %1977 = vmatpush1.bf16.msra.mxu0 0
        %1978 = vmatprep.subr.bf16.mxu0 0
        %1979 = vmatpush1.bf16.msra.mxu0 0
        %1980 = vmatprep.subr.bf16.mxu0 0
        %1981 = vmatpush1.bf16.msra.mxu0 0
        %1982 = vmatprep.subr.bf16.mxu0 0
        %1983 = vmatpush1.bf16.msra.mxu0 0
        %1984 = vmatprep.subr.bf16.mxu0 0
        %1985 = vmatpush1.bf16.msra.mxu0 0
        %1986 = vmatprep.subr.bf16.mxu0 0
        %1987 = vmatpush1.bf16.msra.mxu0 0
        %1988 = vmatprep.subr.bf16.mxu0 0
        %1989 = vmatpush1.bf16.msra.mxu0 0
        %1990 = vmatprep.subr.bf16.mxu0 0
        %1991 = vmatpush1.bf16.msra.mxu0 0
        %1992 = vmatprep.subr.bf16.mxu0 0
        %1993 = vmatpush1.bf16.msra.mxu0 0
        %1994 = vmatprep.subr.bf16.mxu0 0
        %1995 = vmatpush1.bf16.msra.mxu0 0
        %1996 = vmatprep.mubr.bf16.mxu0 0
        %1997 = vmatmul.mubr.bf16.gmra.mrb[0].mxu0 %v1959
        %v1998 = vpop.f32.mrb[0].mxu0
        %v1999 = vadd.f32 0.0, %v1998
        %v2000 = vpop.f32.mrb[0].mxu0
        %v2001 = vpop.f32.mrb[0].mxu0
        %v2002 = vpop.f32.mrb[0].mxu0
        %2003 = vdwg.mxu0
        %v2004 = vpack.c.bf16 %v1999, %v1999
        %2005 = vrot.lane.b32.xlu0 %v1892, 120
        %v2006 = vpop.permute.xlu0 %2005
        %2007 = vrot.lane.b32.xlu0 %v1892, 88
        %v2008 = vpop.permute.xlu0 %2007
        %v2010 = vsel %vm1205, %v2006, 0
        %v2013 = vsel %vm1205, %v2008, 0
        %2015 = vmatprep.subr.bf16.mxu0 0
        %2016 = vmatpush1.bf16.xpose.msra.mxu0 %v2013
        %2017 = vmatprep.subr.bf16.mxu0 0
        %2018 = vmatpush1.bf16.xpose.msra.mxu0 0
        %2019 = vmatprep.subr.bf16.mxu0 0
        %2020 = vmatpush1.bf16.xpose.msra.mxu0 0
        %2021 = vmatprep.subr.bf16.mxu0 0
        %2022 = vmatpush1.bf16.xpose.msra.mxu0 0
        %2023 = vmatprep.subr.bf16.mxu0 0
        %2024 = vmatpush1.bf16.xpose.msra.mxu0 0
        %2025 = vmatprep.subr.bf16.mxu0 0
        %2026 = vmatpush1.bf16.xpose.msra.mxu0 0
        %2027 = vmatprep.subr.bf16.mxu0 0
        %2028 = vmatpush1.bf16.xpose.msra.mxu0 0
        %2029 = vmatprep.subr.bf16.mxu0 0
        %2030 = vmatpush1.bf16.xpose.msra.mxu0 0
        %2031 = vmatprep.subr.bf16.mxu0 0
        %2032 = vmatpush1.bf16.xpose.msra.mxu0 0
        %2033 = vmatprep.subr.bf16.mxu0 0
        %2034 = vmatpush1.bf16.xpose.msra.mxu0 0
        %2035 = vmatprep.subr.bf16.mxu0 0
        %2036 = vmatpush1.bf16.xpose.msra.mxu0 0
        %2037 = vmatprep.subr.bf16.mxu0 0
        %2038 = vmatpush1.bf16.xpose.msra.mxu0 0
        %2039 = vmatprep.subr.bf16.mxu0 0
        %2040 = vmatpush1.bf16.xpose.msra.mxu0 0
        %2041 = vmatprep.subr.bf16.mxu0 0
        %2042 = vmatpush1.bf16.xpose.msra.mxu0 0
        %2043 = vmatprep.subr.bf16.mxu0 0
        %2044 = vmatpush1.bf16.xpose.msra.mxu0 0
        %2045 = vmatprep.subr.bf16.mxu0 0
        %2046 = vmatpush1.bf16.xpose.msra.mxu0 0
        %2047 = vmatprep.mubr.bf16.mxu0 0
        %2048 = vmatmul.mubr.bf16.gmra.mrb[0].mxu0 %v2010
        %v2049 = vpop.f32.mrb[0].mxu0
        %v2050 = vadd.f32 0.0, %v2049
        %v2051 = vpop.f32.mrb[0].mxu0
        %v2052 = vpop.f32.mrb[0].mxu0
        %v2053 = vpop.f32.mrb[0].mxu0
        %2054 = vdwg.mxu0
        %v2055 = vmul.f32 %v2050, 0.35355338
        %v2056 = vadd.f32 %v2055, %v1128
        %v2057 = vsel %vm1205, %v2056, -inf
        %2058 = vmax.xlane.f32.xlu0 %v2057
        %v2059 = vpop.xlane.xlu0 %2058
        %v2060 = vsub.f32 %v2056, %v2059
        %v2061 = vmul.f32 %v2060, 1.442695
        %v2062 = vpow.pop %v2061
        %v2063 = vsel %vm1205, %v2062, 0.0
        %2064 = vadd.xlane.f32.xlu0 %v2063
        %v2065 = vpop.xlane.xlu0 %2064
        %v2066 = vrcp.pop %v2065
        %v2067 = vmul.f32 %v2062, %v2066
        %v2068 = vpack.c.bf16 %v2067, %v2067
        %2069 = vrot.lane.b32.xlu0 %v1892, 56
        %v2070 = vpop.permute.xlu0 %2069
        %v2072 = vsel %vm1205, %v2068, 0
        %v2075 = vsel %vm1271, %v2070, 0
        %2077 = vmatprep.subr.bf16.mxu0 0
        %2078 = vmatpush1.bf16.msra.mxu0 %v2075
        %2079 = vmatprep.subr.bf16.mxu0 0
        %2080 = vmatpush1.bf16.msra.mxu0 0
        %2081 = vmatprep.subr.bf16.mxu0 0
        %2082 = vmatpush1.bf16.msra.mxu0 0
        %2083 = vmatprep.subr.bf16.mxu0 0
        %2084 = vmatpush1.bf16.msra.mxu0 0
        %2085 = vmatprep.subr.bf16.mxu0 0
        %2086 = vmatpush1.bf16.msra.mxu0 0
        %2087 = vmatprep.subr.bf16.mxu0 0
        %2088 = vmatpush1.bf16.msra.mxu0 0
        %2089 = vmatprep.subr.bf16.mxu0 0
        %2090 = vmatpush1.bf16.msra.mxu0 0
        %2091 = vmatprep.subr.bf16.mxu0 0
        %2092 = vmatpush1.bf16.msra.mxu0 0
        %2093 = vmatprep.subr.bf16.mxu0 0
        %2094 = vmatpush1.bf16.msra.mxu0 0
        %2095 = vmatprep.subr.bf16.mxu0 0
        %2096 = vmatpush1.bf16.msra.mxu0 0
        %2097 = vmatprep.subr.bf16.mxu0 0
        %2098 = vmatpush1.bf16.msra.mxu0 0
        %2099 = vmatprep.subr.bf16.mxu0 0
        %2100 = vmatpush1.bf16.msra.mxu0 0
        %2101 = vmatprep.subr.bf16.mxu0 0
        %2102 = vmatpush1.bf16.msra.mxu0 0
        %2103 = vmatprep.subr.bf16.mxu0 0
        %2104 = vmatpush1.bf16.msra.mxu0 0
        %2105 = vmatprep.subr.bf16.mxu0 0
        %2106 = vmatpush1.bf16.msra.mxu0 0
        %2107 = vmatprep.subr.bf16.mxu0 0
        %2108 = vmatpush1.bf16.msra.mxu0 0
        %2109 = vmatprep.mubr.bf16.mxu0 0
        %2110 = vmatmul.mubr.bf16.gmra.mrb[0].mxu0 %v2072
        %v2111 = vpop.f32.mrb[0].mxu0
        %v2112 = vadd.f32 0.0, %v2111
        %v2113 = vpop.f32.mrb[0].mxu0
        %v2114 = vpop.f32.mrb[0].mxu0
        %v2115 = vpop.f32.mrb[0].mxu0
        %2116 = vdwg.mxu0
        %v2117 = vpack.c.bf16 %v2112, %v2112
        %v2119 = vsel %vm1205, %v2117, 0
        %2121 = vmatprep.subr.bf16.mxu0 0
        %2122 = vmatpush1.bf16.msra.mxu0 %v1433
        %2123 = vmatprep.subr.bf16.mxu0 0
        %2124 = vmatpush1.bf16.msra.mxu0 0
        %2125 = vmatprep.subr.bf16.mxu0 0
        %2126 = vmatpush1.bf16.msra.mxu0 0
        %2127 = vmatprep.subr.bf16.mxu0 0
        %2128 = vmatpush1.bf16.msra.mxu0 0
        %2129 = vmatprep.subr.bf16.mxu0 0
        %2130 = vmatpush1.bf16.msra.mxu0 0
        %2131 = vmatprep.subr.bf16.mxu0 0
        %2132 = vmatpush1.bf16.msra.mxu0 0
        %2133 = vmatprep.subr.bf16.mxu0 0
        %2134 = vmatpush1.bf16.msra.mxu0 0
        %2135 = vmatprep.subr.bf16.mxu0 0
        %2136 = vmatpush1.bf16.msra.mxu0 0
        %2137 = vmatprep.subr.bf16.mxu0 0
        %2138 = vmatpush1.bf16.msra.mxu0 0
        %2139 = vmatprep.subr.bf16.mxu0 0
        %2140 = vmatpush1.bf16.msra.mxu0 0
        %2141 = vmatprep.subr.bf16.mxu0 0
        %2142 = vmatpush1.bf16.msra.mxu0 0
        %2143 = vmatprep.subr.bf16.mxu0 0
        %2144 = vmatpush1.bf16.msra.mxu0 0
        %2145 = vmatprep.subr.bf16.mxu0 0
        %2146 = vmatpush1.bf16.msra.mxu0 0
        %2147 = vmatprep.subr.bf16.mxu0 0
        %2148 = vmatpush1.bf16.msra.mxu0 0
        %2149 = vmatprep.subr.bf16.mxu0 0
        %2150 = vmatpush1.bf16.msra.mxu0 0
        %2151 = vmatprep.subr.bf16.mxu0 0
        %2152 = vmatpush1.bf16.msra.mxu0 0
        %2153 = vmatprep.mubr.bf16.mxu0 0
        %2154 = vmatmul.mubr.bf16.gmra.mrb[0].mxu0 %v2119
        %v2155 = vpop.f32.mrb[0].mxu0
        %v2156 = vadd.f32 0.0, %v2155
        %v2157 = vpop.f32.mrb[0].mxu0
        %v2158 = vpop.f32.mrb[0].mxu0
        %v2159 = vpop.f32.mrb[0].mxu0
        %2160 = vdwg.mxu0
        %v2162 = vsel %vm1205, %v2004, 0
        %2164 = vmatprep.subr.bf16.mxu0 0
        %2165 = vmatpush1.bf16.msra.mxu0 %v1479
        %2166 = vmatprep.subr.bf16.mxu0 0
        %2167 = vmatpush1.bf16.msra.mxu0 0
        %2168 = vmatprep.subr.bf16.mxu0 0
        %2169 = vmatpush1.bf16.msra.mxu0 0
        %2170 = vmatprep.subr.bf16.mxu0 0
        %2171 = vmatpush1.bf16.msra.mxu0 0
        %2172 = vmatprep.subr.bf16.mxu0 0
        %2173 = vmatpush1.bf16.msra.mxu0 0
        %2174 = vmatprep.subr.bf16.mxu0 0
        %2175 = vmatpush1.bf16.msra.mxu0 0
        %2176 = vmatprep.subr.bf16.mxu0 0
        %2177 = vmatpush1.bf16.msra.mxu0 0
        %2178 = vmatprep.subr.bf16.mxu0 0
        %2179 = vmatpush1.bf16.msra.mxu0 0
        %2180 = vmatprep.subr.bf16.mxu0 0
        %2181 = vmatpush1.bf16.msra.mxu0 0
        %2182 = vmatprep.subr.bf16.mxu0 0
        %2183 = vmatpush1.bf16.msra.mxu0 0
        %2184 = vmatprep.subr.bf16.mxu0 0
        %2185 = vmatpush1.bf16.msra.mxu0 0
        %2186 = vmatprep.subr.bf16.mxu0 0
        %2187 = vmatpush1.bf16.msra.mxu0 0
        %2188 = vmatprep.subr.bf16.mxu0 0
        %2189 = vmatpush1.bf16.msra.mxu0 0
        %2190 = vmatprep.subr.bf16.mxu0 0
        %2191 = vmatpush1.bf16.msra.mxu0 0
        %2192 = vmatprep.subr.bf16.mxu0 0
        %2193 = vmatpush1.bf16.msra.mxu0 0
        %2194 = vmatprep.subr.bf16.mxu0 0
        %2195 = vmatpush1.bf16.msra.mxu0 0
        %2196 = vmatprep.mubr.bf16.mxu0 0
        %2197 = vmatmul.mubr.bf16.gmra.mrb[0].mxu0 %v2162
        %v2198 = vpop.f32.mrb[0].mxu0
        %v2199 = vadd.f32 %v2156, %v2198
        %v2200 = vpop.f32.mrb[0].mxu0
        %v2201 = vpop.f32.mrb[0].mxu0
        %v2202 = vpop.f32.mrb[0].mxu0
        %2203 = vdwg.mxu0
        %2204 = vrot.lane.b32.xlu0 %v1892, 112
        %v2205 = vpop.permute.xlu0 %2204
        %2206 = vrot.lane.b32.xlu0 %v1892, 80
        %v2207 = vpop.permute.xlu0 %2206
        %v2209 = vsel %vm1205, %v2205, 0
        %v2212 = vsel %vm1205, %v2207, 0
        %2214 = vmatprep.subr.bf16.mxu0 0
        %2215 = vmatpush1.bf16.xpose.msra.mxu0 %v2212
        %2216 = vmatprep.subr.bf16.mxu0 0
        %2217 = vmatpush1.bf16.xpose.msra.mxu0 0
        %2218 = vmatprep.subr.bf16.mxu0 0
        %2219 = vmatpush1.bf16.xpose.msra.mxu0 0
        %2220 = vmatprep.subr.bf16.mxu0 0
        %2221 = vmatpush1.bf16.xpose.msra.mxu0 0
        %2222 = vmatprep.subr.bf16.mxu0 0
        %2223 = vmatpush1.bf16.xpose.msra.mxu0 0
        %2224 = vmatprep.subr.bf16.mxu0 0
        %2225 = vmatpush1.bf16.xpose.msra.mxu0 0
        %2226 = vmatprep.subr.bf16.mxu0 0
        %2227 = vmatpush1.bf16.xpose.msra.mxu0 0
        %2228 = vmatprep.subr.bf16.mxu0 0
        %2229 = vmatpush1.bf16.xpose.msra.mxu0 0
        %2230 = vmatprep.subr.bf16.mxu0 0
        %2231 = vmatpush1.bf16.xpose.msra.mxu0 0
        %2232 = vmatprep.subr.bf16.mxu0 0
        %2233 = vmatpush1.bf16.xpose.msra.mxu0 0
        %2234 = vmatprep.subr.bf16.mxu0 0
        %2235 = vmatpush1.bf16.xpose.msra.mxu0 0
        %2236 = vmatprep.subr.bf16.mxu0 0
        %2237 = vmatpush1.bf16.xpose.msra.mxu0 0
        %2238 = vmatprep.subr.bf16.mxu0 0
        %2239 = vmatpush1.bf16.xpose.msra.mxu0 0
        %2240 = vmatprep.subr.bf16.mxu0 0
        %2241 = vmatpush1.bf16.xpose.msra.mxu0 0
        %2242 = vmatprep.subr.bf16.mxu0 0
        %2243 = vmatpush1.bf16.xpose.msra.mxu0 0
        %2244 = vmatprep.subr.bf16.mxu0 0
        %2245 = vmatpush1.bf16.xpose.msra.mxu0 0
        %2246 = vmatprep.mubr.bf16.mxu0 0
        %2247 = vmatmul.mubr.bf16.gmra.mrb[0].mxu0 %v2209
        %v2248 = vpop.f32.mrb[0].mxu0
        %v2249 = vadd.f32 0.0, %v2248
        %v2250 = vpop.f32.mrb[0].mxu0
        %v2251 = vpop.f32.mrb[0].mxu0
        %v2252 = vpop.f32.mrb[0].mxu0
        %2253 = vdwg.mxu0
        %v2254 = vmul.f32 %v2249, 0.35355338
        %v2255 = vadd.f32 %v2254, %v1128
        %v2256 = vsel %vm1205, %v2255, -inf
        %2257 = vmax.xlane.f32.xlu0 %v2256
        %v2258 = vpop.xlane.xlu0 %2257
        %v2259 = vsub.f32 %v2255, %v2258
        %v2260 = vmul.f32 %v2259, 1.442695
        %v2261 = vpow.pop %v2260
        %v2262 = vsel %vm1205, %v2261, 0.0
        %2263 = vadd.xlane.f32.xlu0 %v2262
        %v2264 = vpop.xlane.xlu0 %2263
        %v2265 = vrcp.pop %v2264
        %v2266 = vmul.f32 %v2261, %v2265
        %v2267 = vpack.c.bf16 %v2266, %v2266
        %2268 = vrot.lane.b32.xlu0 %v1892, 48
        %v2269 = vpop.permute.xlu0 %2268
        %v2271 = vsel %vm1205, %v2267, 0
        %v2274 = vsel %vm1271, %v2269, 0
        %2276 = vmatprep.subr.bf16.mxu0 0
        %2277 = vmatpush1.bf16.msra.mxu0 %v2274
        %2278 = vmatprep.subr.bf16.mxu0 0
        %2279 = vmatpush1.bf16.msra.mxu0 0
        %2280 = vmatprep.subr.bf16.mxu0 0
        %2281 = vmatpush1.bf16.msra.mxu0 0
        %2282 = vmatprep.subr.bf16.mxu0 0
        %2283 = vmatpush1.bf16.msra.mxu0 0
        %2284 = vmatprep.subr.bf16.mxu0 0
        %2285 = vmatpush1.bf16.msra.mxu0 0
        %2286 = vmatprep.subr.bf16.mxu0 0
        %2287 = vmatpush1.bf16.msra.mxu0 0
        %2288 = vmatprep.subr.bf16.mxu0 0
        %2289 = vmatpush1.bf16.msra.mxu0 0
        %2290 = vmatprep.subr.bf16.mxu0 0
        %2291 = vmatpush1.bf16.msra.mxu0 0
        %2292 = vmatprep.subr.bf16.mxu0 0
        %2293 = vmatpush1.bf16.msra.mxu0 0
        %2294 = vmatprep.subr.bf16.mxu0 0
        %2295 = vmatpush1.bf16.msra.mxu0 0
        %2296 = vmatprep.subr.bf16.mxu0 0
        %2297 = vmatpush1.bf16.msra.mxu0 0
        %2298 = vmatprep.subr.bf16.mxu0 0
        %2299 = vmatpush1.bf16.msra.mxu0 0
        %2300 = vmatprep.subr.bf16.mxu0 0
        %2301 = vmatpush1.bf16.msra.mxu0 0
        %2302 = vmatprep.subr.bf16.mxu0 0
        %2303 = vmatpush1.bf16.msra.mxu0 0
        %2304 = vmatprep.subr.bf16.mxu0 0
        %2305 = vmatpush1.bf16.msra.mxu0 0
        %2306 = vmatprep.subr.bf16.mxu0 0
        %2307 = vmatpush1.bf16.msra.mxu0 0
        %2308 = vmatprep.mubr.bf16.mxu0 0
        %2309 = vmatmul.mubr.bf16.gmra.mrb[0].mxu0 %v2271
        %v2310 = vpop.f32.mrb[0].mxu0
        %v2311 = vadd.f32 0.0, %v2310
        %v2312 = vpop.f32.mrb[0].mxu0
        %v2313 = vpop.f32.mrb[0].mxu0
        %v2314 = vpop.f32.mrb[0].mxu0
        %2315 = vdwg.mxu0
        %v2316 = vpack.c.bf16 %v2311, %v2311
        %v2318 = vsel %vm1205, %v2316, 0
        %2320 = vmatprep.subr.bf16.mxu0 0
        %2321 = vmatpush1.bf16.msra.mxu0 %v1638
        %2322 = vmatprep.subr.bf16.mxu0 0
        %2323 = vmatpush1.bf16.msra.mxu0 0
        %2324 = vmatprep.subr.bf16.mxu0 0
        %2325 = vmatpush1.bf16.msra.mxu0 0
        %2326 = vmatprep.subr.bf16.mxu0 0
        %2327 = vmatpush1.bf16.msra.mxu0 0
        %2328 = vmatprep.subr.bf16.mxu0 0
        %2329 = vmatpush1.bf16.msra.mxu0 0
        %2330 = vmatprep.subr.bf16.mxu0 0
        %2331 = vmatpush1.bf16.msra.mxu0 0
        %2332 = vmatprep.subr.bf16.mxu0 0
        %2333 = vmatpush1.bf16.msra.mxu0 0
        %2334 = vmatprep.subr.bf16.mxu0 0
        %2335 = vmatpush1.bf16.msra.mxu0 0
        %2336 = vmatprep.subr.bf16.mxu0 0
        %2337 = vmatpush1.bf16.msra.mxu0 0
        %2338 = vmatprep.subr.bf16.mxu0 0
        %2339 = vmatpush1.bf16.msra.mxu0 0
        %2340 = vmatprep.subr.bf16.mxu0 0
        %2341 = vmatpush1.bf16.msra.mxu0 0
        %2342 = vmatprep.subr.bf16.mxu0 0
        %2343 = vmatpush1.bf16.msra.mxu0 0
        %2344 = vmatprep.subr.bf16.mxu0 0
        %2345 = vmatpush1.bf16.msra.mxu0 0
        %2346 = vmatprep.subr.bf16.mxu0 0
        %2347 = vmatpush1.bf16.msra.mxu0 0
        %2348 = vmatprep.subr.bf16.mxu0 0
        %2349 = vmatpush1.bf16.msra.mxu0 0
        %2350 = vmatprep.subr.bf16.mxu0 0
        %2351 = vmatpush1.bf16.msra.mxu0 0
        %2352 = vmatprep.mubr.bf16.mxu0 0
        %2353 = vmatmul.mubr.bf16.gmra.mrb[0].mxu0 %v2318
        %v2354 = vpop.f32.mrb[0].mxu0
        %v2355 = vadd.f32 0.0, %v2354
        %v2356 = vpop.f32.mrb[0].mxu0
        %v2357 = vpop.f32.mrb[0].mxu0
        %v2358 = vpop.f32.mrb[0].mxu0
        %2359 = vdwg.mxu0
        %v2360 = vadd.f32 %v2199, %v2355
        %2361 = vrot.lane.b32.xlu0 %v1892, 104
        %v2362 = vpop.permute.xlu0 %2361
        %2363 = vrot.lane.b32.xlu0 %v1892, 72
        %v2364 = vpop.permute.xlu0 %2363
        %v2366 = vsel %vm1205, %v2362, 0
        %v2369 = vsel %vm1205, %v2364, 0
        %2371 = vmatprep.subr.bf16.mxu0 0
        %2372 = vmatpush1.bf16.xpose.msra.mxu0 %v2369
        %2373 = vmatprep.subr.bf16.mxu0 0
        %2374 = vmatpush1.bf16.xpose.msra.mxu0 0
        %2375 = vmatprep.subr.bf16.mxu0 0
        %2376 = vmatpush1.bf16.xpose.msra.mxu0 0
        %2377 = vmatprep.subr.bf16.mxu0 0
        %2378 = vmatpush1.bf16.xpose.msra.mxu0 0
        %2379 = vmatprep.subr.bf16.mxu0 0
        %2380 = vmatpush1.bf16.xpose.msra.mxu0 0
        %2381 = vmatprep.subr.bf16.mxu0 0
        %2382 = vmatpush1.bf16.xpose.msra.mxu0 0
        %2383 = vmatprep.subr.bf16.mxu0 0
        %2384 = vmatpush1.bf16.xpose.msra.mxu0 0
        %2385 = vmatprep.subr.bf16.mxu0 0
        %2386 = vmatpush1.bf16.xpose.msra.mxu0 0
        %2387 = vmatprep.subr.bf16.mxu0 0
        %2388 = vmatpush1.bf16.xpose.msra.mxu0 0
        %2389 = vmatprep.subr.bf16.mxu0 0
        %2390 = vmatpush1.bf16.xpose.msra.mxu0 0
        %2391 = vmatprep.subr.bf16.mxu0 0
        %2392 = vmatpush1.bf16.xpose.msra.mxu0 0
        %2393 = vmatprep.subr.bf16.mxu0 0
        %2394 = vmatpush1.bf16.xpose.msra.mxu0 0
        %2395 = vmatprep.subr.bf16.mxu0 0
        %2396 = vmatpush1.bf16.xpose.msra.mxu0 0
        %2397 = vmatprep.subr.bf16.mxu0 0
        %2398 = vmatpush1.bf16.xpose.msra.mxu0 0
        %2399 = vmatprep.subr.bf16.mxu0 0
        %2400 = vmatpush1.bf16.xpose.msra.mxu0 0
        %2401 = vmatprep.subr.bf16.mxu0 0
        %2402 = vmatpush1.bf16.xpose.msra.mxu0 0
        %2403 = vmatprep.mubr.bf16.mxu0 0
        %2404 = vmatmul.mubr.bf16.gmra.mrb[0].mxu0 %v2366
        %v2405 = vpop.f32.mrb[0].mxu0
        %v2406 = vadd.f32 0.0, %v2405
        %v2407 = vpop.f32.mrb[0].mxu0
        %v2408 = vpop.f32.mrb[0].mxu0
        %v2409 = vpop.f32.mrb[0].mxu0
        %2410 = vdwg.mxu0
        %v2411 = vmul.f32 %v2406, 0.35355338
        %v2412 = vadd.f32 %v2411, %v1128
        %v2413 = vsel %vm1205, %v2412, -inf
        %2414 = vmax.xlane.f32.xlu0 %v2413
        %v2415 = vpop.xlane.xlu0 %2414
        %v2416 = vsub.f32 %v2412, %v2415
        %v2417 = vmul.f32 %v2416, 1.442695
        %v2418 = vpow.pop %v2417
        %v2419 = vsel %vm1205, %v2418, 0.0
        %2420 = vadd.xlane.f32.xlu0 %v2419
        %v2421 = vpop.xlane.xlu0 %2420
        %v2422 = vrcp.pop %v2421
        %v2423 = vmul.f32 %v2418, %v2422
        %v2424 = vpack.c.bf16 %v2423, %v2423
        %2425 = vrot.lane.b32.xlu0 %v1892, 40
        %v2426 = vpop.permute.xlu0 %2425
        %v2428 = vsel %vm1205, %v2424, 0
        %v2431 = vsel %vm1271, %v2426, 0
        %2433 = vmatprep.subr.bf16.mxu0 0
        %2434 = vmatpush1.bf16.msra.mxu0 %v2431
        %2435 = vmatprep.subr.bf16.mxu0 0
        %2436 = vmatpush1.bf16.msra.mxu0 0
        %2437 = vmatprep.subr.bf16.mxu0 0
        %2438 = vmatpush1.bf16.msra.mxu0 0
        %2439 = vmatprep.subr.bf16.mxu0 0
        %2440 = vmatpush1.bf16.msra.mxu0 0
        %2441 = vmatprep.subr.bf16.mxu0 0
        %2442 = vmatpush1.bf16.msra.mxu0 0
        %2443 = vmatprep.subr.bf16.mxu0 0
        %2444 = vmatpush1.bf16.msra.mxu0 0
        %2445 = vmatprep.subr.bf16.mxu0 0
        %2446 = vmatpush1.bf16.msra.mxu0 0
        %2447 = vmatprep.subr.bf16.mxu0 0
        %2448 = vmatpush1.bf16.msra.mxu0 0
        %2449 = vmatprep.subr.bf16.mxu0 0
        %2450 = vmatpush1.bf16.msra.mxu0 0
        %2451 = vmatprep.subr.bf16.mxu0 0
        %2452 = vmatpush1.bf16.msra.mxu0 0
        %2453 = vmatprep.subr.bf16.mxu0 0
        %2454 = vmatpush1.bf16.msra.mxu0 0
        %2455 = vmatprep.subr.bf16.mxu0 0
        %2456 = vmatpush1.bf16.msra.mxu0 0
        %2457 = vmatprep.subr.bf16.mxu0 0
        %2458 = vmatpush1.bf16.msra.mxu0 0
        %2459 = vmatprep.subr.bf16.mxu0 0
        %2460 = vmatpush1.bf16.msra.mxu0 0
        %2461 = vmatprep.subr.bf16.mxu0 0
        %2462 = vmatpush1.bf16.msra.mxu0 0
        %2463 = vmatprep.subr.bf16.mxu0 0
        %2464 = vmatpush1.bf16.msra.mxu0 0
        %2465 = vmatprep.mubr.bf16.mxu0 0
        %2466 = vmatmul.mubr.bf16.gmra.mrb[0].mxu0 %v2428
        %v2467 = vpop.f32.mrb[0].mxu0
        %v2468 = vadd.f32 0.0, %v2467
        %v2469 = vpop.f32.mrb[0].mxu0
        %v2470 = vpop.f32.mrb[0].mxu0
        %v2471 = vpop.f32.mrb[0].mxu0
        %2472 = vdwg.mxu0
        %v2473 = vpack.c.bf16 %v2468, %v2468
        %v2475 = vsel %vm1205, %v2473, 0
        %2477 = vmatprep.subr.bf16.mxu0 0
        %2478 = vmatpush1.bf16.msra.mxu0 %v1798
        %2479 = vmatprep.subr.bf16.mxu0 0
        %2480 = vmatpush1.bf16.msra.mxu0 0
        %2481 = vmatprep.subr.bf16.mxu0 0
        %2482 = vmatpush1.bf16.msra.mxu0 0
        %2483 = vmatprep.subr.bf16.mxu0 0
        %2484 = vmatpush1.bf16.msra.mxu0 0
        %2485 = vmatprep.subr.bf16.mxu0 0
        %2486 = vmatpush1.bf16.msra.mxu0 0
        %2487 = vmatprep.subr.bf16.mxu0 0
        %2488 = vmatpush1.bf16.msra.mxu0 0
        %2489 = vmatprep.subr.bf16.mxu0 0
        %2490 = vmatpush1.bf16.msra.mxu0 0
        %2491 = vmatprep.subr.bf16.mxu0 0
        %2492 = vmatpush1.bf16.msra.mxu0 0
        %2493 = vmatprep.subr.bf16.mxu0 0
        %2494 = vmatpush1.bf16.msra.mxu0 0
        %2495 = vmatprep.subr.bf16.mxu0 0
        %2496 = vmatpush1.bf16.msra.mxu0 0
        %2497 = vmatprep.subr.bf16.mxu0 0
        %2498 = vmatpush1.bf16.msra.mxu0 0
        %2499 = vmatprep.subr.bf16.mxu0 0
        %2500 = vmatpush1.bf16.msra.mxu0 0
        %2501 = vmatprep.subr.bf16.mxu0 0
        %2502 = vmatpush1.bf16.msra.mxu0 0
        %2503 = vmatprep.subr.bf16.mxu0 0
        %2504 = vmatpush1.bf16.msra.mxu0 0
        %2505 = vmatprep.subr.bf16.mxu0 0
        %2506 = vmatpush1.bf16.msra.mxu0 0
        %2507 = vmatprep.subr.bf16.mxu0 0
        %2508 = vmatpush1.bf16.msra.mxu0 0
        %2509 = vmatprep.mubr.bf16.mxu0 0
        %2510 = vmatmul.mubr.bf16.gmra.mrb[0].mxu0 %v2475
        %v2511 = vpop.f32.mrb[0].mxu0
        %v2512 = vadd.f32 0.0, %v2511
        %v2513 = vpop.f32.mrb[0].mxu0
        %v2514 = vpop.f32.mrb[0].mxu0
        %v2515 = vpop.f32.mrb[0].mxu0
        %2516 = vdwg.mxu0
        %v2517 = vadd.f32 %v2360, %v2512
        %v2518 = vadd.f32 %v2517, %v1845
        %v2519 = vadd.f32 %v2518, %v1127
        %v2520 = vld [vmem:[#allocation16] sm:$0x1]
        %v2521 = vld [vmem:[#allocation17] sm:$0x1]
        %v2522 = vsel %vm1152, %v2519, 0.0
        %2523 = vadd.xlane.f32.xlu0 %v2522
        %v2524 = vpop.xlane.xlu0 %2523
        %v2525 = vrcp.pop 32.0
        %v2526 = vmul.f32 %v2524, %v2525
        %v2527 = vsub.f32 %v2519, %v2526
        %v2528 = vmul.f32 %v2527, %v2527
        %v2529 = vsel %vm1152, %v2528, 0.0
        %2530 = vadd.xlane.f32.xlu0 %v2529
        %v2531 = vpop.xlane.xlu0 %2530
        %v2532 = vmul.f32 %v2531, %v2525
        %v2533 = vadd.f32 %v2532, 1e-05
        %v2534 = vrsqrt.pop %v2533
        %v2535 = vmul.f32 %v2527, %v2534
        %v2537 = vlaneseq
        %v2538 = vshrl.u32 %v2537, 7
        %v2539 = vsub.s32 0, %v2538
        %v2540 = vrot.slane %v2520, %v2539
        %v2542 = vmul.f32 %v2540, %v2535
        %v2544 = vlaneseq
        %v2545 = vshrl.u32 %v2544, 7
        %v2546 = vsub.s32 0, %v2545
        %v2547 = vrot.slane %v2521, %v2546
        %v2549 = vadd.f32 %v2542, %v2547
        %v2550 = vld [vmem:[%s938] sm:$0xf]
        %v2551 = vld [vmem:[#allocation19] sm:$0xf]
        %v2552 = vld [vmem:[#allocation19 + $0x4] sm:$0xf]
        %v2553 = vld [vmem:[#allocation19 + $0x8] sm:$0xf]
        %v2554 = vld [vmem:[#allocation19 + $0xc] sm:$0xf]
        %v2555 = vld [vmem:[#allocation20] sm:$0x1]
        %v2557 = vlaneseq
        %v2558 = vshrl.u32 %v2557, 7
        %v2559 = vsub.s32 0, %v2558
        %v2560 = vrot.slane %v2555, %v2559
        %v2566 = vunpack.c.l.b16 %v2551
        %v2567 = vunpack.c.l.b16 %v2552
        %v2568 = vunpack.c.l.b16 %v2553
        %v2569 = vunpack.c.l.b16 %v2554
        %v2570 = vpack.c.b16 %v2567, %v2566
        %v2571 = vpack.c.b16 %v2569, %v2568
        %v2575 = vsel %vm1152, %v2550, 0
        %2577 = vmatprep.subr.bf16.mxu0 0
        %2578 = vmatpush1.bf16.msra.mxu0 %v2570
        %2579 = vmatprep.subr.bf16.mxu0 0
        %2580 = vmatpush1.bf16.msra.mxu0 %v2571
        %2581 = vmatprep.subr.bf16.mxu0 0
        %2582 = vmatpush1.bf16.msra.mxu0 0
        %2583 = vmatprep.subr.bf16.mxu0 0
        %2584 = vmatpush1.bf16.msra.mxu0 0
        %2585 = vmatprep.subr.bf16.mxu0 0
        %2586 = vmatpush1.bf16.msra.mxu0 0
        %2587 = vmatprep.subr.bf16.mxu0 0
        %2588 = vmatpush1.bf16.msra.mxu0 0
        %2589 = vmatprep.subr.bf16.mxu0 0
        %2590 = vmatpush1.bf16.msra.mxu0 0
        %2591 = vmatprep.subr.bf16.mxu0 0
        %2592 = vmatpush1.bf16.msra.mxu0 0
        %2593 = vmatprep.subr.bf16.mxu0 0
        %2594 = vmatpush1.bf16.msra.mxu0 0
        %2595 = vmatprep.subr.bf16.mxu0 0
        %2596 = vmatpush1.bf16.msra.mxu0 0
        %2597 = vmatprep.subr.bf16.mxu0 0
        %2598 = vmatpush1.bf16.msra.mxu0 0
        %2599 = vmatprep.subr.bf16.mxu0 0
        %2600 = vmatpush1.bf16.msra.mxu0 0
        %2601 = vmatprep.subr.bf16.mxu0 0
        %2602 = vmatpush1.bf16.msra.mxu0 0
        %2603 = vmatprep.subr.bf16.mxu0 0
        %2604 = vmatpush1.bf16.msra.mxu0 0
        %2605 = vmatprep.subr.bf16.mxu0 0
        %2606 = vmatpush1.bf16.msra.mxu0 0
        %2607 = vmatprep.subr.bf16.mxu0 0
        %2608 = vmatpush1.bf16.msra.mxu0 0
        %2609 = vmatprep.mubr.bf16.mxu0 0
        %2610 = vmatmul.mubr.bf16.gmra.mrb[0].mxu0 %v2575
        %v2611 = vpop.f32.mrb[0].mxu0
        %v2612 = vadd.f32 %v2560, %v2611
        %v2613 = vpop.f32.mrb[0].mxu0
        %v2614 = vpop.f32.mrb[0].mxu0
        %v2615 = vpop.f32.mrb[0].mxu0
        %2616 = vdwg.mxu0
        %v2617 = vpack.c.bf16 %v2549, %v2549
        %v2618 = vld [vmem:[#allocation22] sm:$0xf]
        %v2619 = vld [vmem:[#allocation22 + $0x4] sm:$0xf]
        %v2620 = vld [vmem:[#allocation22 + $0x8] sm:$0xf]
        %v2621 = vld [vmem:[#allocation22 + $0xc] sm:$0xf]
        %v2622 = vld [vmem:[#allocation23] sm:$0x1]
        %v2624 = vlaneseq
        %v2625 = vshrl.u32 %v2624, 7
        %v2626 = vsub.s32 0, %v2625
        %v2627 = vrot.slane %v2622, %v2626
        %v2633 = vunpack.c.l.b16 %v2618
        %v2634 = vunpack.c.l.b16 %v2619
        %v2635 = vunpack.c.l.b16 %v2620
        %v2636 = vunpack.c.l.b16 %v2621
        %v2637 = vpack.c.b16 %v2634, %v2633
        %v2638 = vpack.c.b16 %v2636, %v2635
        %v2642 = vsel %vm1152, %v2617, 0
        %2644 = vmatprep.subr.bf16.mxu0 0
        %2645 = vmatpush1.bf16.msra.mxu0 %v2637
        %2646 = vmatprep.subr.bf16.mxu0 0
        %2647 = vmatpush1.bf16.msra.mxu0 %v2638
        %2648 = vmatprep.subr.bf16.mxu0 0
        %2649 = vmatpush1.bf16.msra.mxu0 0
        %2650 = vmatprep.subr.bf16.mxu0 0
        %2651 = vmatpush1.bf16.msra.mxu0 0
        %2652 = vmatprep.subr.bf16.mxu0 0
        %2653 = vmatpush1.bf16.msra.mxu0 0
        %2654 = vmatprep.subr.bf16.mxu0 0
        %2655 = vmatpush1.bf16.msra.mxu0 0
        %2656 = vmatprep.subr.bf16.mxu0 0
        %2657 = vmatpush1.bf16.msra.mxu0 0
        %2658 = vmatprep.subr.bf16.mxu0 0
        %2659 = vmatpush1.bf16.msra.mxu0 0
        %2660 = vmatprep.subr.bf16.mxu0 0
        %2661 = vmatpush1.bf16.msra.mxu0 0
        %2662 = vmatprep.subr.bf16.mxu0 0
        %2663 = vmatpush1.bf16.msra.mxu0 0
        %2664 = vmatprep.subr.bf16.mxu0 0
        %2665 = vmatpush1.bf16.msra.mxu0 0
        %2666 = vmatprep.subr.bf16.mxu0 0
        %2667 = vmatpush1.bf16.msra.mxu0 0
        %2668 = vmatprep.subr.bf16.mxu0 0
        %2669 = vmatpush1.bf16.msra.mxu0 0
        %2670 = vmatprep.subr.bf16.mxu0 0
        %2671 = vmatpush1.bf16.msra.mxu0 0
        %2672 = vmatprep.subr.bf16.mxu0 0
        %2673 = vmatpush1.bf16.msra.mxu0 0
        %2674 = vmatprep.subr.bf16.mxu0 0
        %2675 = vmatpush1.bf16.msra.mxu0 0
        %2676 = vmatprep.mubr.bf16.mxu0 0
        %2677 = vmatmul.mubr.bf16.gmra.mrb[0].mxu0 %v2642
        %v2678 = vpop.f32.mrb[0].mxu0
        %v2679 = vadd.f32 %v2627, %v2678
        %v2680 = vpop.f32.mrb[0].mxu0
        %v2681 = vpop.f32.mrb[0].mxu0
        %v2682 = vpop.f32.mrb[0].mxu0
        %2683 = vdwg.mxu0
        %v2684 = vld [vmem:[%s965] sm:$0xff]
        %v2685 = vld [vmem:[#allocation25] sm:$0xf]
        %v2686 = vld [vmem:[#allocation25 + $0x4] sm:$0xf]
        %v2687 = vld [vmem:[#allocation25 + $0x8] sm:$0xf]
        %v2688 = vld [vmem:[#allocation25 + $0xc] sm:$0xf]
        %v2689 = vld [vmem:[#allocation26] sm:$0x1]
        %v2690 = vpack.c.bf16 %v2679, %v2679
        %v2691 = vpack.c.bf16 %v2612, %v2612
        %v2693 = vsel %vm1205, %v2690, 0
        %v2696 = vsel %vm1205, %v2691, 0
        %2698 = vmatprep.subr.bf16.mxu0 0
        %2699 = vmatpush1.bf16.xpose.msra.mxu0 %v2696
        %2700 = vmatprep.subr.bf16.mxu0 0
        %2701 = vmatpush1.bf16.xpose.msra.mxu0 0
        %2702 = vmatprep.subr.bf16.mxu0 0
        %2703 = vmatpush1.bf16.xpose.msra.mxu0 0
        %2704 = vmatprep.subr.bf16.mxu0 0
        %2705 = vmatpush1.bf16.xpose.msra.mxu0 0
        %2706 = vmatprep.subr.bf16.mxu0 0
        %2707 = vmatpush1.bf16.xpose.msra.mxu0 0
        %2708 = vmatprep.subr.bf16.mxu0 0
        %2709 = vmatpush1.bf16.xpose.msra.mxu0 0
        %2710 = vmatprep.subr.bf16.mxu0 0
        %2711 = vmatpush1.bf16.xpose.msra.mxu0 0
        %2712 = vmatprep.subr.bf16.mxu0 0
        %2713 = vmatpush1.bf16.xpose.msra.mxu0 0
        %2714 = vmatprep.subr.bf16.mxu0 0
        %2715 = vmatpush1.bf16.xpose.msra.mxu0 0
        %2716 = vmatprep.subr.bf16.mxu0 0
        %2717 = vmatpush1.bf16.xpose.msra.mxu0 0
        %2718 = vmatprep.subr.bf16.mxu0 0
        %2719 = vmatpush1.bf16.xpose.msra.mxu0 0
        %2720 = vmatprep.subr.bf16.mxu0 0
        %2721 = vmatpush1.bf16.xpose.msra.mxu0 0
        %2722 = vmatprep.subr.bf16.mxu0 0
        %2723 = vmatpush1.bf16.xpose.msra.mxu0 0
        %2724 = vmatprep.subr.bf16.mxu0 0
        %2725 = vmatpush1.bf16.xpose.msra.mxu0 0
        %2726 = vmatprep.subr.bf16.mxu0 0
        %2727 = vmatpush1.bf16.xpose.msra.mxu0 0
        %2728 = vmatprep.subr.bf16.mxu0 0
        %2729 = vmatpush1.bf16.xpose.msra.mxu0 0
        %2730 = vmatprep.mubr.bf16.mxu0 0
        %2731 = vmatmul.mubr.bf16.gmra.mrb[0].mxu0 %v2693
        %v2732 = vpop.f32.mrb[0].mxu0
        %v2733 = vadd.f32 0.0, %v2732
        %v2734 = vpop.f32.mrb[0].mxu0
        %v2735 = vpop.f32.mrb[0].mxu0
        %v2736 = vpop.f32.mrb[0].mxu0
        %2737 = vdwg.mxu0
        %v2738 = vmul.f32 %v2733, 0.35355338
        %v2739 = vadd.f32 %v2738, %v2684
        %v2740 = vsel %vm1205, %v2739, -inf
        %2741 = vmax.xlane.f32.xlu0 %v2740
        %v2742 = vpop.xlane.xlu0 %2741
        %v2743 = vsub.f32 %v2739, %v2742
        %v2744 = vmul.f32 %v2743, 1.442695
        %v2745 = vpow.pop %v2744
        %v2746 = vsel %vm1205, %v2745, 0.0
        %2747 = vadd.xlane.f32.xlu0 %v2746
        %v2748 = vpop.xlane.xlu0 %2747
        %v2749 = vrcp.pop %v2748
        %v2750 = vmul.f32 %v2745, %v2749
        %v2751 = vpack.c.bf16 %v2750, %v2750
        %2753 = vrot.lane.b32.xlu0 %v2691, 96
        %v2754 = vpop.permute.xlu0 %2753
        %v2756 = vsel %vm1205, %v2751, 0
        %v2759 = vsel %vm1271, %v2754, 0
        %2761 = vmatprep.subr.bf16.mxu0 0
        %2762 = vmatpush1.bf16.msra.mxu0 %v2759
        %2763 = vmatprep.subr.bf16.mxu0 0
        %2764 = vmatpush1.bf16.msra.mxu0 0
        %2765 = vmatprep.subr.bf16.mxu0 0
        %2766 = vmatpush1.bf16.msra.mxu0 0
        %2767 = vmatprep.subr.bf16.mxu0 0
        %2768 = vmatpush1.bf16.msra.mxu0 0
        %2769 = vmatprep.subr.bf16.mxu0 0
        %2770 = vmatpush1.bf16.msra.mxu0 0
        %2771 = vmatprep.subr.bf16.mxu0 0
        %2772 = vmatpush1.bf16.msra.mxu0 0
        %2773 = vmatprep.subr.bf16.mxu0 0
        %2774 = vmatpush1.bf16.msra.mxu0 0
        %2775 = vmatprep.subr.bf16.mxu0 0
        %2776 = vmatpush1.bf16.msra.mxu0 0
        %2777 = vmatprep.subr.bf16.mxu0 0
        %2778 = vmatpush1.bf16.msra.mxu0 0
        %2779 = vmatprep.subr.bf16.mxu0 0
        %2780 = vmatpush1.bf16.msra.mxu0 0
        %2781 = vmatprep.subr.bf16.mxu0 0
        %2782 = vmatpush1.bf16.msra.mxu0 0
        %2783 = vmatprep.subr.bf16.mxu0 0
        %2784 = vmatpush1.bf16.msra.mxu0 0
        %2785 = vmatprep.subr.bf16.mxu0 0
        %2786 = vmatpush1.bf16.msra.mxu0 0
        %2787 = vmatprep.subr.bf16.mxu0 0
        %2788 = vmatpush1.bf16.msra.mxu0 0
        %2789 = vmatprep.subr.bf16.mxu0 0
        %2790 = vmatpush1.bf16.msra.mxu0 0
        %2791 = vmatprep.subr.bf16.mxu0 0
        %2792 = vmatpush1.bf16.msra.mxu0 0
        %2793 = vmatprep.mubr.bf16.mxu0 0
        %2794 = vmatmul.mubr.bf16.gmra.mrb[0].mxu0 %v2756
        %v2795 = vpop.f32.mrb[0].mxu0
        %v2796 = vadd.f32 0.0, %v2795
        %v2797 = vpop.f32.mrb[0].mxu0
        %v2798 = vpop.f32.mrb[0].mxu0
        %v2799 = vpop.f32.mrb[0].mxu0
        %2800 = vdwg.mxu0
        %v2801 = vpack.c.bf16 %v2796, %v2796
        %2803 = vrot.lane.b32.xlu0 %v2690, 120
        %v2804 = vpop.permute.xlu0 %2803
        %2805 = vrot.lane.b32.xlu0 %v2691, 120
        %v2806 = vpop.permute.xlu0 %2805
        %v2808 = vsel %vm1205, %v2804, 0
        %v2811 = vsel %vm1205, %v2806, 0
        %2813 = vmatprep.subr.bf16.mxu0 0
        %2814 = vmatpush1.bf16.xpose.msra.mxu0 %v2811
        %2815 = vmatprep.subr.bf16.mxu0 0
        %2816 = vmatpush1.bf16.xpose.msra.mxu0 0
        %2817 = vmatprep.subr.bf16.mxu0 0
        %2818 = vmatpush1.bf16.xpose.msra.mxu0 0
        %2819 = vmatprep.subr.bf16.mxu0 0
        %2820 = vmatpush1.bf16.xpose.msra.mxu0 0
        %2821 = vmatprep.subr.bf16.mxu0 0
        %2822 = vmatpush1.bf16.xpose.msra.mxu0 0
        %2823 = vmatprep.subr.bf16.mxu0 0
        %2824 = vmatpush1.bf16.xpose.msra.mxu0 0
        %2825 = vmatprep.subr.bf16.mxu0 0
        %2826 = vmatpush1.bf16.xpose.msra.mxu0 0
        %2827 = vmatprep.subr.bf16.mxu0 0
        %2828 = vmatpush1.bf16.xpose.msra.mxu0 0
        %2829 = vmatprep.subr.bf16.mxu0 0
        %2830 = vmatpush1.bf16.xpose.msra.mxu0 0
        %2831 = vmatprep.subr.bf16.mxu0 0
        %2832 = vmatpush1.bf16.xpose.msra.mxu0 0
        %2833 = vmatprep.subr.bf16.mxu0 0
        %2834 = vmatpush1.bf16.xpose.msra.mxu0 0
        %2835 = vmatprep.subr.bf16.mxu0 0
        %2836 = vmatpush1.bf16.xpose.msra.mxu0 0
        %2837 = vmatprep.subr.bf16.mxu0 0
        %2838 = vmatpush1.bf16.xpose.msra.mxu0 0
        %2839 = vmatprep.subr.bf16.mxu0 0
        %2840 = vmatpush1.bf16.xpose.msra.mxu0 0
        %2841 = vmatprep.subr.bf16.mxu0 0
        %2842 = vmatpush1.bf16.xpose.msra.mxu0 0
        %2843 = vmatprep.subr.bf16.mxu0 0
        %2844 = vmatpush1.bf16.xpose.msra.mxu0 0
        %2845 = vmatprep.mubr.bf16.mxu0 0
        %2846 = vmatmul.mubr.bf16.gmra.mrb[0].mxu0 %v2808
        %v2847 = vpop.f32.mrb[0].mxu0
        %v2848 = vadd.f32 0.0, %v2847
        %v2849 = vpop.f32.mrb[0].mxu0
        %v2850 = vpop.f32.mrb[0].mxu0
        %v2851 = vpop.f32.mrb[0].mxu0
        %2852 = vdwg.mxu0
        %v2853 = vmul.f32 %v2848, 0.35355338
        %v2854 = vadd.f32 %v2853, %v2684
        %v2855 = vsel %vm1205, %v2854, -inf
        %2856 = vmax.xlane.f32.xlu0 %v2855
        %v2857 = vpop.xlane.xlu0 %2856
        %v2858 = vsub.f32 %v2854, %v2857
        %v2859 = vmul.f32 %v2858, 1.442695
        %v2860 = vpow.pop %v2859
        %v2861 = vsel %vm1205, %v2860, 0.0
        %2862 = vadd.xlane.f32.xlu0 %v2861
        %v2863 = vpop.xlane.xlu0 %2862
        %v2864 = vrcp.pop %v2863
        %v2865 = vmul.f32 %v2860, %v2864
        %v2866 = vpack.c.bf16 %v2865, %v2865
        %2867 = vrot.lane.b32.xlu0 %v2691, 88
        %v2868 = vpop.permute.xlu0 %2867
        %v2870 = vsel %vm1205, %v2866, 0
        %v2873 = vsel %vm1271, %v2868, 0
        %2875 = vmatprep.subr.bf16.mxu0 0
        %2876 = vmatpush1.bf16.msra.mxu0 %v2873
        %2877 = vmatprep.subr.bf16.mxu0 0
        %2878 = vmatpush1.bf16.msra.mxu0 0
        %2879 = vmatprep.subr.bf16.mxu0 0
        %2880 = vmatpush1.bf16.msra.mxu0 0
        %2881 = vmatprep.subr.bf16.mxu0 0
        %2882 = vmatpush1.bf16.msra.mxu0 0
        %2883 = vmatprep.subr.bf16.mxu0 0
        %2884 = vmatpush1.bf16.msra.mxu0 0
        %2885 = vmatprep.subr.bf16.mxu0 0
        %2886 = vmatpush1.bf16.msra.mxu0 0
        %2887 = vmatprep.subr.bf16.mxu0 0
        %2888 = vmatpush1.bf16.msra.mxu0 0
        %2889 = vmatprep.subr.bf16.mxu0 0
        %2890 = vmatpush1.bf16.msra.mxu0 0
        %2891 = vmatprep.subr.bf16.mxu0 0
        %2892 = vmatpush1.bf16.msra.mxu0 0
        %2893 = vmatprep.subr.bf16.mxu0 0
        %2894 = vmatpush1.bf16.msra.mxu0 0
        %2895 = vmatprep.subr.bf16.mxu0 0
        %2896 = vmatpush1.bf16.msra.mxu0 0
        %2897 = vmatprep.subr.bf16.mxu0 0
        %2898 = vmatpush1.bf16.msra.mxu0 0
        %2899 = vmatprep.subr.bf16.mxu0 0
        %2900 = vmatpush1.bf16.msra.mxu0 0
        %2901 = vmatprep.subr.bf16.mxu0 0
        %2902 = vmatpush1.bf16.msra.mxu0 0
        %2903 = vmatprep.subr.bf16.mxu0 0
        %2904 = vmatpush1.bf16.msra.mxu0 0
        %2905 = vmatprep.subr.bf16.mxu0 0
        %2906 = vmatpush1.bf16.msra.mxu0 0
        %2907 = vmatprep.mubr.bf16.mxu0 0
        %2908 = vmatmul.mubr.bf16.gmra.mrb[0].mxu0 %v2870
        %v2909 = vpop.f32.mrb[0].mxu0
        %v2910 = vadd.f32 0.0, %v2909
        %v2911 = vpop.f32.mrb[0].mxu0
        %v2912 = vpop.f32.mrb[0].mxu0
        %v2913 = vpop.f32.mrb[0].mxu0
        %2914 = vdwg.mxu0
        %v2915 = vpack.c.bf16 %v2910, %v2910
        %v2917 = vsel %vm1205, %v2915, 0
        %v2920 = vsel %vm1271, %v2686, 0
        %2922 = vmatprep.subr.bf16.mxu0 0
        %2923 = vmatpush1.bf16.msra.mxu0 %v2920
        %2924 = vmatprep.subr.bf16.mxu0 0
        %2925 = vmatpush1.bf16.msra.mxu0 0
        %2926 = vmatprep.subr.bf16.mxu0 0
        %2927 = vmatpush1.bf16.msra.mxu0 0
        %2928 = vmatprep.subr.bf16.mxu0 0
        %2929 = vmatpush1.bf16.msra.mxu0 0
        %2930 = vmatprep.subr.bf16.mxu0 0
        %2931 = vmatpush1.bf16.msra.mxu0 0
        %2932 = vmatprep.subr.bf16.mxu0 0
        %2933 = vmatpush1.bf16.msra.mxu0 0
        %2934 = vmatprep.subr.bf16.mxu0 0
        %2935 = vmatpush1.bf16.msra.mxu0 0
        %2936 = vmatprep.subr.bf16.mxu0 0
        %2937 = vmatpush1.bf16.msra.mxu0 0
        %2938 = vmatprep.subr.bf16.mxu0 0
        %2939 = vmatpush1.bf16.msra.mxu0 0
        %2940 = vmatprep.subr.bf16.mxu0 0
        %2941 = vmatpush1.bf16.msra.mxu0 0
        %2942 = vmatprep.subr.bf16.mxu0 0
        %2943 = vmatpush1.bf16.msra.mxu0 0
        %2944 = vmatprep.subr.bf16.mxu0 0
        %2945 = vmatpush1.bf16.msra.mxu0 0
        %2946 = vmatprep.subr.bf16.mxu0 0
        %2947 = vmatpush1.bf16.msra.mxu0 0
        %2948 = vmatprep.subr.bf16.mxu0 0
        %2949 = vmatpush1.bf16.msra.mxu0 0
        %2950 = vmatprep.subr.bf16.mxu0 0
        %2951 = vmatpush1.bf16.msra.mxu0 0
        %2952 = vmatprep.subr.bf16.mxu0 0
        %2953 = vmatpush1.bf16.msra.mxu0 0
        %2954 = vmatprep.mubr.bf16.mxu0 0
        %2955 = vmatmul.mubr.bf16.gmra.mrb[0].mxu0 %v2917
        %v2956 = vpop.f32.mrb[0].mxu0
        %v2957 = vadd.f32 0.0, %v2956
        %v2958 = vpop.f32.mrb[0].mxu0
        %v2959 = vpop.f32.mrb[0].mxu0
        %v2960 = vpop.f32.mrb[0].mxu0
        %2961 = vdwg.mxu0
        %v2963 = vsel %vm1205, %v2801, 0
        %v2966 = vsel %vm1271, %v2685, 0
        %2968 = vmatprep.subr.bf16.mxu0 0
        %2969 = vmatpush1.bf16.msra.mxu0 %v2966
        %2970 = vmatprep.subr.bf16.mxu0 0
        %2971 = vmatpush1.bf16.msra.mxu0 0
        %2972 = vmatprep.subr.bf16.mxu0 0
        %2973 = vmatpush1.bf16.msra.mxu0 0
        %2974 = vmatprep.subr.bf16.mxu0 0
        %2975 = vmatpush1.bf16.msra.mxu0 0
        %2976 = vmatprep.subr.bf16.mxu0 0
        %2977 = vmatpush1.bf16.msra.mxu0 0
        %2978 = vmatprep.subr.bf16.mxu0 0
        %2979 = vmatpush1.bf16.msra.mxu0 0
        %2980 = vmatprep.subr.bf16.mxu0 0
        %2981 = vmatpush1.bf16.msra.mxu0 0
        %2982 = vmatprep.subr.bf16.mxu0 0
        %2983 = vmatpush1.bf16.msra.mxu0 0
        %2984 = vmatprep.subr.bf16.mxu0 0
        %2985 = vmatpush1.bf16.msra.mxu0 0
        %2986 = vmatprep.subr.bf16.mxu0 0
        %2987 = vmatpush1.bf16.msra.mxu0 0
        %2988 = vmatprep.subr.bf16.mxu0 0
        %2989 = vmatpush1.bf16.msra.mxu0 0
        %2990 = vmatprep.subr.bf16.mxu0 0
        %2991 = vmatpush1.bf16.msra.mxu0 0
        %2992 = vmatprep.subr.bf16.mxu0 0
        %2993 = vmatpush1.bf16.msra.mxu0 0
        %2994 = vmatprep.subr.bf16.mxu0 0
        %2995 = vmatpush1.bf16.msra.mxu0 0
        %2996 = vmatprep.subr.bf16.mxu0 0
        %2997 = vmatpush1.bf16.msra.mxu0 0
        %2998 = vmatprep.subr.bf16.mxu0 0
        %2999 = vmatpush1.bf16.msra.mxu0 0
        %3000 = vmatprep.mubr.bf16.mxu0 0
        %3001 = vmatmul.mubr.bf16.gmra.mrb[0].mxu0 %v2963
        %v3002 = vpop.f32.mrb[0].mxu0
        %v3003 = vadd.f32 %v2957, %v3002
        %v3004 = vpop.f32.mrb[0].mxu0
        %v3005 = vpop.f32.mrb[0].mxu0
        %v3006 = vpop.f32.mrb[0].mxu0
        %3007 = vdwg.mxu0
        %3008 = vrot.lane.b32.xlu0 %v2690, 112
        %v3009 = vpop.permute.xlu0 %3008
        %3010 = vrot.lane.b32.xlu0 %v2691, 112
        %v3011 = vpop.permute.xlu0 %3010
        %v3013 = vsel %vm1205, %v3009, 0
        %v3016 = vsel %vm1205, %v3011, 0
        %3018 = vmatprep.subr.bf16.mxu0 0
        %3019 = vmatpush1.bf16.xpose.msra.mxu0 %v3016
        %3020 = vmatprep.subr.bf16.mxu0 0
        %3021 = vmatpush1.bf16.xpose.msra.mxu0 0
        %3022 = vmatprep.subr.bf16.mxu0 0
        %3023 = vmatpush1.bf16.xpose.msra.mxu0 0
        %3024 = vmatprep.subr.bf16.mxu0 0
        %3025 = vmatpush1.bf16.xpose.msra.mxu0 0
        %3026 = vmatprep.subr.bf16.mxu0 0
        %3027 = vmatpush1.bf16.xpose.msra.mxu0 0
        %3028 = vmatprep.subr.bf16.mxu0 0
        %3029 = vmatpush1.bf16.xpose.msra.mxu0 0
        %3030 = vmatprep.subr.bf16.mxu0 0
        %3031 = vmatpush1.bf16.xpose.msra.mxu0 0
        %3032 = vmatprep.subr.bf16.mxu0 0
        %3033 = vmatpush1.bf16.xpose.msra.mxu0 0
        %3034 = vmatprep.subr.bf16.mxu0 0
        %3035 = vmatpush1.bf16.xpose.msra.mxu0 0
        %3036 = vmatprep.subr.bf16.mxu0 0
        %3037 = vmatpush1.bf16.xpose.msra.mxu0 0
        %3038 = vmatprep.subr.bf16.mxu0 0
        %3039 = vmatpush1.bf16.xpose.msra.mxu0 0
        %3040 = vmatprep.subr.bf16.mxu0 0
        %3041 = vmatpush1.bf16.xpose.msra.mxu0 0
        %3042 = vmatprep.subr.bf16.mxu0 0
        %3043 = vmatpush1.bf16.xpose.msra.mxu0 0
        %3044 = vmatprep.subr.bf16.mxu0 0
        %3045 = vmatpush1.bf16.xpose.msra.mxu0 0
        %3046 = vmatprep.subr.bf16.mxu0 0
        %3047 = vmatpush1.bf16.xpose.msra.mxu0 0
        %3048 = vmatprep.subr.bf16.mxu0 0
        %3049 = vmatpush1.bf16.xpose.msra.mxu0 0
        %3050 = vmatprep.mubr.bf16.mxu0 0
        %3051 = vmatmul.mubr.bf16.gmra.mrb[0].mxu0 %v3013
        %v3052 = vpop.f32.mrb[0].mxu0
        %v3053 = vadd.f32 0.0, %v3052
        %v3054 = vpop.f32.mrb[0].mxu0
        %v3055 = vpop.f32.mrb[0].mxu0
        %v3056 = vpop.f32.mrb[0].mxu0
        %3057 = vdwg.mxu0
        %v3058 = vmul.f32 %v3053, 0.35355338
        %v3059 = vadd.f32 %v3058, %v2684
        %v3060 = vsel %vm1205, %v3059, -inf
        %3061 = vmax.xlane.f32.xlu0 %v3060
        %v3062 = vpop.xlane.xlu0 %3061
        %v3063 = vsub.f32 %v3059, %v3062
        %v3064 = vmul.f32 %v3063, 1.442695
        %v3065 = vpow.pop %v3064
        %v3066 = vsel %vm1205, %v3065, 0.0
        %3067 = vadd.xlane.f32.xlu0 %v3066
        %v3068 = vpop.xlane.xlu0 %3067
        %v3069 = vrcp.pop %v3068
        %v3070 = vmul.f32 %v3065, %v3069
        %v3071 = vpack.c.bf16 %v3070, %v3070
        %3072 = vrot.lane.b32.xlu0 %v2691, 80
        %v3073 = vpop.permute.xlu0 %3072
        %v3075 = vsel %vm1205, %v3071, 0
        %v3078 = vsel %vm1271, %v3073, 0
        %3080 = vmatprep.subr.bf16.mxu0 0
        %3081 = vmatpush1.bf16.msra.mxu0 %v3078
        %3082 = vmatprep.subr.bf16.mxu0 0
        %3083 = vmatpush1.bf16.msra.mxu0 0
        %3084 = vmatprep.subr.bf16.mxu0 0
        %3085 = vmatpush1.bf16.msra.mxu0 0
        %3086 = vmatprep.subr.bf16.mxu0 0
        %3087 = vmatpush1.bf16.msra.mxu0 0
        %3088 = vmatprep.subr.bf16.mxu0 0
        %3089 = vmatpush1.bf16.msra.mxu0 0
        %3090 = vmatprep.subr.bf16.mxu0 0
        %3091 = vmatpush1.bf16.msra.mxu0 0
        %3092 = vmatprep.subr.bf16.mxu0 0
        %3093 = vmatpush1.bf16.msra.mxu0 0
        %3094 = vmatprep.subr.bf16.mxu0 0
        %3095 = vmatpush1.bf16.msra.mxu0 0
        %3096 = vmatprep.subr.bf16.mxu0 0
        %3097 = vmatpush1.bf16.msra.mxu0 0
        %3098 = vmatprep.subr.bf16.mxu0 0
        %3099 = vmatpush1.bf16.msra.mxu0 0
        %3100 = vmatprep.subr.bf16.mxu0 0
        %3101 = vmatpush1.bf16.msra.mxu0 0
        %3102 = vmatprep.subr.bf16.mxu0 0
        %3103 = vmatpush1.bf16.msra.mxu0 0
        %3104 = vmatprep.subr.bf16.mxu0 0
        %3105 = vmatpush1.bf16.msra.mxu0 0
        %3106 = vmatprep.subr.bf16.mxu0 0
        %3107 = vmatpush1.bf16.msra.mxu0 0
        %3108 = vmatprep.subr.bf16.mxu0 0
        %3109 = vmatpush1.bf16.msra.mxu0 0
        %3110 = vmatprep.subr.bf16.mxu0 0
        %3111 = vmatpush1.bf16.msra.mxu0 0
        %3112 = vmatprep.mubr.bf16.mxu0 0
        %3113 = vmatmul.mubr.bf16.gmra.mrb[0].mxu0 %v3075
        %v3114 = vpop.f32.mrb[0].mxu0
        %v3115 = vadd.f32 0.0, %v3114
        %v3116 = vpop.f32.mrb[0].mxu0
        %v3117 = vpop.f32.mrb[0].mxu0
        %v3118 = vpop.f32.mrb[0].mxu0
        %3119 = vdwg.mxu0
        %v3120 = vpack.c.bf16 %v3115, %v3115
        %v3122 = vsel %vm1205, %v3120, 0
        %v3125 = vsel %vm1271, %v2687, 0
        %3127 = vmatprep.subr.bf16.mxu0 0
        %3128 = vmatpush1.bf16.msra.mxu0 %v3125
        %3129 = vmatprep.subr.bf16.mxu0 0
        %3130 = vmatpush1.bf16.msra.mxu0 0
        %3131 = vmatprep.subr.bf16.mxu0 0
        %3132 = vmatpush1.bf16.msra.mxu0 0
        %3133 = vmatprep.subr.bf16.mxu0 0
        %3134 = vmatpush1.bf16.msra.mxu0 0
        %3135 = vmatprep.subr.bf16.mxu0 0
        %3136 = vmatpush1.bf16.msra.mxu0 0
        %3137 = vmatprep.subr.bf16.mxu0 0
        %3138 = vmatpush1.bf16.msra.mxu0 0
        %3139 = vmatprep.subr.bf16.mxu0 0
        %3140 = vmatpush1.bf16.msra.mxu0 0
        %3141 = vmatprep.subr.bf16.mxu0 0
        %3142 = vmatpush1.bf16.msra.mxu0 0
        %3143 = vmatprep.subr.bf16.mxu0 0
        %3144 = vmatpush1.bf16.msra.mxu0 0
        %3145 = vmatprep.subr.bf16.mxu0 0
        %3146 = vmatpush1.bf16.msra.mxu0 0
        %3147 = vmatprep.subr.bf16.mxu0 0
        %3148 = vmatpush1.bf16.msra.mxu0 0
        %3149 = vmatprep.subr.bf16.mxu0 0
        %3150 = vmatpush1.bf16.msra.mxu0 0
        %3151 = vmatprep.subr.bf16.mxu0 0
        %3152 = vmatpush1.bf16.msra.mxu0 0
        %3153 = vmatprep.subr.bf16.mxu0 0
        %3154 = vmatpush1.bf16.msra.mxu0 0
        %3155 = vmatprep.subr.bf16.mxu0 0
        %3156 = vmatpush1.bf16.msra.mxu0 0
        %3157 = vmatprep.subr.bf16.mxu0 0
        %3158 = vmatpush1.bf16.msra.mxu0 0
        %3159 = vmatprep.mubr.bf16.mxu0 0
        %3160 = vmatmul.mubr.bf16.gmra.mrb[0].mxu0 %v3122
        %v3161 = vpop.f32.mrb[0].mxu0
        %v3162 = vadd.f32 0.0, %v3161
        %v3163 = vpop.f32.mrb[0].mxu0
        %v3164 = vpop.f32.mrb[0].mxu0
        %v3165 = vpop.f32.mrb[0].mxu0
        %3166 = vdwg.mxu0
        %v3167 = vadd.f32 %v3003, %v3162
        %3168 = vrot.lane.b32.xlu0 %v2690, 104
        %v3169 = vpop.permute.xlu0 %3168
        %3170 = vrot.lane.b32.xlu0 %v2691, 104
        %v3171 = vpop.permute.xlu0 %3170
        %v3173 = vsel %vm1205, %v3169, 0
        %v3176 = vsel %vm1205, %v3171, 0
        %3178 = vmatprep.subr.bf16.mxu0 0
        %3179 = vmatpush1.bf16.xpose.msra.mxu0 %v3176
        %3180 = vmatprep.subr.bf16.mxu0 0
        %3181 = vmatpush1.bf16.xpose.msra.mxu0 0
        %3182 = vmatprep.subr.bf16.mxu0 0
        %3183 = vmatpush1.bf16.xpose.msra.mxu0 0
        %3184 = vmatprep.subr.bf16.mxu0 0
        %3185 = vmatpush1.bf16.xpose.msra.mxu0 0
        %3186 = vmatprep.subr.bf16.mxu0 0
        %3187 = vmatpush1.bf16.xpose.msra.mxu0 0
        %3188 = vmatprep.subr.bf16.mxu0 0
        %3189 = vmatpush1.bf16.xpose.msra.mxu0 0
        %3190 = vmatprep.subr.bf16.mxu0 0
        %3191 = vmatpush1.bf16.xpose.msra.mxu0 0
        %3192 = vmatprep.subr.bf16.mxu0 0
        %3193 = vmatpush1.bf16.xpose.msra.mxu0 0
        %3194 = vmatprep.subr.bf16.mxu0 0
        %3195 = vmatpush1.bf16.xpose.msra.mxu0 0
        %3196 = vmatprep.subr.bf16.mxu0 0
        %3197 = vmatpush1.bf16.xpose.msra.mxu0 0
        %3198 = vmatprep.subr.bf16.mxu0 0
        %3199 = vmatpush1.bf16.xpose.msra.mxu0 0
        %3200 = vmatprep.subr.bf16.mxu0 0
        %3201 = vmatpush1.bf16.xpose.msra.mxu0 0
        %3202 = vmatprep.subr.bf16.mxu0 0
        %3203 = vmatpush1.bf16.xpose.msra.mxu0 0
        %3204 = vmatprep.subr.bf16.mxu0 0
        %3205 = vmatpush1.bf16.xpose.msra.mxu0 0
        %3206 = vmatprep.subr.bf16.mxu0 0
        %3207 = vmatpush1.bf16.xpose.msra.mxu0 0
        %3208 = vmatprep.subr.bf16.mxu0 0
        %3209 = vmatpush1.bf16.xpose.msra.mxu0 0
        %3210 = vmatprep.mubr.bf16.mxu0 0
        %3211 = vmatmul.mubr.bf16.gmra.mrb[0].mxu0 %v3173
        %v3212 = vpop.f32.mrb[0].mxu0
        %v3213 = vadd.f32 0.0, %v3212
        %v3214 = vpop.f32.mrb[0].mxu0
        %v3215 = vpop.f32.mrb[0].mxu0
        %v3216 = vpop.f32.mrb[0].mxu0
        %3217 = vdwg.mxu0
        %v3218 = vmul.f32 %v3213, 0.35355338
        %v3219 = vadd.f32 %v3218, %v2684
        %v3220 = vsel %vm1205, %v3219, -inf
        %3221 = vmax.xlane.f32.xlu0 %v3220
        %v3222 = vpop.xlane.xlu0 %3221
        %v3223 = vsub.f32 %v3219, %v3222
        %v3224 = vmul.f32 %v3223, 1.442695
        %v3225 = vpow.pop %v3224
        %v3226 = vsel %vm1205, %v3225, 0.0
        %3227 = vadd.xlane.f32.xlu0 %v3226
        %v3228 = vpop.xlane.xlu0 %3227
        %v3229 = vrcp.pop %v3228
        %v3230 = vmul.f32 %v3225, %v3229
        %v3231 = vpack.c.bf16 %v3230, %v3230
        %3232 = vrot.lane.b32.xlu0 %v2691, 72
        %v3233 = vpop.permute.xlu0 %3232
        %v3235 = vsel %vm1205, %v3231, 0
        %v3238 = vsel %vm1271, %v3233, 0
        %3240 = vmatprep.subr.bf16.mxu0 0
        %3241 = vmatpush1.bf16.msra.mxu0 %v3238
        %3242 = vmatprep.subr.bf16.mxu0 0
        %3243 = vmatpush1.bf16.msra.mxu0 0
        %3244 = vmatprep.subr.bf16.mxu0 0
        %3245 = vmatpush1.bf16.msra.mxu0 0
        %3246 = vmatprep.subr.bf16.mxu0 0
        %3247 = vmatpush1.bf16.msra.mxu0 0
        %3248 = vmatprep.subr.bf16.mxu0 0
        %3249 = vmatpush1.bf16.msra.mxu0 0
        %3250 = vmatprep.subr.bf16.mxu0 0
        %3251 = vmatpush1.bf16.msra.mxu0 0
        %3252 = vmatprep.subr.bf16.mxu0 0
        %3253 = vmatpush1.bf16.msra.mxu0 0
        %3254 = vmatprep.subr.bf16.mxu0 0
        %3255 = vmatpush1.bf16.msra.mxu0 0
        %3256 = vmatprep.subr.bf16.mxu0 0
        %3257 = vmatpush1.bf16.msra.mxu0 0
        %3258 = vmatprep.subr.bf16.mxu0 0
        %3259 = vmatpush1.bf16.msra.mxu0 0
        %3260 = vmatprep.subr.bf16.mxu0 0
        %3261 = vmatpush1.bf16.msra.mxu0 0
        %3262 = vmatprep.subr.bf16.mxu0 0
        %3263 = vmatpush1.bf16.msra.mxu0 0
        %3264 = vmatprep.subr.bf16.mxu0 0
        %3265 = vmatpush1.bf16.msra.mxu0 0
        %3266 = vmatprep.subr.bf16.mxu0 0
        %3267 = vmatpush1.bf16.msra.mxu0 0
        %3268 = vmatprep.subr.bf16.mxu0 0
        %3269 = vmatpush1.bf16.msra.mxu0 0
        %3270 = vmatprep.subr.bf16.mxu0 0
        %3271 = vmatpush1.bf16.msra.mxu0 0
        %3272 = vmatprep.mubr.bf16.mxu0 0
        %3273 = vmatmul.mubr.bf16.gmra.mrb[0].mxu0 %v3235
        %v3274 = vpop.f32.mrb[0].mxu0
        %v3275 = vadd.f32 0.0, %v3274
        %v3276 = vpop.f32.mrb[0].mxu0
        %v3277 = vpop.f32.mrb[0].mxu0
        %v3278 = vpop.f32.mrb[0].mxu0
        %3279 = vdwg.mxu0
        %v3280 = vpack.c.bf16 %v3275, %v3275
        %v3282 = vsel %vm1205, %v3280, 0
        %v3285 = vsel %vm1271, %v2688, 0
        %3287 = vmatprep.subr.bf16.mxu0 0
        %3288 = vmatpush1.bf16.msra.mxu0 %v3285
        %3289 = vmatprep.subr.bf16.mxu0 0
        %3290 = vmatpush1.bf16.msra.mxu0 0
        %3291 = vmatprep.subr.bf16.mxu0 0
        %3292 = vmatpush1.bf16.msra.mxu0 0
        %3293 = vmatprep.subr.bf16.mxu0 0
        %3294 = vmatpush1.bf16.msra.mxu0 0
        %3295 = vmatprep.subr.bf16.mxu0 0
        %3296 = vmatpush1.bf16.msra.mxu0 0
        %3297 = vmatprep.subr.bf16.mxu0 0
        %3298 = vmatpush1.bf16.msra.mxu0 0
        %3299 = vmatprep.subr.bf16.mxu0 0
        %3300 = vmatpush1.bf16.msra.mxu0 0
        %3301 = vmatprep.subr.bf16.mxu0 0
        %3302 = vmatpush1.bf16.msra.mxu0 0
        %3303 = vmatprep.subr.bf16.mxu0 0
        %3304 = vmatpush1.bf16.msra.mxu0 0
        %3305 = vmatprep.subr.bf16.mxu0 0
        %3306 = vmatpush1.bf16.msra.mxu0 0
        %3307 = vmatprep.subr.bf16.mxu0 0
        %3308 = vmatpush1.bf16.msra.mxu0 0
        %3309 = vmatprep.subr.bf16.mxu0 0
        %3310 = vmatpush1.bf16.msra.mxu0 0
        %3311 = vmatprep.subr.bf16.mxu0 0
        %3312 = vmatpush1.bf16.msra.mxu0 0
        %3313 = vmatprep.subr.bf16.mxu0 0
        %3314 = vmatpush1.bf16.msra.mxu0 0
        %3315 = vmatprep.subr.bf16.mxu0 0
        %3316 = vmatpush1.bf16.msra.mxu0 0
        %3317 = vmatprep.subr.bf16.mxu0 0
        %3318 = vmatpush1.bf16.msra.mxu0 0
        %3319 = vmatprep.mubr.bf16.mxu0 0
        %3320 = vmatmul.mubr.bf16.gmra.mrb[0].mxu0 %v3282
        %v3321 = vpop.f32.mrb[0].mxu0
        %v3322 = vadd.f32 0.0, %v3321
        %v3323 = vpop.f32.mrb[0].mxu0
        %v3324 = vpop.f32.mrb[0].mxu0
        %v3325 = vpop.f32.mrb[0].mxu0
        %3326 = vdwg.mxu0
        %v3327 = vadd.f32 %v3167, %v3322
        %v3329 = vlaneseq
        %v3330 = vshrl.u32 %v3329, 7
        %v3331 = vsub.s32 0, %v3330
        %v3332 = vrot.slane %v2689, %v3331
        %v3334 = vadd.f32 %v3327, %v3332
        %v3335 = vadd.f32 %v3334, %v2549
        %v3336 = vld [vmem:[#allocation28] sm:$0x1]
        %v3337 = vld [vmem:[#allocation29] sm:$0x1]
        %v3338 = vsel %vm1152, %v3335, 0.0
        %3339 = vadd.xlane.f32.xlu0 %v3338
        %v3340 = vpop.xlane.xlu0 %3339
        %v3341 = vmul.f32 %v3340, %v2525
        %v3342 = vsub.f32 %v3335, %v3341
        %v3343 = vmul.f32 %v3342, %v3342
        %v3344 = vsel %vm1152, %v3343, 0.0
        %3345 = vadd.xlane.f32.xlu0 %v3344
        %v3346 = vpop.xlane.xlu0 %3345
        %v3347 = vmul.f32 %v3346, %v2525
        %v3348 = vadd.f32 %v3347, 1e-05
        %v3349 = vrsqrt.pop %v3348
        %v3350 = vmul.f32 %v3342, %v3349
        %v3352 = vlaneseq
        %v3353 = vshrl.u32 %v3352, 7
        %v3354 = vsub.s32 0, %v3353
        %v3355 = vrot.slane %v3336, %v3354
        %v3357 = vmul.f32 %v3355, %v3350
        %v3359 = vlaneseq
        %v3360 = vshrl.u32 %v3359, 7
        %v3361 = vsub.s32 0, %v3360
        %v3362 = vrot.slane %v3337, %v3361
        %v3364 = vadd.f32 %v3357, %v3362
        %v3365 = vld [vmem:[#allocation31] sm:$0xf]
        %v3366 = vld [vmem:[#allocation31 + $0x4] sm:$0xf]
        %v3367 = vld [vmem:[#allocation31 + $0x8] sm:$0xf]
        %v3368 = vld [vmem:[#allocation31 + $0xc] sm:$0xf]
        %v3369 = vld [vmem:[#allocation32] sm:$0x1]
        %v3370 = vld [vmem:[#allocation34] sm:$0xf]
        %v3371 = vld [vmem:[#allocation34 + $0x4] sm:$0xf]
        %v3372 = vld [vmem:[#allocation34 + $0x8] sm:$0xf]
        %v3373 = vld [vmem:[#allocation34 + $0xc] sm:$0xf]
        %v3374 = vld [vmem:[#allocation34 + $0x10] sm:$0xf]
        %v3375 = vld [vmem:[#allocation34 + $0x14] sm:$0xf]
        %v3376 = vld [vmem:[#allocation34 + $0x18] sm:$0xf]
        %v3377 = vld [vmem:[#allocation34 + $0x1c] sm:$0xf]
        %v3378 = vld [vmem:[#allocation35] sm:$0x1]
        %v3379 = vld [vmem:[#allocation37] sm:$0x1]
        %v3380 = vld [vmem:[#allocation38] sm:$0x1]
        %v3381 = vpack.c.bf16 %v3364, %v3364
        %v3383 = vlaneseq
        %v3384 = vshrl.u32 %v3383, 7
        %v3385 = vsub.s32 0, %v3384
        %v3386 = vrot.slane %v3369, %v3385
        %v3392 = vunpack.c.l.b16 %v3365
        %v3393 = vunpack.c.l.b16 %v3366
        %v3394 = vunpack.c.l.b16 %v3367
        %v3395 = vunpack.c.l.b16 %v3368
        %v3396 = vpack.c.b16 %v3393, %v3392
        %v3397 = vpack.c.b16 %v3395, %v3394
        %v3401 = vsel %vm1152, %v3381, 0
        %3403 = vmatprep.subr.bf16.mxu0 0
        %3404 = vmatpush1.bf16.msra.mxu0 %v3396
        %3405 = vmatprep.subr.bf16.mxu0 0
        %3406 = vmatpush1.bf16.msra.mxu0 %v3397
        %3407 = vmatprep.subr.bf16.mxu0 0
        %3408 = vmatpush1.bf16.msra.mxu0 0
        %3409 = vmatprep.subr.bf16.mxu0 0
        %3410 = vmatpush1.bf16.msra.mxu0 0
        %3411 = vmatprep.subr.bf16.mxu0 0
        %3412 = vmatpush1.bf16.msra.mxu0 0
        %3413 = vmatprep.subr.bf16.mxu0 0
        %3414 = vmatpush1.bf16.msra.mxu0 0
        %3415 = vmatprep.subr.bf16.mxu0 0
        %3416 = vmatpush1.bf16.msra.mxu0 0
        %3417 = vmatprep.subr.bf16.mxu0 0
        %3418 = vmatpush1.bf16.msra.mxu0 0
        %3419 = vmatprep.subr.bf16.mxu0 0
        %3420 = vmatpush1.bf16.msra.mxu0 0
        %3421 = vmatprep.subr.bf16.mxu0 0
        %3422 = vmatpush1.bf16.msra.mxu0 0
        %3423 = vmatprep.subr.bf16.mxu0 0
        %3424 = vmatpush1.bf16.msra.mxu0 0
        %3425 = vmatprep.subr.bf16.mxu0 0
        %3426 = vmatpush1.bf16.msra.mxu0 0
        %3427 = vmatprep.subr.bf16.mxu0 0
        %3428 = vmatpush1.bf16.msra.mxu0 0
        %3429 = vmatprep.subr.bf16.mxu0 0
        %3430 = vmatpush1.bf16.msra.mxu0 0
        %3431 = vmatprep.subr.bf16.mxu0 0
        %3432 = vmatpush1.bf16.msra.mxu0 0
        %3433 = vmatprep.subr.bf16.mxu0 0
        %3434 = vmatpush1.bf16.msra.mxu0 0
        %3435 = vmatprep.mubr.bf16.mxu0 0
        %3436 = vmatmul.mubr.bf16.gmra.mrb[0].mxu0 %v3401
        %v3437 = vpop.f32.mrb[0].mxu0
        %v3438 = vadd.f32 %v3386, %v3437
        %v3439 = vpop.f32.mrb[0].mxu0
        %v3440 = vpop.f32.mrb[0].mxu0
        %v3441 = vpop.f32.mrb[0].mxu0
        %3442 = vdwg.mxu0
        %v3443 = vmax.f32 %v3438, 0.0
        %v3444 = vpack.c.bf16 %v3443, %v3443
        %v3446 = vlaneseq
        %v3447 = vshrl.u32 %v3446, 7
        %v3448 = vsub.s32 0, %v3447
        %v3449 = vrot.slane %v3378, %v3448
        %v3459 = vunpack.c.l.b16 %v3370
        %v3460 = vunpack.c.l.b16 %v3371
        %v3461 = vunpack.c.l.b16 %v3372
        %v3462 = vunpack.c.l.b16 %v3373
        %v3463 = vunpack.c.l.b16 %v3374
        %v3464 = vunpack.c.l.b16 %v3375
        %v3465 = vunpack.c.l.b16 %v3376
        %v3466 = vunpack.c.l.b16 %v3377
        %v3467 = vpack.c.b16 %v3460, %v3459
        %v3468 = vpack.c.b16 %v3462, %v3461
        %v3469 = vpack.c.b16 %v3464, %v3463
        %v3470 = vpack.c.b16 %v3466, %v3465
        %vm3475 = vcmask 523264
        %v3477 = vsel %vm3475, %v3444, 0
        %3479 = vmatprep.subr.bf16.mxu0 0
        %3480 = vmatpush1.bf16.msra.mxu0 %v3467
        %3481 = vmatprep.subr.bf16.mxu0 0
        %3482 = vmatpush1.bf16.msra.mxu0 %v3468
        %3483 = vmatprep.subr.bf16.mxu0 0
        %3484 = vmatpush1.bf16.msra.mxu0 %v3469
        %3485 = vmatprep.subr.bf16.mxu0 0
        %3486 = vmatpush1.bf16.msra.mxu0 %v3470
        %3487 = vmatprep.subr.bf16.mxu0 0
        %3488 = vmatpush1.bf16.msra.mxu0 0
        %3489 = vmatprep.subr.bf16.mxu0 0
        %3490 = vmatpush1.bf16.msra.mxu0 0
        %3491 = vmatprep.subr.bf16.mxu0 0
        %3492 = vmatpush1.bf16.msra.mxu0 0
        %3493 = vmatprep.subr.bf16.mxu0 0
        %3494 = vmatpush1.bf16.msra.mxu0 0
        %3495 = vmatprep.subr.bf16.mxu0 0
        %3496 = vmatpush1.bf16.msra.mxu0 0
        %3497 = vmatprep.subr.bf16.mxu0 0
        %3498 = vmatpush1.bf16.msra.mxu0 0
        %3499 = vmatprep.subr.bf16.mxu0 0
        %3500 = vmatpush1.bf16.msra.mxu0 0
        %3501 = vmatprep.subr.bf16.mxu0 0
        %3502 = vmatpush1.bf16.msra.mxu0 0
        %3503 = vmatprep.subr.bf16.mxu0 0
        %3504 = vmatpush1.bf16.msra.mxu0 0
        %3505 = vmatprep.subr.bf16.mxu0 0
        %3506 = vmatpush1.bf16.msra.mxu0 0
        %3507 = vmatprep.subr.bf16.mxu0 0
        %3508 = vmatpush1.bf16.msra.mxu0 0
        %3509 = vmatprep.subr.bf16.mxu0 0
        %3510 = vmatpush1.bf16.msra.mxu0 0
        %3511 = vmatprep.mubr.bf16.mxu0 0
        %3512 = vmatmul.mubr.bf16.gmra.mrb[0].mxu0 %v3477
        %v3513 = vpop.f32.mrb[0].mxu0
        %v3514 = vadd.f32 %v3449, %v3513
        %v3515 = vpop.f32.mrb[0].mxu0
        %v3516 = vpop.f32.mrb[0].mxu0
        %v3517 = vpop.f32.mrb[0].mxu0
        %3518 = vdwg.mxu0
        %v3519 = vadd.f32 %v3514, %v3364
        %v3520 = vsel %vm1152, %v3519, 0.0
        %3521 = vadd.xlane.f32.xlu0 %v3520
        %v3522 = vpop.xlane.xlu0 %3521
        %v3523 = vmul.f32 %v3522, %v2525
        %v3524 = vsub.f32 %v3519, %v3523
        %v3525 = vmul.f32 %v3524, %v3524
        %v3526 = vsel %vm1152, %v3525, 0.0
        %3527 = vadd.xlane.f32.xlu0 %v3526
        %v3528 = vpop.xlane.xlu0 %3527
        %v3529 = vmul.f32 %v3528, %v2525
        %v3530 = vadd.f32 %v3529, 1e-05
        %v3531 = vrsqrt.pop %v3530
        %v3532 = vmul.f32 %v3524, %v3531
        %v3534 = vlaneseq
        %v3535 = vshrl.u32 %v3534, 7
        %v3536 = vsub.s32 0, %v3535
        %v3537 = vrot.slane %v3379, %v3536
        %v3539 = vmul.f32 %v3537, %v3532
        %v3541 = vlaneseq
        %v3542 = vshrl.u32 %v3541, 7
        %v3543 = vsub.s32 0, %v3542
        %v3544 = vrot.slane %v3380, %v3543
        %v3546 = vadd.f32 %v3539, %v3544
        %v3547 = vpack.c.bf16 %v3546, %v3546
        %vm3548 = vcmask 257024
        %3549 = vst.msk [vmem:[%s1124] sm:$0xf] %vm3548, %v3547
        %s3550 = sand.u32 %s589, 1
        %s3551 = scalar_lea.sflag [#allocation4], %s3550
        %s3552 = sand.u32 %s589, 1
        %s3553 = smul.addr %s3552, 4
        %s3554 = scalar_lea.vmem [#allocation40], %s3553
        // Predicated region
        $region213: #{transformer_forward.4} parent=115 // pred_check
          %p3555 = pneg %p599
        $region214: #{transformer_forward.4} parent=115 // pred_check_branch
          %3557 = sbr.rel (%p3555) target = $region216
        $region215: #{transformer_forward.4} parent=115 // pred_region
          %s3559 = ssub.s32 64, 64
          %3560 = vsyncadd %s3551, %s3559
          %s3561 = smul.addr %s57, 64
          %s3562 = scalar_lea.hbm %s24, %s3561
          %s3564 = sshll.u32 %s3554, 4
          %s3565 = int_to_ptr.vmem [resolvable:$true] %s3564
          %3567 = dma.vmem_to_hbm [thread:$0]  %s3565, 64, %s3562, %s3551
        $region216: #{transformer_forward.4} parent=115 // pred_fallthru
          _
      $region116: #{transformer_forward.4} parent=5 // pred_fallthru
        _
      %p3568 = scmp.le.s32.totalorder 2, %s52
      // Predicated region
      $region217: #{transformer_forward.4} parent=5 // pred_check
        %p3569 = pneg %p3568
      $region218: #{transformer_forward.4} parent=5 // pred_check_branch
        %3571 = sbr.rel (%p3569) target = $region220
      $region219: #{transformer_forward.4} parent=5 // pred_region
        %s3572 = ssub.s32 %s52, 2
        // Predicated region
        $region221: #{transformer_forward.4} parent=219 // pred_check
          %p3573 = pneg %p605
        $region222: #{transformer_forward.4} parent=219 // pred_check_branch
          %3575 = sbr.rel (%p3573) target = $region224
        $region223: #{transformer_forward.4} parent=219 // pred_region
          %s3576 = sand.u32 %s590, 1
          %s3577 = scalar_lea.sflag [#allocation4], %s3576
          %s3578 = sand.u32 %s590, 1
          %s3579 = smul.addr %s3578, 4
          %s3580 = scalar_lea.vmem [#allocation40], %s3579
          %3581 = dma.done %s3577, 64
        $region224: #{transformer_forward.4} parent=219 // pred_fallthru
          _
      $region220: #{transformer_forward.4} parent=5 // pred_fallthru
        _
    $region6: #{transformer_forward.4} parent=1 // loop_footer
      %s56 = sadd.s32 1, %s52
    $region7: #{transformer_forward.4} parent=1 // loop_footer_branch
      %51 = sbr.rel target = $region3
    $region8: #{transformer_forward.4} parent=1 // loop_exit
      _
    %3582 = vsyncpa [#allocation3], 1
    %s3583 = scalar_lea.sflag [#allocation3], 1
    %3584 = vsyncpa %s3583, 1
    %3585 = vsyncpa [#allocation6], 1
    %s3586 = scalar_lea.sflag [#allocation6], 1
    %3587 = vsyncpa %s3586, 1
    %3588 = vsyncpa [#allocation9], 1
    %s3589 = scalar_lea.sflag [#allocation9], 1
    %3590 = vsyncpa %s3589, 1
    %3591 = vsyncpa [#allocation12], 1
    %3592 = vsyncpa [#allocation15], 1
    %3593 = vsyncpa [#allocation18], 1
    %3594 = vsyncpa [#allocation21], 1
    %3595 = vsyncpa [#allocation24], 1
    %3596 = vsyncpa [#allocation27], 1
    %3597 = vsyncpa [#allocation30], 1
    %3598 = vsyncpa [#allocation33], 1
    %3599 = vsyncpa [#allocation36], 1
    %3600 = vsyncpa [#allocation39], 1
    %3601 = vsyncpa [#allocation4], 1
    %s3602 = scalar_lea.sflag [#allocation4], 1
    %3603 = vsyncpa %s3602, 1

</llo_original>
